<compile_context>
chip_gen: v5e
topology: v5e:2x2
jax: 0.10.0
libtpu: 0.0.40
codegen_flags: <defaults>
</compile_context>

<pallas_src>
import functools
import math

import jax
import jax.numpy as jnp
from jax.experimental import pallas as pl
from jax.experimental.pallas import tpu as pltpu


_VMEM_LIMIT = 48 * 1024 * 1024  # < 64 MiB (v7x physical), safe on v5e/v6e too


def _round_up(x, m):
    return ((x + m - 1) // m) * m


def _row_tile(m, cap=512):
    # 8-aligned row tile; large tiles amortize the ~0.35us per-grid-step cost.
    return min(cap, _round_up(max(m, 1), 8))


def _gva_row_tile(n, s, c):
    # VMEM budget: double-buffered grouped inputs (key/val/pos) plus the
    # in-kernel [tn,S,C] temporaries (peb, rel, val+peb, expanded weights, ...).
    # Kept well under the 48 MiB scoped limit so it also fits v7x (64 MiB VMEM).
    bytes_per_row = 4 * s * (2 * c + 4) * 2          # DMA'd cubes, double buffered
    bytes_per_row += 4 * s * c * 6                   # rough temporary footprint
    budget = 20 * 1024 * 1024
    tn = max(8, min(256, (budget // max(bytes_per_row, 1)) // 8 * 8))
    return min(tn, _round_up(n, 8))


# ----------------------------------------------------------------------------
# Kernel 1: fused Linear (+ folded bias/BN affine) (+ residual) (+ ReLU)
# ----------------------------------------------------------------------------
def _linear_kernel(x_ref, w_ref, s_ref, t_ref, o_ref, *, relu):
    x = x_ref[...].astype(jnp.bfloat16)
    y = jnp.dot(x, w_ref[...], preferred_element_type=jnp.float32)
    y = y * s_ref[...] + t_ref[...]
    if relu:
        y = jnp.maximum(y, 0.0)
    o_ref[...] = y


def _linear_res_kernel(x_ref, w_ref, s_ref, t_ref, r_ref, o_ref, *, relu):
    x = x_ref[...].astype(jnp.bfloat16)
    y = jnp.dot(x, w_ref[...], preferred_element_type=jnp.float32)
    y = y * s_ref[...] + t_ref[...] + r_ref[...]     # residual add fused in-kernel
    if relu:
        y = jnp.maximum(y, 0.0)
    o_ref[...] = y


def fused_linear(x, w, scale, shift, residual=None, relu=False):
    """y = relu?( (x @ w) * scale + shift [+ residual] ); w is bf16, acc f32."""
    M, Cin = x.shape
    Cout = w.shape[1]
    tm = _row_tile(M)
    m_pad = _round_up(M, tm)
    xp = jnp.pad(x, ((0, m_pad - M), (0, 0))) if m_pad != M else x

    args = [xp, w, scale, shift]
    in_specs = [
        pl.BlockSpec((tm, Cin), lambda i: (i, 0)),
        pl.BlockSpec((Cin, Cout), lambda i: (0, 0)),
        pl.BlockSpec((1, Cout), lambda i: (0, 0)),
        pl.BlockSpec((1, Cout), lambda i: (0, 0)),
    ]
    if residual is not None:
        rp = (jnp.pad(residual, ((0, m_pad - M), (0, 0)))
              if m_pad != M else residual)
        args.append(rp)
        in_specs.append(pl.BlockSpec((tm, Cout), lambda i: (i, 0)))
        kernel = functools.partial(_linear_res_kernel, relu=relu)
    else:
        kernel = functools.partial(_linear_kernel, relu=relu)

    out = pl.pallas_call(
        kernel,
        out_shape=jax.ShapeDtypeStruct((m_pad, Cout), jnp.float32),
        grid=(m_pad // tm,),
        in_specs=in_specs,
        out_specs=pl.BlockSpec((tm, Cout), lambda i: (i, 0)),
        compiler_params=pltpu.CompilerParams(
            dimension_semantics=("parallel",),
            vmem_limit_bytes=_VMEM_LIMIT),
    )(*args)
    return out[:M] if m_pad != M else out


# ----------------------------------------------------------------------------
# Kernel 2: fused fc1 -> norm1 -> ReLU -> concatenated q/k/v projection
#   (one kernel, feat read once, lane-dense >=128-wide output)
# ----------------------------------------------------------------------------
def _fc1_qkv_kernel(x_ref, w1_ref, s1_ref, t1_ref,
                    wq_ref, sq_ref, tq_ref, rm_ref, o_ref):
    x = x_ref[...].astype(jnp.bfloat16)
    h = jnp.dot(x, w1_ref[...], preferred_element_type=jnp.float32)
    h = jnp.maximum(h * s1_ref[...] + t1_ref[...], 0.0)           # fc1+BN+ReLU
    y = jnp.dot(h.astype(jnp.bfloat16), wq_ref[...],
                preferred_element_type=jnp.float32)
    y = y * sq_ref[...] + tq_ref[...]                             # bias/BN folded
    rm = rm_ref[...]                                              # ReLU on q,k only
    o_ref[...] = rm * jnp.maximum(y, 0.0) + (1.0 - rm) * y


def fused_fc1_qkv(x, fc1_w, fc1_s, fc1_t, qkv_w, qkv_s, qkv_t, qkv_rm):
    M, C = x.shape
    P = qkv_w.shape[1]
    tm = _row_tile(M)
    m_pad = _round_up(M, tm)
    xp = jnp.pad(x, ((0, m_pad - M), (0, 0))) if m_pad != M else x
    out = pl.pallas_call(
        _fc1_qkv_kernel,
        out_shape=jax.ShapeDtypeStruct((m_pad, P), jnp.float32),
        grid=(m_pad // tm,),
        in_specs=[
            pl.BlockSpec((tm, C), lambda i: (i, 0)),
            pl.BlockSpec((C, C), lambda i: (0, 0)),
            pl.BlockSpec((1, C), lambda i: (0, 0)),
            pl.BlockSpec((1, C), lambda i: (0, 0)),
            pl.BlockSpec((C, P), lambda i: (0, 0)),
            pl.BlockSpec((1, P), lambda i: (0, 0)),
            pl.BlockSpec((1, P), lambda i: (0, 0)),
            pl.BlockSpec((1, P), lambda i: (0, 0)),
        ],
        out_specs=pl.BlockSpec((tm, P), lambda i: (i, 0)),
        compiler_params=pltpu.CompilerParams(
            dimension_semantics=("parallel",),
            vmem_limit_bytes=_VMEM_LIMIT),
    )(xp, fc1_w, fc1_s, fc1_t, qkv_w, qkv_s, qkv_t, qkv_rm)
    return out[:M]


# ----------------------------------------------------------------------------
# Kernel 3: GroupedVectorAttention core (+ in-kernel pe_bias MLP, + norm2+ReLU)
# ----------------------------------------------------------------------------
def _gva_kernel(q_ref, key_ref, val_ref, pos_ref, mask_ref,
                p1w_ref, p1s_ref, p1t_ref, p2w_ref, p2b_ref,
                we1w_ref, we1s_ref, we1t_ref, we2w_ref, we2b_ref,
                eg_ref, n2s_ref, n2t_ref, o_ref):
    TN, S, C = key_ref.shape
    G = we1w_ref.shape[1]
    TNS = TN * S

    # --- pe_bias MLP on relative xyz (fully in-kernel).
    #     Cin=3 stage: 3 broadcast FMAs on the VPU instead of a K=3 matmul.
    pos = pos_ref[...]                                          # [TN, S, 3]
    h = (pos[:, :, 0:1] * p1w_ref[0:1, :]
         + pos[:, :, 1:2] * p1w_ref[1:2, :]
         + pos[:, :, 2:3] * p1w_ref[2:3, :])                    # [TN, S, C]
    h = jnp.maximum(h * p1s_ref[...] + p1t_ref[...], 0.0)       # BN+ReLU (folded)
    peb = jnp.dot(h.reshape(TNS, C).astype(jnp.bfloat16), p2w_ref[...],
                  preferred_element_type=jnp.float32) + p2b_ref[...]
    peb = peb.reshape(TN, S, C)

    q = q_ref[...]                                              # [TN, C]
    rel = key_ref[...] - q[:, None, :] + peb                    # [TN, S, C]
    val = val_ref[...] + peb                                    # [TN, S, C]

    # --- weight encoding: Linear(C,G) -> BN -> ReLU -> Linear(G,G)
    hw = jnp.dot(rel.reshape(TNS, C).astype(jnp.bfloat16), we1w_ref[...],
                 preferred_element_type=jnp.float32)            # [TNS, G]
    hw = jnp.maximum(hw * we1s_ref[...] + we1t_ref[...], 0.0)
    # G x G stage unrolled as VPU FMAs (keeps the tiny matmul off the MXU)
    w = we2b_ref[...] + hw[:, 0:1] * we2w_ref[0:1, :]
    for j in range(1, G):
        w = w + hw[:, j:j + 1] * we2w_ref[j:j + 1, :]
    w = w.reshape(TN, S, G)

    # --- softmax over the neighbour axis (dim=1), then mask (matches torch)
    w = w - jnp.max(w, axis=1, keepdims=True)
    w = jnp.exp(w)
    w = w / jnp.sum(w, axis=1, keepdims=True)
    w = w * mask_ref[...][:, :, None]

    # --- grouped aggregation at full C lane width:
    #     expand per-group weights to per-channel weights (G broadcast FMAs),
    #     then a single multiply + sublane reduce over S.
    w_exp = w[:, :, 0:1] * eg_ref[0:1, :]
    for g in range(1, G):
        w_exp = w_exp + w[:, :, g:g + 1] * eg_ref[g:g + 1, :]   # [TN, S, C]
    out = jnp.sum(val * w_exp, axis=1)                          # [TN, C]

    # --- fused norm2 + ReLU (Block epilogue before fc3)
    o_ref[...] = jnp.maximum(out * n2s_ref[...] + n2t_ref[...], 0.0)


def gva_attention(q, key_g, val_g, pos, mask, blk):
    N, S, C = key_g.shape
    G = blk["we1_w"].shape[1]
    tn = _gva_row_tile(N, S, C)
    n_pad = _round_up(N, tn)
    if n_pad != N:
        dp = n_pad - N
        q = jnp.pad(q, ((0, dp), (0, 0)))
        key_g = jnp.pad(key_g, ((0, dp), (0, 0), (0, 0)))
        val_g = jnp.pad(val_g, ((0, dp), (0, 0), (0, 0)))
        pos = jnp.pad(pos, ((0, dp), (0, 0), (0, 0)))
        mask = jnp.pad(mask, ((0, dp), (0, 0)))

    row = lambda i: (i, 0)
    cube = lambda i: (i, 0, 0)
    c2 = lambda i: (0, 0)
    out = pl.pallas_call(
        _gva_kernel,
        out_shape=jax.ShapeDtypeStruct((n_pad, C), jnp.float32),
        grid=(n_pad // tn,),
        in_specs=[
            pl.BlockSpec((tn, C), row),        # q
            pl.BlockSpec((tn, S, C), cube),    # grouped key
            pl.BlockSpec((tn, S, C), cube),    # grouped value
            pl.BlockSpec((tn, S, 3), cube),    # relative xyz
            pl.BlockSpec((tn, S), row),        # mask
            pl.BlockSpec((3, C), c2),          # pe_bias W1 (f32, VPU path)
            pl.BlockSpec((1, C), c2),          # pe_bias BN scale
            pl.BlockSpec((1, C), c2),          # pe_bias BN shift (+bias)
            pl.BlockSpec((C, C), c2),          # pe_bias W2 (bf16)
            pl.BlockSpec((1, C), c2),          # pe_bias b2
            pl.BlockSpec((C, G), c2),          # weight-enc W1 (bf16)
            pl.BlockSpec((1, G), c2),          # weight-enc BN scale
            pl.BlockSpec((1, G), c2),          # weight-enc BN shift (+bias)
            pl.BlockSpec((G, G), c2),          # weight-enc W2 (f32, VPU path)
            pl.BlockSpec((1, G), c2),          # weight-enc b2
            pl.BlockSpec((G, C), c2),          # group->channel expansion matrix
            pl.BlockSpec((1, C), c2),          # norm2 scale
            pl.BlockSpec((1, C), c2),          # norm2 shift
        ],
        out_specs=pl.BlockSpec((tn, C), row),
        compiler_params=pltpu.CompilerParams(
            dimension_semantics=("parallel",),
            vmem_limit_bytes=_VMEM_LIMIT),
    )(q, key_g, val_g, pos, mask,
      blk["p1_w"], blk["p1_s"], blk["p1_t"], blk["p2_w"], blk["p2_b"],
      blk["we1_w"], blk["we1_s"], blk["we1_t"], blk["we2_w"], blk["we2_b"],
      blk["grp_e"], blk["n2_s"], blk["n2_t"])
    return out[:N]


# ----------------------------------------------------------------------------
# Plain-JAX glue: knn query + neighbourhood grouping (data-dependent gathers)
# TODO(synk): move the neighbour gather in-kernel (PrefetchScalarGridSpec +
#             manual make_async_copy row gather) to avoid materializing the
#             [N,S,C] grouped tensors in HBM.
# ----------------------------------------------------------------------------
def knn_query(coord, k):
    # single-offset batch: brute-force kNN (includes self), sorted by distance
    d2 = jnp.sum((coord[:, None, :] - coord[None, :, :]) ** 2, axis=-1)
    return jnp.argsort(d2, axis=1)[:, :k].astype(jnp.int32)


def group_neighbours(idx, feat, coord):
    # pointops.attention_grouping semantics (with_xyz=True)
    g_feat = feat[idx]                               # [N, S, C]
    g_xyz = coord[idx] - coord[:, None, :]           # [N, S, 3] relative xyz
    return g_xyz, g_feat


# ----------------------------------------------------------------------------
# Parameter init (deterministic, synthetic) — shapes follow the torch module
# ----------------------------------------------------------------------------
def _init_linear(key, cin, cout, bias=True):
    k1, k2 = jax.random.split(key)
    w = (jax.random.normal(k1, (cin, cout), jnp.float32) / math.sqrt(cin))
    b = (0.02 * jax.random.normal(k2, (cout,), jnp.float32)) if bias else None
    return w, b


def _init_bn(key, c, eps=1e-5):
    k1, k2, k3, k4 = jax.random.split(key, 4)
    gamma = 1.0 + 0.1 * jax.random.normal(k1, (c,), jnp.float32)
    beta = 0.1 * jax.random.normal(k2, (c,), jnp.float32)
    mean = 0.1 * jax.random.normal(k3, (c,), jnp.float32)
    var = 1.0 + 0.1 * jnp.abs(jax.random.normal(k4, (c,), jnp.float32))
    scale = gamma / jnp.sqrt(var + eps)
    shift = beta - mean * scale
    return scale, shift


def init_decoder_params(key, in_ch, skip_ch, embed_ch, groups, depth):
    keys = iter(jax.random.split(key, 128))
    p = {}
    # UnpoolWithSkip
    p["proj_w"], p["proj_b"] = _init_linear(next(keys), in_ch, embed_ch)
    p["proj_s"], p["proj_t"] = _init_bn(next(keys), embed_ch)
    p["ps_w"], p["ps_b"] = _init_linear(next(keys), skip_ch, embed_ch)
    p["ps_s"], p["ps_t"] = _init_bn(next(keys), embed_ch)
    # Blocks
    blocks = []
    for _ in range(depth):
        b = {}
        b["fc1_w"], _ = _init_linear(next(keys), embed_ch, embed_ch, bias=False)
        b["n1_s"], b["n1_t"] = _init_bn(next(keys), embed_ch)
        b["q_w"], b["q_b"] = _init_linear(next(keys), embed_ch, embed_ch)
        b["q_s"], b["q_t"] = _init_bn(next(keys), embed_ch)
        b["k_w"], b["k_b"] = _init_linear(next(keys), embed_ch, embed_ch)
        b["k_s"], b["k_t"] = _init_bn(next(keys), embed_ch)
        b["v_w"], b["v_b"] = _init_linear(next(keys), embed_ch, embed_ch)
        # pe_bias MLP: Linear(3,C) -> BN -> ReLU -> Linear(C,C)
        b["p1_w"], b["p1_b"] = _init_linear(next(keys), 3, embed_ch)
        b["p1_s"], b["p1_t"] = _init_bn(next(keys), embed_ch)
        b["p2_w"], b["p2_b"] = _init_linear(next(keys), embed_ch, embed_ch)
        # weight encoding: Linear(C,G) -> BN -> ReLU -> Linear(G,G)
        b["we1_w"], b["we1_b"] = _init_linear(next(keys), embed_ch, groups)
        b["we1_s"], b["we1_t"] = _init_bn(next(keys), groups)
        b["we2_w"], b["we2_b"] = _init_linear(next(keys), groups, groups)
        b["n2_s"], b["n2_t"] = _init_bn(next(keys), embed_ch)
        b["fc3_w"], _ = _init_linear(next(keys), embed_ch, embed_ch, bias=False)
        b["n3_s"], b["n3_t"] = _init_bn(next(keys), embed_ch)
        blocks.append(b)
    p["blocks"] = blocks
    return p


def fold_decoder_params(raw, embed_ch, groups):
    """Fold Linear biases into BN shifts, fuse q/k/v weights (pad to 128 lanes),
    pre-cast matmul weights to bf16, build the group->channel expansion matrix."""
    C, G = embed_ch, groups
    I = C // G

    def aff(bias, s, t):
        cout = s.shape[0]
        tt = t if bias is None else bias * s + t
        return s.reshape(1, cout), tt.reshape(1, cout)

    p = {}
    p["proj_w"] = raw["proj_w"].astype(jnp.bfloat16)
    p["proj_s"], p["proj_t"] = aff(raw["proj_b"], raw["proj_s"], raw["proj_t"])
    p["ps_w"] = raw["ps_w"].astype(jnp.bfloat16)
    p["ps_s"], p["ps_t"] = aff(raw["ps_b"], raw["ps_s"], raw["ps_t"])

    P = _round_up(3 * C, 128)   # lane-dense qkv output width
    blocks = []
    for rb in raw["blocks"]:
        b = {}
        b["fc1_w"] = rb["fc1_w"].astype(jnp.bfloat16)
        b["fc1_s"], b["fc1_t"] = aff(None, rb["n1_s"], rb["n1_t"])

        wq = jnp.concatenate([rb["q_w"], rb["k_w"], rb["v_w"]], axis=1)   # [C,3C]
        sq = jnp.concatenate([rb["q_s"], rb["k_s"], jnp.ones((C,), jnp.float32)])
        tq = jnp.concatenate([rb["q_b"] * rb["q_s"] + rb["q_t"],
                              rb["k_b"] * rb["k_s"] + rb["k_t"],
                              rb["v_b"]])
        rm = jnp.concatenate([jnp.ones((2 * C,), jnp.float32),
                              jnp.zeros((C,), jnp.float32)])   # ReLU on q,k only
        pad = P - 3 * C
        if pad:
            wq = jnp.pad(wq, ((0, 0), (0, pad)))
            sq = jnp.pad(sq, (0, pad), constant_values=1.0)
            tq = jnp.pad(tq, (0, pad))
            rm = jnp.pad(rm, (0, pad))
        b["qkv_w"] = wq.astype(jnp.bfloat16)
        b["qkv_s"] = sq.reshape(1, P)
        b["qkv_t"] = tq.reshape(1, P)
        b["qkv_rm"] = rm.reshape(1, P)

        b["p1_w"] = rb["p1_w"]                                   # f32, VPU FMAs
        b["p1_s"], b["p1_t"] = aff(rb["p1_b"], rb["p1_s"], rb["p1_t"])
        b["p2_w"] = rb["p2_w"].astype(jnp.bfloat16)
        b["p2_b"] = rb["p2_b"].reshape(1, C)

        b["we1_w"] = rb["we1_w"].astype(jnp.bfloat16)
        b["we1_s"], b["we1_t"] = aff(rb["we1_b"], rb["we1_s"], rb["we1_t"])
        b["we2_w"] = rb["we2_w"]                                 # f32, VPU FMAs
        b["we2_b"] = rb["we2_b"].reshape(1, G)

        b["n2_s"] = rb["n2_s"].reshape(1, C)
        b["n2_t"] = rb["n2_t"].reshape(1, C)

        b["fc3_w"] = rb["fc3_w"].astype(jnp.bfloat16)
        b["fc3_s"], b["fc3_t"] = aff(None, rb["n3_s"], rb["n3_t"])

        # E[g, c] = 1 iff channel c belongs to group g (c // I == g)
        b["grp_e"] = jnp.repeat(jnp.eye(G, dtype=jnp.float32), I, axis=1)
        blocks.append(b)
    p["blocks"] = blocks
    return p


# ----------------------------------------------------------------------------
# Decoder forward
# ----------------------------------------------------------------------------
def decoder_forward(params, points, skip_points, cluster, neighbours):
    coord, feat, offset = points
    skip_coord, skip_feat, skip_offset = skip_points

    # --- UnpoolWithSkip (backend='map') ---
    f = fused_linear(feat, params["proj_w"], params["proj_s"], params["proj_t"],
                     relu=True)
    f = f[cluster]                                   # map un-pooling (gather, glue)
    fs = fused_linear(skip_feat, params["ps_w"], params["ps_s"], params["ps_t"],
                      relu=True)
    feat = f + fs
    coord, offset = skip_coord, skip_offset

    # --- BlockSequence ---
    ref_idx = knn_query(coord, neighbours)                      # [N, S]
    mask = jnp.sign(ref_idx + 1).astype(jnp.float32)            # [N, S] (all ones)
    N, C = feat.shape

    for blk in params["blocks"]:
        identity = feat

        # fc1 -> norm1 -> ReLU -> fused q/k/v projection (single kernel)
        qkv = fused_fc1_qkv(feat, blk["fc1_w"], blk["fc1_s"], blk["fc1_t"],
                            blk["qkv_w"], blk["qkv_s"], blk["qkv_t"], blk["qkv_rm"])
        q = qkv[:, :C]
        k = qkv[:, C:2 * C]
        v = qkv[:, 2 * C:3 * C]

        # neighbourhood grouping (data-dependent gather, plain-JAX glue)
        pos, key_g = group_neighbours(ref_idx, k, coord)        # [N,S,3], [N,S,C]
        val_g = v[ref_idx]                                      # [N,S,C]

        # GVA (pe_bias MLP + attention + norm2 + ReLU all in-kernel)
        x = gva_attention(q, key_g, val_g, pos, mask, blk)      # [N, C]

        # fc3 -> norm3 -> +identity -> ReLU (single kernel)
        feat = fused_linear(x, blk["fc3_w"], blk["fc3_s"], blk["fc3_t"],
                            residual=identity, relu=True)

    return [coord, feat, offset]


# ----------------------------------------------------------------------------
if __name__ == "__main__":
    # sizes
    IN_CH, SKIP_CH, EMBED_CH, GROUPS, DEPTH, NEIGHBOURS = 32, 16, 32, 4, 2, 8
    N_COARSE, N_SKIP = 16, 64

    key = jax.random.PRNGKey(0)
    kp, kc, kf, ksc, ksf, kcl = jax.random.split(key, 6)

    raw_params = init_decoder_params(kp, IN_CH, SKIP_CH, EMBED_CH, GROUPS, DEPTH)
    params = fold_decoder_params(raw_params, EMBED_CH, GROUPS)

    coord = jax.random.normal(kc, (N_COARSE, 3), jnp.float32)
    feat = jax.random.normal(kf, (N_COARSE, IN_CH), jnp.float32)
    offset = jnp.array([N_COARSE], jnp.int32)

    skip_coord = jax.random.normal(ksc, (N_SKIP, 3), jnp.float32)
    skip_feat = jax.random.normal(ksf, (N_SKIP, SKIP_CH), jnp.float32)
    skip_offset = jnp.array([N_SKIP], jnp.int32)

    cluster = jax.random.randint(kcl, (N_SKIP,), 0, N_COARSE, jnp.int32)

    fwd = jax.jit(decoder_forward, static_argnums=(4,))
    out_coord, out_feat, out_offset = fwd(
        params,
        (coord, feat, offset),
        (skip_coord, skip_feat, skip_offset),
        cluster,
        NEIGHBOURS,
    )
    jax.block_until_ready(out_feat)

    assert out_feat.shape == (N_SKIP, EMBED_CH)
    assert bool(jnp.all(jnp.isfinite(out_feat)))
    print("KERNEL_OK")
</pallas_src>

<mosaic_0001>
module attributes {stable_mosaic.version = 11 : i64} {
  func.func @_linear_kernel(%arg0: i32, %arg1: memref<16x32xf32, #tpu.memory_space<vmem>>, %arg2: memref<32x32xbf16, #tpu.memory_space<vmem>>, %arg3: memref<1x32xf32, #tpu.memory_space<vmem>>, %arg4: memref<1x32xf32, #tpu.memory_space<vmem>>, %arg5: memref<16x32xf32, #tpu.memory_space<vmem>>) attributes {dimension_semantics = [#tpu.dimension_semantics<parallel>], iteration_bounds = array<i64: 1>, scalar_prefetch = 0 : i64, scratch_operands = 0 : i64, tpu.core_type = #tpu.core_type<tc>, window_params = [{transform_indices = @transform_0, window_bounds = array<i64: 16, 32>}, {pipeline_mode = #tpu.pipeline_mode<synchronous>, transform_indices = @transform_1, window_bounds = array<i64: 32, 32>}, {pipeline_mode = #tpu.pipeline_mode<synchronous>, transform_indices = @transform_2, window_bounds = array<i64: 1, 32>}, {pipeline_mode = #tpu.pipeline_mode<synchronous>, transform_indices = @transform_3, window_bounds = array<i64: 1, 32>}, {transform_indices = @transform_4, window_bounds = array<i64: 16, 32>}]} {
    %c0 = arith.constant 0 : index
    %c0_0 = arith.constant 0 : index
    %0 = vector.load %arg1[%c0, %c0_0] : memref<16x32xf32, #tpu.memory_space<vmem>>, vector<16x32xf32>
    %1 = arith.truncf %0 : vector<16x32xf32> to vector<16x32xbf16>
    %c0_1 = arith.constant 0 : index
    %c0_2 = arith.constant 0 : index
    %2 = vector.load %arg2[%c0_1, %c0_2] : memref<32x32xbf16, #tpu.memory_space<vmem>>, vector<32x32xbf16>
    %cst = arith.constant dense<0.000000e+00> : vector<16x32xf32>
    %3 = tpu.matmul %1, %2, %cst {dimension_numbers = #tpu.dot_dimension_numbers<[1], [0], [0], [1], [0, 0, 1, 1], [], []>} : vector<16x32xbf16>, vector<32x32xbf16>, vector<16x32xf32> -> vector<16x32xf32>
    %c0_3 = arith.constant 0 : index
    %c0_4 = arith.constant 0 : index
    %4 = vector.load %arg3[%c0_3, %c0_4] : memref<1x32xf32, #tpu.memory_space<vmem>>, vector<1x32xf32>
    %5 = vector.broadcast %4 : vector<1x32xf32> to vector<16x32xf32>
    %6 = arith.mulf %3, %5 : vector<16x32xf32>
    %c0_5 = arith.constant 0 : index
    %c0_6 = arith.constant 0 : index
    %7 = vector.load %arg4[%c0_5, %c0_6] : memref<1x32xf32, #tpu.memory_space<vmem>>, vector<1x32xf32>
    %8 = vector.broadcast %7 : vector<1x32xf32> to vector<16x32xf32>
    %9 = arith.addf %6, %8 : vector<16x32xf32>
    %cst_7 = arith.constant 0.000000e+00 : f32
    %10 = vector.broadcast %cst_7 : f32 to vector<16x32xf32>
    %11 = arith.maximumf %9, %10 : vector<16x32xf32>
    %c0_8 = arith.constant 0 : index
    %c0_9 = arith.constant 0 : index
    %12 = vector.load %arg5[%c0_8, %c0_9] : memref<16x32xf32, #tpu.memory_space<vmem>>, vector<16x32xf32>
    tpu.vector_store %arg5[%c0_8, %c0_9], %11 {strides = array<i32>} : memref<16x32xf32, #tpu.memory_space<vmem>>, vector<16x32xf32>,
    return
  }
  func.func @transform_0(%arg0: i32) -> (i32, i32) {
    %c0_i32 = arith.constant 0 : i32
    %c0_i32_0 = arith.constant 0 : i32
    return %arg0, %c0_i32 : i32, i32
  }
  func.func @transform_1(%arg0: i32) -> (i32, i32) {
    %c0_i32 = arith.constant 0 : i32
    %c0_i32_0 = arith.constant 0 : i32
    %c0_i32_1 = arith.constant 0 : i32
    return %c0_i32, %c0_i32_0 : i32, i32
  }
  func.func @transform_2(%arg0: i32) -> (i32, i32) {
    %c0_i32 = arith.constant 0 : i32
    %c0_i32_0 = arith.constant 0 : i32
    %c0_i32_1 = arith.constant 0 : i32
    return %c0_i32, %c0_i32_0 : i32, i32
  }
  func.func @transform_3(%arg0: i32) -> (i32, i32) {
    %c0_i32 = arith.constant 0 : i32
    %c0_i32_0 = arith.constant 0 : i32
    %c0_i32_1 = arith.constant 0 : i32
    return %c0_i32, %c0_i32_0 : i32, i32
  }
  func.func @transform_4(%arg0: i32) -> (i32, i32) {
    %c0_i32 = arith.constant 0 : i32
    %c0_i32_0 = arith.constant 0 : i32
    return %arg0, %c0_i32 : i32, i32
  }
}

module attributes {stable_mosaic.version = 11 : i64} {
  func.func @_linear_kernel(%arg0: i32, %arg1: memref<64x16xf32, #tpu.memory_space<vmem>>, %arg2: memref<16x32xbf16, #tpu.memory_space<vmem>>, %arg3: memref<1x32xf32, #tpu.memory_space<vmem>>, %arg4: memref<1x32xf32, #tpu.memory_space<vmem>>, %arg5: memref<64x32xf32, #tpu.memory_space<vmem>>) attributes {dimension_semantics = [#tpu.dimension_semantics<parallel>], iteration_bounds = array<i64: 1>, scalar_prefetch = 0 : i64, scratch_operands = 0 : i64, tpu.core_type = #tpu.core_type<tc>, window_params = [{transform_indices = @transform_0, window_bounds = array<i64: 64, 16>}, {pipeline_mode = #tpu.pipeline_mode<synchronous>, transform_indices = @transform_1, window_bounds = array<i64: 16, 32>}, {pipeline_mode = #tpu.pipeline_mode<synchronous>, transform_indices = @transform_2, window_bounds = array<i64: 1, 32>}, {pipeline_mode = #tpu.pipeline_mode<synchronous>, transform_indices = @transform_3, window_bounds = array<i64: 1, 32>}, {transform_indices = @transform_4, window_bounds = array<i64: 64, 32>}]} {
    %c0 = arith.constant 0 : index
    %c0_0 = arith.constant 0 : index
    %0 = vector.load %arg1[%c0, %c0_0] : memref<64x16xf32, #tpu.memory_space<vmem>>, vector<64x16xf32>
    %1 = arith.truncf %0 : vector<64x16xf32> to vector<64x16xbf16>
    %c0_1 = arith.constant 0 : index
    %c0_2 = arith.constant 0 : index
    %2 = vector.load %arg2[%c0_1, %c0_2] : memref<16x32xbf16, #tpu.memory_space<vmem>>, vector<16x32xbf16>
    %cst = arith.constant dense<0.000000e+00> : vector<64x32xf32>
    %3 = tpu.matmul %1, %2, %cst {dimension_numbers = #tpu.dot_dimension_numbers<[1], [0], [0], [1], [0, 0, 1, 1], [], []>} : vector<64x16xbf16>, vector<16x32xbf16>, vector<64x32xf32> -> vector<64x32xf32>
    %c0_3 = arith.constant 0 : index
    %c0_4 = arith.constant 0 : index
    %4 = vector.load %arg3[%c0_3, %c0_4] : memref<1x32xf32, #tpu.memory_space<vmem>>, vector<1x32xf32>
    %5 = vector.broadcast %4 : vector<1x32xf32> to vector<64x32xf32>
    %6 = arith.mulf %3, %5 : vector<64x32xf32>
    %c0_5 = arith.constant 0 : index
    %c0_6 = arith.constant 0 : index
    %7 = vector.load %arg4[%c0_5, %c0_6] : memref<1x32xf32, #tpu.memory_space<vmem>>, vector<1x32xf32>
    %8 = vector.broadcast %7 : vector<1x32xf32> to vector<64x32xf32>
    %9 = arith.addf %6, %8 : vector<64x32xf32>
    %cst_7 = arith.constant 0.000000e+00 : f32
    %10 = vector.broadcast %cst_7 : f32 to vector<64x32xf32>
    %11 = arith.maximumf %9, %10 : vector<64x32xf32>
    %c0_8 = arith.constant 0 : index
    %c0_9 = arith.constant 0 : index
    %12 = vector.load %arg5[%c0_8, %c0_9] : memref<64x32xf32, #tpu.memory_space<vmem>>, vector<64x32xf32>
    tpu.vector_store %arg5[%c0_8, %c0_9], %11 {strides = array<i32>} : memref<64x32xf32, #tpu.memory_space<vmem>>, vector<64x32xf32>,
    return
  }
  func.func @transform_0(%arg0: i32) -> (i32, i32) {
    %c0_i32 = arith.constant 0 : i32
    %c0_i32_0 = arith.constant 0 : i32
    return %arg0, %c0_i32 : i32, i32
  }
  func.func @transform_1(%arg0: i32) -> (i32, i32) {
    %c0_i32 = arith.constant 0 : i32
    %c0_i32_0 = arith.constant 0 : i32
    %c0_i32_1 = arith.constant 0 : i32
    return %c0_i32, %c0_i32_0 : i32, i32
  }
  func.func @transform_2(%arg0: i32) -> (i32, i32) {
    %c0_i32 = arith.constant 0 : i32
    %c0_i32_0 = arith.constant 0 : i32
    %c0_i32_1 = arith.constant 0 : i32
    return %c0_i32, %c0_i32_0 : i32, i32
  }
  func.func @transform_3(%arg0: i32) -> (i32, i32) {
    %c0_i32 = arith.constant 0 : i32
    %c0_i32_0 = arith.constant 0 : i32
    %c0_i32_1 = arith.constant 0 : i32
    return %c0_i32, %c0_i32_0 : i32, i32
  }
  func.func @transform_4(%arg0: i32) -> (i32, i32) {
    %c0_i32 = arith.constant 0 : i32
    %c0_i32_0 = arith.constant 0 : i32
    return %arg0, %c0_i32 : i32, i32
  }
}

module attributes {stable_mosaic.version = 11 : i64} {
  func.func @_fc1_qkv_kernel(%arg0: i32, %arg1: memref<64x32xf32, #tpu.memory_space<vmem>>, %arg2: memref<32x32xbf16, #tpu.memory_space<vmem>>, %arg3: memref<1x32xf32, #tpu.memory_space<vmem>>, %arg4: memref<1x32xf32, #tpu.memory_space<vmem>>, %arg5: memref<32x128xbf16, #tpu.memory_space<vmem>>, %arg6: memref<1x128xf32, #tpu.memory_space<vmem>>, %arg7: memref<1x128xf32, #tpu.memory_space<vmem>>, %arg8: memref<1x128xf32, #tpu.memory_space<vmem>>, %arg9: memref<64x128xf32, #tpu.memory_space<vmem>>) attributes {dimension_semantics = [#tpu.dimension_semantics<parallel>], iteration_bounds = array<i64: 1>, scalar_prefetch = 0 : i64, scratch_operands = 0 : i64, tpu.core_type = #tpu.core_type<tc>, window_params = [{transform_indices = @transform_0, window_bounds = array<i64: 64, 32>}, {pipeline_mode = #tpu.pipeline_mode<synchronous>, transform_indices = @transform_1, window_bounds = array<i64: 32, 32>}, {pipeline_mode = #tpu.pipeline_mode<synchronous>, transform_indices = @transform_2, window_bounds = array<i64: 1, 32>}, {pipeline_mode = #tpu.pipeline_mode<synchronous>, transform_indices = @transform_3, window_bounds = array<i64: 1, 32>}, {pipeline_mode = #tpu.pipeline_mode<synchronous>, transform_indices = @transform_4, window_bounds = array<i64: 32, 128>}, {pipeline_mode = #tpu.pipeline_mode<synchronous>, transform_indices = @transform_5, window_bounds = array<i64: 1, 128>}, {pipeline_mode = #tpu.pipeline_mode<synchronous>, transform_indices = @transform_6, window_bounds = array<i64: 1, 128>}, {pipeline_mode = #tpu.pipeline_mode<synchronous>, transform_indices = @transform_7, window_bounds = array<i64: 1, 128>}, {transform_indices = @transform_8, window_bounds = array<i64: 64, 128>}]} {
    %c0 = arith.constant 0 : index
    %c0_0 = arith.constant 0 : index
    %0 = vector.load %arg1[%c0, %c0_0] : memref<64x32xf32, #tpu.memory_space<vmem>>, vector<64x32xf32>
    %1 = arith.truncf %0 : vector<64x32xf32> to vector<64x32xbf16>
    %c0_1 = arith.constant 0 : index
    %c0_2 = arith.constant 0 : index
    %2 = vector.load %arg2[%c0_1, %c0_2] : memref<32x32xbf16, #tpu.memory_space<vmem>>, vector<32x32xbf16>
    %cst = arith.constant dense<0.000000e+00> : vector<64x32xf32>
    %3 = tpu.matmul %1, %2, %cst {dimension_numbers = #tpu.dot_dimension_numbers<[1], [0], [0], [1], [0, 0, 1, 1], [], []>} : vector<64x32xbf16>, vector<32x32xbf16>, vector<64x32xf32> -> vector<64x32xf32>
    %c0_3 = arith.constant 0 : index
    %c0_4 = arith.constant 0 : index
    %4 = vector.load %arg3[%c0_3, %c0_4] : memref<1x32xf32, #tpu.memory_space<vmem>>, vector<1x32xf32>
    %5 = vector.broadcast %4 : vector<1x32xf32> to vector<64x32xf32>
    %6 = arith.mulf %3, %5 : vector<64x32xf32>
    %c0_5 = arith.constant 0 : index
    %c0_6 = arith.constant 0 : index
    %7 = vector.load %arg4[%c0_5, %c0_6] : memref<1x32xf32, #tpu.memory_space<vmem>>, vector<1x32xf32>
    %8 = vector.broadcast %7 : vector<1x32xf32> to vector<64x32xf32>
    %9 = arith.addf %6, %8 : vector<64x32xf32>
    %cst_7 = arith.constant 0.000000e+00 : f32
    %10 = vector.broadcast %cst_7 : f32 to vector<64x32xf32>
    %11 = arith.maximumf %9, %10 : vector<64x32xf32>
    %12 = arith.truncf %11 : vector<64x32xf32> to vector<64x32xbf16>
    %c0_8 = arith.constant 0 : index
    %c0_9 = arith.constant 0 : index
    %13 = vector.load %arg5[%c0_8, %c0_9] : memref<32x128xbf16, #tpu.memory_space<vmem>>, vector<32x128xbf16>
    %cst_10 = arith.constant dense<0.000000e+00> : vector<64x128xf32>
    %14 = tpu.matmul %12, %13, %cst_10 {dimension_numbers = #tpu.dot_dimension_numbers<[1], [0], [0], [1], [0, 0, 1, 1], [], []>} : vector<64x32xbf16>, vector<32x128xbf16>, vector<64x128xf32> -> vector<64x128xf32>
    %c0_11 = arith.constant 0 : index
    %c0_12 = arith.constant 0 : index
    %15 = vector.load %arg6[%c0_11, %c0_12] : memref<1x128xf32, #tpu.memory_space<vmem>>, vector<1x128xf32>
    %16 = vector.broadcast %15 : vector<1x128xf32> to vector<64x128xf32>
    %17 = arith.mulf %14, %16 : vector<64x128xf32>
    %c0_13 = arith.constant 0 : index
    %c0_14 = arith.constant 0 : index
    %18 = vector.load %arg7[%c0_13, %c0_14] : memref<1x128xf32, #tpu.memory_space<vmem>>, vector<1x128xf32>
    %19 = vector.broadcast %18 : vector<1x128xf32> to vector<64x128xf32>
    %20 = arith.addf %17, %19 : vector<64x128xf32>
    %c0_15 = arith.constant 0 : index
    %c0_16 = arith.constant 0 : index
    %21 = vector.load %arg8[%c0_15, %c0_16] : memref<1x128xf32, #tpu.memory_space<vmem>>, vector<1x128xf32>
    %cst_17 = arith.constant 0.000000e+00 : f32
    %22 = vector.broadcast %cst_17 : f32 to vector<64x128xf32>
    %23 = arith.maximumf %20, %22 : vector<64x128xf32>
    %24 = vector.broadcast %21 : vector<1x128xf32> to vector<64x128xf32>
    %25 = arith.mulf %24, %23 : vector<64x128xf32>
    %cst_18 = arith.constant 1.000000e+00 : f32
    %26 = vector.broadcast %cst_18 : f32 to vector<1x128xf32>
    %27 = arith.subf %26, %21 : vector<1x128xf32>
    %28 = vector.broadcast %27 : vector<1x128xf32> to vector<64x128xf32>
    %29 = arith.mulf %28, %20 : vector<64x128xf32>
    %30 = arith.addf %25, %29 : vector<64x128xf32>
    %c0_19 = arith.constant 0 : index
    %c0_20 = arith.constant 0 : index
    %31 = vector.load %arg9[%c0_19, %c0_20] : memref<64x128xf32, #tpu.memory_space<vmem>>, vector<64x128xf32>
    tpu.vector_store %arg9[%c0_19, %c0_20], %30 {strides = array<i32>} : memref<64x128xf32, #tpu.memory_space<vmem>>, vector<64x128xf32>,
    return
  }
  func.func @transform_0(%arg0: i32) -> (i32, i32) {
    %c0_i32 = arith.constant 0 : i32
    %c0_i32_0 = arith.constant 0 : i32
    return %arg0, %c0_i32 : i32, i32
  }
  func.func @transform_1(%arg0: i32) -> (i32, i32) {
    %c0_i32 = arith.constant 0 : i32
    %c0_i32_0 = arith.constant 0 : i32
    %c0_i32_1 = arith.constant 0 : i32
    return %c0_i32, %c0_i32_0 : i32, i32
  }
  func.func @transform_2(%arg0: i32) -> (i32, i32) {
    %c0_i32 = arith.constant 0 : i32
    %c0_i32_0 = arith.constant 0 : i32
    %c0_i32_1 = arith.constant 0 : i32
    return %c0_i32, %c0_i32_0 : i32, i32
  }
  func.func @transform_3(%arg0: i32) -> (i32, i32) {
    %c0_i32 = arith.constant 0 : i32
    %c0_i32_0 = arith.constant 0 : i32
    %c0_i32_1 = arith.constant 0 : i32
    return %c0_i32, %c0_i32_0 : i32, i32
  }
  func.func @transform_4(%arg0: i32) -> (i32, i32) {
    %c0_i32 = arith.constant 0 : i32
    %c0_i32_0 = arith.constant 0 : i32
    %c0_i32_1 = arith.constant 0 : i32
    return %c0_i32, %c0_i32_0 : i32, i32
  }
  func.func @transform_5(%arg0: i32) -> (i32, i32) {
    %c0_i32 = arith.constant 0 : i32
    %c0_i32_0 = arith.constant 0 : i32
    %c0_i32_1 = arith.constant 0 : i32
    return %c0_i32, %c0_i32_0 : i32, i32
  }
  func.func @transform_6(%arg0: i32) -> (i32, i32) {
    %c0_i32 = arith.constant 0 : i32
    %c0_i32_0 = arith.constant 0 : i32
    %c0_i32_1 = arith.constant 0 : i32
    return %c0_i32, %c0_i32_0 : i32, i32
  }
  func.func @transform_7(%arg0: i32) -> (i32, i32) {
    %c0_i32 = arith.constant 0 : i32
    %c0_i32_0 = arith.constant 0 : i32
    %c0_i32_1 = arith.constant 0 : i32
    return %c0_i32, %c0_i32_0 : i32, i32
  }
  func.func @transform_8(%arg0: i32) -> (i32, i32) {
    %c0_i32 = arith.constant 0 : i32
    %c0_i32_0 = arith.constant 0 : i32
    return %arg0, %c0_i32 : i32, i32
  }
}

module attributes {stable_mosaic.version = 11 : i64} {
  func.func @_gva_kernel(%arg0: i32, %arg1: memref<64x32xf32, #tpu.memory_space<vmem>>, %arg2: memref<64x8x32xf32, #tpu.memory_space<vmem>>, %arg3: memref<64x8x32xf32, #tpu.memory_space<vmem>>, %arg4: memref<64x8x3xf32, #tpu.memory_space<vmem>>, %arg5: memref<64x8xf32, #tpu.memory_space<vmem>>, %arg6: memref<3x32xf32, #tpu.memory_space<vmem>>, %arg7: memref<1x32xf32, #tpu.memory_space<vmem>>, %arg8: memref<1x32xf32, #tpu.memory_space<vmem>>, %arg9: memref<32x32xbf16, #tpu.memory_space<vmem>>, %arg10: memref<1x32xf32, #tpu.memory_space<vmem>>, %arg11: memref<32x4xbf16, #tpu.memory_space<vmem>>, %arg12: memref<1x4xf32, #tpu.memory_space<vmem>>, %arg13: memref<1x4xf32, #tpu.memory_space<vmem>>, %arg14: memref<4x4xf32, #tpu.memory_space<vmem>>, %arg15: memref<1x4xf32, #tpu.memory_space<vmem>>, %arg16: memref<4x32xf32, #tpu.memory_space<vmem>>, %arg17: memref<1x32xf32, #tpu.memory_space<vmem>>, %arg18: memref<1x32xf32, #tpu.memory_space<vmem>>, %arg19: memref<64x32xf32, #tpu.memory_space<vmem>>) attributes {dimension_semantics = [#tpu.dimension_semantics<parallel>], iteration_bounds = array<i64: 1>, scalar_prefetch = 0 : i64, scratch_operands = 0 : i64, tpu.core_type = #tpu.core_type<tc>, window_params = [{transform_indices = @transform_0, window_bounds = array<i64: 64, 32>}, {transform_indices = @transform_1, window_bounds = array<i64: 64, 8, 32>}, {transform_indices = @transform_2, window_bounds = array<i64: 64, 8, 32>}, {transform_indices = @transform_3, window_bounds = array<i64: 64, 8, 3>}, {transform_indices = @transform_4, window_bounds = array<i64: 64, 8>}, {pipeline_mode = #tpu.pipeline_mode<synchronous>, transform_indices = @transform_5, window_bounds = array<i64: 3, 32>}, {pipeline_mode = #tpu.pipeline_mode<synchronous>, transform_indices = @transform_6, window_bounds = array<i64: 1, 32>}, {pipeline_mode = #tpu.pipeline_mode<synchronous>, transform_indices = @transform_7, window_bounds = array<i64: 1, 32>}, {pipeline_mode = #tpu.pipeline_mode<synchronous>, transform_indices = @transform_8, window_bounds = array<i64: 32, 32>}, {pipeline_mode = #tpu.pipeline_mode<synchronous>, transform_indices = @transform_9, window_bounds = array<i64: 1, 32>}, {pipeline_mode = #tpu.pipeline_mode<synchronous>, transform_indices = @transform_10, window_bounds = array<i64: 32, 4>}, {pipeline_mode = #tpu.pipeline_mode<synchronous>, transform_indices = @transform_11, window_bounds = array<i64: 1, 4>}, {pipeline_mode = #tpu.pipeline_mode<synchronous>, transform_indices = @transform_12, window_bounds = array<i64: 1, 4>}, {pipeline_mode = #tpu.pipeline_mode<synchronous>, transform_indices = @transform_13, window_bounds = array<i64: 4, 4>}, {pipeline_mode = #tpu.pipeline_mode<synchronous>, transform_indices = @transform_14, window_bounds = array<i64: 1, 4>}, {pipeline_mode = #tpu.pipeline_mode<synchronous>, transform_indices = @transform_15, window_bounds = array<i64: 4, 32>}, {pipeline_mode = #tpu.pipeline_mode<synchronous>, transform_indices = @transform_16, window_bounds = array<i64: 1, 32>}, {pipeline_mode = #tpu.pipeline_mode<synchronous>, transform_indices = @transform_17, window_bounds = array<i64: 1, 32>}, {transform_indices = @transform_18, window_bounds = array<i64: 64, 32>}]} {
    %c0 = arith.constant 0 : index
    %c0_0 = arith.constant 0 : index
    %c0_1 = arith.constant 0 : index
    %0 = vector.load %arg4[%c0, %c0_0, %c0_1] : memref<64x8x3xf32, #tpu.memory_space<vmem>>, vector<64x8x3xf32>
    %1 = vector.extract_strided_slice %0 {offsets = [0, 0, 0], sizes = [64, 8, 1], strides = [1, 1, 1]} : vector<64x8x3xf32> to vector<64x8x1xf32>
    %c0_2 = arith.constant 0 : index
    %c0_3 = arith.constant 0 : index
    %2 = vector.load %arg6[%c0_2, %c0_3] : memref<3x32xf32, #tpu.memory_space<vmem>>, vector<1x32xf32>
    %3 = vector.shape_cast %2 : vector<1x32xf32> to vector<1x1x32xf32>
    %4 = vector.broadcast %1 : vector<64x8x1xf32> to vector<64x8x32xf32>
    %5 = vector.broadcast %3 : vector<1x1x32xf32> to vector<64x8x32xf32>
    %6 = arith.mulf %4, %5 : vector<64x8x32xf32>
    %7 = vector.extract_strided_slice %0 {offsets = [0, 0, 1], sizes = [64, 8, 1], strides = [1, 1, 1]} : vector<64x8x3xf32> to vector<64x8x1xf32>
    %c1 = arith.constant 1 : index
    %c0_4 = arith.constant 0 : index
    %8 = vector.load %arg6[%c1, %c0_4] : memref<3x32xf32, #tpu.memory_space<vmem>>, vector<1x32xf32>
    %9 = vector.shape_cast %8 : vector<1x32xf32> to vector<1x1x32xf32>
    %10 = vector.broadcast %7 : vector<64x8x1xf32> to vector<64x8x32xf32>
    %11 = vector.broadcast %9 : vector<1x1x32xf32> to vector<64x8x32xf32>
    %12 = arith.mulf %10, %11 : vector<64x8x32xf32>
    %13 = arith.addf %6, %12 : vector<64x8x32xf32>
    %14 = vector.extract_strided_slice %0 {offsets = [0, 0, 2], sizes = [64, 8, 1], strides = [1, 1, 1]} : vector<64x8x3xf32> to vector<64x8x1xf32>
    %c2 = arith.constant 2 : index
    %c0_5 = arith.constant 0 : index
    %15 = vector.load %arg6[%c2, %c0_5] : memref<3x32xf32, #tpu.memory_space<vmem>>, vector<1x32xf32>
    %16 = vector.shape_cast %15 : vector<1x32xf32> to vector<1x1x32xf32>
    %17 = vector.broadcast %14 : vector<64x8x1xf32> to vector<64x8x32xf32>
    %18 = vector.broadcast %16 : vector<1x1x32xf32> to vector<64x8x32xf32>
    %19 = arith.mulf %17, %18 : vector<64x8x32xf32>
    %20 = arith.addf %13, %19 : vector<64x8x32xf32>
    %c0_6 = arith.constant 0 : index
    %c0_7 = arith.constant 0 : index
    %21 = vector.load %arg7[%c0_6, %c0_7] : memref<1x32xf32, #tpu.memory_space<vmem>>, vector<1x32xf32>
    %22 = vector.shape_cast %21 : vector<1x32xf32> to vector<1x1x32xf32>
    %23 = vector.broadcast %22 : vector<1x1x32xf32> to vector<64x8x32xf32>
    %24 = arith.mulf %20, %23 : vector<64x8x32xf32>
    %c0_8 = arith.constant 0 : index
    %c0_9 = arith.constant 0 : index
    %25 = vector.load %arg8[%c0_8, %c0_9] : memref<1x32xf32, #tpu.memory_space<vmem>>, vector<1x32xf32>
    %26 = vector.shape_cast %25 : vector<1x32xf32> to vector<1x1x32xf32>
    %27 = vector.broadcast %26 : vector<1x1x32xf32> to vector<64x8x32xf32>
    %28 = arith.addf %24, %27 : vector<64x8x32xf32>
    %cst = arith.constant 0.000000e+00 : f32
    %29 = vector.broadcast %cst : f32 to vector<64x8x32xf32>
    %30 = arith.maximumf %28, %29 : vector<64x8x32xf32>
    %31 = vector.shape_cast %30 : vector<64x8x32xf32> to vector<512x32xf32>
    %32 = arith.truncf %31 : vector<512x32xf32> to vector<512x32xbf16>
    %c0_10 = arith.constant 0 : index
    %c0_11 = arith.constant 0 : index
    %33 = vector.load %arg9[%c0_10, %c0_11] : memref<32x32xbf16, #tpu.memory_space<vmem>>, vector<32x32xbf16>
    %cst_12 = arith.constant dense<0.000000e+00> : vector<512x32xf32>
    %34 = tpu.matmul %32, %33, %cst_12 {dimension_numbers = #tpu.dot_dimension_numbers<[1], [0], [0], [1], [0, 0, 1, 1], [], []>} : vector<512x32xbf16>, vector<32x32xbf16>, vector<512x32xf32> -> vector<512x32xf32>
    %c0_13 = arith.constant 0 : index
    %c0_14 = arith.constant 0 : index
    %35 = vector.load %arg10[%c0_13, %c0_14] : memref<1x32xf32, #tpu.memory_space<vmem>>, vector<1x32xf32>
    %36 = vector.broadcast %35 : vector<1x32xf32> to vector<512x32xf32>
    %37 = arith.addf %34, %36 : vector<512x32xf32>
    %38 = vector.shape_cast %37 : vector<512x32xf32> to vector<64x8x32xf32>
    %c0_15 = arith.constant 0 : index
    %c0_16 = arith.constant 0 : index
    %39 = vector.load %arg1[%c0_15, %c0_16] : memref<64x32xf32, #tpu.memory_space<vmem>>, vector<64x32xf32>
    %c0_17 = arith.constant 0 : index
    %c0_18 = arith.constant 0 : index
    %c0_19 = arith.constant 0 : index
    %40 = vector.load %arg2[%c0_17, %c0_18, %c0_19] : memref<64x8x32xf32, #tpu.memory_space<vmem>>, vector<64x8x32xf32>
    %41 = vector.shape_cast %39 : vector<64x32xf32> to vector<64x1x32xf32>
    %42 = vector.broadcast %41 : vector<64x1x32xf32> to vector<64x8x32xf32>
    %43 = arith.subf %40, %42 : vector<64x8x32xf32>
    %44 = arith.addf %43, %38 : vector<64x8x32xf32>
    %c0_20 = arith.constant 0 : index
    %c0_21 = arith.constant 0 : index
    %c0_22 = arith.constant 0 : index
    %45 = vector.load %arg3[%c0_20, %c0_21, %c0_22] : memref<64x8x32xf32, #tpu.memory_space<vmem>>, vector<64x8x32xf32>
    %46 = arith.addf %45, %38 : vector<64x8x32xf32>
    %47 = vector.shape_cast %44 : vector<64x8x32xf32> to vector<512x32xf32>
    %48 = arith.truncf %47 : vector<512x32xf32> to vector<512x32xbf16>
    %c0_23 = arith.constant 0 : index
    %c0_24 = arith.constant 0 : index
    %49 = vector.load %arg11[%c0_23, %c0_24] : memref<32x4xbf16, #tpu.memory_space<vmem>>, vector<32x4xbf16>
    %cst_25 = arith.constant dense<0.000000e+00> : vector<512x4xf32>
    %50 = tpu.matmul %48, %49, %cst_25 {dimension_numbers = #tpu.dot_dimension_numbers<[1], [0], [0], [1], [0, 0, 1, 1], [], []>} : vector<512x32xbf16>, vector<32x4xbf16>, vector<512x4xf32> -> vector<512x4xf32>
    %c0_26 = arith.constant 0 : index
    %c0_27 = arith.constant 0 : index
    %51 = vector.load %arg12[%c0_26, %c0_27] : memref<1x4xf32, #tpu.memory_space<vmem>>, vector<1x4xf32>
    %52 = vector.broadcast %51 : vector<1x4xf32> to vector<512x4xf32>
    %53 = arith.mulf %50, %52 : vector<512x4xf32>
    %c0_28 = arith.constant 0 : index
    %c0_29 = arith.constant 0 : index
    %54 = vector.load %arg13[%c0_28, %c0_29] : memref<1x4xf32, #tpu.memory_space<vmem>>, vector<1x4xf32>
    %55 = vector.broadcast %54 : vector<1x4xf32> to vector<512x4xf32>
    %56 = arith.addf %53, %55 : vector<512x4xf32>
    %cst_30 = arith.constant 0.000000e+00 : f32
    %57 = vector.broadcast %cst_30 : f32 to vector<512x4xf32>
    %58 = arith.maximumf %56, %57 : vector<512x4xf32>
    %c0_31 = arith.constant 0 : index
    %c0_32 = arith.constant 0 : index
    %59 = vector.load %arg15[%c0_31, %c0_32] : memref<1x4xf32, #tpu.memory_space<vmem>>, vector<1x4xf32>
    %60 = vector.extract_strided_slice %58 {offsets = [0, 0], sizes = [512, 1], strides = [1, 1]} : vector<512x4xf32> to vector<512x1xf32>
    %c0_33 = arith.constant 0 : index
    %c0_34 = arith.constant 0 : index
    %61 = vector.load %arg14[%c0_33, %c0_34] : memref<4x4xf32, #tpu.memory_space<vmem>>, vector<1x4xf32>
    %62 = vector.broadcast %60 : vector<512x1xf32> to vector<512x4xf32>
    %63 = vector.broadcast %61 : vector<1x4xf32> to vector<512x4xf32>
    %64 = arith.mulf %62, %63 : vector<512x4xf32>
    %65 = vector.broadcast %59 : vector<1x4xf32> to vector<512x4xf32>
    %66 = arith.addf %65, %64 : vector<512x4xf32>
    %67 = vector.extract_strided_slice %58 {offsets = [0, 1], sizes = [512, 1], strides = [1, 1]} : vector<512x4xf32> to vector<512x1xf32>
    %c1_35 = arith.constant 1 : index
    %c0_36 = arith.constant 0 : index
    %68 = vector.load %arg14[%c1_35, %c0_36] : memref<4x4xf32, #tpu.memory_space<vmem>>, vector<1x4xf32>
    %69 = vector.broadcast %67 : vector<512x1xf32> to vector<512x4xf32>
    %70 = vector.broadcast %68 : vector<1x4xf32> to vector<512x4xf32>
    %71 = arith.mulf %69, %70 : vector<512x4xf32>
    %72 = arith.addf %66, %71 : vector<512x4xf32>
    %73 = vector.extract_strided_slice %58 {offsets = [0, 2], sizes = [512, 1], strides = [1, 1]} : vector<512x4xf32> to vector<512x1xf32>
    %c2_37 = arith.constant 2 : index
    %c0_38 = arith.constant 0 : index
    %74 = vector.load %arg14[%c2_37, %c0_38] : memref<4x4xf32, #tpu.memory_space<vmem>>, vector<1x4xf32>
    %75 = vector.broadcast %73 : vector<512x1xf32> to vector<512x4xf32>
    %76 = vector.broadcast %74 : vector<1x4xf32> to vector<512x4xf32>
    %77 = arith.mulf %75, %76 : vector<512x4xf32>
    %78 = arith.addf %72, %77 : vector<512x4xf32>
    %79 = vector.extract_strided_slice %58 {offsets = [0, 3], sizes = [512, 1], strides = [1, 1]} : vector<512x4xf32> to vector<512x1xf32>
    %c3 = arith.constant 3 : index
    %c0_39 = arith.constant 0 : index
    %80 = vector.load %arg14[%c3, %c0_39] : memref<4x4xf32, #tpu.memory_space<vmem>>, vector<1x4xf32>
    %81 = vector.broadcast %79 : vector<512x1xf32> to vector<512x4xf32>
    %82 = vector.broadcast %80 : vector<1x4xf32> to vector<512x4xf32>
    %83 = arith.mulf %81, %82 : vector<512x4xf32>
    %84 = arith.addf %78, %83 : vector<512x4xf32>
    %85 = vector.shape_cast %84 : vector<512x4xf32> to vector<64x8x4xf32>
    %cst_40 = arith.constant dense<0xFF800000> : vector<64x4xf32>
    %86 = vector.multi_reduction <maximumf>, %85, %cst_40 [1] : vector<64x8x4xf32> to vector<64x4xf32>
    %87 = vector.shape_cast %86 : vector<64x4xf32> to vector<64x1x4xf32>
    %88 = vector.broadcast %87 : vector<64x1x4xf32> to vector<64x8x4xf32>
    %89 = arith.subf %85, %88 : vector<64x8x4xf32>
    %90 = math.exp %89 : vector<64x8x4xf32>
    %cst_41 = arith.constant dense<0.000000e+00> : vector<64x4xf32>
    %91 = vector.multi_reduction <add>, %90, %cst_41 [1] : vector<64x8x4xf32> to vector<64x4xf32>
    %92 = vector.shape_cast %91 : vector<64x4xf32> to vector<64x1x4xf32>
    %93 = vector.broadcast %92 : vector<64x1x4xf32> to vector<64x8x4xf32>
    %94 = arith.divf %90, %93 : vector<64x8x4xf32>
    %c0_42 = arith.constant 0 : index
    %c0_43 = arith.constant 0 : index
    %95 = vector.load %arg5[%c0_42, %c0_43] : memref<64x8xf32, #tpu.memory_space<vmem>>, vector<64x8xf32>
    %96 = vector.shape_cast %95 : vector<64x8xf32> to vector<64x8x1xf32>
    %97 = vector.broadcast %96 : vector<64x8x1xf32> to vector<64x8x4xf32>
    %98 = arith.mulf %94, %97 : vector<64x8x4xf32>
    %99 = vector.extract_strided_slice %98 {offsets = [0, 0, 0], sizes = [64, 8, 1], strides = [1, 1, 1]} : vector<64x8x4xf32> to vector<64x8x1xf32>
    %c0_44 = arith.constant 0 : index
    %c0_45 = arith.constant 0 : index
    %100 = vector.load %arg16[%c0_44, %c0_45] : memref<4x32xf32, #tpu.memory_space<vmem>>, vector<1x32xf32>
    %101 = vector.shape_cast %100 : vector<1x32xf32> to vector<1x1x32xf32>
    %102 = vector.broadcast %99 : vector<64x8x1xf32> to vector<64x8x32xf32>
    %103 = vector.broadcast %101 : vector<1x1x32xf32> to vector<64x8x32xf32>
    %104 = arith.mulf %102, %103 : vector<64x8x32xf32>
    %105 = vector.extract_strided_slice %98 {offsets = [0, 0, 1], sizes = [64, 8, 1], strides = [1, 1, 1]} : vector<64x8x4xf32> to vector<64x8x1xf32>
    %c1_46 = arith.constant 1 : index
    %c0_47 = arith.constant 0 : index
    %106 = vector.load %arg16[%c1_46, %c0_47] : memref<4x32xf32, #tpu.memory_space<vmem>>, vector<1x32xf32>
    %107 = vector.shape_cast %106 : vector<1x32xf32> to vector<1x1x32xf32>
    %108 = vector.broadcast %105 : vector<64x8x1xf32> to vector<64x8x32xf32>
    %109 = vector.broadcast %107 : vector<1x1x32xf32> to vector<64x8x32xf32>
    %110 = arith.mulf %108, %109 : vector<64x8x32xf32>
    %111 = arith.addf %104, %110 : vector<64x8x32xf32>
    %112 = vector.extract_strided_slice %98 {offsets = [0, 0, 2], sizes = [64, 8, 1], strides = [1, 1, 1]} : vector<64x8x4xf32> to vector<64x8x1xf32>
    %c2_48 = arith.constant 2 : index
    %c0_49 = arith.constant 0 : index
    %113 = vector.load %arg16[%c2_48, %c0_49] : memref<4x32xf32, #tpu.memory_space<vmem>>, vector<1x32xf32>
    %114 = vector.shape_cast %113 : vector<1x32xf32> to vector<1x1x32xf32>
    %115 = vector.broadcast %112 : vector<64x8x1xf32> to vector<64x8x32xf32>
    %116 = vector.broadcast %114 : vector<1x1x32xf32> to vector<64x8x32xf32>
    %117 = arith.mulf %115, %116 : vector<64x8x32xf32>
    %118 = arith.addf %111, %117 : vector<64x8x32xf32>
    %119 = vector.extract_strided_slice %98 {offsets = [0, 0, 3], sizes = [64, 8, 1], strides = [1, 1, 1]} : vector<64x8x4xf32> to vector<64x8x1xf32>
    %c3_50 = arith.constant 3 : index
    %c0_51 = arith.constant 0 : index
    %120 = vector.load %arg16[%c3_50, %c0_51] : memref<4x32xf32, #tpu.memory_space<vmem>>, vector<1x32xf32>
    %121 = vector.shape_cast %120 : vector<1x32xf32> to vector<1x1x32xf32>
    %122 = vector.broadcast %119 : vector<64x8x1xf32> to vector<64x8x32xf32>
    %123 = vector.broadcast %121 : vector<1x1x32xf32> to vector<64x8x32xf32>
    %124 = arith.mulf %122, %123 : vector<64x8x32xf32>
    %125 = arith.addf %118, %124 : vector<64x8x32xf32>
    %126 = arith.mulf %46, %125 : vector<64x8x32xf32>
    %cst_52 = arith.constant dense<0.000000e+00> : vector<64x32xf32>
    %127 = vector.multi_reduction <add>, %126, %cst_52 [1] : vector<64x8x32xf32> to vector<64x32xf32>
    %c0_53 = arith.constant 0 : index
    %c0_54 = arith.constant 0 : index
    %128 = vector.load %arg17[%c0_53, %c0_54] : memref<1x32xf32, #tpu.memory_space<vmem>>, vector<1x32xf32>
    %129 = vector.broadcast %128 : vector<1x32xf32> to vector<64x32xf32>
    %130 = arith.mulf %127, %129 : vector<64x32xf32>
    %c0_55 = arith.constant 0 : index
    %c0_56 = arith.constant 0 : index
    %131 = vector.load %arg18[%c0_55, %c0_56] : memref<1x32xf32, #tpu.memory_space<vmem>>, vector<1x32xf32>
    %132 = vector.broadcast %131 : vector<1x32xf32> to vector<64x32xf32>
    %133 = arith.addf %130, %132 : vector<64x32xf32>
    %cst_57 = arith.constant 0.000000e+00 : f32
    %134 = vector.broadcast %cst_57 : f32 to vector<64x32xf32>
    %135 = arith.maximumf %133, %134 : vector<64x32xf32>
    %c0_58 = arith.constant 0 : index
    %c0_59 = arith.constant 0 : index
    %136 = vector.load %arg19[%c0_58, %c0_59] : memref<64x32xf32, #tpu.memory_space<vmem>>, vector<64x32xf32>
    tpu.vector_store %arg19[%c0_58, %c0_59], %135 {strides = array<i32>} : memref<64x32xf32, #tpu.memory_space<vmem>>, vector<64x32xf32>,
    return
  }
  func.func @transform_0(%arg0: i32) -> (i32, i32) {
    %c0_i32 = arith.constant 0 : i32
    %c0_i32_0 = arith.constant 0 : i32
    return %arg0, %c0_i32 : i32, i32
  }
  func.func @transform_1(%arg0: i32) -> (i32, i32, i32) {
    %c0_i32 = arith.constant 0 : i32
    %c0_i32_0 = arith.constant 0 : i32
    %c0_i32_1 = arith.constant 0 : i32
    return %arg0, %c0_i32, %c0_i32_0 : i32, i32, i32
  }
  func.func @transform_2(%arg0: i32) -> (i32, i32, i32) {
    %c0_i32 = arith.constant 0 : i32
    %c0_i32_0 = arith.constant 0 : i32
    %c0_i32_1 = arith.constant 0 : i32
    return %arg0, %c0_i32, %c0_i32_0 : i32, i32, i32
  }
  func.func @transform_3(%arg0: i32) -> (i32, i32, i32) {
    %c0_i32 = arith.constant 0 : i32
    %c0_i32_0 = arith.constant 0 : i32
    %c0_i32_1 = arith.constant 0 : i32
    return %arg0, %c0_i32, %c0_i32_0 : i32, i32, i32
  }
  func.func @transform_4(%arg0: i32) -> (i32, i32) {
    %c0_i32 = arith.constant 0 : i32
    %c0_i32_0 = arith.constant 0 : i32
    return %arg0, %c0_i32 : i32, i32
  }
  func.func @transform_5(%arg0: i32) -> (i32, i32) {
    %c0_i32 = arith.constant 0 : i32
    %c0_i32_0 = arith.constant 0 : i32
    %c0_i32_1 = arith.constant 0 : i32
    return %c0_i32, %c0_i32_0 : i32, i32
  }
  func.func @transform_6(%arg0: i32) -> (i32, i32) {
    %c0_i32 = arith.constant 0 : i32
    %c0_i32_0 = arith.constant 0 : i32
    %c0_i32_1 = arith.constant 0 : i32
    return %c0_i32, %c0_i32_0 : i32, i32
  }
  func.func @transform_7(%arg0: i32) -> (i32, i32) {
    %c0_i32 = arith.constant 0 : i32
    %c0_i32_0 = arith.constant 0 : i32
    %c0_i32_1 = arith.constant 0 : i32
    return %c0_i32, %c0_i32_0 : i32, i32
  }
  func.func @transform_8(%arg0: i32) -> (i32, i32) {
    %c0_i32 = arith.constant 0 : i32
    %c0_i32_0 = arith.constant 0 : i32
    %c0_i32_1 = arith.constant 0 : i32
    return %c0_i32, %c0_i32_0 : i32, i32
  }
  func.func @transform_9(%arg0: i32) -> (i32, i32) {
    %c0_i32 = arith.constant 0 : i32
    %c0_i32_0 = arith.constant 0 : i32
    %c0_i32_1 = arith.constant 0 : i32
    return %c0_i32, %c0_i32_0 : i32, i32
  }
  func.func @transform_10(%arg0: i32) -> (i32, i32) {
    %c0_i32 = arith.constant 0 : i32
    %c0_i32_0 = arith.constant 0 : i32
    %c0_i32_1 = arith.constant 0 : i32
    return %c0_i32, %c0_i32_0 : i32, i32
  }
  func.func @transform_11(%arg0: i32) -> (i32, i32) {
    %c0_i32 = arith.constant 0 : i32
    %c0_i32_0 = arith.constant 0 : i32
    %c0_i32_1 = arith.constant 0 : i32
    return %c0_i32, %c0_i32_0 : i32, i32
  }
  func.func @transform_12(%arg0: i32) -> (i32, i32) {
    %c0_i32 = arith.constant 0 : i32
    %c0_i32_0 = arith.constant 0 : i32
    %c0_i32_1 = arith.constant 0 : i32
    return %c0_i32, %c0_i32_0 : i32, i32
  }
  func.func @transform_13(%arg0: i32) -> (i32, i32) {
    %c0_i32 = arith.constant 0 : i32
    %c0_i32_0 = arith.constant 0 : i32
    %c0_i32_1 = arith.constant 0 : i32
    return %c0_i32, %c0_i32_0 : i32, i32
  }
  func.func @transform_14(%arg0: i32) -> (i32, i32) {
    %c0_i32 = arith.constant 0 : i32
    %c0_i32_0 = arith.constant 0 : i32
    %c0_i32_1 = arith.constant 0 : i32
    return %c0_i32, %c0_i32_0 : i32, i32
  }
  func.func @transform_15(%arg0: i32) -> (i32, i32) {
    %c0_i32 = arith.constant 0 : i32
    %c0_i32_0 = arith.constant 0 : i32
    %c0_i32_1 = arith.constant 0 : i32
    return %c0_i32, %c0_i32_0 : i32, i32
  }
  func.func @transform_16(%arg0: i32) -> (i32, i32) {
    %c0_i32 = arith.constant 0 : i32
    %c0_i32_0 = arith.constant 0 : i32
    %c0_i32_1 = arith.constant 0 : i32
    return %c0_i32, %c0_i32_0 : i32, i32
  }
  func.func @transform_17(%arg0: i32) -> (i32, i32) {
    %c0_i32 = arith.constant 0 : i32
    %c0_i32_0 = arith.constant 0 : i32
    %c0_i32_1 = arith.constant 0 : i32
    return %c0_i32, %c0_i32_0 : i32, i32
  }
  func.func @transform_18(%arg0: i32) -> (i32, i32) {
    %c0_i32 = arith.constant 0 : i32
    %c0_i32_0 = arith.constant 0 : i32
    return %arg0, %c0_i32 : i32, i32
  }
}

module attributes {stable_mosaic.version = 11 : i64} {
  func.func @_linear_res_kernel(%arg0: i32, %arg1: memref<64x32xf32, #tpu.memory_space<vmem>>, %arg2: memref<32x32xbf16, #tpu.memory_space<vmem>>, %arg3: memref<1x32xf32, #tpu.memory_space<vmem>>, %arg4: memref<1x32xf32, #tpu.memory_space<vmem>>, %arg5: memref<64x32xf32, #tpu.memory_space<vmem>>, %arg6: memref<64x32xf32, #tpu.memory_space<vmem>>) attributes {dimension_semantics = [#tpu.dimension_semantics<parallel>], iteration_bounds = array<i64: 1>, scalar_prefetch = 0 : i64, scratch_operands = 0 : i64, tpu.core_type = #tpu.core_type<tc>, window_params = [{transform_indices = @transform_0, window_bounds = array<i64: 64, 32>}, {pipeline_mode = #tpu.pipeline_mode<synchronous>, transform_indices = @transform_1, window_bounds = array<i64: 32, 32>}, {pipeline_mode = #tpu.pipeline_mode<synchronous>, transform_indices = @transform_2, window_bounds = array<i64: 1, 32>}, {pipeline_mode = #tpu.pipeline_mode<synchronous>, transform_indices = @transform_3, window_bounds = array<i64: 1, 32>}, {transform_indices = @transform_4, window_bounds = array<i64: 64, 32>}, {transform_indices = @transform_5, window_bounds = array<i64: 64, 32>}]} {
    %c0 = arith.constant 0 : index
    %c0_0 = arith.constant 0 : index
    %0 = vector.load %arg1[%c0, %c0_0] : memref<64x32xf32, #tpu.memory_space<vmem>>, vector<64x32xf32>
    %1 = arith.truncf %0 : vector<64x32xf32> to vector<64x32xbf16>
    %c0_1 = arith.constant 0 : index
    %c0_2 = arith.constant 0 : index
    %2 = vector.load %arg2[%c0_1, %c0_2] : memref<32x32xbf16, #tpu.memory_space<vmem>>, vector<32x32xbf16>
    %cst = arith.constant dense<0.000000e+00> : vector<64x32xf32>
    %3 = tpu.matmul %1, %2, %cst {dimension_numbers = #tpu.dot_dimension_numbers<[1], [0], [0], [1], [0, 0, 1, 1], [], []>} : vector<64x32xbf16>, vector<32x32xbf16>, vector<64x32xf32> -> vector<64x32xf32>
    %c0_3 = arith.constant 0 : index
    %c0_4 = arith.constant 0 : index
    %4 = vector.load %arg3[%c0_3, %c0_4] : memref<1x32xf32, #tpu.memory_space<vmem>>, vector<1x32xf32>
    %5 = vector.broadcast %4 : vector<1x32xf32> to vector<64x32xf32>
    %6 = arith.mulf %3, %5 : vector<64x32xf32>
    %c0_5 = arith.constant 0 : index
    %c0_6 = arith.constant 0 : index
    %7 = vector.load %arg4[%c0_5, %c0_6] : memref<1x32xf32, #tpu.memory_space<vmem>>, vector<1x32xf32>
    %8 = vector.broadcast %7 : vector<1x32xf32> to vector<64x32xf32>
    %9 = arith.addf %6, %8 : vector<64x32xf32>
    %c0_7 = arith.constant 0 : index
    %c0_8 = arith.constant 0 : index
    %10 = vector.load %arg5[%c0_7, %c0_8] : memref<64x32xf32, #tpu.memory_space<vmem>>, vector<64x32xf32>
    %11 = arith.addf %9, %10 : vector<64x32xf32>
    %cst_9 = arith.constant 0.000000e+00 : f32
    %12 = vector.broadcast %cst_9 : f32 to vector<64x32xf32>
    %13 = arith.maximumf %11, %12 : vector<64x32xf32>
    %c0_10 = arith.constant 0 : index
    %c0_11 = arith.constant 0 : index
    %14 = vector.load %arg6[%c0_10, %c0_11] : memref<64x32xf32, #tpu.memory_space<vmem>>, vector<64x32xf32>
    tpu.vector_store %arg6[%c0_10, %c0_11], %13 {strides = array<i32>} : memref<64x32xf32, #tpu.memory_space<vmem>>, vector<64x32xf32>,
    return
  }
  func.func @transform_0(%arg0: i32) -> (i32, i32) {
    %c0_i32 = arith.constant 0 : i32
    %c0_i32_0 = arith.constant 0 : i32
    return %arg0, %c0_i32 : i32, i32
  }
  func.func @transform_1(%arg0: i32) -> (i32, i32) {
    %c0_i32 = arith.constant 0 : i32
    %c0_i32_0 = arith.constant 0 : i32
    %c0_i32_1 = arith.constant 0 : i32
    return %c0_i32, %c0_i32_0 : i32, i32
  }
  func.func @transform_2(%arg0: i32) -> (i32, i32) {
    %c0_i32 = arith.constant 0 : i32
    %c0_i32_0 = arith.constant 0 : i32
    %c0_i32_1 = arith.constant 0 : i32
    return %c0_i32, %c0_i32_0 : i32, i32
  }
  func.func @transform_3(%arg0: i32) -> (i32, i32) {
    %c0_i32 = arith.constant 0 : i32
    %c0_i32_0 = arith.constant 0 : i32
    %c0_i32_1 = arith.constant 0 : i32
    return %c0_i32, %c0_i32_0 : i32, i32
  }
  func.func @transform_4(%arg0: i32) -> (i32, i32) {
    %c0_i32 = arith.constant 0 : i32
    %c0_i32_0 = arith.constant 0 : i32
    return %arg0, %c0_i32 : i32, i32
  }
  func.func @transform_5(%arg0: i32) -> (i32, i32) {
    %c0_i32 = arith.constant 0 : i32
    %c0_i32_0 = arith.constant 0 : i32
    return %arg0, %c0_i32 : i32, i32
  }
}

</mosaic_0001>

<llo_original>
// kernel: decoder_forward.9
$region0: #{decoder_forward.9}
  #allocation0 [shape = 'u32[]', space=smem, size = 0x4, offset = 0x4, fixed_abs, tag = 'smem constant byte address 0x4 - core index']
  #allocation1 [shape = 'u32[72,128]{1,0:T(1,128)}', space=vmem, size = 0x9000, scoped, tag = 'internal scratch']
  %s0 = inlined_call_operand.vmem [shape: f32[64,16], index: 0, kind: input, shape index: {}]
  %s1 = inlined_call_operand.vmem [shape: bf16[16,32], index: 1, kind: input, shape index: {}]
  %s2 = inlined_call_operand.vmem [shape: f32[1,32], index: 2, kind: input, shape index: {}]
  %s3 = inlined_call_operand.vmem [shape: f32[1,32], index: 3, kind: input, shape index: {}]
  %s4 = inlined_call_operand.vmem [shape: f32[64,32], index: 4, kind: output, shape index: {}]
  %s5 = sld [smem:[#allocation0]]
  $region26: #{decoder_forward.9} parent=0
    _
  %s7 = ssub.s32 1, %s5
  %s8 = scalar_select 0, %s7, %s5
  // Predicated region
  $region2: #{decoder_forward.9} parent=0 // pred_check
    _
  $region3: #{decoder_forward.9} parent=0 // pred_check_branch
    %10 = sbr.rel (0) target = $region5
  $region4: #{decoder_forward.9} parent=0 // pred_region
    _
  $region5: #{decoder_forward.9} parent=0 // pred_fallthru
    _
  // Predicated region
  $region6: #{decoder_forward.9} parent=0 // pred_check
    _
  $region7: #{decoder_forward.9} parent=0 // pred_check_branch
    %12 = sbr.rel (0) target = $region9
  $region8: #{decoder_forward.9} parent=0 // pred_region
    _
  $region9: #{decoder_forward.9} parent=0 // pred_fallthru
    _
  // Predicated region
  $region10: #{decoder_forward.9} parent=0 // pred_check
    _
  $region11: #{decoder_forward.9} parent=0 // pred_check_branch
    %14 = sbr.rel (0) target = $region13
  $region12: #{decoder_forward.9} parent=0 // pred_region
    _
  $region13: #{decoder_forward.9} parent=0 // pred_fallthru
    _
  // Predicated region
  $region14: #{decoder_forward.9} parent=0 // pred_check
    _
  $region15: #{decoder_forward.9} parent=0 // pred_check_branch
    %16 = sbr.rel (0) target = $region17
  $region16: #{decoder_forward.9} parent=0 // pred_region
    _
  $region17: #{decoder_forward.9} parent=0 // pred_fallthru
    _
  %v18 = vld [vmem:[%s0] sm:$0xff]
  %v19 = vld [vmem:[%s0 + $0x8] sm:$0xff]
  %v20 = vld [vmem:[%s0 + $0x10] sm:$0xff]
  %v21 = vld [vmem:[%s0 + $0x18] sm:$0xff]
  %v22 = vld [vmem:[%s0 + $0x20] sm:$0xff]
  %v23 = vld [vmem:[%s0 + $0x28] sm:$0xff]
  %v24 = vld [vmem:[%s0 + $0x30] sm:$0xff]
  %v25 = vld [vmem:[%s0 + $0x38] sm:$0xff]
  %v26 = vpack.c.bf16 %v19, %v18
  %v27 = vpack.c.bf16 %v21, %v20
  %v28 = vpack.c.bf16 %v23, %v22
  %v29 = vpack.c.bf16 %v25, %v24
  %v30 = vld [vmem:[%s1] sm:$0xf]
  %v31 = vld [vmem:[%s1 + $0x4] sm:$0xf]
  %v34 = vunpack.c.l.b16 %v30
  %v35 = vunpack.c.l.b16 %v31
  %v36 = vpack.c.b16 %v35, %v34
  %vm38 = vcmask 130048
  %v40 = vsel %vm38, %v26, 0
  %v43 = vsel %vm38, %v27, 0
  %v46 = vsel %vm38, %v28, 0
  %v49 = vsel %vm38, %v29, 0
  %51 = vmatpush.bf16.msra.mxu0 0
  %52 = vmatpush.bf16.msra.mxu0 0
  %53 = vmatpush.bf16.msra.mxu0 0
  %54 = vmatpush.bf16.msra.mxu0 0
  %55 = vmatpush.bf16.msra.mxu0 0
  %56 = vmatpush.bf16.msra.mxu0 0
  %57 = vmatpush.bf16.msra.mxu0 0
  %58 = vmatpush.bf16.msra.mxu0 %v36
  %59 = vmatmul.bf16.gmra.mxu0 %v40
  %v60 = vpop.f32.mrf.mxu0
  %v61 = vadd.f32 0.0, %v60
  %v62 = vpop.f32.mrf.mxu0
  %v63 = vadd.f32 0.0, %v62
  %64 = vmatmul.bf16.gmra.mxu0 %v43
  %v65 = vpop.f32.mrf.mxu0
  %v66 = vadd.f32 0.0, %v65
  %v67 = vpop.f32.mrf.mxu0
  %v68 = vadd.f32 0.0, %v67
  %69 = vmatmul.bf16.gmra.mxu0 %v46
  %v70 = vpop.f32.mrf.mxu0
  %v71 = vadd.f32 0.0, %v70
  %v72 = vpop.f32.mrf.mxu0
  %v73 = vadd.f32 0.0, %v72
  %74 = vmatmul.bf16.gmra.mxu0 %v49
  %v75 = vpop.f32.mrf.mxu0
  %v76 = vadd.f32 0.0, %v75
  %v77 = vpop.f32.mrf.mxu0
  %v78 = vadd.f32 0.0, %v77
  %79 = vdwg.mxu0
  %v80 = vld [vmem:[%s2] sm:$0x1]
  %v82 = vperm.slane %v80, 0
  %v84 = vmul.f32 %v61, %v82
  %v85 = vmul.f32 %v63, %v82
  %v86 = vmul.f32 %v66, %v82
  %v87 = vmul.f32 %v68, %v82
  %v88 = vmul.f32 %v71, %v82
  %v89 = vmul.f32 %v73, %v82
  %v90 = vmul.f32 %v76, %v82
  %v91 = vmul.f32 %v78, %v82
  %v92 = vld [vmem:[%s3] sm:$0x1]
  %v94 = vperm.slane %v92, 0
  %v96 = vadd.f32 %v84, %v94
  %v97 = vadd.f32 %v85, %v94
  %v98 = vadd.f32 %v86, %v94
  %v99 = vadd.f32 %v87, %v94
  %v100 = vadd.f32 %v88, %v94
  %v101 = vadd.f32 %v89, %v94
  %v102 = vadd.f32 %v90, %v94
  %v103 = vadd.f32 %v91, %v94
  %v104 = vmax.f32 %v96, 0.0
  %v105 = vmax.f32 %v97, 0.0
  %v106 = vmax.f32 %v98, 0.0
  %v107 = vmax.f32 %v99, 0.0
  %v108 = vmax.f32 %v100, 0.0
  %v109 = vmax.f32 %v101, 0.0
  %v110 = vmax.f32 %v102, 0.0
  %v111 = vmax.f32 %v103, 0.0
  %vm112 = vcmask 261120
  %113 = vst.msk [vmem:[%s4] sm:$0xff] %vm112, %v104
  %114 = vst.msk [vmem:[%s4 + $0x8] sm:$0xff] %vm112, %v105
  %115 = vst.msk [vmem:[%s4 + $0x10] sm:$0xff] %vm112, %v106
  %116 = vst.msk [vmem:[%s4 + $0x18] sm:$0xff] %vm112, %v107
  %117 = vst.msk [vmem:[%s4 + $0x20] sm:$0xff] %vm112, %v108
  %118 = vst.msk [vmem:[%s4 + $0x28] sm:$0xff] %vm112, %v109
  %119 = vst.msk [vmem:[%s4 + $0x30] sm:$0xff] %vm112, %v110
  %120 = vst.msk [vmem:[%s4 + $0x38] sm:$0xff] %vm112, %v111
  // Predicated region
  $region18: #{decoder_forward.9} parent=0 // pred_check
    _
  $region19: #{decoder_forward.9} parent=0 // pred_check_branch
    %122 = sbr.rel (0) target = $region21
  $region20: #{decoder_forward.9} parent=0 // pred_region
    _
  $region21: #{decoder_forward.9} parent=0 // pred_fallthru
    _
  // Predicated region
  $region22: #{decoder_forward.9} parent=0 // pred_check
    _
  $region23: #{decoder_forward.9} parent=0 // pred_check_branch
    %124 = sbr.rel (0) target = $region25
  $region24: #{decoder_forward.9} parent=0 // pred_region
    _
  $region25: #{decoder_forward.9} parent=0 // pred_fallthru
    _

// kernel: decoder_forward.8
$region0: #{decoder_forward.8}
  #allocation0 [shape = 'u32[]', space=smem, size = 0x4, offset = 0x4, fixed_abs, tag = 'smem constant byte address 0x4 - core index']
  #allocation1 [shape = 'u32[72,128]{1,0:T(1,128)}', space=vmem, size = 0x9000, scoped, tag = 'internal scratch']
  %s0 = inlined_call_operand.vmem [shape: f32[16,32], index: 0, kind: input, shape index: {}]
  %s1 = inlined_call_operand.vmem [shape: bf16[32,32], index: 1, kind: input, shape index: {}]
  %s2 = inlined_call_operand.vmem [shape: f32[1,32], index: 2, kind: input, shape index: {}]
  %s3 = inlined_call_operand.vmem [shape: f32[1,32], index: 3, kind: input, shape index: {}]
  %s4 = inlined_call_operand.vmem [shape: f32[16,32], index: 4, kind: output, shape index: {}]
  %s5 = sld [smem:[#allocation0]]
  $region26: #{decoder_forward.8} parent=0
    _
  %s7 = ssub.s32 1, %s5
  %s8 = scalar_select 0, %s7, %s5
  // Predicated region
  $region2: #{decoder_forward.8} parent=0 // pred_check
    _
  $region3: #{decoder_forward.8} parent=0 // pred_check_branch
    %10 = sbr.rel (0) target = $region5
  $region4: #{decoder_forward.8} parent=0 // pred_region
    _
  $region5: #{decoder_forward.8} parent=0 // pred_fallthru
    _
  // Predicated region
  $region6: #{decoder_forward.8} parent=0 // pred_check
    _
  $region7: #{decoder_forward.8} parent=0 // pred_check_branch
    %12 = sbr.rel (0) target = $region9
  $region8: #{decoder_forward.8} parent=0 // pred_region
    _
  $region9: #{decoder_forward.8} parent=0 // pred_fallthru
    _
  // Predicated region
  $region10: #{decoder_forward.8} parent=0 // pred_check
    _
  $region11: #{decoder_forward.8} parent=0 // pred_check_branch
    %14 = sbr.rel (0) target = $region13
  $region12: #{decoder_forward.8} parent=0 // pred_region
    _
  $region13: #{decoder_forward.8} parent=0 // pred_fallthru
    _
  // Predicated region
  $region14: #{decoder_forward.8} parent=0 // pred_check
    _
  $region15: #{decoder_forward.8} parent=0 // pred_check_branch
    %16 = sbr.rel (0) target = $region17
  $region16: #{decoder_forward.8} parent=0 // pred_region
    _
  $region17: #{decoder_forward.8} parent=0 // pred_fallthru
    _
  %v18 = vld [vmem:[%s0] sm:$0xff]
  %v19 = vld [vmem:[%s0 + $0x8] sm:$0xff]
  %v20 = vpack.c.bf16 %v19, %v18
  %v21 = vld [vmem:[%s1] sm:$0xf]
  %v22 = vld [vmem:[%s1 + $0x4] sm:$0xf]
  %v23 = vld [vmem:[%s1 + $0x8] sm:$0xf]
  %v24 = vld [vmem:[%s1 + $0xc] sm:$0xf]
  %v29 = vunpack.c.l.b16 %v21
  %v30 = vunpack.c.l.b16 %v22
  %v31 = vunpack.c.l.b16 %v23
  %v32 = vunpack.c.l.b16 %v24
  %v33 = vpack.c.b16 %v30, %v29
  %v34 = vpack.c.b16 %v32, %v31
  %vm37 = vcmask 261120
  %v39 = vsel %vm37, %v20, 0
  %41 = vmatpush.bf16.msra.mxu0 0
  %42 = vmatpush.bf16.msra.mxu0 0
  %43 = vmatpush.bf16.msra.mxu0 0
  %44 = vmatpush.bf16.msra.mxu0 0
  %45 = vmatpush.bf16.msra.mxu0 0
  %46 = vmatpush.bf16.msra.mxu0 0
  %47 = vmatpush.bf16.msra.mxu0 %v34
  %48 = vmatpush.bf16.msra.mxu0 %v33
  %49 = vmatmul.bf16.gmra.mxu0 %v39
  %v50 = vpop.f32.mrf.mxu0
  %v51 = vadd.f32 0.0, %v50
  %v52 = vpop.f32.mrf.mxu0
  %v53 = vadd.f32 0.0, %v52
  %54 = vdwg.mxu0
  %v55 = vld [vmem:[%s2] sm:$0x1]
  %v57 = vperm.slane %v55, 0
  %v59 = vmul.f32 %v51, %v57
  %v60 = vmul.f32 %v53, %v57
  %v61 = vld [vmem:[%s3] sm:$0x1]
  %v63 = vperm.slane %v61, 0
  %v65 = vadd.f32 %v59, %v63
  %v66 = vadd.f32 %v60, %v63
  %v67 = vmax.f32 %v65, 0.0
  %v68 = vmax.f32 %v66, 0.0
  %69 = vst.msk [vmem:[%s4] sm:$0xff] %vm37, %v67
  %70 = vst.msk [vmem:[%s4 + $0x8] sm:$0xff] %vm37, %v68
  // Predicated region
  $region18: #{decoder_forward.8} parent=0 // pred_check
    _
  $region19: #{decoder_forward.8} parent=0 // pred_check_branch
    %72 = sbr.rel (0) target = $region21
  $region20: #{decoder_forward.8} parent=0 // pred_region
    _
  $region21: #{decoder_forward.8} parent=0 // pred_fallthru
    _
  // Predicated region
  $region22: #{decoder_forward.8} parent=0 // pred_check
    _
  $region23: #{decoder_forward.8} parent=0 // pred_check_branch
    %74 = sbr.rel (0) target = $region25
  $region24: #{decoder_forward.8} parent=0 // pred_region
    _
  $region25: #{decoder_forward.8} parent=0 // pred_fallthru
    _

// kernel: decoder_forward.10
$region0: #{decoder_forward.10}
  #allocation0 [shape = 'u32[]', space=smem, size = 0x4, offset = 0x4, fixed_abs, tag = 'smem constant byte address 0x4 - core index']
  #allocation1 [shape = 'u32[72,128]{1,0:T(1,128)}', space=vmem, size = 0x9000, scoped, tag = 'internal scratch']
  %s0 = inlined_call_operand.vmem [shape: f32[64,32], index: 0, kind: input, shape index: {}]
  %s1 = inlined_call_operand.vmem [shape: bf16[32,32], index: 1, kind: input, shape index: {}]
  %s2 = inlined_call_operand.vmem [shape: f32[1,32], index: 2, kind: input, shape index: {}]
  %s3 = inlined_call_operand.vmem [shape: f32[1,32], index: 3, kind: input, shape index: {}]
  %s4 = inlined_call_operand.vmem [shape: bf16[32,128], index: 4, kind: input, shape index: {}]
  %s5 = inlined_call_operand.vmem [shape: f32[1,128], index: 5, kind: input, shape index: {}]
  %s6 = inlined_call_operand.vmem [shape: f32[1,128], index: 6, kind: input, shape index: {}]
  %s7 = inlined_call_operand.vmem [shape: f32[1,128], index: 7, kind: input, shape index: {}]
  %s8 = inlined_call_operand.vmem [shape: f32[64,128], index: 8, kind: output, shape index: {}]
  %s9 = sld [smem:[#allocation0]]
  $region42: #{decoder_forward.10} parent=0
    _
  %s11 = ssub.s32 1, %s9
  %s12 = scalar_select 0, %s11, %s9
  // Predicated region
  $region2: #{decoder_forward.10} parent=0 // pred_check
    _
  $region3: #{decoder_forward.10} parent=0 // pred_check_branch
    %14 = sbr.rel (0) target = $region5
  $region4: #{decoder_forward.10} parent=0 // pred_region
    _
  $region5: #{decoder_forward.10} parent=0 // pred_fallthru
    _
  // Predicated region
  $region6: #{decoder_forward.10} parent=0 // pred_check
    _
  $region7: #{decoder_forward.10} parent=0 // pred_check_branch
    %16 = sbr.rel (0) target = $region9
  $region8: #{decoder_forward.10} parent=0 // pred_region
    _
  $region9: #{decoder_forward.10} parent=0 // pred_fallthru
    _
  // Predicated region
  $region10: #{decoder_forward.10} parent=0 // pred_check
    _
  $region11: #{decoder_forward.10} parent=0 // pred_check_branch
    %18 = sbr.rel (0) target = $region13
  $region12: #{decoder_forward.10} parent=0 // pred_region
    _
  $region13: #{decoder_forward.10} parent=0 // pred_fallthru
    _
  // Predicated region
  $region14: #{decoder_forward.10} parent=0 // pred_check
    _
  $region15: #{decoder_forward.10} parent=0 // pred_check_branch
    %20 = sbr.rel (0) target = $region17
  $region16: #{decoder_forward.10} parent=0 // pred_region
    _
  $region17: #{decoder_forward.10} parent=0 // pred_fallthru
    _
  // Predicated region
  $region18: #{decoder_forward.10} parent=0 // pred_check
    _
  $region19: #{decoder_forward.10} parent=0 // pred_check_branch
    %22 = sbr.rel (0) target = $region21
  $region20: #{decoder_forward.10} parent=0 // pred_region
    _
  $region21: #{decoder_forward.10} parent=0 // pred_fallthru
    _
  // Predicated region
  $region22: #{decoder_forward.10} parent=0 // pred_check
    _
  $region23: #{decoder_forward.10} parent=0 // pred_check_branch
    %24 = sbr.rel (0) target = $region25
  $region24: #{decoder_forward.10} parent=0 // pred_region
    _
  $region25: #{decoder_forward.10} parent=0 // pred_fallthru
    _
  // Predicated region
  $region26: #{decoder_forward.10} parent=0 // pred_check
    _
  $region27: #{decoder_forward.10} parent=0 // pred_check_branch
    %26 = sbr.rel (0) target = $region29
  $region28: #{decoder_forward.10} parent=0 // pred_region
    _
  $region29: #{decoder_forward.10} parent=0 // pred_fallthru
    _
  // Predicated region
  $region30: #{decoder_forward.10} parent=0 // pred_check
    _
  $region31: #{decoder_forward.10} parent=0 // pred_check_branch
    %28 = sbr.rel (0) target = $region33
  $region32: #{decoder_forward.10} parent=0 // pred_region
    _
  $region33: #{decoder_forward.10} parent=0 // pred_fallthru
    _
  %v30 = vld [vmem:[%s0] sm:$0xff]
  %v31 = vld [vmem:[%s0 + $0x8] sm:$0xff]
  %v32 = vld [vmem:[%s0 + $0x10] sm:$0xff]
  %v33 = vld [vmem:[%s0 + $0x18] sm:$0xff]
  %v34 = vld [vmem:[%s0 + $0x20] sm:$0xff]
  %v35 = vld [vmem:[%s0 + $0x28] sm:$0xff]
  %v36 = vld [vmem:[%s0 + $0x30] sm:$0xff]
  %v37 = vld [vmem:[%s0 + $0x38] sm:$0xff]
  %v38 = vpack.c.bf16 %v31, %v30
  %v39 = vpack.c.bf16 %v33, %v32
  %v40 = vpack.c.bf16 %v35, %v34
  %v41 = vpack.c.bf16 %v37, %v36
  %v42 = vld [vmem:[%s1] sm:$0xf]
  %v43 = vld [vmem:[%s1 + $0x4] sm:$0xf]
  %v44 = vld [vmem:[%s1 + $0x8] sm:$0xf]
  %v45 = vld [vmem:[%s1 + $0xc] sm:$0xf]
  %v50 = vunpack.c.l.b16 %v42
  %v51 = vunpack.c.l.b16 %v43
  %v52 = vunpack.c.l.b16 %v44
  %v53 = vunpack.c.l.b16 %v45
  %v54 = vpack.c.b16 %v51, %v50
  %v55 = vpack.c.b16 %v53, %v52
  %vm58 = vcmask 261120
  %v60 = vsel %vm58, %v38, 0
  %v63 = vsel %vm58, %v39, 0
  %v66 = vsel %vm58, %v40, 0
  %v69 = vsel %vm58, %v41, 0
  %71 = vmatpush.bf16.msra.mxu0 0
  %72 = vmatpush.bf16.msra.mxu0 0
  %73 = vmatpush.bf16.msra.mxu0 0
  %74 = vmatpush.bf16.msra.mxu0 0
  %75 = vmatpush.bf16.msra.mxu0 0
  %76 = vmatpush.bf16.msra.mxu0 0
  %77 = vmatpush.bf16.msra.mxu0 %v55
  %78 = vmatpush.bf16.msra.mxu0 %v54
  %79 = vmatmul.bf16.gmra.mxu0 %v60
  %v80 = vpop.f32.mrf.mxu0
  %v81 = vadd.f32 0.0, %v80
  %v82 = vpop.f32.mrf.mxu0
  %v83 = vadd.f32 0.0, %v82
  %84 = vmatmul.bf16.gmra.mxu0 %v63
  %v85 = vpop.f32.mrf.mxu0
  %v86 = vadd.f32 0.0, %v85
  %v87 = vpop.f32.mrf.mxu0
  %v88 = vadd.f32 0.0, %v87
  %89 = vmatmul.bf16.gmra.mxu0 %v66
  %v90 = vpop.f32.mrf.mxu0
  %v91 = vadd.f32 0.0, %v90
  %v92 = vpop.f32.mrf.mxu0
  %v93 = vadd.f32 0.0, %v92
  %94 = vmatmul.bf16.gmra.mxu0 %v69
  %v95 = vpop.f32.mrf.mxu0
  %v96 = vadd.f32 0.0, %v95
  %v97 = vpop.f32.mrf.mxu0
  %v98 = vadd.f32 0.0, %v97
  %99 = vdwg.mxu0
  %v100 = vld [vmem:[%s2] sm:$0x1]
  %v102 = vperm.slane %v100, 0
  %v104 = vmul.f32 %v81, %v102
  %v105 = vmul.f32 %v83, %v102
  %v106 = vmul.f32 %v86, %v102
  %v107 = vmul.f32 %v88, %v102
  %v108 = vmul.f32 %v91, %v102
  %v109 = vmul.f32 %v93, %v102
  %v110 = vmul.f32 %v96, %v102
  %v111 = vmul.f32 %v98, %v102
  %v112 = vld [vmem:[%s3] sm:$0x1]
  %v114 = vperm.slane %v112, 0
  %v116 = vadd.f32 %v104, %v114
  %v117 = vadd.f32 %v105, %v114
  %v118 = vadd.f32 %v106, %v114
  %v119 = vadd.f32 %v107, %v114
  %v120 = vadd.f32 %v108, %v114
  %v121 = vadd.f32 %v109, %v114
  %v122 = vadd.f32 %v110, %v114
  %v123 = vadd.f32 %v111, %v114
  %v124 = vmax.f32 %v116, 0.0
  %v125 = vmax.f32 %v117, 0.0
  %v126 = vmax.f32 %v118, 0.0
  %v127 = vmax.f32 %v119, 0.0
  %v128 = vmax.f32 %v120, 0.0
  %v129 = vmax.f32 %v121, 0.0
  %v130 = vmax.f32 %v122, 0.0
  %v131 = vmax.f32 %v123, 0.0
  %v132 = vpack.c.bf16 %v125, %v124
  %v133 = vpack.c.bf16 %v127, %v126
  %v134 = vpack.c.bf16 %v129, %v128
  %v135 = vpack.c.bf16 %v131, %v130
  %v136 = vld [vmem:[%s4] sm:$0xf]
  %v137 = vld [vmem:[%s4 + $0x4] sm:$0xf]
  %v138 = vld [vmem:[%s4 + $0x8] sm:$0xf]
  %v139 = vld [vmem:[%s4 + $0xc] sm:$0xf]
  %v144 = vunpack.c.l.b16 %v136
  %v145 = vunpack.c.l.b16 %v137
  %v146 = vunpack.c.l.b16 %v138
  %v147 = vunpack.c.l.b16 %v139
  %v148 = vpack.c.b16 %v145, %v144
  %v149 = vpack.c.b16 %v147, %v146
  %v153 = vsel %vm58, %v132, 0
  %v156 = vsel %vm58, %v133, 0
  %v159 = vsel %vm58, %v134, 0
  %v162 = vsel %vm58, %v135, 0
  %164 = vmatpush.bf16.msra.mxu0 0
  %165 = vmatpush.bf16.msra.mxu0 0
  %166 = vmatpush.bf16.msra.mxu0 0
  %167 = vmatpush.bf16.msra.mxu0 0
  %168 = vmatpush.bf16.msra.mxu0 0
  %169 = vmatpush.bf16.msra.mxu0 0
  %170 = vmatpush.bf16.msra.mxu0 %v149
  %171 = vmatpush.bf16.msra.mxu0 %v148
  %172 = vmatmul.bf16.gmra.mxu0 %v153
  %v173 = vpop.f32.mrf.mxu0
  %v174 = vadd.f32 0.0, %v173
  %v175 = vpop.f32.mrf.mxu0
  %v176 = vadd.f32 0.0, %v175
  %177 = vmatmul.bf16.gmra.mxu0 %v156
  %v178 = vpop.f32.mrf.mxu0
  %v179 = vadd.f32 0.0, %v178
  %v180 = vpop.f32.mrf.mxu0
  %v181 = vadd.f32 0.0, %v180
  %182 = vmatmul.bf16.gmra.mxu0 %v159
  %v183 = vpop.f32.mrf.mxu0
  %v184 = vadd.f32 0.0, %v183
  %v185 = vpop.f32.mrf.mxu0
  %v186 = vadd.f32 0.0, %v185
  %187 = vmatmul.bf16.gmra.mxu0 %v162
  %v188 = vpop.f32.mrf.mxu0
  %v189 = vadd.f32 0.0, %v188
  %v190 = vpop.f32.mrf.mxu0
  %v191 = vadd.f32 0.0, %v190
  %192 = vdwg.mxu0
  %v193 = vld [vmem:[%s5] sm:$0x1]
  %v195 = vperm.slane %v193, 0
  %v197 = vmul.f32 %v174, %v195
  %v198 = vmul.f32 %v176, %v195
  %v199 = vmul.f32 %v179, %v195
  %v200 = vmul.f32 %v181, %v195
  %v201 = vmul.f32 %v184, %v195
  %v202 = vmul.f32 %v186, %v195
  %v203 = vmul.f32 %v189, %v195
  %v204 = vmul.f32 %v191, %v195
  %v205 = vld [vmem:[%s6] sm:$0x1]
  %v207 = vperm.slane %v205, 0
  %v209 = vadd.f32 %v197, %v207
  %v210 = vadd.f32 %v198, %v207
  %v211 = vadd.f32 %v199, %v207
  %v212 = vadd.f32 %v200, %v207
  %v213 = vadd.f32 %v201, %v207
  %v214 = vadd.f32 %v202, %v207
  %v215 = vadd.f32 %v203, %v207
  %v216 = vadd.f32 %v204, %v207
  %v217 = vld [vmem:[%s7] sm:$0x1]
  %v218 = vmax.f32 %v209, 0.0
  %v219 = vmax.f32 %v210, 0.0
  %v220 = vmax.f32 %v211, 0.0
  %v221 = vmax.f32 %v212, 0.0
  %v222 = vmax.f32 %v213, 0.0
  %v223 = vmax.f32 %v214, 0.0
  %v224 = vmax.f32 %v215, 0.0
  %v225 = vmax.f32 %v216, 0.0
  %v227 = vperm.slane %v217, 0
  %v229 = vmul.f32 %v227, %v218
  %v230 = vmul.f32 %v227, %v219
  %v231 = vmul.f32 %v227, %v220
  %v232 = vmul.f32 %v227, %v221
  %v233 = vmul.f32 %v227, %v222
  %v234 = vmul.f32 %v227, %v223
  %v235 = vmul.f32 %v227, %v224
  %v236 = vmul.f32 %v227, %v225
  %v237 = vsub.f32 1.0, %v217
  %v239 = vperm.slane %v237, 0
  %v241 = vmul.f32 %v239, %v209
  %v242 = vmul.f32 %v239, %v210
  %v243 = vmul.f32 %v239, %v211
  %v244 = vmul.f32 %v239, %v212
  %v245 = vmul.f32 %v239, %v213
  %v246 = vmul.f32 %v239, %v214
  %v247 = vmul.f32 %v239, %v215
  %v248 = vmul.f32 %v239, %v216
  %v249 = vadd.f32 %v229, %v241
  %v250 = vadd.f32 %v230, %v242
  %v251 = vadd.f32 %v231, %v243
  %v252 = vadd.f32 %v232, %v244
  %v253 = vadd.f32 %v233, %v245
  %v254 = vadd.f32 %v234, %v246
  %v255 = vadd.f32 %v235, %v247
  %v256 = vadd.f32 %v236, %v248
  %257 = vst [vmem:[%s8] sm:$0xff] %v249
  %258 = vst [vmem:[%s8 + $0x8] sm:$0xff] %v250
  %259 = vst [vmem:[%s8 + $0x10] sm:$0xff] %v251
  %260 = vst [vmem:[%s8 + $0x18] sm:$0xff] %v252
  %261 = vst [vmem:[%s8 + $0x20] sm:$0xff] %v253
  %262 = vst [vmem:[%s8 + $0x28] sm:$0xff] %v254
  %263 = vst [vmem:[%s8 + $0x30] sm:$0xff] %v255
  %264 = vst [vmem:[%s8 + $0x38] sm:$0xff] %v256
  // Predicated region
  $region34: #{decoder_forward.10} parent=0 // pred_check
    _
  $region35: #{decoder_forward.10} parent=0 // pred_check_branch
    %266 = sbr.rel (0) target = $region37
  $region36: #{decoder_forward.10} parent=0 // pred_region
    _
  $region37: #{decoder_forward.10} parent=0 // pred_fallthru
    _
  // Predicated region
  $region38: #{decoder_forward.10} parent=0 // pred_check
    _
  $region39: #{decoder_forward.10} parent=0 // pred_check_branch
    %268 = sbr.rel (0) target = $region41
  $region40: #{decoder_forward.10} parent=0 // pred_region
    _
  $region41: #{decoder_forward.10} parent=0 // pred_fallthru
    _

// kernel: decoder_forward.12
$region0: #{decoder_forward.12}
  #allocation0 [shape = 'u32[]', space=smem, size = 0x4, offset = 0x4, fixed_abs, tag = 'smem constant byte address 0x4 - core index']
  #allocation1 [shape = 'u32[72,128]{1,0:T(1,128)}', space=vmem, size = 0x9000, scoped, tag = 'internal scratch']
  %s0 = inlined_call_operand.vmem [shape: f32[64,32], index: 0, kind: input, shape index: {}]
  %s1 = inlined_call_operand.vmem [shape: bf16[32,32], index: 1, kind: input, shape index: {}]
  %s2 = inlined_call_operand.vmem [shape: f32[1,32], index: 2, kind: input, shape index: {}]
  %s3 = inlined_call_operand.vmem [shape: f32[1,32], index: 3, kind: input, shape index: {}]
  %s4 = inlined_call_operand.vmem [shape: f32[64,32], index: 4, kind: input, shape index: {}]
  %s5 = inlined_call_operand.vmem [shape: f32[64,32], index: 5, kind: output, shape index: {}]
  %s6 = sld [smem:[#allocation0]]
  $region30: #{decoder_forward.12} parent=0
    _
  %s8 = ssub.s32 1, %s6
  %s9 = scalar_select 0, %s8, %s6
  // Predicated region
  $region2: #{decoder_forward.12} parent=0 // pred_check
    _
  $region3: #{decoder_forward.12} parent=0 // pred_check_branch
    %11 = sbr.rel (0) target = $region5
  $region4: #{decoder_forward.12} parent=0 // pred_region
    _
  $region5: #{decoder_forward.12} parent=0 // pred_fallthru
    _
  // Predicated region
  $region6: #{decoder_forward.12} parent=0 // pred_check
    _
  $region7: #{decoder_forward.12} parent=0 // pred_check_branch
    %13 = sbr.rel (0) target = $region9
  $region8: #{decoder_forward.12} parent=0 // pred_region
    _
  $region9: #{decoder_forward.12} parent=0 // pred_fallthru
    _
  // Predicated region
  $region10: #{decoder_forward.12} parent=0 // pred_check
    _
  $region11: #{decoder_forward.12} parent=0 // pred_check_branch
    %15 = sbr.rel (0) target = $region13
  $region12: #{decoder_forward.12} parent=0 // pred_region
    _
  $region13: #{decoder_forward.12} parent=0 // pred_fallthru
    _
  // Predicated region
  $region14: #{decoder_forward.12} parent=0 // pred_check
    _
  $region15: #{decoder_forward.12} parent=0 // pred_check_branch
    %17 = sbr.rel (0) target = $region17
  $region16: #{decoder_forward.12} parent=0 // pred_region
    _
  $region17: #{decoder_forward.12} parent=0 // pred_fallthru
    _
  // Predicated region
  $region18: #{decoder_forward.12} parent=0 // pred_check
    _
  $region19: #{decoder_forward.12} parent=0 // pred_check_branch
    %19 = sbr.rel (0) target = $region21
  $region20: #{decoder_forward.12} parent=0 // pred_region
    _
  $region21: #{decoder_forward.12} parent=0 // pred_fallthru
    _
  %v21 = vld [vmem:[%s0] sm:$0xff]
  %v22 = vld [vmem:[%s0 + $0x8] sm:$0xff]
  %v23 = vld [vmem:[%s0 + $0x10] sm:$0xff]
  %v24 = vld [vmem:[%s0 + $0x18] sm:$0xff]
  %v25 = vld [vmem:[%s0 + $0x20] sm:$0xff]
  %v26 = vld [vmem:[%s0 + $0x28] sm:$0xff]
  %v27 = vld [vmem:[%s0 + $0x30] sm:$0xff]
  %v28 = vld [vmem:[%s0 + $0x38] sm:$0xff]
  %v29 = vpack.c.bf16 %v22, %v21
  %v30 = vpack.c.bf16 %v24, %v23
  %v31 = vpack.c.bf16 %v26, %v25
  %v32 = vpack.c.bf16 %v28, %v27
  %v33 = vld [vmem:[%s1] sm:$0xf]
  %v34 = vld [vmem:[%s1 + $0x4] sm:$0xf]
  %v35 = vld [vmem:[%s1 + $0x8] sm:$0xf]
  %v36 = vld [vmem:[%s1 + $0xc] sm:$0xf]
  %v41 = vunpack.c.l.b16 %v33
  %v42 = vunpack.c.l.b16 %v34
  %v43 = vunpack.c.l.b16 %v35
  %v44 = vunpack.c.l.b16 %v36
  %v45 = vpack.c.b16 %v42, %v41
  %v46 = vpack.c.b16 %v44, %v43
  %vm49 = vcmask 261120
  %v51 = vsel %vm49, %v29, 0
  %v54 = vsel %vm49, %v30, 0
  %v57 = vsel %vm49, %v31, 0
  %v60 = vsel %vm49, %v32, 0
  %62 = vmatpush.bf16.msra.mxu0 0
  %63 = vmatpush.bf16.msra.mxu0 0
  %64 = vmatpush.bf16.msra.mxu0 0
  %65 = vmatpush.bf16.msra.mxu0 0
  %66 = vmatpush.bf16.msra.mxu0 0
  %67 = vmatpush.bf16.msra.mxu0 0
  %68 = vmatpush.bf16.msra.mxu0 %v46
  %69 = vmatpush.bf16.msra.mxu0 %v45
  %70 = vmatmul.bf16.gmra.mxu0 %v51
  %v71 = vpop.f32.mrf.mxu0
  %v72 = vadd.f32 0.0, %v71
  %v73 = vpop.f32.mrf.mxu0
  %v74 = vadd.f32 0.0, %v73
  %75 = vmatmul.bf16.gmra.mxu0 %v54
  %v76 = vpop.f32.mrf.mxu0
  %v77 = vadd.f32 0.0, %v76
  %v78 = vpop.f32.mrf.mxu0
  %v79 = vadd.f32 0.0, %v78
  %80 = vmatmul.bf16.gmra.mxu0 %v57
  %v81 = vpop.f32.mrf.mxu0
  %v82 = vadd.f32 0.0, %v81
  %v83 = vpop.f32.mrf.mxu0
  %v84 = vadd.f32 0.0, %v83
  %85 = vmatmul.bf16.gmra.mxu0 %v60
  %v86 = vpop.f32.mrf.mxu0
  %v87 = vadd.f32 0.0, %v86
  %v88 = vpop.f32.mrf.mxu0
  %v89 = vadd.f32 0.0, %v88
  %90 = vdwg.mxu0
  %v91 = vld [vmem:[%s2] sm:$0x1]
  %v93 = vperm.slane %v91, 0
  %v95 = vmul.f32 %v72, %v93
  %v96 = vmul.f32 %v74, %v93
  %v97 = vmul.f32 %v77, %v93
  %v98 = vmul.f32 %v79, %v93
  %v99 = vmul.f32 %v82, %v93
  %v100 = vmul.f32 %v84, %v93
  %v101 = vmul.f32 %v87, %v93
  %v102 = vmul.f32 %v89, %v93
  %v103 = vld [vmem:[%s3] sm:$0x1]
  %v105 = vperm.slane %v103, 0
  %v107 = vadd.f32 %v95, %v105
  %v108 = vadd.f32 %v96, %v105
  %v109 = vadd.f32 %v97, %v105
  %v110 = vadd.f32 %v98, %v105
  %v111 = vadd.f32 %v99, %v105
  %v112 = vadd.f32 %v100, %v105
  %v113 = vadd.f32 %v101, %v105
  %v114 = vadd.f32 %v102, %v105
  %v115 = vld [vmem:[%s4] sm:$0xff]
  %v116 = vld [vmem:[%s4 + $0x8] sm:$0xff]
  %v117 = vld [vmem:[%s4 + $0x10] sm:$0xff]
  %v118 = vld [vmem:[%s4 + $0x18] sm:$0xff]
  %v119 = vld [vmem:[%s4 + $0x20] sm:$0xff]
  %v120 = vld [vmem:[%s4 + $0x28] sm:$0xff]
  %v121 = vld [vmem:[%s4 + $0x30] sm:$0xff]
  %v122 = vld [vmem:[%s4 + $0x38] sm:$0xff]
  %v123 = vadd.f32 %v107, %v115
  %v124 = vadd.f32 %v108, %v116
  %v125 = vadd.f32 %v109, %v117
  %v126 = vadd.f32 %v110, %v118
  %v127 = vadd.f32 %v111, %v119
  %v128 = vadd.f32 %v112, %v120
  %v129 = vadd.f32 %v113, %v121
  %v130 = vadd.f32 %v114, %v122
  %v131 = vmax.f32 %v123, 0.0
  %v132 = vmax.f32 %v124, 0.0
  %v133 = vmax.f32 %v125, 0.0
  %v134 = vmax.f32 %v126, 0.0
  %v135 = vmax.f32 %v127, 0.0
  %v136 = vmax.f32 %v128, 0.0
  %v137 = vmax.f32 %v129, 0.0
  %v138 = vmax.f32 %v130, 0.0
  %139 = vst.msk [vmem:[%s5] sm:$0xff] %vm49, %v131
  %140 = vst.msk [vmem:[%s5 + $0x8] sm:$0xff] %vm49, %v132
  %141 = vst.msk [vmem:[%s5 + $0x10] sm:$0xff] %vm49, %v133
  %142 = vst.msk [vmem:[%s5 + $0x18] sm:$0xff] %vm49, %v134
  %143 = vst.msk [vmem:[%s5 + $0x20] sm:$0xff] %vm49, %v135
  %144 = vst.msk [vmem:[%s5 + $0x28] sm:$0xff] %vm49, %v136
  %145 = vst.msk [vmem:[%s5 + $0x30] sm:$0xff] %vm49, %v137
  %146 = vst.msk [vmem:[%s5 + $0x38] sm:$0xff] %vm49, %v138
  // Predicated region
  $region22: #{decoder_forward.12} parent=0 // pred_check
    _
  $region23: #{decoder_forward.12} parent=0 // pred_check_branch
    %148 = sbr.rel (0) target = $region25
  $region24: #{decoder_forward.12} parent=0 // pred_region
    _
  $region25: #{decoder_forward.12} parent=0 // pred_fallthru
    _
  // Predicated region
  $region26: #{decoder_forward.12} parent=0 // pred_check
    _
  $region27: #{decoder_forward.12} parent=0 // pred_check_branch
    %150 = sbr.rel (0) target = $region29
  $region28: #{decoder_forward.12} parent=0 // pred_region
    _
  $region29: #{decoder_forward.12} parent=0 // pred_fallthru
    _

// kernel: decoder_forward.11
$region0: #{decoder_forward.11}
  #allocation0 [shape = 'u32[]', space=smem, size = 0x4, offset = 0x4, fixed_abs, tag = 'smem constant byte address 0x4 - core index']
  #allocation1 [shape = 'u32[72,128]{1,0:T(1,128)}', space=vmem, size = 0x9000, scoped, tag = 'internal scratch']
  %s0 = inlined_call_operand.vmem [shape: f32[64,32], index: 0, kind: input, shape index: {}]
  %s1 = inlined_call_operand.vmem [shape: f32[64,8,32], index: 1, kind: input, shape index: {}]
  %s2 = inlined_call_operand.vmem [shape: f32[64,8,32], index: 2, kind: input, shape index: {}]
  %s3 = inlined_call_operand.vmem [shape: f32[64,8,3], index: 3, kind: input, shape index: {}]
  %s4 = inlined_call_operand.vmem [shape: f32[64,8], index: 4, kind: input, shape index: {}]
  %s5 = inlined_call_operand.vmem [shape: f32[3,32], index: 5, kind: input, shape index: {}]
  %s6 = inlined_call_operand.vmem [shape: f32[1,32], index: 6, kind: input, shape index: {}]
  %s7 = inlined_call_operand.vmem [shape: f32[1,32], index: 7, kind: input, shape index: {}]
  %s8 = inlined_call_operand.vmem [shape: bf16[32,32], index: 8, kind: input, shape index: {}]
  %s9 = inlined_call_operand.vmem [shape: f32[1,32], index: 9, kind: input, shape index: {}]
  %s10 = inlined_call_operand.vmem [shape: bf16[32,4], index: 10, kind: input, shape index: {}]
  %s11 = inlined_call_operand.vmem [shape: f32[1,4], index: 11, kind: input, shape index: {}]
  %s12 = inlined_call_operand.vmem [shape: f32[1,4], index: 12, kind: input, shape index: {}]
  %s13 = inlined_call_operand.vmem [shape: f32[4,4], index: 13, kind: input, shape index: {}]
  %s14 = inlined_call_operand.vmem [shape: f32[1,4], index: 14, kind: input, shape index: {}]
  %s15 = inlined_call_operand.vmem [shape: f32[4,32], index: 15, kind: input, shape index: {}]
  %s16 = inlined_call_operand.vmem [shape: f32[1,32], index: 16, kind: input, shape index: {}]
  %s17 = inlined_call_operand.vmem [shape: f32[1,32], index: 17, kind: input, shape index: {}]
  %s18 = inlined_call_operand.vmem [shape: f32[64,32], index: 18, kind: output, shape index: {}]
  %s19 = sld [smem:[#allocation0]]
  $region82: #{decoder_forward.11} parent=0
    _
  %s21 = ssub.s32 1, %s19
  %s22 = scalar_select 0, %s21, %s19
  // Predicated region
  $region2: #{decoder_forward.11} parent=0 // pred_check
    _
  $region3: #{decoder_forward.11} parent=0 // pred_check_branch
    %24 = sbr.rel (0) target = $region5
  $region4: #{decoder_forward.11} parent=0 // pred_region
    _
  $region5: #{decoder_forward.11} parent=0 // pred_fallthru
    _
  // Predicated region
  $region6: #{decoder_forward.11} parent=0 // pred_check
    _
  $region7: #{decoder_forward.11} parent=0 // pred_check_branch
    %26 = sbr.rel (0) target = $region9
  $region8: #{decoder_forward.11} parent=0 // pred_region
    _
  $region9: #{decoder_forward.11} parent=0 // pred_fallthru
    _
  // Predicated region
  $region10: #{decoder_forward.11} parent=0 // pred_check
    _
  $region11: #{decoder_forward.11} parent=0 // pred_check_branch
    %28 = sbr.rel (0) target = $region13
  $region12: #{decoder_forward.11} parent=0 // pred_region
    _
  $region13: #{decoder_forward.11} parent=0 // pred_fallthru
    _
  // Predicated region
  $region14: #{decoder_forward.11} parent=0 // pred_check
    _
  $region15: #{decoder_forward.11} parent=0 // pred_check_branch
    %30 = sbr.rel (0) target = $region17
  $region16: #{decoder_forward.11} parent=0 // pred_region
    _
  $region17: #{decoder_forward.11} parent=0 // pred_fallthru
    _
  // Predicated region
  $region18: #{decoder_forward.11} parent=0 // pred_check
    _
  $region19: #{decoder_forward.11} parent=0 // pred_check_branch
    %32 = sbr.rel (0) target = $region21
  $region20: #{decoder_forward.11} parent=0 // pred_region
    _
  $region21: #{decoder_forward.11} parent=0 // pred_fallthru
    _
  // Predicated region
  $region22: #{decoder_forward.11} parent=0 // pred_check
    _
  $region23: #{decoder_forward.11} parent=0 // pred_check_branch
    %34 = sbr.rel (0) target = $region25
  $region24: #{decoder_forward.11} parent=0 // pred_region
    _
  $region25: #{decoder_forward.11} parent=0 // pred_fallthru
    _
  // Predicated region
  $region26: #{decoder_forward.11} parent=0 // pred_check
    _
  $region27: #{decoder_forward.11} parent=0 // pred_check_branch
    %36 = sbr.rel (0) target = $region29
  $region28: #{decoder_forward.11} parent=0 // pred_region
    _
  $region29: #{decoder_forward.11} parent=0 // pred_fallthru
    _
  // Predicated region
  $region30: #{decoder_forward.11} parent=0 // pred_check
    _
  $region31: #{decoder_forward.11} parent=0 // pred_check_branch
    %38 = sbr.rel (0) target = $region33
  $region32: #{decoder_forward.11} parent=0 // pred_region
    _
  $region33: #{decoder_forward.11} parent=0 // pred_fallthru
    _
  // Predicated region
  $region34: #{decoder_forward.11} parent=0 // pred_check
    _
  $region35: #{decoder_forward.11} parent=0 // pred_check_branch
    %40 = sbr.rel (0) target = $region37
  $region36: #{decoder_forward.11} parent=0 // pred_region
    _
  $region37: #{decoder_forward.11} parent=0 // pred_fallthru
    _
  // Predicated region
  $region38: #{decoder_forward.11} parent=0 // pred_check
    _
  $region39: #{decoder_forward.11} parent=0 // pred_check_branch
    %42 = sbr.rel (0) target = $region41
  $region40: #{decoder_forward.11} parent=0 // pred_region
    _
  $region41: #{decoder_forward.11} parent=0 // pred_fallthru
    _
  // Predicated region
  $region42: #{decoder_forward.11} parent=0 // pred_check
    _
  $region43: #{decoder_forward.11} parent=0 // pred_check_branch
    %44 = sbr.rel (0) target = $region45
  $region44: #{decoder_forward.11} parent=0 // pred_region
    _
  $region45: #{decoder_forward.11} parent=0 // pred_fallthru
    _
  // Predicated region
  $region46: #{decoder_forward.11} parent=0 // pred_check
    _
  $region47: #{decoder_forward.11} parent=0 // pred_check_branch
    %46 = sbr.rel (0) target = $region49
  $region48: #{decoder_forward.11} parent=0 // pred_region
    _
  $region49: #{decoder_forward.11} parent=0 // pred_fallthru
    _
  // Predicated region
  $region50: #{decoder_forward.11} parent=0 // pred_check
    _
  $region51: #{decoder_forward.11} parent=0 // pred_check_branch
    %48 = sbr.rel (0) target = $region53
  $region52: #{decoder_forward.11} parent=0 // pred_region
    _
  $region53: #{decoder_forward.11} parent=0 // pred_fallthru
    _
  // Predicated region
  $region54: #{decoder_forward.11} parent=0 // pred_check
    _
  $region55: #{decoder_forward.11} parent=0 // pred_check_branch
    %50 = sbr.rel (0) target = $region57
  $region56: #{decoder_forward.11} parent=0 // pred_region
    _
  $region57: #{decoder_forward.11} parent=0 // pred_fallthru
    _
  // Predicated region
  $region58: #{decoder_forward.11} parent=0 // pred_check
    _
  $region59: #{decoder_forward.11} parent=0 // pred_check_branch
    %52 = sbr.rel (0) target = $region61
  $region60: #{decoder_forward.11} parent=0 // pred_region
    _
  $region61: #{decoder_forward.11} parent=0 // pred_fallthru
    _
  // Predicated region
  $region62: #{decoder_forward.11} parent=0 // pred_check
    _
  $region63: #{decoder_forward.11} parent=0 // pred_check_branch
    %54 = sbr.rel (0) target = $region65
  $region64: #{decoder_forward.11} parent=0 // pred_region
    _
  $region65: #{decoder_forward.11} parent=0 // pred_fallthru
    _
  // Predicated region
  $region66: #{decoder_forward.11} parent=0 // pred_check
    _
  $region67: #{decoder_forward.11} parent=0 // pred_check_branch
    %56 = sbr.rel (0) target = $region69
  $region68: #{decoder_forward.11} parent=0 // pred_region
    _
  $region69: #{decoder_forward.11} parent=0 // pred_fallthru
    _
  // Predicated region
  $region70: #{decoder_forward.11} parent=0 // pred_check
    _
  $region71: #{decoder_forward.11} parent=0 // pred_check_branch
    %58 = sbr.rel (0) target = $region73
  $region72: #{decoder_forward.11} parent=0 // pred_region
    _
  $region73: #{decoder_forward.11} parent=0 // pred_fallthru
    _
  %v60 = vld [vmem:[%s3] sm:$0xff]
  %v61 = vld [vmem:[%s3 + $0x8] sm:$0xff]
  %v62 = vld [vmem:[%s3 + $0x10] sm:$0xff]
  %v63 = vld [vmem:[%s3 + $0x18] sm:$0xff]
  %v64 = vld [vmem:[%s3 + $0x20] sm:$0xff]
  %v65 = vld [vmem:[%s3 + $0x28] sm:$0xff]
  %v66 = vld [vmem:[%s3 + $0x30] sm:$0xff]
  %v67 = vld [vmem:[%s3 + $0x38] sm:$0xff]
  %v68 = vld [vmem:[%s3 + $0x40] sm:$0xff]
  %v69 = vld [vmem:[%s3 + $0x48] sm:$0xff]
  %v70 = vld [vmem:[%s3 + $0x50] sm:$0xff]
  %v71 = vld [vmem:[%s3 + $0x58] sm:$0xff]
  %v72 = vld [vmem:[%s3 + $0x60] sm:$0xff]
  %v73 = vld [vmem:[%s3 + $0x68] sm:$0xff]
  %v74 = vld [vmem:[%s3 + $0x70] sm:$0xff]
  %v75 = vld [vmem:[%s3 + $0x78] sm:$0xff]
  %v76 = vld [vmem:[%s3 + $0x80] sm:$0xff]
  %v77 = vld [vmem:[%s3 + $0x88] sm:$0xff]
  %v78 = vld [vmem:[%s3 + $0x90] sm:$0xff]
  %v79 = vld [vmem:[%s3 + $0x98] sm:$0xff]
  %v80 = vld [vmem:[%s3 + $0xa0] sm:$0xff]
  %v81 = vld [vmem:[%s3 + $0xa8] sm:$0xff]
  %v82 = vld [vmem:[%s3 + $0xb0] sm:$0xff]
  %v83 = vld [vmem:[%s3 + $0xb8] sm:$0xff]
  %v84 = vld [vmem:[%s3 + $0xc0] sm:$0xff]
  %v85 = vld [vmem:[%s3 + $0xc8] sm:$0xff]
  %v86 = vld [vmem:[%s3 + $0xd0] sm:$0xff]
  %v87 = vld [vmem:[%s3 + $0xd8] sm:$0xff]
  %v88 = vld [vmem:[%s3 + $0xe0] sm:$0xff]
  %v89 = vld [vmem:[%s3 + $0xe8] sm:$0xff]
  %v90 = vld [vmem:[%s3 + $0xf0] sm:$0xff]
  %v91 = vld [vmem:[%s3 + $0xf8] sm:$0xff]
  %v92 = vld [vmem:[%s3 + $0x100] sm:$0xff]
  %v93 = vld [vmem:[%s3 + $0x108] sm:$0xff]
  %v94 = vld [vmem:[%s3 + $0x110] sm:$0xff]
  %v95 = vld [vmem:[%s3 + $0x118] sm:$0xff]
  %v96 = vld [vmem:[%s3 + $0x120] sm:$0xff]
  %v97 = vld [vmem:[%s3 + $0x128] sm:$0xff]
  %v98 = vld [vmem:[%s3 + $0x130] sm:$0xff]
  %v99 = vld [vmem:[%s3 + $0x138] sm:$0xff]
  %v100 = vld [vmem:[%s3 + $0x140] sm:$0xff]
  %v101 = vld [vmem:[%s3 + $0x148] sm:$0xff]
  %v102 = vld [vmem:[%s3 + $0x150] sm:$0xff]
  %v103 = vld [vmem:[%s3 + $0x158] sm:$0xff]
  %v104 = vld [vmem:[%s3 + $0x160] sm:$0xff]
  %v105 = vld [vmem:[%s3 + $0x168] sm:$0xff]
  %v106 = vld [vmem:[%s3 + $0x170] sm:$0xff]
  %v107 = vld [vmem:[%s3 + $0x178] sm:$0xff]
  %v108 = vld [vmem:[%s3 + $0x180] sm:$0xff]
  %v109 = vld [vmem:[%s3 + $0x188] sm:$0xff]
  %v110 = vld [vmem:[%s3 + $0x190] sm:$0xff]
  %v111 = vld [vmem:[%s3 + $0x198] sm:$0xff]
  %v112 = vld [vmem:[%s3 + $0x1a0] sm:$0xff]
  %v113 = vld [vmem:[%s3 + $0x1a8] sm:$0xff]
  %v114 = vld [vmem:[%s3 + $0x1b0] sm:$0xff]
  %v115 = vld [vmem:[%s3 + $0x1b8] sm:$0xff]
  %v116 = vld [vmem:[%s3 + $0x1c0] sm:$0xff]
  %v117 = vld [vmem:[%s3 + $0x1c8] sm:$0xff]
  %v118 = vld [vmem:[%s3 + $0x1d0] sm:$0xff]
  %v119 = vld [vmem:[%s3 + $0x1d8] sm:$0xff]
  %v120 = vld [vmem:[%s3 + $0x1e0] sm:$0xff]
  %v121 = vld [vmem:[%s3 + $0x1e8] sm:$0xff]
  %v122 = vld [vmem:[%s3 + $0x1f0] sm:$0xff]
  %v123 = vld [vmem:[%s3 + $0x1f8] sm:$0xff]
  %v124 = vld [vmem:[%s5] sm:$0x1]
  %126 = vset.pattern.permute.xlu0 0
  %127 = vperm.xlu0 %126, %v60
  %v128 = vpop.permute.xlu0 %127
  %131 = vset.pattern.permute.xlu0 0
  %132 = vperm.xlu0 %131, %v61
  %v133 = vpop.permute.xlu0 %132
  %136 = vset.pattern.permute.xlu0 0
  %137 = vperm.xlu0 %136, %v62
  %v138 = vpop.permute.xlu0 %137
  %141 = vset.pattern.permute.xlu0 0
  %142 = vperm.xlu0 %141, %v63
  %v143 = vpop.permute.xlu0 %142
  %146 = vset.pattern.permute.xlu0 0
  %147 = vperm.xlu0 %146, %v64
  %v148 = vpop.permute.xlu0 %147
  %151 = vset.pattern.permute.xlu0 0
  %152 = vperm.xlu0 %151, %v65
  %v153 = vpop.permute.xlu0 %152
  %156 = vset.pattern.permute.xlu0 0
  %157 = vperm.xlu0 %156, %v66
  %v158 = vpop.permute.xlu0 %157
  %161 = vset.pattern.permute.xlu0 0
  %162 = vperm.xlu0 %161, %v67
  %v163 = vpop.permute.xlu0 %162
  %166 = vset.pattern.permute.xlu0 0
  %167 = vperm.xlu0 %166, %v68
  %v168 = vpop.permute.xlu0 %167
  %171 = vset.pattern.permute.xlu0 0
  %172 = vperm.xlu0 %171, %v69
  %v173 = vpop.permute.xlu0 %172
  %176 = vset.pattern.permute.xlu0 0
  %177 = vperm.xlu0 %176, %v70
  %v178 = vpop.permute.xlu0 %177
  %181 = vset.pattern.permute.xlu0 0
  %182 = vperm.xlu0 %181, %v71
  %v183 = vpop.permute.xlu0 %182
  %186 = vset.pattern.permute.xlu0 0
  %187 = vperm.xlu0 %186, %v72
  %v188 = vpop.permute.xlu0 %187
  %191 = vset.pattern.permute.xlu0 0
  %192 = vperm.xlu0 %191, %v73
  %v193 = vpop.permute.xlu0 %192
  %196 = vset.pattern.permute.xlu0 0
  %197 = vperm.xlu0 %196, %v74
  %v198 = vpop.permute.xlu0 %197
  %201 = vset.pattern.permute.xlu0 0
  %202 = vperm.xlu0 %201, %v75
  %v203 = vpop.permute.xlu0 %202
  %206 = vset.pattern.permute.xlu0 0
  %207 = vperm.xlu0 %206, %v76
  %v208 = vpop.permute.xlu0 %207
  %211 = vset.pattern.permute.xlu0 0
  %212 = vperm.xlu0 %211, %v77
  %v213 = vpop.permute.xlu0 %212
  %216 = vset.pattern.permute.xlu0 0
  %217 = vperm.xlu0 %216, %v78
  %v218 = vpop.permute.xlu0 %217
  %221 = vset.pattern.permute.xlu0 0
  %222 = vperm.xlu0 %221, %v79
  %v223 = vpop.permute.xlu0 %222
  %226 = vset.pattern.permute.xlu0 0
  %227 = vperm.xlu0 %226, %v80
  %v228 = vpop.permute.xlu0 %227
  %231 = vset.pattern.permute.xlu0 0
  %232 = vperm.xlu0 %231, %v81
  %v233 = vpop.permute.xlu0 %232
  %236 = vset.pattern.permute.xlu0 0
  %237 = vperm.xlu0 %236, %v82
  %v238 = vpop.permute.xlu0 %237
  %241 = vset.pattern.permute.xlu0 0
  %242 = vperm.xlu0 %241, %v83
  %v243 = vpop.permute.xlu0 %242
  %246 = vset.pattern.permute.xlu0 0
  %247 = vperm.xlu0 %246, %v84
  %v248 = vpop.permute.xlu0 %247
  %251 = vset.pattern.permute.xlu0 0
  %252 = vperm.xlu0 %251, %v85
  %v253 = vpop.permute.xlu0 %252
  %256 = vset.pattern.permute.xlu0 0
  %257 = vperm.xlu0 %256, %v86
  %v258 = vpop.permute.xlu0 %257
  %261 = vset.pattern.permute.xlu0 0
  %262 = vperm.xlu0 %261, %v87
  %v263 = vpop.permute.xlu0 %262
  %266 = vset.pattern.permute.xlu0 0
  %267 = vperm.xlu0 %266, %v88
  %v268 = vpop.permute.xlu0 %267
  %271 = vset.pattern.permute.xlu0 0
  %272 = vperm.xlu0 %271, %v89
  %v273 = vpop.permute.xlu0 %272
  %276 = vset.pattern.permute.xlu0 0
  %277 = vperm.xlu0 %276, %v90
  %v278 = vpop.permute.xlu0 %277
  %281 = vset.pattern.permute.xlu0 0
  %282 = vperm.xlu0 %281, %v91
  %v283 = vpop.permute.xlu0 %282
  %286 = vset.pattern.permute.xlu0 0
  %287 = vperm.xlu0 %286, %v92
  %v288 = vpop.permute.xlu0 %287
  %291 = vset.pattern.permute.xlu0 0
  %292 = vperm.xlu0 %291, %v93
  %v293 = vpop.permute.xlu0 %292
  %296 = vset.pattern.permute.xlu0 0
  %297 = vperm.xlu0 %296, %v94
  %v298 = vpop.permute.xlu0 %297
  %301 = vset.pattern.permute.xlu0 0
  %302 = vperm.xlu0 %301, %v95
  %v303 = vpop.permute.xlu0 %302
  %306 = vset.pattern.permute.xlu0 0
  %307 = vperm.xlu0 %306, %v96
  %v308 = vpop.permute.xlu0 %307
  %311 = vset.pattern.permute.xlu0 0
  %312 = vperm.xlu0 %311, %v97
  %v313 = vpop.permute.xlu0 %312
  %316 = vset.pattern.permute.xlu0 0
  %317 = vperm.xlu0 %316, %v98
  %v318 = vpop.permute.xlu0 %317
  %321 = vset.pattern.permute.xlu0 0
  %322 = vperm.xlu0 %321, %v99
  %v323 = vpop.permute.xlu0 %322
  %326 = vset.pattern.permute.xlu0 0
  %327 = vperm.xlu0 %326, %v100
  %v328 = vpop.permute.xlu0 %327
  %331 = vset.pattern.permute.xlu0 0
  %332 = vperm.xlu0 %331, %v101
  %v333 = vpop.permute.xlu0 %332
  %336 = vset.pattern.permute.xlu0 0
  %337 = vperm.xlu0 %336, %v102
  %v338 = vpop.permute.xlu0 %337
  %341 = vset.pattern.permute.xlu0 0
  %342 = vperm.xlu0 %341, %v103
  %v343 = vpop.permute.xlu0 %342
  %346 = vset.pattern.permute.xlu0 0
  %347 = vperm.xlu0 %346, %v104
  %v348 = vpop.permute.xlu0 %347
  %351 = vset.pattern.permute.xlu0 0
  %352 = vperm.xlu0 %351, %v105
  %v353 = vpop.permute.xlu0 %352
  %356 = vset.pattern.permute.xlu0 0
  %357 = vperm.xlu0 %356, %v106
  %v358 = vpop.permute.xlu0 %357
  %361 = vset.pattern.permute.xlu0 0
  %362 = vperm.xlu0 %361, %v107
  %v363 = vpop.permute.xlu0 %362
  %366 = vset.pattern.permute.xlu0 0
  %367 = vperm.xlu0 %366, %v108
  %v368 = vpop.permute.xlu0 %367
  %371 = vset.pattern.permute.xlu0 0
  %372 = vperm.xlu0 %371, %v109
  %v373 = vpop.permute.xlu0 %372
  %376 = vset.pattern.permute.xlu0 0
  %377 = vperm.xlu0 %376, %v110
  %v378 = vpop.permute.xlu0 %377
  %381 = vset.pattern.permute.xlu0 0
  %382 = vperm.xlu0 %381, %v111
  %v383 = vpop.permute.xlu0 %382
  %386 = vset.pattern.permute.xlu0 0
  %387 = vperm.xlu0 %386, %v112
  %v388 = vpop.permute.xlu0 %387
  %391 = vset.pattern.permute.xlu0 0
  %392 = vperm.xlu0 %391, %v113
  %v393 = vpop.permute.xlu0 %392
  %396 = vset.pattern.permute.xlu0 0
  %397 = vperm.xlu0 %396, %v114
  %v398 = vpop.permute.xlu0 %397
  %401 = vset.pattern.permute.xlu0 0
  %402 = vperm.xlu0 %401, %v115
  %v403 = vpop.permute.xlu0 %402
  %406 = vset.pattern.permute.xlu0 0
  %407 = vperm.xlu0 %406, %v116
  %v408 = vpop.permute.xlu0 %407
  %411 = vset.pattern.permute.xlu0 0
  %412 = vperm.xlu0 %411, %v117
  %v413 = vpop.permute.xlu0 %412
  %416 = vset.pattern.permute.xlu0 0
  %417 = vperm.xlu0 %416, %v118
  %v418 = vpop.permute.xlu0 %417
  %421 = vset.pattern.permute.xlu0 0
  %422 = vperm.xlu0 %421, %v119
  %v423 = vpop.permute.xlu0 %422
  %426 = vset.pattern.permute.xlu0 0
  %427 = vperm.xlu0 %426, %v120
  %v428 = vpop.permute.xlu0 %427
  %431 = vset.pattern.permute.xlu0 0
  %432 = vperm.xlu0 %431, %v121
  %v433 = vpop.permute.xlu0 %432
  %436 = vset.pattern.permute.xlu0 0
  %437 = vperm.xlu0 %436, %v122
  %v438 = vpop.permute.xlu0 %437
  %441 = vset.pattern.permute.xlu0 0
  %442 = vperm.xlu0 %441, %v123
  %v443 = vpop.permute.xlu0 %442
  %v445 = vperm.slane %v124, 0
  %v446 = vmul.f32 %v128, %v445
  %v447 = vmul.f32 %v133, %v445
  %v448 = vmul.f32 %v138, %v445
  %v449 = vmul.f32 %v143, %v445
  %v450 = vmul.f32 %v148, %v445
  %v451 = vmul.f32 %v153, %v445
  %v452 = vmul.f32 %v158, %v445
  %v453 = vmul.f32 %v163, %v445
  %v454 = vmul.f32 %v168, %v445
  %v455 = vmul.f32 %v173, %v445
  %v456 = vmul.f32 %v178, %v445
  %v457 = vmul.f32 %v183, %v445
  %v458 = vmul.f32 %v188, %v445
  %v459 = vmul.f32 %v193, %v445
  %v460 = vmul.f32 %v198, %v445
  %v461 = vmul.f32 %v203, %v445
  %v462 = vmul.f32 %v208, %v445
  %v463 = vmul.f32 %v213, %v445
  %v464 = vmul.f32 %v218, %v445
  %v465 = vmul.f32 %v223, %v445
  %v466 = vmul.f32 %v228, %v445
  %v467 = vmul.f32 %v233, %v445
  %v468 = vmul.f32 %v238, %v445
  %v469 = vmul.f32 %v243, %v445
  %v470 = vmul.f32 %v248, %v445
  %v471 = vmul.f32 %v253, %v445
  %v472 = vmul.f32 %v258, %v445
  %v473 = vmul.f32 %v263, %v445
  %v474 = vmul.f32 %v268, %v445
  %v475 = vmul.f32 %v273, %v445
  %v476 = vmul.f32 %v278, %v445
  %v477 = vmul.f32 %v283, %v445
  %v478 = vmul.f32 %v288, %v445
  %v479 = vmul.f32 %v293, %v445
  %v480 = vmul.f32 %v298, %v445
  %v481 = vmul.f32 %v303, %v445
  %v482 = vmul.f32 %v308, %v445
  %v483 = vmul.f32 %v313, %v445
  %v484 = vmul.f32 %v318, %v445
  %v485 = vmul.f32 %v323, %v445
  %v486 = vmul.f32 %v328, %v445
  %v487 = vmul.f32 %v333, %v445
  %v488 = vmul.f32 %v338, %v445
  %v489 = vmul.f32 %v343, %v445
  %v490 = vmul.f32 %v348, %v445
  %v491 = vmul.f32 %v353, %v445
  %v492 = vmul.f32 %v358, %v445
  %v493 = vmul.f32 %v363, %v445
  %v494 = vmul.f32 %v368, %v445
  %v495 = vmul.f32 %v373, %v445
  %v496 = vmul.f32 %v378, %v445
  %v497 = vmul.f32 %v383, %v445
  %v498 = vmul.f32 %v388, %v445
  %v499 = vmul.f32 %v393, %v445
  %v500 = vmul.f32 %v398, %v445
  %v501 = vmul.f32 %v403, %v445
  %v502 = vmul.f32 %v408, %v445
  %v503 = vmul.f32 %v413, %v445
  %v504 = vmul.f32 %v418, %v445
  %v505 = vmul.f32 %v423, %v445
  %v506 = vmul.f32 %v428, %v445
  %v507 = vmul.f32 %v433, %v445
  %v508 = vmul.f32 %v438, %v445
  %v509 = vmul.f32 %v443, %v445
  %v510 = vld [vmem:[%s5 + $0x1] sm:$0x1]
  %511 = vset.pattern.permute.xlu0 1
  %512 = vperm.xlu0 %511, %v60
  %v513 = vpop.permute.xlu0 %512
  %515 = vset.pattern.permute.xlu0 1
  %516 = vperm.xlu0 %515, %v61
  %v517 = vpop.permute.xlu0 %516
  %519 = vset.pattern.permute.xlu0 1
  %520 = vperm.xlu0 %519, %v62
  %v521 = vpop.permute.xlu0 %520
  %523 = vset.pattern.permute.xlu0 1
  %524 = vperm.xlu0 %523, %v63
  %v525 = vpop.permute.xlu0 %524
  %527 = vset.pattern.permute.xlu0 1
  %528 = vperm.xlu0 %527, %v64
  %v529 = vpop.permute.xlu0 %528
  %531 = vset.pattern.permute.xlu0 1
  %532 = vperm.xlu0 %531, %v65
  %v533 = vpop.permute.xlu0 %532
  %535 = vset.pattern.permute.xlu0 1
  %536 = vperm.xlu0 %535, %v66
  %v537 = vpop.permute.xlu0 %536
  %539 = vset.pattern.permute.xlu0 1
  %540 = vperm.xlu0 %539, %v67
  %v541 = vpop.permute.xlu0 %540
  %543 = vset.pattern.permute.xlu0 1
  %544 = vperm.xlu0 %543, %v68
  %v545 = vpop.permute.xlu0 %544
  %547 = vset.pattern.permute.xlu0 1
  %548 = vperm.xlu0 %547, %v69
  %v549 = vpop.permute.xlu0 %548
  %551 = vset.pattern.permute.xlu0 1
  %552 = vperm.xlu0 %551, %v70
  %v553 = vpop.permute.xlu0 %552
  %555 = vset.pattern.permute.xlu0 1
  %556 = vperm.xlu0 %555, %v71
  %v557 = vpop.permute.xlu0 %556
  %559 = vset.pattern.permute.xlu0 1
  %560 = vperm.xlu0 %559, %v72
  %v561 = vpop.permute.xlu0 %560
  %563 = vset.pattern.permute.xlu0 1
  %564 = vperm.xlu0 %563, %v73
  %v565 = vpop.permute.xlu0 %564
  %567 = vset.pattern.permute.xlu0 1
  %568 = vperm.xlu0 %567, %v74
  %v569 = vpop.permute.xlu0 %568
  %571 = vset.pattern.permute.xlu0 1
  %572 = vperm.xlu0 %571, %v75
  %v573 = vpop.permute.xlu0 %572
  %575 = vset.pattern.permute.xlu0 1
  %576 = vperm.xlu0 %575, %v76
  %v577 = vpop.permute.xlu0 %576
  %579 = vset.pattern.permute.xlu0 1
  %580 = vperm.xlu0 %579, %v77
  %v581 = vpop.permute.xlu0 %580
  %583 = vset.pattern.permute.xlu0 1
  %584 = vperm.xlu0 %583, %v78
  %v585 = vpop.permute.xlu0 %584
  %587 = vset.pattern.permute.xlu0 1
  %588 = vperm.xlu0 %587, %v79
  %v589 = vpop.permute.xlu0 %588
  %591 = vset.pattern.permute.xlu0 1
  %592 = vperm.xlu0 %591, %v80
  %v593 = vpop.permute.xlu0 %592
  %595 = vset.pattern.permute.xlu0 1
  %596 = vperm.xlu0 %595, %v81
  %v597 = vpop.permute.xlu0 %596
  %599 = vset.pattern.permute.xlu0 1
  %600 = vperm.xlu0 %599, %v82
  %v601 = vpop.permute.xlu0 %600
  %603 = vset.pattern.permute.xlu0 1
  %604 = vperm.xlu0 %603, %v83
  %v605 = vpop.permute.xlu0 %604
  %607 = vset.pattern.permute.xlu0 1
  %608 = vperm.xlu0 %607, %v84
  %v609 = vpop.permute.xlu0 %608
  %611 = vset.pattern.permute.xlu0 1
  %612 = vperm.xlu0 %611, %v85
  %v613 = vpop.permute.xlu0 %612
  %615 = vset.pattern.permute.xlu0 1
  %616 = vperm.xlu0 %615, %v86
  %v617 = vpop.permute.xlu0 %616
  %619 = vset.pattern.permute.xlu0 1
  %620 = vperm.xlu0 %619, %v87
  %v621 = vpop.permute.xlu0 %620
  %623 = vset.pattern.permute.xlu0 1
  %624 = vperm.xlu0 %623, %v88
  %v625 = vpop.permute.xlu0 %624
  %627 = vset.pattern.permute.xlu0 1
  %628 = vperm.xlu0 %627, %v89
  %v629 = vpop.permute.xlu0 %628
  %631 = vset.pattern.permute.xlu0 1
  %632 = vperm.xlu0 %631, %v90
  %v633 = vpop.permute.xlu0 %632
  %635 = vset.pattern.permute.xlu0 1
  %636 = vperm.xlu0 %635, %v91
  %v637 = vpop.permute.xlu0 %636
  %639 = vset.pattern.permute.xlu0 1
  %640 = vperm.xlu0 %639, %v92
  %v641 = vpop.permute.xlu0 %640
  %643 = vset.pattern.permute.xlu0 1
  %644 = vperm.xlu0 %643, %v93
  %v645 = vpop.permute.xlu0 %644
  %647 = vset.pattern.permute.xlu0 1
  %648 = vperm.xlu0 %647, %v94
  %v649 = vpop.permute.xlu0 %648
  %651 = vset.pattern.permute.xlu0 1
  %652 = vperm.xlu0 %651, %v95
  %v653 = vpop.permute.xlu0 %652
  %655 = vset.pattern.permute.xlu0 1
  %656 = vperm.xlu0 %655, %v96
  %v657 = vpop.permute.xlu0 %656
  %659 = vset.pattern.permute.xlu0 1
  %660 = vperm.xlu0 %659, %v97
  %v661 = vpop.permute.xlu0 %660
  %663 = vset.pattern.permute.xlu0 1
  %664 = vperm.xlu0 %663, %v98
  %v665 = vpop.permute.xlu0 %664
  %667 = vset.pattern.permute.xlu0 1
  %668 = vperm.xlu0 %667, %v99
  %v669 = vpop.permute.xlu0 %668
  %671 = vset.pattern.permute.xlu0 1
  %672 = vperm.xlu0 %671, %v100
  %v673 = vpop.permute.xlu0 %672
  %675 = vset.pattern.permute.xlu0 1
  %676 = vperm.xlu0 %675, %v101
  %v677 = vpop.permute.xlu0 %676
  %679 = vset.pattern.permute.xlu0 1
  %680 = vperm.xlu0 %679, %v102
  %v681 = vpop.permute.xlu0 %680
  %683 = vset.pattern.permute.xlu0 1
  %684 = vperm.xlu0 %683, %v103
  %v685 = vpop.permute.xlu0 %684
  %687 = vset.pattern.permute.xlu0 1
  %688 = vperm.xlu0 %687, %v104
  %v689 = vpop.permute.xlu0 %688
  %691 = vset.pattern.permute.xlu0 1
  %692 = vperm.xlu0 %691, %v105
  %v693 = vpop.permute.xlu0 %692
  %695 = vset.pattern.permute.xlu0 1
  %696 = vperm.xlu0 %695, %v106
  %v697 = vpop.permute.xlu0 %696
  %699 = vset.pattern.permute.xlu0 1
  %700 = vperm.xlu0 %699, %v107
  %v701 = vpop.permute.xlu0 %700
  %703 = vset.pattern.permute.xlu0 1
  %704 = vperm.xlu0 %703, %v108
  %v705 = vpop.permute.xlu0 %704
  %707 = vset.pattern.permute.xlu0 1
  %708 = vperm.xlu0 %707, %v109
  %v709 = vpop.permute.xlu0 %708
  %711 = vset.pattern.permute.xlu0 1
  %712 = vperm.xlu0 %711, %v110
  %v713 = vpop.permute.xlu0 %712
  %715 = vset.pattern.permute.xlu0 1
  %716 = vperm.xlu0 %715, %v111
  %v717 = vpop.permute.xlu0 %716
  %719 = vset.pattern.permute.xlu0 1
  %720 = vperm.xlu0 %719, %v112
  %v721 = vpop.permute.xlu0 %720
  %723 = vset.pattern.permute.xlu0 1
  %724 = vperm.xlu0 %723, %v113
  %v725 = vpop.permute.xlu0 %724
  %727 = vset.pattern.permute.xlu0 1
  %728 = vperm.xlu0 %727, %v114
  %v729 = vpop.permute.xlu0 %728
  %731 = vset.pattern.permute.xlu0 1
  %732 = vperm.xlu0 %731, %v115
  %v733 = vpop.permute.xlu0 %732
  %735 = vset.pattern.permute.xlu0 1
  %736 = vperm.xlu0 %735, %v116
  %v737 = vpop.permute.xlu0 %736
  %739 = vset.pattern.permute.xlu0 1
  %740 = vperm.xlu0 %739, %v117
  %v741 = vpop.permute.xlu0 %740
  %743 = vset.pattern.permute.xlu0 1
  %744 = vperm.xlu0 %743, %v118
  %v745 = vpop.permute.xlu0 %744
  %747 = vset.pattern.permute.xlu0 1
  %748 = vperm.xlu0 %747, %v119
  %v749 = vpop.permute.xlu0 %748
  %751 = vset.pattern.permute.xlu0 1
  %752 = vperm.xlu0 %751, %v120
  %v753 = vpop.permute.xlu0 %752
  %755 = vset.pattern.permute.xlu0 1
  %756 = vperm.xlu0 %755, %v121
  %v757 = vpop.permute.xlu0 %756
  %759 = vset.pattern.permute.xlu0 1
  %760 = vperm.xlu0 %759, %v122
  %v761 = vpop.permute.xlu0 %760
  %763 = vset.pattern.permute.xlu0 1
  %764 = vperm.xlu0 %763, %v123
  %v765 = vpop.permute.xlu0 %764
  %v767 = vperm.slane %v510, 0
  %v768 = vmul.f32 %v513, %v767
  %v769 = vmul.f32 %v517, %v767
  %v770 = vmul.f32 %v521, %v767
  %v771 = vmul.f32 %v525, %v767
  %v772 = vmul.f32 %v529, %v767
  %v773 = vmul.f32 %v533, %v767
  %v774 = vmul.f32 %v537, %v767
  %v775 = vmul.f32 %v541, %v767
  %v776 = vmul.f32 %v545, %v767
  %v777 = vmul.f32 %v549, %v767
  %v778 = vmul.f32 %v553, %v767
  %v779 = vmul.f32 %v557, %v767
  %v780 = vmul.f32 %v561, %v767
  %v781 = vmul.f32 %v565, %v767
  %v782 = vmul.f32 %v569, %v767
  %v783 = vmul.f32 %v573, %v767
  %v784 = vmul.f32 %v577, %v767
  %v785 = vmul.f32 %v581, %v767
  %v786 = vmul.f32 %v585, %v767
  %v787 = vmul.f32 %v589, %v767
  %v788 = vmul.f32 %v593, %v767
  %v789 = vmul.f32 %v597, %v767
  %v790 = vmul.f32 %v601, %v767
  %v791 = vmul.f32 %v605, %v767
  %v792 = vmul.f32 %v609, %v767
  %v793 = vmul.f32 %v613, %v767
  %v794 = vmul.f32 %v617, %v767
  %v795 = vmul.f32 %v621, %v767
  %v796 = vmul.f32 %v625, %v767
  %v797 = vmul.f32 %v629, %v767
  %v798 = vmul.f32 %v633, %v767
  %v799 = vmul.f32 %v637, %v767
  %v800 = vmul.f32 %v641, %v767
  %v801 = vmul.f32 %v645, %v767
  %v802 = vmul.f32 %v649, %v767
  %v803 = vmul.f32 %v653, %v767
  %v804 = vmul.f32 %v657, %v767
  %v805 = vmul.f32 %v661, %v767
  %v806 = vmul.f32 %v665, %v767
  %v807 = vmul.f32 %v669, %v767
  %v808 = vmul.f32 %v673, %v767
  %v809 = vmul.f32 %v677, %v767
  %v810 = vmul.f32 %v681, %v767
  %v811 = vmul.f32 %v685, %v767
  %v812 = vmul.f32 %v689, %v767
  %v813 = vmul.f32 %v693, %v767
  %v814 = vmul.f32 %v697, %v767
  %v815 = vmul.f32 %v701, %v767
  %v816 = vmul.f32 %v705, %v767
  %v817 = vmul.f32 %v709, %v767
  %v818 = vmul.f32 %v713, %v767
  %v819 = vmul.f32 %v717, %v767
  %v820 = vmul.f32 %v721, %v767
  %v821 = vmul.f32 %v725, %v767
  %v822 = vmul.f32 %v729, %v767
  %v823 = vmul.f32 %v733, %v767
  %v824 = vmul.f32 %v737, %v767
  %v825 = vmul.f32 %v741, %v767
  %v826 = vmul.f32 %v745, %v767
  %v827 = vmul.f32 %v749, %v767
  %v828 = vmul.f32 %v753, %v767
  %v829 = vmul.f32 %v757, %v767
  %v830 = vmul.f32 %v761, %v767
  %v831 = vmul.f32 %v765, %v767
  %v832 = vadd.f32 %v446, %v768
  %v833 = vadd.f32 %v447, %v769
  %v834 = vadd.f32 %v448, %v770
  %v835 = vadd.f32 %v449, %v771
  %v836 = vadd.f32 %v450, %v772
  %v837 = vadd.f32 %v451, %v773
  %v838 = vadd.f32 %v452, %v774
  %v839 = vadd.f32 %v453, %v775
  %v840 = vadd.f32 %v454, %v776
  %v841 = vadd.f32 %v455, %v777
  %v842 = vadd.f32 %v456, %v778
  %v843 = vadd.f32 %v457, %v779
  %v844 = vadd.f32 %v458, %v780
  %v845 = vadd.f32 %v459, %v781
  %v846 = vadd.f32 %v460, %v782
  %v847 = vadd.f32 %v461, %v783
  %v848 = vadd.f32 %v462, %v784
  %v849 = vadd.f32 %v463, %v785
  %v850 = vadd.f32 %v464, %v786
  %v851 = vadd.f32 %v465, %v787
  %v852 = vadd.f32 %v466, %v788
  %v853 = vadd.f32 %v467, %v789
  %v854 = vadd.f32 %v468, %v790
  %v855 = vadd.f32 %v469, %v791
  %v856 = vadd.f32 %v470, %v792
  %v857 = vadd.f32 %v471, %v793
  %v858 = vadd.f32 %v472, %v794
  %v859 = vadd.f32 %v473, %v795
  %v860 = vadd.f32 %v474, %v796
  %v861 = vadd.f32 %v475, %v797
  %v862 = vadd.f32 %v476, %v798
  %v863 = vadd.f32 %v477, %v799
  %v864 = vadd.f32 %v478, %v800
  %v865 = vadd.f32 %v479, %v801
  %v866 = vadd.f32 %v480, %v802
  %v867 = vadd.f32 %v481, %v803
  %v868 = vadd.f32 %v482, %v804
  %v869 = vadd.f32 %v483, %v805
  %v870 = vadd.f32 %v484, %v806
  %v871 = vadd.f32 %v485, %v807
  %v872 = vadd.f32 %v486, %v808
  %v873 = vadd.f32 %v487, %v809
  %v874 = vadd.f32 %v488, %v810
  %v875 = vadd.f32 %v489, %v811
  %v876 = vadd.f32 %v490, %v812
  %v877 = vadd.f32 %v491, %v813
  %v878 = vadd.f32 %v492, %v814
  %v879 = vadd.f32 %v493, %v815
  %v880 = vadd.f32 %v494, %v816
  %v881 = vadd.f32 %v495, %v817
  %v882 = vadd.f32 %v496, %v818
  %v883 = vadd.f32 %v497, %v819
  %v884 = vadd.f32 %v498, %v820
  %v885 = vadd.f32 %v499, %v821
  %v886 = vadd.f32 %v500, %v822
  %v887 = vadd.f32 %v501, %v823
  %v888 = vadd.f32 %v502, %v824
  %v889 = vadd.f32 %v503, %v825
  %v890 = vadd.f32 %v504, %v826
  %v891 = vadd.f32 %v505, %v827
  %v892 = vadd.f32 %v506, %v828
  %v893 = vadd.f32 %v507, %v829
  %v894 = vadd.f32 %v508, %v830
  %v895 = vadd.f32 %v509, %v831
  %v896 = vld [vmem:[%s5 + $0x2] sm:$0x1]
  %897 = vset.pattern.permute.xlu0 2
  %898 = vperm.xlu0 %897, %v60
  %v899 = vpop.permute.xlu0 %898
  %901 = vset.pattern.permute.xlu0 2
  %902 = vperm.xlu0 %901, %v61
  %v903 = vpop.permute.xlu0 %902
  %905 = vset.pattern.permute.xlu0 2
  %906 = vperm.xlu0 %905, %v62
  %v907 = vpop.permute.xlu0 %906
  %909 = vset.pattern.permute.xlu0 2
  %910 = vperm.xlu0 %909, %v63
  %v911 = vpop.permute.xlu0 %910
  %913 = vset.pattern.permute.xlu0 2
  %914 = vperm.xlu0 %913, %v64
  %v915 = vpop.permute.xlu0 %914
  %917 = vset.pattern.permute.xlu0 2
  %918 = vperm.xlu0 %917, %v65
  %v919 = vpop.permute.xlu0 %918
  %921 = vset.pattern.permute.xlu0 2
  %922 = vperm.xlu0 %921, %v66
  %v923 = vpop.permute.xlu0 %922
  %925 = vset.pattern.permute.xlu0 2
  %926 = vperm.xlu0 %925, %v67
  %v927 = vpop.permute.xlu0 %926
  %929 = vset.pattern.permute.xlu0 2
  %930 = vperm.xlu0 %929, %v68
  %v931 = vpop.permute.xlu0 %930
  %933 = vset.pattern.permute.xlu0 2
  %934 = vperm.xlu0 %933, %v69
  %v935 = vpop.permute.xlu0 %934
  %937 = vset.pattern.permute.xlu0 2
  %938 = vperm.xlu0 %937, %v70
  %v939 = vpop.permute.xlu0 %938
  %941 = vset.pattern.permute.xlu0 2
  %942 = vperm.xlu0 %941, %v71
  %v943 = vpop.permute.xlu0 %942
  %945 = vset.pattern.permute.xlu0 2
  %946 = vperm.xlu0 %945, %v72
  %v947 = vpop.permute.xlu0 %946
  %949 = vset.pattern.permute.xlu0 2
  %950 = vperm.xlu0 %949, %v73
  %v951 = vpop.permute.xlu0 %950
  %953 = vset.pattern.permute.xlu0 2
  %954 = vperm.xlu0 %953, %v74
  %v955 = vpop.permute.xlu0 %954
  %957 = vset.pattern.permute.xlu0 2
  %958 = vperm.xlu0 %957, %v75
  %v959 = vpop.permute.xlu0 %958
  %961 = vset.pattern.permute.xlu0 2
  %962 = vperm.xlu0 %961, %v76
  %v963 = vpop.permute.xlu0 %962
  %965 = vset.pattern.permute.xlu0 2
  %966 = vperm.xlu0 %965, %v77
  %v967 = vpop.permute.xlu0 %966
  %969 = vset.pattern.permute.xlu0 2
  %970 = vperm.xlu0 %969, %v78
  %v971 = vpop.permute.xlu0 %970
  %973 = vset.pattern.permute.xlu0 2
  %974 = vperm.xlu0 %973, %v79
  %v975 = vpop.permute.xlu0 %974
  %977 = vset.pattern.permute.xlu0 2
  %978 = vperm.xlu0 %977, %v80
  %v979 = vpop.permute.xlu0 %978
  %981 = vset.pattern.permute.xlu0 2
  %982 = vperm.xlu0 %981, %v81
  %v983 = vpop.permute.xlu0 %982
  %985 = vset.pattern.permute.xlu0 2
  %986 = vperm.xlu0 %985, %v82
  %v987 = vpop.permute.xlu0 %986
  %989 = vset.pattern.permute.xlu0 2
  %990 = vperm.xlu0 %989, %v83
  %v991 = vpop.permute.xlu0 %990
  %993 = vset.pattern.permute.xlu0 2
  %994 = vperm.xlu0 %993, %v84
  %v995 = vpop.permute.xlu0 %994
  %997 = vset.pattern.permute.xlu0 2
  %998 = vperm.xlu0 %997, %v85
  %v999 = vpop.permute.xlu0 %998
  %1001 = vset.pattern.permute.xlu0 2
  %1002 = vperm.xlu0 %1001, %v86
  %v1003 = vpop.permute.xlu0 %1002
  %1005 = vset.pattern.permute.xlu0 2
  %1006 = vperm.xlu0 %1005, %v87
  %v1007 = vpop.permute.xlu0 %1006
  %1009 = vset.pattern.permute.xlu0 2
  %1010 = vperm.xlu0 %1009, %v88
  %v1011 = vpop.permute.xlu0 %1010
  %1013 = vset.pattern.permute.xlu0 2
  %1014 = vperm.xlu0 %1013, %v89
  %v1015 = vpop.permute.xlu0 %1014
  %1017 = vset.pattern.permute.xlu0 2
  %1018 = vperm.xlu0 %1017, %v90
  %v1019 = vpop.permute.xlu0 %1018
  %1021 = vset.pattern.permute.xlu0 2
  %1022 = vperm.xlu0 %1021, %v91
  %v1023 = vpop.permute.xlu0 %1022
  %1025 = vset.pattern.permute.xlu0 2
  %1026 = vperm.xlu0 %1025, %v92
  %v1027 = vpop.permute.xlu0 %1026
  %1029 = vset.pattern.permute.xlu0 2
  %1030 = vperm.xlu0 %1029, %v93
  %v1031 = vpop.permute.xlu0 %1030
  %1033 = vset.pattern.permute.xlu0 2
  %1034 = vperm.xlu0 %1033, %v94
  %v1035 = vpop.permute.xlu0 %1034
  %1037 = vset.pattern.permute.xlu0 2
  %1038 = vperm.xlu0 %1037, %v95
  %v1039 = vpop.permute.xlu0 %1038
  %1041 = vset.pattern.permute.xlu0 2
  %1042 = vperm.xlu0 %1041, %v96
  %v1043 = vpop.permute.xlu0 %1042
  %1045 = vset.pattern.permute.xlu0 2
  %1046 = vperm.xlu0 %1045, %v97
  %v1047 = vpop.permute.xlu0 %1046
  %1049 = vset.pattern.permute.xlu0 2
  %1050 = vperm.xlu0 %1049, %v98
  %v1051 = vpop.permute.xlu0 %1050
  %1053 = vset.pattern.permute.xlu0 2
  %1054 = vperm.xlu0 %1053, %v99
  %v1055 = vpop.permute.xlu0 %1054
  %1057 = vset.pattern.permute.xlu0 2
  %1058 = vperm.xlu0 %1057, %v100
  %v1059 = vpop.permute.xlu0 %1058
  %1061 = vset.pattern.permute.xlu0 2
  %1062 = vperm.xlu0 %1061, %v101
  %v1063 = vpop.permute.xlu0 %1062
  %1065 = vset.pattern.permute.xlu0 2
  %1066 = vperm.xlu0 %1065, %v102
  %v1067 = vpop.permute.xlu0 %1066
  %1069 = vset.pattern.permute.xlu0 2
  %1070 = vperm.xlu0 %1069, %v103
  %v1071 = vpop.permute.xlu0 %1070
  %1073 = vset.pattern.permute.xlu0 2
  %1074 = vperm.xlu0 %1073, %v104
  %v1075 = vpop.permute.xlu0 %1074
  %1077 = vset.pattern.permute.xlu0 2
  %1078 = vperm.xlu0 %1077, %v105
  %v1079 = vpop.permute.xlu0 %1078
  %1081 = vset.pattern.permute.xlu0 2
  %1082 = vperm.xlu0 %1081, %v106
  %v1083 = vpop.permute.xlu0 %1082
  %1085 = vset.pattern.permute.xlu0 2
  %1086 = vperm.xlu0 %1085, %v107
  %v1087 = vpop.permute.xlu0 %1086
  %1089 = vset.pattern.permute.xlu0 2
  %1090 = vperm.xlu0 %1089, %v108
  %v1091 = vpop.permute.xlu0 %1090
  %1093 = vset.pattern.permute.xlu0 2
  %1094 = vperm.xlu0 %1093, %v109
  %v1095 = vpop.permute.xlu0 %1094
  %1097 = vset.pattern.permute.xlu0 2
  %1098 = vperm.xlu0 %1097, %v110
  %v1099 = vpop.permute.xlu0 %1098
  %1101 = vset.pattern.permute.xlu0 2
  %1102 = vperm.xlu0 %1101, %v111
  %v1103 = vpop.permute.xlu0 %1102
  %1105 = vset.pattern.permute.xlu0 2
  %1106 = vperm.xlu0 %1105, %v112
  %v1107 = vpop.permute.xlu0 %1106
  %1109 = vset.pattern.permute.xlu0 2
  %1110 = vperm.xlu0 %1109, %v113
  %v1111 = vpop.permute.xlu0 %1110
  %1113 = vset.pattern.permute.xlu0 2
  %1114 = vperm.xlu0 %1113, %v114
  %v1115 = vpop.permute.xlu0 %1114
  %1117 = vset.pattern.permute.xlu0 2
  %1118 = vperm.xlu0 %1117, %v115
  %v1119 = vpop.permute.xlu0 %1118
  %1121 = vset.pattern.permute.xlu0 2
  %1122 = vperm.xlu0 %1121, %v116
  %v1123 = vpop.permute.xlu0 %1122
  %1125 = vset.pattern.permute.xlu0 2
  %1126 = vperm.xlu0 %1125, %v117
  %v1127 = vpop.permute.xlu0 %1126
  %1129 = vset.pattern.permute.xlu0 2
  %1130 = vperm.xlu0 %1129, %v118
  %v1131 = vpop.permute.xlu0 %1130
  %1133 = vset.pattern.permute.xlu0 2
  %1134 = vperm.xlu0 %1133, %v119
  %v1135 = vpop.permute.xlu0 %1134
  %1137 = vset.pattern.permute.xlu0 2
  %1138 = vperm.xlu0 %1137, %v120
  %v1139 = vpop.permute.xlu0 %1138
  %1141 = vset.pattern.permute.xlu0 2
  %1142 = vperm.xlu0 %1141, %v121
  %v1143 = vpop.permute.xlu0 %1142
  %1145 = vset.pattern.permute.xlu0 2
  %1146 = vperm.xlu0 %1145, %v122
  %v1147 = vpop.permute.xlu0 %1146
  %1149 = vset.pattern.permute.xlu0 2
  %1150 = vperm.xlu0 %1149, %v123
  %v1151 = vpop.permute.xlu0 %1150
  %v1153 = vperm.slane %v896, 0
  %v1154 = vmul.f32 %v899, %v1153
  %v1155 = vmul.f32 %v903, %v1153
  %v1156 = vmul.f32 %v907, %v1153
  %v1157 = vmul.f32 %v911, %v1153
  %v1158 = vmul.f32 %v915, %v1153
  %v1159 = vmul.f32 %v919, %v1153
  %v1160 = vmul.f32 %v923, %v1153
  %v1161 = vmul.f32 %v927, %v1153
  %v1162 = vmul.f32 %v931, %v1153
  %v1163 = vmul.f32 %v935, %v1153
  %v1164 = vmul.f32 %v939, %v1153
  %v1165 = vmul.f32 %v943, %v1153
  %v1166 = vmul.f32 %v947, %v1153
  %v1167 = vmul.f32 %v951, %v1153
  %v1168 = vmul.f32 %v955, %v1153
  %v1169 = vmul.f32 %v959, %v1153
  %v1170 = vmul.f32 %v963, %v1153
  %v1171 = vmul.f32 %v967, %v1153
  %v1172 = vmul.f32 %v971, %v1153
  %v1173 = vmul.f32 %v975, %v1153
  %v1174 = vmul.f32 %v979, %v1153
  %v1175 = vmul.f32 %v983, %v1153
  %v1176 = vmul.f32 %v987, %v1153
  %v1177 = vmul.f32 %v991, %v1153
  %v1178 = vmul.f32 %v995, %v1153
  %v1179 = vmul.f32 %v999, %v1153
  %v1180 = vmul.f32 %v1003, %v1153
  %v1181 = vmul.f32 %v1007, %v1153
  %v1182 = vmul.f32 %v1011, %v1153
  %v1183 = vmul.f32 %v1015, %v1153
  %v1184 = vmul.f32 %v1019, %v1153
  %v1185 = vmul.f32 %v1023, %v1153
  %v1186 = vmul.f32 %v1027, %v1153
  %v1187 = vmul.f32 %v1031, %v1153
  %v1188 = vmul.f32 %v1035, %v1153
  %v1189 = vmul.f32 %v1039, %v1153
  %v1190 = vmul.f32 %v1043, %v1153
  %v1191 = vmul.f32 %v1047, %v1153
  %v1192 = vmul.f32 %v1051, %v1153
  %v1193 = vmul.f32 %v1055, %v1153
  %v1194 = vmul.f32 %v1059, %v1153
  %v1195 = vmul.f32 %v1063, %v1153
  %v1196 = vmul.f32 %v1067, %v1153
  %v1197 = vmul.f32 %v1071, %v1153
  %v1198 = vmul.f32 %v1075, %v1153
  %v1199 = vmul.f32 %v1079, %v1153
  %v1200 = vmul.f32 %v1083, %v1153
  %v1201 = vmul.f32 %v1087, %v1153
  %v1202 = vmul.f32 %v1091, %v1153
  %v1203 = vmul.f32 %v1095, %v1153
  %v1204 = vmul.f32 %v1099, %v1153
  %v1205 = vmul.f32 %v1103, %v1153
  %v1206 = vmul.f32 %v1107, %v1153
  %v1207 = vmul.f32 %v1111, %v1153
  %v1208 = vmul.f32 %v1115, %v1153
  %v1209 = vmul.f32 %v1119, %v1153
  %v1210 = vmul.f32 %v1123, %v1153
  %v1211 = vmul.f32 %v1127, %v1153
  %v1212 = vmul.f32 %v1131, %v1153
  %v1213 = vmul.f32 %v1135, %v1153
  %v1214 = vmul.f32 %v1139, %v1153
  %v1215 = vmul.f32 %v1143, %v1153
  %v1216 = vmul.f32 %v1147, %v1153
  %v1217 = vmul.f32 %v1151, %v1153
  %v1218 = vadd.f32 %v832, %v1154
  %v1219 = vadd.f32 %v833, %v1155
  %v1220 = vadd.f32 %v834, %v1156
  %v1221 = vadd.f32 %v835, %v1157
  %v1222 = vadd.f32 %v836, %v1158
  %v1223 = vadd.f32 %v837, %v1159
  %v1224 = vadd.f32 %v838, %v1160
  %v1225 = vadd.f32 %v839, %v1161
  %v1226 = vadd.f32 %v840, %v1162
  %v1227 = vadd.f32 %v841, %v1163
  %v1228 = vadd.f32 %v842, %v1164
  %v1229 = vadd.f32 %v843, %v1165
  %v1230 = vadd.f32 %v844, %v1166
  %v1231 = vadd.f32 %v845, %v1167
  %v1232 = vadd.f32 %v846, %v1168
  %v1233 = vadd.f32 %v847, %v1169
  %v1234 = vadd.f32 %v848, %v1170
  %v1235 = vadd.f32 %v849, %v1171
  %v1236 = vadd.f32 %v850, %v1172
  %v1237 = vadd.f32 %v851, %v1173
  %v1238 = vadd.f32 %v852, %v1174
  %v1239 = vadd.f32 %v853, %v1175
  %v1240 = vadd.f32 %v854, %v1176
  %v1241 = vadd.f32 %v855, %v1177
  %v1242 = vadd.f32 %v856, %v1178
  %v1243 = vadd.f32 %v857, %v1179
  %v1244 = vadd.f32 %v858, %v1180
  %v1245 = vadd.f32 %v859, %v1181
  %v1246 = vadd.f32 %v860, %v1182
  %v1247 = vadd.f32 %v861, %v1183
  %v1248 = vadd.f32 %v862, %v1184
  %v1249 = vadd.f32 %v863, %v1185
  %v1250 = vadd.f32 %v864, %v1186
  %v1251 = vadd.f32 %v865, %v1187
  %v1252 = vadd.f32 %v866, %v1188
  %v1253 = vadd.f32 %v867, %v1189
  %v1254 = vadd.f32 %v868, %v1190
  %v1255 = vadd.f32 %v869, %v1191
  %v1256 = vadd.f32 %v870, %v1192
  %v1257 = vadd.f32 %v871, %v1193
  %v1258 = vadd.f32 %v872, %v1194
  %v1259 = vadd.f32 %v873, %v1195
  %v1260 = vadd.f32 %v874, %v1196
  %v1261 = vadd.f32 %v875, %v1197
  %v1262 = vadd.f32 %v876, %v1198
  %v1263 = vadd.f32 %v877, %v1199
  %v1264 = vadd.f32 %v878, %v1200
  %v1265 = vadd.f32 %v879, %v1201
  %v1266 = vadd.f32 %v880, %v1202
  %v1267 = vadd.f32 %v881, %v1203
  %v1268 = vadd.f32 %v882, %v1204
  %v1269 = vadd.f32 %v883, %v1205
  %v1270 = vadd.f32 %v884, %v1206
  %v1271 = vadd.f32 %v885, %v1207
  %v1272 = vadd.f32 %v886, %v1208
  %v1273 = vadd.f32 %v887, %v1209
  %v1274 = vadd.f32 %v888, %v1210
  %v1275 = vadd.f32 %v889, %v1211
  %v1276 = vadd.f32 %v890, %v1212
  %v1277 = vadd.f32 %v891, %v1213
  %v1278 = vadd.f32 %v892, %v1214
  %v1279 = vadd.f32 %v893, %v1215
  %v1280 = vadd.f32 %v894, %v1216
  %v1281 = vadd.f32 %v895, %v1217
  %v1282 = vld [vmem:[%s6] sm:$0x1]
  %v1284 = vperm.slane %v1282, 0
  %v1286 = vmul.f32 %v1218, %v1284
  %v1287 = vmul.f32 %v1219, %v1284
  %v1288 = vmul.f32 %v1220, %v1284
  %v1289 = vmul.f32 %v1221, %v1284
  %v1290 = vmul.f32 %v1222, %v1284
  %v1291 = vmul.f32 %v1223, %v1284
  %v1292 = vmul.f32 %v1224, %v1284
  %v1293 = vmul.f32 %v1225, %v1284
  %v1294 = vmul.f32 %v1226, %v1284
  %v1295 = vmul.f32 %v1227, %v1284
  %v1296 = vmul.f32 %v1228, %v1284
  %v1297 = vmul.f32 %v1229, %v1284
  %v1298 = vmul.f32 %v1230, %v1284
  %v1299 = vmul.f32 %v1231, %v1284
  %v1300 = vmul.f32 %v1232, %v1284
  %v1301 = vmul.f32 %v1233, %v1284
  %v1302 = vmul.f32 %v1234, %v1284
  %v1303 = vmul.f32 %v1235, %v1284
  %v1304 = vmul.f32 %v1236, %v1284
  %v1305 = vmul.f32 %v1237, %v1284
  %v1306 = vmul.f32 %v1238, %v1284
  %v1307 = vmul.f32 %v1239, %v1284
  %v1308 = vmul.f32 %v1240, %v1284
  %v1309 = vmul.f32 %v1241, %v1284
  %v1310 = vmul.f32 %v1242, %v1284
  %v1311 = vmul.f32 %v1243, %v1284
  %v1312 = vmul.f32 %v1244, %v1284
  %v1313 = vmul.f32 %v1245, %v1284
  %v1314 = vmul.f32 %v1246, %v1284
  %v1315 = vmul.f32 %v1247, %v1284
  %v1316 = vmul.f32 %v1248, %v1284
  %v1317 = vmul.f32 %v1249, %v1284
  %v1318 = vmul.f32 %v1250, %v1284
  %v1319 = vmul.f32 %v1251, %v1284
  %v1320 = vmul.f32 %v1252, %v1284
  %v1321 = vmul.f32 %v1253, %v1284
  %v1322 = vmul.f32 %v1254, %v1284
  %v1323 = vmul.f32 %v1255, %v1284
  %v1324 = vmul.f32 %v1256, %v1284
  %v1325 = vmul.f32 %v1257, %v1284
  %v1326 = vmul.f32 %v1258, %v1284
  %v1327 = vmul.f32 %v1259, %v1284
  %v1328 = vmul.f32 %v1260, %v1284
  %v1329 = vmul.f32 %v1261, %v1284
  %v1330 = vmul.f32 %v1262, %v1284
  %v1331 = vmul.f32 %v1263, %v1284
  %v1332 = vmul.f32 %v1264, %v1284
  %v1333 = vmul.f32 %v1265, %v1284
  %v1334 = vmul.f32 %v1266, %v1284
  %v1335 = vmul.f32 %v1267, %v1284
  %v1336 = vmul.f32 %v1268, %v1284
  %v1337 = vmul.f32 %v1269, %v1284
  %v1338 = vmul.f32 %v1270, %v1284
  %v1339 = vmul.f32 %v1271, %v1284
  %v1340 = vmul.f32 %v1272, %v1284
  %v1341 = vmul.f32 %v1273, %v1284
  %v1342 = vmul.f32 %v1274, %v1284
  %v1343 = vmul.f32 %v1275, %v1284
  %v1344 = vmul.f32 %v1276, %v1284
  %v1345 = vmul.f32 %v1277, %v1284
  %v1346 = vmul.f32 %v1278, %v1284
  %v1347 = vmul.f32 %v1279, %v1284
  %v1348 = vmul.f32 %v1280, %v1284
  %v1349 = vmul.f32 %v1281, %v1284
  %v1350 = vld [vmem:[%s7] sm:$0x1]
  %v1352 = vperm.slane %v1350, 0
  %v1354 = vadd.f32 %v1286, %v1352
  %v1355 = vadd.f32 %v1287, %v1352
  %v1356 = vadd.f32 %v1288, %v1352
  %v1357 = vadd.f32 %v1289, %v1352
  %v1358 = vadd.f32 %v1290, %v1352
  %v1359 = vadd.f32 %v1291, %v1352
  %v1360 = vadd.f32 %v1292, %v1352
  %v1361 = vadd.f32 %v1293, %v1352
  %v1362 = vadd.f32 %v1294, %v1352
  %v1363 = vadd.f32 %v1295, %v1352
  %v1364 = vadd.f32 %v1296, %v1352
  %v1365 = vadd.f32 %v1297, %v1352
  %v1366 = vadd.f32 %v1298, %v1352
  %v1367 = vadd.f32 %v1299, %v1352
  %v1368 = vadd.f32 %v1300, %v1352
  %v1369 = vadd.f32 %v1301, %v1352
  %v1370 = vadd.f32 %v1302, %v1352
  %v1371 = vadd.f32 %v1303, %v1352
  %v1372 = vadd.f32 %v1304, %v1352
  %v1373 = vadd.f32 %v1305, %v1352
  %v1374 = vadd.f32 %v1306, %v1352
  %v1375 = vadd.f32 %v1307, %v1352
  %v1376 = vadd.f32 %v1308, %v1352
  %v1377 = vadd.f32 %v1309, %v1352
  %v1378 = vadd.f32 %v1310, %v1352
  %v1379 = vadd.f32 %v1311, %v1352
  %v1380 = vadd.f32 %v1312, %v1352
  %v1381 = vadd.f32 %v1313, %v1352
  %v1382 = vadd.f32 %v1314, %v1352
  %v1383 = vadd.f32 %v1315, %v1352
  %v1384 = vadd.f32 %v1316, %v1352
  %v1385 = vadd.f32 %v1317, %v1352
  %v1386 = vadd.f32 %v1318, %v1352
  %v1387 = vadd.f32 %v1319, %v1352
  %v1388 = vadd.f32 %v1320, %v1352
  %v1389 = vadd.f32 %v1321, %v1352
  %v1390 = vadd.f32 %v1322, %v1352
  %v1391 = vadd.f32 %v1323, %v1352
  %v1392 = vadd.f32 %v1324, %v1352
  %v1393 = vadd.f32 %v1325, %v1352
  %v1394 = vadd.f32 %v1326, %v1352
  %v1395 = vadd.f32 %v1327, %v1352
  %v1396 = vadd.f32 %v1328, %v1352
  %v1397 = vadd.f32 %v1329, %v1352
  %v1398 = vadd.f32 %v1330, %v1352
  %v1399 = vadd.f32 %v1331, %v1352
  %v1400 = vadd.f32 %v1332, %v1352
  %v1401 = vadd.f32 %v1333, %v1352
  %v1402 = vadd.f32 %v1334, %v1352
  %v1403 = vadd.f32 %v1335, %v1352
  %v1404 = vadd.f32 %v1336, %v1352
  %v1405 = vadd.f32 %v1337, %v1352
  %v1406 = vadd.f32 %v1338, %v1352
  %v1407 = vadd.f32 %v1339, %v1352
  %v1408 = vadd.f32 %v1340, %v1352
  %v1409 = vadd.f32 %v1341, %v1352
  %v1410 = vadd.f32 %v1342, %v1352
  %v1411 = vadd.f32 %v1343, %v1352
  %v1412 = vadd.f32 %v1344, %v1352
  %v1413 = vadd.f32 %v1345, %v1352
  %v1414 = vadd.f32 %v1346, %v1352
  %v1415 = vadd.f32 %v1347, %v1352
  %v1416 = vadd.f32 %v1348, %v1352
  %v1417 = vadd.f32 %v1349, %v1352
  %v1418 = vmax.f32 %v1354, 0.0
  %v1419 = vmax.f32 %v1355, 0.0
  %v1420 = vmax.f32 %v1356, 0.0
  %v1421 = vmax.f32 %v1357, 0.0
  %v1422 = vmax.f32 %v1358, 0.0
  %v1423 = vmax.f32 %v1359, 0.0
  %v1424 = vmax.f32 %v1360, 0.0
  %v1425 = vmax.f32 %v1361, 0.0
  %v1426 = vmax.f32 %v1362, 0.0
  %v1427 = vmax.f32 %v1363, 0.0
  %v1428 = vmax.f32 %v1364, 0.0
  %v1429 = vmax.f32 %v1365, 0.0
  %v1430 = vmax.f32 %v1366, 0.0
  %v1431 = vmax.f32 %v1367, 0.0
  %v1432 = vmax.f32 %v1368, 0.0
  %v1433 = vmax.f32 %v1369, 0.0
  %v1434 = vmax.f32 %v1370, 0.0
  %v1435 = vmax.f32 %v1371, 0.0
  %v1436 = vmax.f32 %v1372, 0.0
  %v1437 = vmax.f32 %v1373, 0.0
  %v1438 = vmax.f32 %v1374, 0.0
  %v1439 = vmax.f32 %v1375, 0.0
  %v1440 = vmax.f32 %v1376, 0.0
  %v1441 = vmax.f32 %v1377, 0.0
  %v1442 = vmax.f32 %v1378, 0.0
  %v1443 = vmax.f32 %v1379, 0.0
  %v1444 = vmax.f32 %v1380, 0.0
  %v1445 = vmax.f32 %v1381, 0.0
  %v1446 = vmax.f32 %v1382, 0.0
  %v1447 = vmax.f32 %v1383, 0.0
  %v1448 = vmax.f32 %v1384, 0.0
  %v1449 = vmax.f32 %v1385, 0.0
  %v1450 = vmax.f32 %v1386, 0.0
  %v1451 = vmax.f32 %v1387, 0.0
  %v1452 = vmax.f32 %v1388, 0.0
  %v1453 = vmax.f32 %v1389, 0.0
  %v1454 = vmax.f32 %v1390, 0.0
  %v1455 = vmax.f32 %v1391, 0.0
  %v1456 = vmax.f32 %v1392, 0.0
  %v1457 = vmax.f32 %v1393, 0.0
  %v1458 = vmax.f32 %v1394, 0.0
  %v1459 = vmax.f32 %v1395, 0.0
  %v1460 = vmax.f32 %v1396, 0.0
  %v1461 = vmax.f32 %v1397, 0.0
  %v1462 = vmax.f32 %v1398, 0.0
  %v1463 = vmax.f32 %v1399, 0.0
  %v1464 = vmax.f32 %v1400, 0.0
  %v1465 = vmax.f32 %v1401, 0.0
  %v1466 = vmax.f32 %v1402, 0.0
  %v1467 = vmax.f32 %v1403, 0.0
  %v1468 = vmax.f32 %v1404, 0.0
  %v1469 = vmax.f32 %v1405, 0.0
  %v1470 = vmax.f32 %v1406, 0.0
  %v1471 = vmax.f32 %v1407, 0.0
  %v1472 = vmax.f32 %v1408, 0.0
  %v1473 = vmax.f32 %v1409, 0.0
  %v1474 = vmax.f32 %v1410, 0.0
  %v1475 = vmax.f32 %v1411, 0.0
  %v1476 = vmax.f32 %v1412, 0.0
  %v1477 = vmax.f32 %v1413, 0.0
  %v1478 = vmax.f32 %v1414, 0.0
  %v1479 = vmax.f32 %v1415, 0.0
  %v1480 = vmax.f32 %v1416, 0.0
  %v1481 = vmax.f32 %v1417, 0.0
  %v1482 = vpack.c.bf16 %v1419, %v1418
  %v1483 = vpack.c.bf16 %v1421, %v1420
  %v1484 = vpack.c.bf16 %v1423, %v1422
  %v1485 = vpack.c.bf16 %v1425, %v1424
  %v1486 = vpack.c.bf16 %v1427, %v1426
  %v1487 = vpack.c.bf16 %v1429, %v1428
  %v1488 = vpack.c.bf16 %v1431, %v1430
  %v1489 = vpack.c.bf16 %v1433, %v1432
  %v1490 = vpack.c.bf16 %v1435, %v1434
  %v1491 = vpack.c.bf16 %v1437, %v1436
  %v1492 = vpack.c.bf16 %v1439, %v1438
  %v1493 = vpack.c.bf16 %v1441, %v1440
  %v1494 = vpack.c.bf16 %v1443, %v1442
  %v1495 = vpack.c.bf16 %v1445, %v1444
  %v1496 = vpack.c.bf16 %v1447, %v1446
  %v1497 = vpack.c.bf16 %v1449, %v1448
  %v1498 = vpack.c.bf16 %v1451, %v1450
  %v1499 = vpack.c.bf16 %v1453, %v1452
  %v1500 = vpack.c.bf16 %v1455, %v1454
  %v1501 = vpack.c.bf16 %v1457, %v1456
  %v1502 = vpack.c.bf16 %v1459, %v1458
  %v1503 = vpack.c.bf16 %v1461, %v1460
  %v1504 = vpack.c.bf16 %v1463, %v1462
  %v1505 = vpack.c.bf16 %v1465, %v1464
  %v1506 = vpack.c.bf16 %v1467, %v1466
  %v1507 = vpack.c.bf16 %v1469, %v1468
  %v1508 = vpack.c.bf16 %v1471, %v1470
  %v1509 = vpack.c.bf16 %v1473, %v1472
  %v1510 = vpack.c.bf16 %v1475, %v1474
  %v1511 = vpack.c.bf16 %v1477, %v1476
  %v1512 = vpack.c.bf16 %v1479, %v1478
  %v1513 = vpack.c.bf16 %v1481, %v1480
  %v1514 = vld [vmem:[%s8] sm:$0xf]
  %v1515 = vld [vmem:[%s8 + $0x4] sm:$0xf]
  %v1516 = vld [vmem:[%s8 + $0x8] sm:$0xf]
  %v1517 = vld [vmem:[%s8 + $0xc] sm:$0xf]
  %v1518 = vld [vmem:[%s9] sm:$0x1]
  %v1520 = vperm.slane %v1518, 0
  %v1526 = vunpack.c.l.b16 %v1514
  %v1527 = vunpack.c.l.b16 %v1515
  %v1528 = vunpack.c.l.b16 %v1516
  %v1529 = vunpack.c.l.b16 %v1517
  %v1530 = vpack.c.b16 %v1527, %v1526
  %v1531 = vpack.c.b16 %v1529, %v1528
  %vm1534 = vcmask 261120
  %v1536 = vsel %vm1534, %v1482, 0
  %v1539 = vsel %vm1534, %v1483, 0
  %v1542 = vsel %vm1534, %v1484, 0
  %v1545 = vsel %vm1534, %v1485, 0
  %v1548 = vsel %vm1534, %v1486, 0
  %v1551 = vsel %vm1534, %v1487, 0
  %v1554 = vsel %vm1534, %v1488, 0
  %v1557 = vsel %vm1534, %v1489, 0
  %v1560 = vsel %vm1534, %v1490, 0
  %v1563 = vsel %vm1534, %v1491, 0
  %v1566 = vsel %vm1534, %v1492, 0
  %v1569 = vsel %vm1534, %v1493, 0
  %v1572 = vsel %vm1534, %v1494, 0
  %v1575 = vsel %vm1534, %v1495, 0
  %v1578 = vsel %vm1534, %v1496, 0
  %v1581 = vsel %vm1534, %v1497, 0
  %v1584 = vsel %vm1534, %v1498, 0
  %v1587 = vsel %vm1534, %v1499, 0
  %v1590 = vsel %vm1534, %v1500, 0
  %v1593 = vsel %vm1534, %v1501, 0
  %v1596 = vsel %vm1534, %v1502, 0
  %v1599 = vsel %vm1534, %v1503, 0
  %v1602 = vsel %vm1534, %v1504, 0
  %v1605 = vsel %vm1534, %v1505, 0
  %v1608 = vsel %vm1534, %v1506, 0
  %v1611 = vsel %vm1534, %v1507, 0
  %v1614 = vsel %vm1534, %v1508, 0
  %v1617 = vsel %vm1534, %v1509, 0
  %v1620 = vsel %vm1534, %v1510, 0
  %v1623 = vsel %vm1534, %v1511, 0
  %v1626 = vsel %vm1534, %v1512, 0
  %v1629 = vsel %vm1534, %v1513, 0
  %1631 = vmatpush.bf16.msra.mxu0 0
  %1632 = vmatpush.bf16.msra.mxu0 0
  %1633 = vmatpush.bf16.msra.mxu0 0
  %1634 = vmatpush.bf16.msra.mxu0 0
  %1635 = vmatpush.bf16.msra.mxu0 0
  %1636 = vmatpush.bf16.msra.mxu0 0
  %1637 = vmatpush.bf16.msra.mxu0 %v1531
  %1638 = vmatpush.bf16.msra.mxu0 %v1530
  %1639 = vmatmul.bf16.gmra.mxu0 %v1536
  %v1640 = vpop.f32.mrf.mxu0
  %v1641 = vadd.f32 %v1520, %v1640
  %v1642 = vpop.f32.mrf.mxu0
  %v1643 = vadd.f32 %v1520, %v1642
  %1644 = vmatmul.bf16.gmra.mxu0 %v1539
  %v1645 = vpop.f32.mrf.mxu0
  %v1646 = vadd.f32 %v1520, %v1645
  %v1647 = vpop.f32.mrf.mxu0
  %v1648 = vadd.f32 %v1520, %v1647
  %1649 = vmatmul.bf16.gmra.mxu0 %v1542
  %v1650 = vpop.f32.mrf.mxu0
  %v1651 = vadd.f32 %v1520, %v1650
  %v1652 = vpop.f32.mrf.mxu0
  %v1653 = vadd.f32 %v1520, %v1652
  %1654 = vmatmul.bf16.gmra.mxu0 %v1545
  %v1655 = vpop.f32.mrf.mxu0
  %v1656 = vadd.f32 %v1520, %v1655
  %v1657 = vpop.f32.mrf.mxu0
  %v1658 = vadd.f32 %v1520, %v1657
  %1659 = vmatmul.bf16.gmra.mxu0 %v1548
  %v1660 = vpop.f32.mrf.mxu0
  %v1661 = vadd.f32 %v1520, %v1660
  %v1662 = vpop.f32.mrf.mxu0
  %v1663 = vadd.f32 %v1520, %v1662
  %1664 = vmatmul.bf16.gmra.mxu0 %v1551
  %v1665 = vpop.f32.mrf.mxu0
  %v1666 = vadd.f32 %v1520, %v1665
  %v1667 = vpop.f32.mrf.mxu0
  %v1668 = vadd.f32 %v1520, %v1667
  %1669 = vmatmul.bf16.gmra.mxu0 %v1554
  %v1670 = vpop.f32.mrf.mxu0
  %v1671 = vadd.f32 %v1520, %v1670
  %v1672 = vpop.f32.mrf.mxu0
  %v1673 = vadd.f32 %v1520, %v1672
  %1674 = vmatmul.bf16.gmra.mxu0 %v1557
  %v1675 = vpop.f32.mrf.mxu0
  %v1676 = vadd.f32 %v1520, %v1675
  %v1677 = vpop.f32.mrf.mxu0
  %v1678 = vadd.f32 %v1520, %v1677
  %1679 = vmatmul.bf16.gmra.mxu0 %v1560
  %v1680 = vpop.f32.mrf.mxu0
  %v1681 = vadd.f32 %v1520, %v1680
  %v1682 = vpop.f32.mrf.mxu0
  %v1683 = vadd.f32 %v1520, %v1682
  %1684 = vmatmul.bf16.gmra.mxu0 %v1563
  %v1685 = vpop.f32.mrf.mxu0
  %v1686 = vadd.f32 %v1520, %v1685
  %v1687 = vpop.f32.mrf.mxu0
  %v1688 = vadd.f32 %v1520, %v1687
  %1689 = vmatmul.bf16.gmra.mxu0 %v1566
  %v1690 = vpop.f32.mrf.mxu0
  %v1691 = vadd.f32 %v1520, %v1690
  %v1692 = vpop.f32.mrf.mxu0
  %v1693 = vadd.f32 %v1520, %v1692
  %1694 = vmatmul.bf16.gmra.mxu0 %v1569
  %v1695 = vpop.f32.mrf.mxu0
  %v1696 = vadd.f32 %v1520, %v1695
  %v1697 = vpop.f32.mrf.mxu0
  %v1698 = vadd.f32 %v1520, %v1697
  %1699 = vmatmul.bf16.gmra.mxu0 %v1572
  %v1700 = vpop.f32.mrf.mxu0
  %v1701 = vadd.f32 %v1520, %v1700
  %v1702 = vpop.f32.mrf.mxu0
  %v1703 = vadd.f32 %v1520, %v1702
  %1704 = vmatmul.bf16.gmra.mxu0 %v1575
  %v1705 = vpop.f32.mrf.mxu0
  %v1706 = vadd.f32 %v1520, %v1705
  %v1707 = vpop.f32.mrf.mxu0
  %v1708 = vadd.f32 %v1520, %v1707
  %1709 = vmatmul.bf16.gmra.mxu0 %v1578
  %v1710 = vpop.f32.mrf.mxu0
  %v1711 = vadd.f32 %v1520, %v1710
  %v1712 = vpop.f32.mrf.mxu0
  %v1713 = vadd.f32 %v1520, %v1712
  %1714 = vmatmul.bf16.gmra.mxu0 %v1581
  %v1715 = vpop.f32.mrf.mxu0
  %v1716 = vadd.f32 %v1520, %v1715
  %v1717 = vpop.f32.mrf.mxu0
  %v1718 = vadd.f32 %v1520, %v1717
  %1719 = vmatmul.bf16.gmra.mxu0 %v1584
  %v1720 = vpop.f32.mrf.mxu0
  %v1721 = vadd.f32 %v1520, %v1720
  %v1722 = vpop.f32.mrf.mxu0
  %v1723 = vadd.f32 %v1520, %v1722
  %1724 = vmatmul.bf16.gmra.mxu0 %v1587
  %v1725 = vpop.f32.mrf.mxu0
  %v1726 = vadd.f32 %v1520, %v1725
  %v1727 = vpop.f32.mrf.mxu0
  %v1728 = vadd.f32 %v1520, %v1727
  %1729 = vmatmul.bf16.gmra.mxu0 %v1590
  %v1730 = vpop.f32.mrf.mxu0
  %v1731 = vadd.f32 %v1520, %v1730
  %v1732 = vpop.f32.mrf.mxu0
  %v1733 = vadd.f32 %v1520, %v1732
  %1734 = vmatmul.bf16.gmra.mxu0 %v1593
  %v1735 = vpop.f32.mrf.mxu0
  %v1736 = vadd.f32 %v1520, %v1735
  %v1737 = vpop.f32.mrf.mxu0
  %v1738 = vadd.f32 %v1520, %v1737
  %1739 = vmatmul.bf16.gmra.mxu0 %v1596
  %v1740 = vpop.f32.mrf.mxu0
  %v1741 = vadd.f32 %v1520, %v1740
  %v1742 = vpop.f32.mrf.mxu0
  %v1743 = vadd.f32 %v1520, %v1742
  %1744 = vmatmul.bf16.gmra.mxu0 %v1599
  %v1745 = vpop.f32.mrf.mxu0
  %v1746 = vadd.f32 %v1520, %v1745
  %v1747 = vpop.f32.mrf.mxu0
  %v1748 = vadd.f32 %v1520, %v1747
  %1749 = vmatmul.bf16.gmra.mxu0 %v1602
  %v1750 = vpop.f32.mrf.mxu0
  %v1751 = vadd.f32 %v1520, %v1750
  %v1752 = vpop.f32.mrf.mxu0
  %v1753 = vadd.f32 %v1520, %v1752
  %1754 = vmatmul.bf16.gmra.mxu0 %v1605
  %v1755 = vpop.f32.mrf.mxu0
  %v1756 = vadd.f32 %v1520, %v1755
  %v1757 = vpop.f32.mrf.mxu0
  %v1758 = vadd.f32 %v1520, %v1757
  %1759 = vmatmul.bf16.gmra.mxu0 %v1608
  %v1760 = vpop.f32.mrf.mxu0
  %v1761 = vadd.f32 %v1520, %v1760
  %v1762 = vpop.f32.mrf.mxu0
  %v1763 = vadd.f32 %v1520, %v1762
  %1764 = vmatmul.bf16.gmra.mxu0 %v1611
  %v1765 = vpop.f32.mrf.mxu0
  %v1766 = vadd.f32 %v1520, %v1765
  %v1767 = vpop.f32.mrf.mxu0
  %v1768 = vadd.f32 %v1520, %v1767
  %1769 = vmatmul.bf16.gmra.mxu0 %v1614
  %v1770 = vpop.f32.mrf.mxu0
  %v1771 = vadd.f32 %v1520, %v1770
  %v1772 = vpop.f32.mrf.mxu0
  %v1773 = vadd.f32 %v1520, %v1772
  %1774 = vmatmul.bf16.gmra.mxu0 %v1617
  %v1775 = vpop.f32.mrf.mxu0
  %v1776 = vadd.f32 %v1520, %v1775
  %v1777 = vpop.f32.mrf.mxu0
  %v1778 = vadd.f32 %v1520, %v1777
  %1779 = vmatmul.bf16.gmra.mxu0 %v1620
  %v1780 = vpop.f32.mrf.mxu0
  %v1781 = vadd.f32 %v1520, %v1780
  %v1782 = vpop.f32.mrf.mxu0
  %v1783 = vadd.f32 %v1520, %v1782
  %1784 = vmatmul.bf16.gmra.mxu0 %v1623
  %v1785 = vpop.f32.mrf.mxu0
  %v1786 = vadd.f32 %v1520, %v1785
  %v1787 = vpop.f32.mrf.mxu0
  %v1788 = vadd.f32 %v1520, %v1787
  %1789 = vmatmul.bf16.gmra.mxu0 %v1626
  %v1790 = vpop.f32.mrf.mxu0
  %v1791 = vadd.f32 %v1520, %v1790
  %v1792 = vpop.f32.mrf.mxu0
  %v1793 = vadd.f32 %v1520, %v1792
  %1794 = vmatmul.bf16.gmra.mxu0 %v1629
  %v1795 = vpop.f32.mrf.mxu0
  %v1796 = vadd.f32 %v1520, %v1795
  %v1797 = vpop.f32.mrf.mxu0
  %v1798 = vadd.f32 %v1520, %v1797
  %1799 = vdwg.mxu0
  %v1800 = vld [vmem:[%s0] sm:$0xff]
  %v1801 = vld [vmem:[%s0 + $0x8] sm:$0xff]
  %v1802 = vld [vmem:[%s0 + $0x10] sm:$0xff]
  %v1803 = vld [vmem:[%s0 + $0x18] sm:$0xff]
  %v1804 = vld [vmem:[%s0 + $0x20] sm:$0xff]
  %v1805 = vld [vmem:[%s0 + $0x28] sm:$0xff]
  %v1806 = vld [vmem:[%s0 + $0x30] sm:$0xff]
  %v1807 = vld [vmem:[%s0 + $0x38] sm:$0xff]
  %v1808 = vld [vmem:[%s1] sm:$0xff]
  %v1809 = vld [vmem:[%s1 + $0x8] sm:$0xff]
  %v1810 = vld [vmem:[%s1 + $0x10] sm:$0xff]
  %v1811 = vld [vmem:[%s1 + $0x18] sm:$0xff]
  %v1812 = vld [vmem:[%s1 + $0x20] sm:$0xff]
  %v1813 = vld [vmem:[%s1 + $0x28] sm:$0xff]
  %v1814 = vld [vmem:[%s1 + $0x30] sm:$0xff]
  %v1815 = vld [vmem:[%s1 + $0x38] sm:$0xff]
  %v1816 = vld [vmem:[%s1 + $0x40] sm:$0xff]
  %v1817 = vld [vmem:[%s1 + $0x48] sm:$0xff]
  %v1818 = vld [vmem:[%s1 + $0x50] sm:$0xff]
  %v1819 = vld [vmem:[%s1 + $0x58] sm:$0xff]
  %v1820 = vld [vmem:[%s1 + $0x60] sm:$0xff]
  %v1821 = vld [vmem:[%s1 + $0x68] sm:$0xff]
  %v1822 = vld [vmem:[%s1 + $0x70] sm:$0xff]
  %v1823 = vld [vmem:[%s1 + $0x78] sm:$0xff]
  %v1824 = vld [vmem:[%s1 + $0x80] sm:$0xff]
  %v1825 = vld [vmem:[%s1 + $0x88] sm:$0xff]
  %v1826 = vld [vmem:[%s1 + $0x90] sm:$0xff]
  %v1827 = vld [vmem:[%s1 + $0x98] sm:$0xff]
  %v1828 = vld [vmem:[%s1 + $0xa0] sm:$0xff]
  %v1829 = vld [vmem:[%s1 + $0xa8] sm:$0xff]
  %v1830 = vld [vmem:[%s1 + $0xb0] sm:$0xff]
  %v1831 = vld [vmem:[%s1 + $0xb8] sm:$0xff]
  %v1832 = vld [vmem:[%s1 + $0xc0] sm:$0xff]
  %v1833 = vld [vmem:[%s1 + $0xc8] sm:$0xff]
  %v1834 = vld [vmem:[%s1 + $0xd0] sm:$0xff]
  %v1835 = vld [vmem:[%s1 + $0xd8] sm:$0xff]
  %v1836 = vld [vmem:[%s1 + $0xe0] sm:$0xff]
  %v1837 = vld [vmem:[%s1 + $0xe8] sm:$0xff]
  %v1838 = vld [vmem:[%s1 + $0xf0] sm:$0xff]
  %v1839 = vld [vmem:[%s1 + $0xf8] sm:$0xff]
  %v1840 = vld [vmem:[%s1 + $0x100] sm:$0xff]
  %v1841 = vld [vmem:[%s1 + $0x108] sm:$0xff]
  %v1842 = vld [vmem:[%s1 + $0x110] sm:$0xff]
  %v1843 = vld [vmem:[%s1 + $0x118] sm:$0xff]
  %v1844 = vld [vmem:[%s1 + $0x120] sm:$0xff]
  %v1845 = vld [vmem:[%s1 + $0x128] sm:$0xff]
  %v1846 = vld [vmem:[%s1 + $0x130] sm:$0xff]
  %v1847 = vld [vmem:[%s1 + $0x138] sm:$0xff]
  %v1848 = vld [vmem:[%s1 + $0x140] sm:$0xff]
  %v1849 = vld [vmem:[%s1 + $0x148] sm:$0xff]
  %v1850 = vld [vmem:[%s1 + $0x150] sm:$0xff]
  %v1851 = vld [vmem:[%s1 + $0x158] sm:$0xff]
  %v1852 = vld [vmem:[%s1 + $0x160] sm:$0xff]
  %v1853 = vld [vmem:[%s1 + $0x168] sm:$0xff]
  %v1854 = vld [vmem:[%s1 + $0x170] sm:$0xff]
  %v1855 = vld [vmem:[%s1 + $0x178] sm:$0xff]
  %v1856 = vld [vmem:[%s1 + $0x180] sm:$0xff]
  %v1857 = vld [vmem:[%s1 + $0x188] sm:$0xff]
  %v1858 = vld [vmem:[%s1 + $0x190] sm:$0xff]
  %v1859 = vld [vmem:[%s1 + $0x198] sm:$0xff]
  %v1860 = vld [vmem:[%s1 + $0x1a0] sm:$0xff]
  %v1861 = vld [vmem:[%s1 + $0x1a8] sm:$0xff]
  %v1862 = vld [vmem:[%s1 + $0x1b0] sm:$0xff]
  %v1863 = vld [vmem:[%s1 + $0x1b8] sm:$0xff]
  %v1864 = vld [vmem:[%s1 + $0x1c0] sm:$0xff]
  %v1865 = vld [vmem:[%s1 + $0x1c8] sm:$0xff]
  %v1866 = vld [vmem:[%s1 + $0x1d0] sm:$0xff]
  %v1867 = vld [vmem:[%s1 + $0x1d8] sm:$0xff]
  %v1868 = vld [vmem:[%s1 + $0x1e0] sm:$0xff]
  %v1869 = vld [vmem:[%s1 + $0x1e8] sm:$0xff]
  %v1870 = vld [vmem:[%s1 + $0x1f0] sm:$0xff]
  %v1871 = vld [vmem:[%s1 + $0x1f8] sm:$0xff]
  %v1880 = vrot.slane %v1800, 1
  %v1881 = vrot.slane %v1800, 2
  %v1882 = vrot.slane %v1800, 3
  %v1883 = vrot.slane %v1800, 4
  %v1884 = vrot.slane %v1800, 5
  %v1885 = vrot.slane %v1800, 6
  %v1886 = vrot.slane %v1800, 7
  %v1887 = vrot.slane %v1801, 1
  %v1888 = vrot.slane %v1801, 2
  %v1889 = vrot.slane %v1801, 3
  %v1890 = vrot.slane %v1801, 4
  %v1891 = vrot.slane %v1801, 5
  %v1892 = vrot.slane %v1801, 6
  %v1893 = vrot.slane %v1801, 7
  %v1894 = vrot.slane %v1802, 1
  %v1895 = vrot.slane %v1802, 2
  %v1896 = vrot.slane %v1802, 3
  %v1897 = vrot.slane %v1802, 4
  %v1898 = vrot.slane %v1802, 5
  %v1899 = vrot.slane %v1802, 6
  %v1900 = vrot.slane %v1802, 7
  %v1901 = vrot.slane %v1803, 1
  %v1902 = vrot.slane %v1803, 2
  %v1903 = vrot.slane %v1803, 3
  %v1904 = vrot.slane %v1803, 4
  %v1905 = vrot.slane %v1803, 5
  %v1906 = vrot.slane %v1803, 6
  %v1907 = vrot.slane %v1803, 7
  %v1908 = vrot.slane %v1804, 1
  %v1909 = vrot.slane %v1804, 2
  %v1910 = vrot.slane %v1804, 3
  %v1911 = vrot.slane %v1804, 4
  %v1912 = vrot.slane %v1804, 5
  %v1913 = vrot.slane %v1804, 6
  %v1914 = vrot.slane %v1804, 7
  %v1915 = vrot.slane %v1805, 1
  %v1916 = vrot.slane %v1805, 2
  %v1917 = vrot.slane %v1805, 3
  %v1918 = vrot.slane %v1805, 4
  %v1919 = vrot.slane %v1805, 5
  %v1920 = vrot.slane %v1805, 6
  %v1921 = vrot.slane %v1805, 7
  %v1922 = vrot.slane %v1806, 1
  %v1923 = vrot.slane %v1806, 2
  %v1924 = vrot.slane %v1806, 3
  %v1925 = vrot.slane %v1806, 4
  %v1926 = vrot.slane %v1806, 5
  %v1927 = vrot.slane %v1806, 6
  %v1928 = vrot.slane %v1806, 7
  %v1929 = vrot.slane %v1807, 1
  %v1930 = vrot.slane %v1807, 2
  %v1931 = vrot.slane %v1807, 3
  %v1932 = vrot.slane %v1807, 4
  %v1933 = vrot.slane %v1807, 5
  %v1934 = vrot.slane %v1807, 6
  %v1935 = vrot.slane %v1807, 7
  %v1936 = vperm.slane %v1800, 0
  %v1937 = vperm.slane %v1880, 0
  %v1938 = vperm.slane %v1881, 0
  %v1939 = vperm.slane %v1882, 0
  %v1940 = vperm.slane %v1883, 0
  %v1941 = vperm.slane %v1884, 0
  %v1942 = vperm.slane %v1885, 0
  %v1943 = vperm.slane %v1886, 0
  %v1944 = vperm.slane %v1801, 0
  %v1945 = vperm.slane %v1887, 0
  %v1946 = vperm.slane %v1888, 0
  %v1947 = vperm.slane %v1889, 0
  %v1948 = vperm.slane %v1890, 0
  %v1949 = vperm.slane %v1891, 0
  %v1950 = vperm.slane %v1892, 0
  %v1951 = vperm.slane %v1893, 0
  %v1952 = vperm.slane %v1802, 0
  %v1953 = vperm.slane %v1894, 0
  %v1954 = vperm.slane %v1895, 0
  %v1955 = vperm.slane %v1896, 0
  %v1956 = vperm.slane %v1897, 0
  %v1957 = vperm.slane %v1898, 0
  %v1958 = vperm.slane %v1899, 0
  %v1959 = vperm.slane %v1900, 0
  %v1960 = vperm.slane %v1803, 0
  %v1961 = vperm.slane %v1901, 0
  %v1962 = vperm.slane %v1902, 0
  %v1963 = vperm.slane %v1903, 0
  %v1964 = vperm.slane %v1904, 0
  %v1965 = vperm.slane %v1905, 0
  %v1966 = vperm.slane %v1906, 0
  %v1967 = vperm.slane %v1907, 0
  %v1968 = vperm.slane %v1804, 0
  %v1969 = vperm.slane %v1908, 0
  %v1970 = vperm.slane %v1909, 0
  %v1971 = vperm.slane %v1910, 0
  %v1972 = vperm.slane %v1911, 0
  %v1973 = vperm.slane %v1912, 0
  %v1974 = vperm.slane %v1913, 0
  %v1975 = vperm.slane %v1914, 0
  %v1976 = vperm.slane %v1805, 0
  %v1977 = vperm.slane %v1915, 0
  %v1978 = vperm.slane %v1916, 0
  %v1979 = vperm.slane %v1917, 0
  %v1980 = vperm.slane %v1918, 0
  %v1981 = vperm.slane %v1919, 0
  %v1982 = vperm.slane %v1920, 0
  %v1983 = vperm.slane %v1921, 0
  %v1984 = vperm.slane %v1806, 0
  %v1985 = vperm.slane %v1922, 0
  %v1986 = vperm.slane %v1923, 0
  %v1987 = vperm.slane %v1924, 0
  %v1988 = vperm.slane %v1925, 0
  %v1989 = vperm.slane %v1926, 0
  %v1990 = vperm.slane %v1927, 0
  %v1991 = vperm.slane %v1928, 0
  %v1992 = vperm.slane %v1807, 0
  %v1993 = vperm.slane %v1929, 0
  %v1994 = vperm.slane %v1930, 0
  %v1995 = vperm.slane %v1931, 0
  %v1996 = vperm.slane %v1932, 0
  %v1997 = vperm.slane %v1933, 0
  %v1998 = vperm.slane %v1934, 0
  %v1999 = vperm.slane %v1935, 0
  %v2064 = vsub.f32 %v1808, %v1936
  %v2065 = vsub.f32 %v1809, %v1937
  %v2066 = vsub.f32 %v1810, %v1938
  %v2067 = vsub.f32 %v1811, %v1939
  %v2068 = vsub.f32 %v1812, %v1940
  %v2069 = vsub.f32 %v1813, %v1941
  %v2070 = vsub.f32 %v1814, %v1942
  %v2071 = vsub.f32 %v1815, %v1943
  %v2072 = vsub.f32 %v1816, %v1944
  %v2073 = vsub.f32 %v1817, %v1945
  %v2074 = vsub.f32 %v1818, %v1946
  %v2075 = vsub.f32 %v1819, %v1947
  %v2076 = vsub.f32 %v1820, %v1948
  %v2077 = vsub.f32 %v1821, %v1949
  %v2078 = vsub.f32 %v1822, %v1950
  %v2079 = vsub.f32 %v1823, %v1951
  %v2080 = vsub.f32 %v1824, %v1952
  %v2081 = vsub.f32 %v1825, %v1953
  %v2082 = vsub.f32 %v1826, %v1954
  %v2083 = vsub.f32 %v1827, %v1955
  %v2084 = vsub.f32 %v1828, %v1956
  %v2085 = vsub.f32 %v1829, %v1957
  %v2086 = vsub.f32 %v1830, %v1958
  %v2087 = vsub.f32 %v1831, %v1959
  %v2088 = vsub.f32 %v1832, %v1960
  %v2089 = vsub.f32 %v1833, %v1961
  %v2090 = vsub.f32 %v1834, %v1962
  %v2091 = vsub.f32 %v1835, %v1963
  %v2092 = vsub.f32 %v1836, %v1964
  %v2093 = vsub.f32 %v1837, %v1965
  %v2094 = vsub.f32 %v1838, %v1966
  %v2095 = vsub.f32 %v1839, %v1967
  %v2096 = vsub.f32 %v1840, %v1968
  %v2097 = vsub.f32 %v1841, %v1969
  %v2098 = vsub.f32 %v1842, %v1970
  %v2099 = vsub.f32 %v1843, %v1971
  %v2100 = vsub.f32 %v1844, %v1972
  %v2101 = vsub.f32 %v1845, %v1973
  %v2102 = vsub.f32 %v1846, %v1974
  %v2103 = vsub.f32 %v1847, %v1975
  %v2104 = vsub.f32 %v1848, %v1976
  %v2105 = vsub.f32 %v1849, %v1977
  %v2106 = vsub.f32 %v1850, %v1978
  %v2107 = vsub.f32 %v1851, %v1979
  %v2108 = vsub.f32 %v1852, %v1980
  %v2109 = vsub.f32 %v1853, %v1981
  %v2110 = vsub.f32 %v1854, %v1982
  %v2111 = vsub.f32 %v1855, %v1983
  %v2112 = vsub.f32 %v1856, %v1984
  %v2113 = vsub.f32 %v1857, %v1985
  %v2114 = vsub.f32 %v1858, %v1986
  %v2115 = vsub.f32 %v1859, %v1987
  %v2116 = vsub.f32 %v1860, %v1988
  %v2117 = vsub.f32 %v1861, %v1989
  %v2118 = vsub.f32 %v1862, %v1990
  %v2119 = vsub.f32 %v1863, %v1991
  %v2120 = vsub.f32 %v1864, %v1992
  %v2121 = vsub.f32 %v1865, %v1993
  %v2122 = vsub.f32 %v1866, %v1994
  %v2123 = vsub.f32 %v1867, %v1995
  %v2124 = vsub.f32 %v1868, %v1996
  %v2125 = vsub.f32 %v1869, %v1997
  %v2126 = vsub.f32 %v1870, %v1998
  %v2127 = vsub.f32 %v1871, %v1999
  %v2128 = vadd.f32 %v2064, %v1641
  %v2129 = vadd.f32 %v2065, %v1643
  %v2130 = vadd.f32 %v2066, %v1646
  %v2131 = vadd.f32 %v2067, %v1648
  %v2132 = vadd.f32 %v2068, %v1651
  %v2133 = vadd.f32 %v2069, %v1653
  %v2134 = vadd.f32 %v2070, %v1656
  %v2135 = vadd.f32 %v2071, %v1658
  %v2136 = vadd.f32 %v2072, %v1661
  %v2137 = vadd.f32 %v2073, %v1663
  %v2138 = vadd.f32 %v2074, %v1666
  %v2139 = vadd.f32 %v2075, %v1668
  %v2140 = vadd.f32 %v2076, %v1671
  %v2141 = vadd.f32 %v2077, %v1673
  %v2142 = vadd.f32 %v2078, %v1676
  %v2143 = vadd.f32 %v2079, %v1678
  %v2144 = vadd.f32 %v2080, %v1681
  %v2145 = vadd.f32 %v2081, %v1683
  %v2146 = vadd.f32 %v2082, %v1686
  %v2147 = vadd.f32 %v2083, %v1688
  %v2148 = vadd.f32 %v2084, %v1691
  %v2149 = vadd.f32 %v2085, %v1693
  %v2150 = vadd.f32 %v2086, %v1696
  %v2151 = vadd.f32 %v2087, %v1698
  %v2152 = vadd.f32 %v2088, %v1701
  %v2153 = vadd.f32 %v2089, %v1703
  %v2154 = vadd.f32 %v2090, %v1706
  %v2155 = vadd.f32 %v2091, %v1708
  %v2156 = vadd.f32 %v2092, %v1711
  %v2157 = vadd.f32 %v2093, %v1713
  %v2158 = vadd.f32 %v2094, %v1716
  %v2159 = vadd.f32 %v2095, %v1718
  %v2160 = vadd.f32 %v2096, %v1721
  %v2161 = vadd.f32 %v2097, %v1723
  %v2162 = vadd.f32 %v2098, %v1726
  %v2163 = vadd.f32 %v2099, %v1728
  %v2164 = vadd.f32 %v2100, %v1731
  %v2165 = vadd.f32 %v2101, %v1733
  %v2166 = vadd.f32 %v2102, %v1736
  %v2167 = vadd.f32 %v2103, %v1738
  %v2168 = vadd.f32 %v2104, %v1741
  %v2169 = vadd.f32 %v2105, %v1743
  %v2170 = vadd.f32 %v2106, %v1746
  %v2171 = vadd.f32 %v2107, %v1748
  %v2172 = vadd.f32 %v2108, %v1751
  %v2173 = vadd.f32 %v2109, %v1753
  %v2174 = vadd.f32 %v2110, %v1756
  %v2175 = vadd.f32 %v2111, %v1758
  %v2176 = vadd.f32 %v2112, %v1761
  %v2177 = vadd.f32 %v2113, %v1763
  %v2178 = vadd.f32 %v2114, %v1766
  %v2179 = vadd.f32 %v2115, %v1768
  %v2180 = vadd.f32 %v2116, %v1771
  %v2181 = vadd.f32 %v2117, %v1773
  %v2182 = vadd.f32 %v2118, %v1776
  %v2183 = vadd.f32 %v2119, %v1778
  %v2184 = vadd.f32 %v2120, %v1781
  %v2185 = vadd.f32 %v2121, %v1783
  %v2186 = vadd.f32 %v2122, %v1786
  %v2187 = vadd.f32 %v2123, %v1788
  %v2188 = vadd.f32 %v2124, %v1791
  %v2189 = vadd.f32 %v2125, %v1793
  %v2190 = vadd.f32 %v2126, %v1796
  %v2191 = vadd.f32 %v2127, %v1798
  %v2192 = vld [vmem:[%s2] sm:$0xff]
  %v2193 = vld [vmem:[%s2 + $0x8] sm:$0xff]
  %v2194 = vld [vmem:[%s2 + $0x10] sm:$0xff]
  %v2195 = vld [vmem:[%s2 + $0x18] sm:$0xff]
  %v2196 = vld [vmem:[%s2 + $0x20] sm:$0xff]
  %v2197 = vld [vmem:[%s2 + $0x28] sm:$0xff]
  %v2198 = vld [vmem:[%s2 + $0x30] sm:$0xff]
  %v2199 = vld [vmem:[%s2 + $0x38] sm:$0xff]
  %v2200 = vld [vmem:[%s2 + $0x40] sm:$0xff]
  %v2201 = vld [vmem:[%s2 + $0x48] sm:$0xff]
  %v2202 = vld [vmem:[%s2 + $0x50] sm:$0xff]
  %v2203 = vld [vmem:[%s2 + $0x58] sm:$0xff]
  %v2204 = vld [vmem:[%s2 + $0x60] sm:$0xff]
  %v2205 = vld [vmem:[%s2 + $0x68] sm:$0xff]
  %v2206 = vld [vmem:[%s2 + $0x70] sm:$0xff]
  %v2207 = vld [vmem:[%s2 + $0x78] sm:$0xff]
  %v2208 = vld [vmem:[%s2 + $0x80] sm:$0xff]
  %v2209 = vld [vmem:[%s2 + $0x88] sm:$0xff]
  %v2210 = vld [vmem:[%s2 + $0x90] sm:$0xff]
  %v2211 = vld [vmem:[%s2 + $0x98] sm:$0xff]
  %v2212 = vld [vmem:[%s2 + $0xa0] sm:$0xff]
  %v2213 = vld [vmem:[%s2 + $0xa8] sm:$0xff]
  %v2214 = vld [vmem:[%s2 + $0xb0] sm:$0xff]
  %v2215 = vld [vmem:[%s2 + $0xb8] sm:$0xff]
  %v2216 = vld [vmem:[%s2 + $0xc0] sm:$0xff]
  %v2217 = vld [vmem:[%s2 + $0xc8] sm:$0xff]
  %v2218 = vld [vmem:[%s2 + $0xd0] sm:$0xff]
  %v2219 = vld [vmem:[%s2 + $0xd8] sm:$0xff]
  %v2220 = vld [vmem:[%s2 + $0xe0] sm:$0xff]
  %v2221 = vld [vmem:[%s2 + $0xe8] sm:$0xff]
  %v2222 = vld [vmem:[%s2 + $0xf0] sm:$0xff]
  %v2223 = vld [vmem:[%s2 + $0xf8] sm:$0xff]
  %v2224 = vld [vmem:[%s2 + $0x100] sm:$0xff]
  %v2225 = vld [vmem:[%s2 + $0x108] sm:$0xff]
  %v2226 = vld [vmem:[%s2 + $0x110] sm:$0xff]
  %v2227 = vld [vmem:[%s2 + $0x118] sm:$0xff]
  %v2228 = vld [vmem:[%s2 + $0x120] sm:$0xff]
  %v2229 = vld [vmem:[%s2 + $0x128] sm:$0xff]
  %v2230 = vld [vmem:[%s2 + $0x130] sm:$0xff]
  %v2231 = vld [vmem:[%s2 + $0x138] sm:$0xff]
  %v2232 = vld [vmem:[%s2 + $0x140] sm:$0xff]
  %v2233 = vld [vmem:[%s2 + $0x148] sm:$0xff]
  %v2234 = vld [vmem:[%s2 + $0x150] sm:$0xff]
  %v2235 = vld [vmem:[%s2 + $0x158] sm:$0xff]
  %v2236 = vld [vmem:[%s2 + $0x160] sm:$0xff]
  %v2237 = vld [vmem:[%s2 + $0x168] sm:$0xff]
  %v2238 = vld [vmem:[%s2 + $0x170] sm:$0xff]
  %v2239 = vld [vmem:[%s2 + $0x178] sm:$0xff]
  %v2240 = vld [vmem:[%s2 + $0x180] sm:$0xff]
  %v2241 = vld [vmem:[%s2 + $0x188] sm:$0xff]
  %v2242 = vld [vmem:[%s2 + $0x190] sm:$0xff]
  %v2243 = vld [vmem:[%s2 + $0x198] sm:$0xff]
  %v2244 = vld [vmem:[%s2 + $0x1a0] sm:$0xff]
  %v2245 = vld [vmem:[%s2 + $0x1a8] sm:$0xff]
  %v2246 = vld [vmem:[%s2 + $0x1b0] sm:$0xff]
  %v2247 = vld [vmem:[%s2 + $0x1b8] sm:$0xff]
  %v2248 = vld [vmem:[%s2 + $0x1c0] sm:$0xff]
  %v2249 = vld [vmem:[%s2 + $0x1c8] sm:$0xff]
  %v2250 = vld [vmem:[%s2 + $0x1d0] sm:$0xff]
  %v2251 = vld [vmem:[%s2 + $0x1d8] sm:$0xff]
  %v2252 = vld [vmem:[%s2 + $0x1e0] sm:$0xff]
  %v2253 = vld [vmem:[%s2 + $0x1e8] sm:$0xff]
  %v2254 = vld [vmem:[%s2 + $0x1f0] sm:$0xff]
  %v2255 = vld [vmem:[%s2 + $0x1f8] sm:$0xff]
  %v2256 = vadd.f32 %v2192, %v1641
  %v2257 = vadd.f32 %v2193, %v1643
  %v2258 = vadd.f32 %v2194, %v1646
  %v2259 = vadd.f32 %v2195, %v1648
  %v2260 = vadd.f32 %v2196, %v1651
  %v2261 = vadd.f32 %v2197, %v1653
  %v2262 = vadd.f32 %v2198, %v1656
  %v2263 = vadd.f32 %v2199, %v1658
  %v2264 = vadd.f32 %v2200, %v1661
  %v2265 = vadd.f32 %v2201, %v1663
  %v2266 = vadd.f32 %v2202, %v1666
  %v2267 = vadd.f32 %v2203, %v1668
  %v2268 = vadd.f32 %v2204, %v1671
  %v2269 = vadd.f32 %v2205, %v1673
  %v2270 = vadd.f32 %v2206, %v1676
  %v2271 = vadd.f32 %v2207, %v1678
  %v2272 = vadd.f32 %v2208, %v1681
  %v2273 = vadd.f32 %v2209, %v1683
  %v2274 = vadd.f32 %v2210, %v1686
  %v2275 = vadd.f32 %v2211, %v1688
  %v2276 = vadd.f32 %v2212, %v1691
  %v2277 = vadd.f32 %v2213, %v1693
  %v2278 = vadd.f32 %v2214, %v1696
  %v2279 = vadd.f32 %v2215, %v1698
  %v2280 = vadd.f32 %v2216, %v1701
  %v2281 = vadd.f32 %v2217, %v1703
  %v2282 = vadd.f32 %v2218, %v1706
  %v2283 = vadd.f32 %v2219, %v1708
  %v2284 = vadd.f32 %v2220, %v1711
  %v2285 = vadd.f32 %v2221, %v1713
  %v2286 = vadd.f32 %v2222, %v1716
  %v2287 = vadd.f32 %v2223, %v1718
  %v2288 = vadd.f32 %v2224, %v1721
  %v2289 = vadd.f32 %v2225, %v1723
  %v2290 = vadd.f32 %v2226, %v1726
  %v2291 = vadd.f32 %v2227, %v1728
  %v2292 = vadd.f32 %v2228, %v1731
  %v2293 = vadd.f32 %v2229, %v1733
  %v2294 = vadd.f32 %v2230, %v1736
  %v2295 = vadd.f32 %v2231, %v1738
  %v2296 = vadd.f32 %v2232, %v1741
  %v2297 = vadd.f32 %v2233, %v1743
  %v2298 = vadd.f32 %v2234, %v1746
  %v2299 = vadd.f32 %v2235, %v1748
  %v2300 = vadd.f32 %v2236, %v1751
  %v2301 = vadd.f32 %v2237, %v1753
  %v2302 = vadd.f32 %v2238, %v1756
  %v2303 = vadd.f32 %v2239, %v1758
  %v2304 = vadd.f32 %v2240, %v1761
  %v2305 = vadd.f32 %v2241, %v1763
  %v2306 = vadd.f32 %v2242, %v1766
  %v2307 = vadd.f32 %v2243, %v1768
  %v2308 = vadd.f32 %v2244, %v1771
  %v2309 = vadd.f32 %v2245, %v1773
  %v2310 = vadd.f32 %v2246, %v1776
  %v2311 = vadd.f32 %v2247, %v1778
  %v2312 = vadd.f32 %v2248, %v1781
  %v2313 = vadd.f32 %v2249, %v1783
  %v2314 = vadd.f32 %v2250, %v1786
  %v2315 = vadd.f32 %v2251, %v1788
  %v2316 = vadd.f32 %v2252, %v1791
  %v2317 = vadd.f32 %v2253, %v1793
  %v2318 = vadd.f32 %v2254, %v1796
  %v2319 = vadd.f32 %v2255, %v1798
  %v2320 = vpack.c.bf16 %v2129, %v2128
  %v2321 = vpack.c.bf16 %v2131, %v2130
  %v2322 = vpack.c.bf16 %v2133, %v2132
  %v2323 = vpack.c.bf16 %v2135, %v2134
  %v2324 = vpack.c.bf16 %v2137, %v2136
  %v2325 = vpack.c.bf16 %v2139, %v2138
  %v2326 = vpack.c.bf16 %v2141, %v2140
  %v2327 = vpack.c.bf16 %v2143, %v2142
  %v2328 = vpack.c.bf16 %v2145, %v2144
  %v2329 = vpack.c.bf16 %v2147, %v2146
  %v2330 = vpack.c.bf16 %v2149, %v2148
  %v2331 = vpack.c.bf16 %v2151, %v2150
  %v2332 = vpack.c.bf16 %v2153, %v2152
  %v2333 = vpack.c.bf16 %v2155, %v2154
  %v2334 = vpack.c.bf16 %v2157, %v2156
  %v2335 = vpack.c.bf16 %v2159, %v2158
  %v2336 = vpack.c.bf16 %v2161, %v2160
  %v2337 = vpack.c.bf16 %v2163, %v2162
  %v2338 = vpack.c.bf16 %v2165, %v2164
  %v2339 = vpack.c.bf16 %v2167, %v2166
  %v2340 = vpack.c.bf16 %v2169, %v2168
  %v2341 = vpack.c.bf16 %v2171, %v2170
  %v2342 = vpack.c.bf16 %v2173, %v2172
  %v2343 = vpack.c.bf16 %v2175, %v2174
  %v2344 = vpack.c.bf16 %v2177, %v2176
  %v2345 = vpack.c.bf16 %v2179, %v2178
  %v2346 = vpack.c.bf16 %v2181, %v2180
  %v2347 = vpack.c.bf16 %v2183, %v2182
  %v2348 = vpack.c.bf16 %v2185, %v2184
  %v2349 = vpack.c.bf16 %v2187, %v2186
  %v2350 = vpack.c.bf16 %v2189, %v2188
  %v2351 = vpack.c.bf16 %v2191, %v2190
  %v2352 = vld [vmem:[%s10] sm:$0xf]
  %v2353 = vld [vmem:[%s10 + $0x4] sm:$0xf]
  %v2354 = vld [vmem:[%s10 + $0x8] sm:$0xf]
  %v2355 = vld [vmem:[%s10 + $0xc] sm:$0xf]
  %v2360 = vunpack.c.l.b16 %v2352
  %v2361 = vunpack.c.l.b16 %v2353
  %v2362 = vunpack.c.l.b16 %v2354
  %v2363 = vunpack.c.l.b16 %v2355
  %v2364 = vpack.c.b16 %v2361, %v2360
  %v2365 = vpack.c.b16 %v2363, %v2362
  %v2369 = vsel %vm1534, %v2320, 0
  %v2372 = vsel %vm1534, %v2321, 0
  %v2375 = vsel %vm1534, %v2322, 0
  %v2378 = vsel %vm1534, %v2323, 0
  %v2381 = vsel %vm1534, %v2324, 0
  %v2384 = vsel %vm1534, %v2325, 0
  %v2387 = vsel %vm1534, %v2326, 0
  %v2390 = vsel %vm1534, %v2327, 0
  %v2393 = vsel %vm1534, %v2328, 0
  %v2396 = vsel %vm1534, %v2329, 0
  %v2399 = vsel %vm1534, %v2330, 0
  %v2402 = vsel %vm1534, %v2331, 0
  %v2405 = vsel %vm1534, %v2332, 0
  %v2408 = vsel %vm1534, %v2333, 0
  %v2411 = vsel %vm1534, %v2334, 0
  %v2414 = vsel %vm1534, %v2335, 0
  %v2417 = vsel %vm1534, %v2336, 0
  %v2420 = vsel %vm1534, %v2337, 0
  %v2423 = vsel %vm1534, %v2338, 0
  %v2426 = vsel %vm1534, %v2339, 0
  %v2429 = vsel %vm1534, %v2340, 0
  %v2432 = vsel %vm1534, %v2341, 0
  %v2435 = vsel %vm1534, %v2342, 0
  %v2438 = vsel %vm1534, %v2343, 0
  %v2441 = vsel %vm1534, %v2344, 0
  %v2444 = vsel %vm1534, %v2345, 0
  %v2447 = vsel %vm1534, %v2346, 0
  %v2450 = vsel %vm1534, %v2347, 0
  %v2453 = vsel %vm1534, %v2348, 0
  %v2456 = vsel %vm1534, %v2349, 0
  %v2459 = vsel %vm1534, %v2350, 0
  %v2462 = vsel %vm1534, %v2351, 0
  %2464 = vmatpush.bf16.msra.mxu0 0
  %2465 = vmatpush.bf16.msra.mxu0 0
  %2466 = vmatpush.bf16.msra.mxu0 0
  %2467 = vmatpush.bf16.msra.mxu0 0
  %2468 = vmatpush.bf16.msra.mxu0 0
  %2469 = vmatpush.bf16.msra.mxu0 0
  %2470 = vmatpush.bf16.msra.mxu0 %v2365
  %2471 = vmatpush.bf16.msra.mxu0 %v2364
  %2472 = vmatmul.bf16.gmra.mxu0 %v2369
  %v2473 = vpop.f32.mrf.mxu0
  %v2474 = vadd.f32 0.0, %v2473
  %v2475 = vpop.f32.mrf.mxu0
  %v2476 = vadd.f32 0.0, %v2475
  %2477 = vmatmul.bf16.gmra.mxu0 %v2372
  %v2478 = vpop.f32.mrf.mxu0
  %v2479 = vadd.f32 0.0, %v2478
  %v2480 = vpop.f32.mrf.mxu0
  %v2481 = vadd.f32 0.0, %v2480
  %2482 = vmatmul.bf16.gmra.mxu0 %v2375
  %v2483 = vpop.f32.mrf.mxu0
  %v2484 = vadd.f32 0.0, %v2483
  %v2485 = vpop.f32.mrf.mxu0
  %v2486 = vadd.f32 0.0, %v2485
  %2487 = vmatmul.bf16.gmra.mxu0 %v2378
  %v2488 = vpop.f32.mrf.mxu0
  %v2489 = vadd.f32 0.0, %v2488
  %v2490 = vpop.f32.mrf.mxu0
  %v2491 = vadd.f32 0.0, %v2490
  %2492 = vmatmul.bf16.gmra.mxu0 %v2381
  %v2493 = vpop.f32.mrf.mxu0
  %v2494 = vadd.f32 0.0, %v2493
  %v2495 = vpop.f32.mrf.mxu0
  %v2496 = vadd.f32 0.0, %v2495
  %2497 = vmatmul.bf16.gmra.mxu0 %v2384
  %v2498 = vpop.f32.mrf.mxu0
  %v2499 = vadd.f32 0.0, %v2498
  %v2500 = vpop.f32.mrf.mxu0
  %v2501 = vadd.f32 0.0, %v2500
  %2502 = vmatmul.bf16.gmra.mxu0 %v2387
  %v2503 = vpop.f32.mrf.mxu0
  %v2504 = vadd.f32 0.0, %v2503
  %v2505 = vpop.f32.mrf.mxu0
  %v2506 = vadd.f32 0.0, %v2505
  %2507 = vmatmul.bf16.gmra.mxu0 %v2390
  %v2508 = vpop.f32.mrf.mxu0
  %v2509 = vadd.f32 0.0, %v2508
  %v2510 = vpop.f32.mrf.mxu0
  %v2511 = vadd.f32 0.0, %v2510
  %2512 = vmatmul.bf16.gmra.mxu0 %v2393
  %v2513 = vpop.f32.mrf.mxu0
  %v2514 = vadd.f32 0.0, %v2513
  %v2515 = vpop.f32.mrf.mxu0
  %v2516 = vadd.f32 0.0, %v2515
  %2517 = vmatmul.bf16.gmra.mxu0 %v2396
  %v2518 = vpop.f32.mrf.mxu0
  %v2519 = vadd.f32 0.0, %v2518
  %v2520 = vpop.f32.mrf.mxu0
  %v2521 = vadd.f32 0.0, %v2520
  %2522 = vmatmul.bf16.gmra.mxu0 %v2399
  %v2523 = vpop.f32.mrf.mxu0
  %v2524 = vadd.f32 0.0, %v2523
  %v2525 = vpop.f32.mrf.mxu0
  %v2526 = vadd.f32 0.0, %v2525
  %2527 = vmatmul.bf16.gmra.mxu0 %v2402
  %v2528 = vpop.f32.mrf.mxu0
  %v2529 = vadd.f32 0.0, %v2528
  %v2530 = vpop.f32.mrf.mxu0
  %v2531 = vadd.f32 0.0, %v2530
  %2532 = vmatmul.bf16.gmra.mxu0 %v2405
  %v2533 = vpop.f32.mrf.mxu0
  %v2534 = vadd.f32 0.0, %v2533
  %v2535 = vpop.f32.mrf.mxu0
  %v2536 = vadd.f32 0.0, %v2535
  %2537 = vmatmul.bf16.gmra.mxu0 %v2408
  %v2538 = vpop.f32.mrf.mxu0
  %v2539 = vadd.f32 0.0, %v2538
  %v2540 = vpop.f32.mrf.mxu0
  %v2541 = vadd.f32 0.0, %v2540
  %2542 = vmatmul.bf16.gmra.mxu0 %v2411
  %v2543 = vpop.f32.mrf.mxu0
  %v2544 = vadd.f32 0.0, %v2543
  %v2545 = vpop.f32.mrf.mxu0
  %v2546 = vadd.f32 0.0, %v2545
  %2547 = vmatmul.bf16.gmra.mxu0 %v2414
  %v2548 = vpop.f32.mrf.mxu0
  %v2549 = vadd.f32 0.0, %v2548
  %v2550 = vpop.f32.mrf.mxu0
  %v2551 = vadd.f32 0.0, %v2550
  %2552 = vmatmul.bf16.gmra.mxu0 %v2417
  %v2553 = vpop.f32.mrf.mxu0
  %v2554 = vadd.f32 0.0, %v2553
  %v2555 = vpop.f32.mrf.mxu0
  %v2556 = vadd.f32 0.0, %v2555
  %2557 = vmatmul.bf16.gmra.mxu0 %v2420
  %v2558 = vpop.f32.mrf.mxu0
  %v2559 = vadd.f32 0.0, %v2558
  %v2560 = vpop.f32.mrf.mxu0
  %v2561 = vadd.f32 0.0, %v2560
  %2562 = vmatmul.bf16.gmra.mxu0 %v2423
  %v2563 = vpop.f32.mrf.mxu0
  %v2564 = vadd.f32 0.0, %v2563
  %v2565 = vpop.f32.mrf.mxu0
  %v2566 = vadd.f32 0.0, %v2565
  %2567 = vmatmul.bf16.gmra.mxu0 %v2426
  %v2568 = vpop.f32.mrf.mxu0
  %v2569 = vadd.f32 0.0, %v2568
  %v2570 = vpop.f32.mrf.mxu0
  %v2571 = vadd.f32 0.0, %v2570
  %2572 = vmatmul.bf16.gmra.mxu0 %v2429
  %v2573 = vpop.f32.mrf.mxu0
  %v2574 = vadd.f32 0.0, %v2573
  %v2575 = vpop.f32.mrf.mxu0
  %v2576 = vadd.f32 0.0, %v2575
  %2577 = vmatmul.bf16.gmra.mxu0 %v2432
  %v2578 = vpop.f32.mrf.mxu0
  %v2579 = vadd.f32 0.0, %v2578
  %v2580 = vpop.f32.mrf.mxu0
  %v2581 = vadd.f32 0.0, %v2580
  %2582 = vmatmul.bf16.gmra.mxu0 %v2435
  %v2583 = vpop.f32.mrf.mxu0
  %v2584 = vadd.f32 0.0, %v2583
  %v2585 = vpop.f32.mrf.mxu0
  %v2586 = vadd.f32 0.0, %v2585
  %2587 = vmatmul.bf16.gmra.mxu0 %v2438
  %v2588 = vpop.f32.mrf.mxu0
  %v2589 = vadd.f32 0.0, %v2588
  %v2590 = vpop.f32.mrf.mxu0
  %v2591 = vadd.f32 0.0, %v2590
  %2592 = vmatmul.bf16.gmra.mxu0 %v2441
  %v2593 = vpop.f32.mrf.mxu0
  %v2594 = vadd.f32 0.0, %v2593
  %v2595 = vpop.f32.mrf.mxu0
  %v2596 = vadd.f32 0.0, %v2595
  %2597 = vmatmul.bf16.gmra.mxu0 %v2444
  %v2598 = vpop.f32.mrf.mxu0
  %v2599 = vadd.f32 0.0, %v2598
  %v2600 = vpop.f32.mrf.mxu0
  %v2601 = vadd.f32 0.0, %v2600
  %2602 = vmatmul.bf16.gmra.mxu0 %v2447
  %v2603 = vpop.f32.mrf.mxu0
  %v2604 = vadd.f32 0.0, %v2603
  %v2605 = vpop.f32.mrf.mxu0
  %v2606 = vadd.f32 0.0, %v2605
  %2607 = vmatmul.bf16.gmra.mxu0 %v2450
  %v2608 = vpop.f32.mrf.mxu0
  %v2609 = vadd.f32 0.0, %v2608
  %v2610 = vpop.f32.mrf.mxu0
  %v2611 = vadd.f32 0.0, %v2610
  %2612 = vmatmul.bf16.gmra.mxu0 %v2453
  %v2613 = vpop.f32.mrf.mxu0
  %v2614 = vadd.f32 0.0, %v2613
  %v2615 = vpop.f32.mrf.mxu0
  %v2616 = vadd.f32 0.0, %v2615
  %2617 = vmatmul.bf16.gmra.mxu0 %v2456
  %v2618 = vpop.f32.mrf.mxu0
  %v2619 = vadd.f32 0.0, %v2618
  %v2620 = vpop.f32.mrf.mxu0
  %v2621 = vadd.f32 0.0, %v2620
  %2622 = vmatmul.bf16.gmra.mxu0 %v2459
  %v2623 = vpop.f32.mrf.mxu0
  %v2624 = vadd.f32 0.0, %v2623
  %v2625 = vpop.f32.mrf.mxu0
  %v2626 = vadd.f32 0.0, %v2625
  %2627 = vmatmul.bf16.gmra.mxu0 %v2462
  %v2628 = vpop.f32.mrf.mxu0
  %v2629 = vadd.f32 0.0, %v2628
  %v2630 = vpop.f32.mrf.mxu0
  %v2631 = vadd.f32 0.0, %v2630
  %2632 = vdwg.mxu0
  %v2633 = vld [vmem:[%s11] sm:$0x1]
  %v2635 = vperm.slane %v2633, 0
  %v2637 = vmul.f32 %v2474, %v2635
  %v2638 = vmul.f32 %v2476, %v2635
  %v2639 = vmul.f32 %v2479, %v2635
  %v2640 = vmul.f32 %v2481, %v2635
  %v2641 = vmul.f32 %v2484, %v2635
  %v2642 = vmul.f32 %v2486, %v2635
  %v2643 = vmul.f32 %v2489, %v2635
  %v2644 = vmul.f32 %v2491, %v2635
  %v2645 = vmul.f32 %v2494, %v2635
  %v2646 = vmul.f32 %v2496, %v2635
  %v2647 = vmul.f32 %v2499, %v2635
  %v2648 = vmul.f32 %v2501, %v2635
  %v2649 = vmul.f32 %v2504, %v2635
  %v2650 = vmul.f32 %v2506, %v2635
  %v2651 = vmul.f32 %v2509, %v2635
  %v2652 = vmul.f32 %v2511, %v2635
  %v2653 = vmul.f32 %v2514, %v2635
  %v2654 = vmul.f32 %v2516, %v2635
  %v2655 = vmul.f32 %v2519, %v2635
  %v2656 = vmul.f32 %v2521, %v2635
  %v2657 = vmul.f32 %v2524, %v2635
  %v2658 = vmul.f32 %v2526, %v2635
  %v2659 = vmul.f32 %v2529, %v2635
  %v2660 = vmul.f32 %v2531, %v2635
  %v2661 = vmul.f32 %v2534, %v2635
  %v2662 = vmul.f32 %v2536, %v2635
  %v2663 = vmul.f32 %v2539, %v2635
  %v2664 = vmul.f32 %v2541, %v2635
  %v2665 = vmul.f32 %v2544, %v2635
  %v2666 = vmul.f32 %v2546, %v2635
  %v2667 = vmul.f32 %v2549, %v2635
  %v2668 = vmul.f32 %v2551, %v2635
  %v2669 = vmul.f32 %v2554, %v2635
  %v2670 = vmul.f32 %v2556, %v2635
  %v2671 = vmul.f32 %v2559, %v2635
  %v2672 = vmul.f32 %v2561, %v2635
  %v2673 = vmul.f32 %v2564, %v2635
  %v2674 = vmul.f32 %v2566, %v2635
  %v2675 = vmul.f32 %v2569, %v2635
  %v2676 = vmul.f32 %v2571, %v2635
  %v2677 = vmul.f32 %v2574, %v2635
  %v2678 = vmul.f32 %v2576, %v2635
  %v2679 = vmul.f32 %v2579, %v2635
  %v2680 = vmul.f32 %v2581, %v2635
  %v2681 = vmul.f32 %v2584, %v2635
  %v2682 = vmul.f32 %v2586, %v2635
  %v2683 = vmul.f32 %v2589, %v2635
  %v2684 = vmul.f32 %v2591, %v2635
  %v2685 = vmul.f32 %v2594, %v2635
  %v2686 = vmul.f32 %v2596, %v2635
  %v2687 = vmul.f32 %v2599, %v2635
  %v2688 = vmul.f32 %v2601, %v2635
  %v2689 = vmul.f32 %v2604, %v2635
  %v2690 = vmul.f32 %v2606, %v2635
  %v2691 = vmul.f32 %v2609, %v2635
  %v2692 = vmul.f32 %v2611, %v2635
  %v2693 = vmul.f32 %v2614, %v2635
  %v2694 = vmul.f32 %v2616, %v2635
  %v2695 = vmul.f32 %v2619, %v2635
  %v2696 = vmul.f32 %v2621, %v2635
  %v2697 = vmul.f32 %v2624, %v2635
  %v2698 = vmul.f32 %v2626, %v2635
  %v2699 = vmul.f32 %v2629, %v2635
  %v2700 = vmul.f32 %v2631, %v2635
  %v2701 = vld [vmem:[%s12] sm:$0x1]
  %v2703 = vperm.slane %v2701, 0
  %v2705 = vadd.f32 %v2637, %v2703
  %v2706 = vadd.f32 %v2638, %v2703
  %v2707 = vadd.f32 %v2639, %v2703
  %v2708 = vadd.f32 %v2640, %v2703
  %v2709 = vadd.f32 %v2641, %v2703
  %v2710 = vadd.f32 %v2642, %v2703
  %v2711 = vadd.f32 %v2643, %v2703
  %v2712 = vadd.f32 %v2644, %v2703
  %v2713 = vadd.f32 %v2645, %v2703
  %v2714 = vadd.f32 %v2646, %v2703
  %v2715 = vadd.f32 %v2647, %v2703
  %v2716 = vadd.f32 %v2648, %v2703
  %v2717 = vadd.f32 %v2649, %v2703
  %v2718 = vadd.f32 %v2650, %v2703
  %v2719 = vadd.f32 %v2651, %v2703
  %v2720 = vadd.f32 %v2652, %v2703
  %v2721 = vadd.f32 %v2653, %v2703
  %v2722 = vadd.f32 %v2654, %v2703
  %v2723 = vadd.f32 %v2655, %v2703
  %v2724 = vadd.f32 %v2656, %v2703
  %v2725 = vadd.f32 %v2657, %v2703
  %v2726 = vadd.f32 %v2658, %v2703
  %v2727 = vadd.f32 %v2659, %v2703
  %v2728 = vadd.f32 %v2660, %v2703
  %v2729 = vadd.f32 %v2661, %v2703
  %v2730 = vadd.f32 %v2662, %v2703
  %v2731 = vadd.f32 %v2663, %v2703
  %v2732 = vadd.f32 %v2664, %v2703
  %v2733 = vadd.f32 %v2665, %v2703
  %v2734 = vadd.f32 %v2666, %v2703
  %v2735 = vadd.f32 %v2667, %v2703
  %v2736 = vadd.f32 %v2668, %v2703
  %v2737 = vadd.f32 %v2669, %v2703
  %v2738 = vadd.f32 %v2670, %v2703
  %v2739 = vadd.f32 %v2671, %v2703
  %v2740 = vadd.f32 %v2672, %v2703
  %v2741 = vadd.f32 %v2673, %v2703
  %v2742 = vadd.f32 %v2674, %v2703
  %v2743 = vadd.f32 %v2675, %v2703
  %v2744 = vadd.f32 %v2676, %v2703
  %v2745 = vadd.f32 %v2677, %v2703
  %v2746 = vadd.f32 %v2678, %v2703
  %v2747 = vadd.f32 %v2679, %v2703
  %v2748 = vadd.f32 %v2680, %v2703
  %v2749 = vadd.f32 %v2681, %v2703
  %v2750 = vadd.f32 %v2682, %v2703
  %v2751 = vadd.f32 %v2683, %v2703
  %v2752 = vadd.f32 %v2684, %v2703
  %v2753 = vadd.f32 %v2685, %v2703
  %v2754 = vadd.f32 %v2686, %v2703
  %v2755 = vadd.f32 %v2687, %v2703
  %v2756 = vadd.f32 %v2688, %v2703
  %v2757 = vadd.f32 %v2689, %v2703
  %v2758 = vadd.f32 %v2690, %v2703
  %v2759 = vadd.f32 %v2691, %v2703
  %v2760 = vadd.f32 %v2692, %v2703
  %v2761 = vadd.f32 %v2693, %v2703
  %v2762 = vadd.f32 %v2694, %v2703
  %v2763 = vadd.f32 %v2695, %v2703
  %v2764 = vadd.f32 %v2696, %v2703
  %v2765 = vadd.f32 %v2697, %v2703
  %v2766 = vadd.f32 %v2698, %v2703
  %v2767 = vadd.f32 %v2699, %v2703
  %v2768 = vadd.f32 %v2700, %v2703
  %v2769 = vmax.f32 %v2705, 0.0
  %v2770 = vmax.f32 %v2706, 0.0
  %v2771 = vmax.f32 %v2707, 0.0
  %v2772 = vmax.f32 %v2708, 0.0
  %v2773 = vmax.f32 %v2709, 0.0
  %v2774 = vmax.f32 %v2710, 0.0
  %v2775 = vmax.f32 %v2711, 0.0
  %v2776 = vmax.f32 %v2712, 0.0
  %v2777 = vmax.f32 %v2713, 0.0
  %v2778 = vmax.f32 %v2714, 0.0
  %v2779 = vmax.f32 %v2715, 0.0
  %v2780 = vmax.f32 %v2716, 0.0
  %v2781 = vmax.f32 %v2717, 0.0
  %v2782 = vmax.f32 %v2718, 0.0
  %v2783 = vmax.f32 %v2719, 0.0
  %v2784 = vmax.f32 %v2720, 0.0
  %v2785 = vmax.f32 %v2721, 0.0
  %v2786 = vmax.f32 %v2722, 0.0
  %v2787 = vmax.f32 %v2723, 0.0
  %v2788 = vmax.f32 %v2724, 0.0
  %v2789 = vmax.f32 %v2725, 0.0
  %v2790 = vmax.f32 %v2726, 0.0
  %v2791 = vmax.f32 %v2727, 0.0
  %v2792 = vmax.f32 %v2728, 0.0
  %v2793 = vmax.f32 %v2729, 0.0
  %v2794 = vmax.f32 %v2730, 0.0
  %v2795 = vmax.f32 %v2731, 0.0
  %v2796 = vmax.f32 %v2732, 0.0
  %v2797 = vmax.f32 %v2733, 0.0
  %v2798 = vmax.f32 %v2734, 0.0
  %v2799 = vmax.f32 %v2735, 0.0
  %v2800 = vmax.f32 %v2736, 0.0
  %v2801 = vmax.f32 %v2737, 0.0
  %v2802 = vmax.f32 %v2738, 0.0
  %v2803 = vmax.f32 %v2739, 0.0
  %v2804 = vmax.f32 %v2740, 0.0
  %v2805 = vmax.f32 %v2741, 0.0
  %v2806 = vmax.f32 %v2742, 0.0
  %v2807 = vmax.f32 %v2743, 0.0
  %v2808 = vmax.f32 %v2744, 0.0
  %v2809 = vmax.f32 %v2745, 0.0
  %v2810 = vmax.f32 %v2746, 0.0
  %v2811 = vmax.f32 %v2747, 0.0
  %v2812 = vmax.f32 %v2748, 0.0
  %v2813 = vmax.f32 %v2749, 0.0
  %v2814 = vmax.f32 %v2750, 0.0
  %v2815 = vmax.f32 %v2751, 0.0
  %v2816 = vmax.f32 %v2752, 0.0
  %v2817 = vmax.f32 %v2753, 0.0
  %v2818 = vmax.f32 %v2754, 0.0
  %v2819 = vmax.f32 %v2755, 0.0
  %v2820 = vmax.f32 %v2756, 0.0
  %v2821 = vmax.f32 %v2757, 0.0
  %v2822 = vmax.f32 %v2758, 0.0
  %v2823 = vmax.f32 %v2759, 0.0
  %v2824 = vmax.f32 %v2760, 0.0
  %v2825 = vmax.f32 %v2761, 0.0
  %v2826 = vmax.f32 %v2762, 0.0
  %v2827 = vmax.f32 %v2763, 0.0
  %v2828 = vmax.f32 %v2764, 0.0
  %v2829 = vmax.f32 %v2765, 0.0
  %v2830 = vmax.f32 %v2766, 0.0
  %v2831 = vmax.f32 %v2767, 0.0
  %v2832 = vmax.f32 %v2768, 0.0
  %v2833 = vld [vmem:[%s14] sm:$0x1]
  %v2834 = vld [vmem:[%s13] sm:$0x1]
  %2836 = vset.pattern.permute.xlu0 0
  %2837 = vperm.xlu0 %2836, %v2769
  %v2838 = vpop.permute.xlu0 %2837
  %2841 = vset.pattern.permute.xlu0 0
  %2842 = vperm.xlu0 %2841, %v2770
  %v2843 = vpop.permute.xlu0 %2842
  %2846 = vset.pattern.permute.xlu0 0
  %2847 = vperm.xlu0 %2846, %v2771
  %v2848 = vpop.permute.xlu0 %2847
  %2851 = vset.pattern.permute.xlu0 0
  %2852 = vperm.xlu0 %2851, %v2772
  %v2853 = vpop.permute.xlu0 %2852
  %2856 = vset.pattern.permute.xlu0 0
  %2857 = vperm.xlu0 %2856, %v2773
  %v2858 = vpop.permute.xlu0 %2857
  %2861 = vset.pattern.permute.xlu0 0
  %2862 = vperm.xlu0 %2861, %v2774
  %v2863 = vpop.permute.xlu0 %2862
  %2866 = vset.pattern.permute.xlu0 0
  %2867 = vperm.xlu0 %2866, %v2775
  %v2868 = vpop.permute.xlu0 %2867
  %2871 = vset.pattern.permute.xlu0 0
  %2872 = vperm.xlu0 %2871, %v2776
  %v2873 = vpop.permute.xlu0 %2872
  %2876 = vset.pattern.permute.xlu0 0
  %2877 = vperm.xlu0 %2876, %v2777
  %v2878 = vpop.permute.xlu0 %2877
  %2881 = vset.pattern.permute.xlu0 0
  %2882 = vperm.xlu0 %2881, %v2778
  %v2883 = vpop.permute.xlu0 %2882
  %2886 = vset.pattern.permute.xlu0 0
  %2887 = vperm.xlu0 %2886, %v2779
  %v2888 = vpop.permute.xlu0 %2887
  %2891 = vset.pattern.permute.xlu0 0
  %2892 = vperm.xlu0 %2891, %v2780
  %v2893 = vpop.permute.xlu0 %2892
  %2896 = vset.pattern.permute.xlu0 0
  %2897 = vperm.xlu0 %2896, %v2781
  %v2898 = vpop.permute.xlu0 %2897
  %2901 = vset.pattern.permute.xlu0 0
  %2902 = vperm.xlu0 %2901, %v2782
  %v2903 = vpop.permute.xlu0 %2902
  %2906 = vset.pattern.permute.xlu0 0
  %2907 = vperm.xlu0 %2906, %v2783
  %v2908 = vpop.permute.xlu0 %2907
  %2911 = vset.pattern.permute.xlu0 0
  %2912 = vperm.xlu0 %2911, %v2784
  %v2913 = vpop.permute.xlu0 %2912
  %2916 = vset.pattern.permute.xlu0 0
  %2917 = vperm.xlu0 %2916, %v2785
  %v2918 = vpop.permute.xlu0 %2917
  %2921 = vset.pattern.permute.xlu0 0
  %2922 = vperm.xlu0 %2921, %v2786
  %v2923 = vpop.permute.xlu0 %2922
  %2926 = vset.pattern.permute.xlu0 0
  %2927 = vperm.xlu0 %2926, %v2787
  %v2928 = vpop.permute.xlu0 %2927
  %2931 = vset.pattern.permute.xlu0 0
  %2932 = vperm.xlu0 %2931, %v2788
  %v2933 = vpop.permute.xlu0 %2932
  %2936 = vset.pattern.permute.xlu0 0
  %2937 = vperm.xlu0 %2936, %v2789
  %v2938 = vpop.permute.xlu0 %2937
  %2941 = vset.pattern.permute.xlu0 0
  %2942 = vperm.xlu0 %2941, %v2790
  %v2943 = vpop.permute.xlu0 %2942
  %2946 = vset.pattern.permute.xlu0 0
  %2947 = vperm.xlu0 %2946, %v2791
  %v2948 = vpop.permute.xlu0 %2947
  %2951 = vset.pattern.permute.xlu0 0
  %2952 = vperm.xlu0 %2951, %v2792
  %v2953 = vpop.permute.xlu0 %2952
  %2956 = vset.pattern.permute.xlu0 0
  %2957 = vperm.xlu0 %2956, %v2793
  %v2958 = vpop.permute.xlu0 %2957
  %2961 = vset.pattern.permute.xlu0 0
  %2962 = vperm.xlu0 %2961, %v2794
  %v2963 = vpop.permute.xlu0 %2962
  %2966 = vset.pattern.permute.xlu0 0
  %2967 = vperm.xlu0 %2966, %v2795
  %v2968 = vpop.permute.xlu0 %2967
  %2971 = vset.pattern.permute.xlu0 0
  %2972 = vperm.xlu0 %2971, %v2796
  %v2973 = vpop.permute.xlu0 %2972
  %2976 = vset.pattern.permute.xlu0 0
  %2977 = vperm.xlu0 %2976, %v2797
  %v2978 = vpop.permute.xlu0 %2977
  %2981 = vset.pattern.permute.xlu0 0
  %2982 = vperm.xlu0 %2981, %v2798
  %v2983 = vpop.permute.xlu0 %2982
  %2986 = vset.pattern.permute.xlu0 0
  %2987 = vperm.xlu0 %2986, %v2799
  %v2988 = vpop.permute.xlu0 %2987
  %2991 = vset.pattern.permute.xlu0 0
  %2992 = vperm.xlu0 %2991, %v2800
  %v2993 = vpop.permute.xlu0 %2992
  %2996 = vset.pattern.permute.xlu0 0
  %2997 = vperm.xlu0 %2996, %v2801
  %v2998 = vpop.permute.xlu0 %2997
  %3001 = vset.pattern.permute.xlu0 0
  %3002 = vperm.xlu0 %3001, %v2802
  %v3003 = vpop.permute.xlu0 %3002
  %3006 = vset.pattern.permute.xlu0 0
  %3007 = vperm.xlu0 %3006, %v2803
  %v3008 = vpop.permute.xlu0 %3007
  %3011 = vset.pattern.permute.xlu0 0
  %3012 = vperm.xlu0 %3011, %v2804
  %v3013 = vpop.permute.xlu0 %3012
  %3016 = vset.pattern.permute.xlu0 0
  %3017 = vperm.xlu0 %3016, %v2805
  %v3018 = vpop.permute.xlu0 %3017
  %3021 = vset.pattern.permute.xlu0 0
  %3022 = vperm.xlu0 %3021, %v2806
  %v3023 = vpop.permute.xlu0 %3022
  %3026 = vset.pattern.permute.xlu0 0
  %3027 = vperm.xlu0 %3026, %v2807
  %v3028 = vpop.permute.xlu0 %3027
  %3031 = vset.pattern.permute.xlu0 0
  %3032 = vperm.xlu0 %3031, %v2808
  %v3033 = vpop.permute.xlu0 %3032
  %3036 = vset.pattern.permute.xlu0 0
  %3037 = vperm.xlu0 %3036, %v2809
  %v3038 = vpop.permute.xlu0 %3037
  %3041 = vset.pattern.permute.xlu0 0
  %3042 = vperm.xlu0 %3041, %v2810
  %v3043 = vpop.permute.xlu0 %3042
  %3046 = vset.pattern.permute.xlu0 0
  %3047 = vperm.xlu0 %3046, %v2811
  %v3048 = vpop.permute.xlu0 %3047
  %3051 = vset.pattern.permute.xlu0 0
  %3052 = vperm.xlu0 %3051, %v2812
  %v3053 = vpop.permute.xlu0 %3052
  %3056 = vset.pattern.permute.xlu0 0
  %3057 = vperm.xlu0 %3056, %v2813
  %v3058 = vpop.permute.xlu0 %3057
  %3061 = vset.pattern.permute.xlu0 0
  %3062 = vperm.xlu0 %3061, %v2814
  %v3063 = vpop.permute.xlu0 %3062
  %3066 = vset.pattern.permute.xlu0 0
  %3067 = vperm.xlu0 %3066, %v2815
  %v3068 = vpop.permute.xlu0 %3067
  %3071 = vset.pattern.permute.xlu0 0
  %3072 = vperm.xlu0 %3071, %v2816
  %v3073 = vpop.permute.xlu0 %3072
  %3076 = vset.pattern.permute.xlu0 0
  %3077 = vperm.xlu0 %3076, %v2817
  %v3078 = vpop.permute.xlu0 %3077
  %3081 = vset.pattern.permute.xlu0 0
  %3082 = vperm.xlu0 %3081, %v2818
  %v3083 = vpop.permute.xlu0 %3082
  %3086 = vset.pattern.permute.xlu0 0
  %3087 = vperm.xlu0 %3086, %v2819
  %v3088 = vpop.permute.xlu0 %3087
  %3091 = vset.pattern.permute.xlu0 0
  %3092 = vperm.xlu0 %3091, %v2820
  %v3093 = vpop.permute.xlu0 %3092
  %3096 = vset.pattern.permute.xlu0 0
  %3097 = vperm.xlu0 %3096, %v2821
  %v3098 = vpop.permute.xlu0 %3097
  %3101 = vset.pattern.permute.xlu0 0
  %3102 = vperm.xlu0 %3101, %v2822
  %v3103 = vpop.permute.xlu0 %3102
  %3106 = vset.pattern.permute.xlu0 0
  %3107 = vperm.xlu0 %3106, %v2823
  %v3108 = vpop.permute.xlu0 %3107
  %3111 = vset.pattern.permute.xlu0 0
  %3112 = vperm.xlu0 %3111, %v2824
  %v3113 = vpop.permute.xlu0 %3112
  %3116 = vset.pattern.permute.xlu0 0
  %3117 = vperm.xlu0 %3116, %v2825
  %v3118 = vpop.permute.xlu0 %3117
  %3121 = vset.pattern.permute.xlu0 0
  %3122 = vperm.xlu0 %3121, %v2826
  %v3123 = vpop.permute.xlu0 %3122
  %3126 = vset.pattern.permute.xlu0 0
  %3127 = vperm.xlu0 %3126, %v2827
  %v3128 = vpop.permute.xlu0 %3127
  %3131 = vset.pattern.permute.xlu0 0
  %3132 = vperm.xlu0 %3131, %v2828
  %v3133 = vpop.permute.xlu0 %3132
  %3136 = vset.pattern.permute.xlu0 0
  %3137 = vperm.xlu0 %3136, %v2829
  %v3138 = vpop.permute.xlu0 %3137
  %3141 = vset.pattern.permute.xlu0 0
  %3142 = vperm.xlu0 %3141, %v2830
  %v3143 = vpop.permute.xlu0 %3142
  %3146 = vset.pattern.permute.xlu0 0
  %3147 = vperm.xlu0 %3146, %v2831
  %v3148 = vpop.permute.xlu0 %3147
  %3151 = vset.pattern.permute.xlu0 0
  %3152 = vperm.xlu0 %3151, %v2832
  %v3153 = vpop.permute.xlu0 %3152
  %v3155 = vperm.slane %v2834, 0
  %v3156 = vmul.f32 %v2838, %v3155
  %v3157 = vmul.f32 %v2843, %v3155
  %v3158 = vmul.f32 %v2848, %v3155
  %v3159 = vmul.f32 %v2853, %v3155
  %v3160 = vmul.f32 %v2858, %v3155
  %v3161 = vmul.f32 %v2863, %v3155
  %v3162 = vmul.f32 %v2868, %v3155
  %v3163 = vmul.f32 %v2873, %v3155
  %v3164 = vmul.f32 %v2878, %v3155
  %v3165 = vmul.f32 %v2883, %v3155
  %v3166 = vmul.f32 %v2888, %v3155
  %v3167 = vmul.f32 %v2893, %v3155
  %v3168 = vmul.f32 %v2898, %v3155
  %v3169 = vmul.f32 %v2903, %v3155
  %v3170 = vmul.f32 %v2908, %v3155
  %v3171 = vmul.f32 %v2913, %v3155
  %v3172 = vmul.f32 %v2918, %v3155
  %v3173 = vmul.f32 %v2923, %v3155
  %v3174 = vmul.f32 %v2928, %v3155
  %v3175 = vmul.f32 %v2933, %v3155
  %v3176 = vmul.f32 %v2938, %v3155
  %v3177 = vmul.f32 %v2943, %v3155
  %v3178 = vmul.f32 %v2948, %v3155
  %v3179 = vmul.f32 %v2953, %v3155
  %v3180 = vmul.f32 %v2958, %v3155
  %v3181 = vmul.f32 %v2963, %v3155
  %v3182 = vmul.f32 %v2968, %v3155
  %v3183 = vmul.f32 %v2973, %v3155
  %v3184 = vmul.f32 %v2978, %v3155
  %v3185 = vmul.f32 %v2983, %v3155
  %v3186 = vmul.f32 %v2988, %v3155
  %v3187 = vmul.f32 %v2993, %v3155
  %v3188 = vmul.f32 %v2998, %v3155
  %v3189 = vmul.f32 %v3003, %v3155
  %v3190 = vmul.f32 %v3008, %v3155
  %v3191 = vmul.f32 %v3013, %v3155
  %v3192 = vmul.f32 %v3018, %v3155
  %v3193 = vmul.f32 %v3023, %v3155
  %v3194 = vmul.f32 %v3028, %v3155
  %v3195 = vmul.f32 %v3033, %v3155
  %v3196 = vmul.f32 %v3038, %v3155
  %v3197 = vmul.f32 %v3043, %v3155
  %v3198 = vmul.f32 %v3048, %v3155
  %v3199 = vmul.f32 %v3053, %v3155
  %v3200 = vmul.f32 %v3058, %v3155
  %v3201 = vmul.f32 %v3063, %v3155
  %v3202 = vmul.f32 %v3068, %v3155
  %v3203 = vmul.f32 %v3073, %v3155
  %v3204 = vmul.f32 %v3078, %v3155
  %v3205 = vmul.f32 %v3083, %v3155
  %v3206 = vmul.f32 %v3088, %v3155
  %v3207 = vmul.f32 %v3093, %v3155
  %v3208 = vmul.f32 %v3098, %v3155
  %v3209 = vmul.f32 %v3103, %v3155
  %v3210 = vmul.f32 %v3108, %v3155
  %v3211 = vmul.f32 %v3113, %v3155
  %v3212 = vmul.f32 %v3118, %v3155
  %v3213 = vmul.f32 %v3123, %v3155
  %v3214 = vmul.f32 %v3128, %v3155
  %v3215 = vmul.f32 %v3133, %v3155
  %v3216 = vmul.f32 %v3138, %v3155
  %v3217 = vmul.f32 %v3143, %v3155
  %v3218 = vmul.f32 %v3148, %v3155
  %v3219 = vmul.f32 %v3153, %v3155
  %v3221 = vperm.slane %v2833, 0
  %v3223 = vadd.f32 %v3221, %v3156
  %v3224 = vadd.f32 %v3221, %v3157
  %v3225 = vadd.f32 %v3221, %v3158
  %v3226 = vadd.f32 %v3221, %v3159
  %v3227 = vadd.f32 %v3221, %v3160
  %v3228 = vadd.f32 %v3221, %v3161
  %v3229 = vadd.f32 %v3221, %v3162
  %v3230 = vadd.f32 %v3221, %v3163
  %v3231 = vadd.f32 %v3221, %v3164
  %v3232 = vadd.f32 %v3221, %v3165
  %v3233 = vadd.f32 %v3221, %v3166
  %v3234 = vadd.f32 %v3221, %v3167
  %v3235 = vadd.f32 %v3221, %v3168
  %v3236 = vadd.f32 %v3221, %v3169
  %v3237 = vadd.f32 %v3221, %v3170
  %v3238 = vadd.f32 %v3221, %v3171
  %v3239 = vadd.f32 %v3221, %v3172
  %v3240 = vadd.f32 %v3221, %v3173
  %v3241 = vadd.f32 %v3221, %v3174
  %v3242 = vadd.f32 %v3221, %v3175
  %v3243 = vadd.f32 %v3221, %v3176
  %v3244 = vadd.f32 %v3221, %v3177
  %v3245 = vadd.f32 %v3221, %v3178
  %v3246 = vadd.f32 %v3221, %v3179
  %v3247 = vadd.f32 %v3221, %v3180
  %v3248 = vadd.f32 %v3221, %v3181
  %v3249 = vadd.f32 %v3221, %v3182
  %v3250 = vadd.f32 %v3221, %v3183
  %v3251 = vadd.f32 %v3221, %v3184
  %v3252 = vadd.f32 %v3221, %v3185
  %v3253 = vadd.f32 %v3221, %v3186
  %v3254 = vadd.f32 %v3221, %v3187
  %v3255 = vadd.f32 %v3221, %v3188
  %v3256 = vadd.f32 %v3221, %v3189
  %v3257 = vadd.f32 %v3221, %v3190
  %v3258 = vadd.f32 %v3221, %v3191
  %v3259 = vadd.f32 %v3221, %v3192
  %v3260 = vadd.f32 %v3221, %v3193
  %v3261 = vadd.f32 %v3221, %v3194
  %v3262 = vadd.f32 %v3221, %v3195
  %v3263 = vadd.f32 %v3221, %v3196
  %v3264 = vadd.f32 %v3221, %v3197
  %v3265 = vadd.f32 %v3221, %v3198
  %v3266 = vadd.f32 %v3221, %v3199
  %v3267 = vadd.f32 %v3221, %v3200
  %v3268 = vadd.f32 %v3221, %v3201
  %v3269 = vadd.f32 %v3221, %v3202
  %v3270 = vadd.f32 %v3221, %v3203
  %v3271 = vadd.f32 %v3221, %v3204
  %v3272 = vadd.f32 %v3221, %v3205
  %v3273 = vadd.f32 %v3221, %v3206
  %v3274 = vadd.f32 %v3221, %v3207
  %v3275 = vadd.f32 %v3221, %v3208
  %v3276 = vadd.f32 %v3221, %v3209
  %v3277 = vadd.f32 %v3221, %v3210
  %v3278 = vadd.f32 %v3221, %v3211
  %v3279 = vadd.f32 %v3221, %v3212
  %v3280 = vadd.f32 %v3221, %v3213
  %v3281 = vadd.f32 %v3221, %v3214
  %v3282 = vadd.f32 %v3221, %v3215
  %v3283 = vadd.f32 %v3221, %v3216
  %v3284 = vadd.f32 %v3221, %v3217
  %v3285 = vadd.f32 %v3221, %v3218
  %v3286 = vadd.f32 %v3221, %v3219
  %v3287 = vld [vmem:[%s13 + $0x1] sm:$0x1]
  %3288 = vset.pattern.permute.xlu0 1
  %3289 = vperm.xlu0 %3288, %v2769
  %v3290 = vpop.permute.xlu0 %3289
  %3292 = vset.pattern.permute.xlu0 1
  %3293 = vperm.xlu0 %3292, %v2770
  %v3294 = vpop.permute.xlu0 %3293
  %3296 = vset.pattern.permute.xlu0 1
  %3297 = vperm.xlu0 %3296, %v2771
  %v3298 = vpop.permute.xlu0 %3297
  %3300 = vset.pattern.permute.xlu0 1
  %3301 = vperm.xlu0 %3300, %v2772
  %v3302 = vpop.permute.xlu0 %3301
  %3304 = vset.pattern.permute.xlu0 1
  %3305 = vperm.xlu0 %3304, %v2773
  %v3306 = vpop.permute.xlu0 %3305
  %3308 = vset.pattern.permute.xlu0 1
  %3309 = vperm.xlu0 %3308, %v2774
  %v3310 = vpop.permute.xlu0 %3309
  %3312 = vset.pattern.permute.xlu0 1
  %3313 = vperm.xlu0 %3312, %v2775
  %v3314 = vpop.permute.xlu0 %3313
  %3316 = vset.pattern.permute.xlu0 1
  %3317 = vperm.xlu0 %3316, %v2776
  %v3318 = vpop.permute.xlu0 %3317
  %3320 = vset.pattern.permute.xlu0 1
  %3321 = vperm.xlu0 %3320, %v2777
  %v3322 = vpop.permute.xlu0 %3321
  %3324 = vset.pattern.permute.xlu0 1
  %3325 = vperm.xlu0 %3324, %v2778
  %v3326 = vpop.permute.xlu0 %3325
  %3328 = vset.pattern.permute.xlu0 1
  %3329 = vperm.xlu0 %3328, %v2779
  %v3330 = vpop.permute.xlu0 %3329
  %3332 = vset.pattern.permute.xlu0 1
  %3333 = vperm.xlu0 %3332, %v2780
  %v3334 = vpop.permute.xlu0 %3333
  %3336 = vset.pattern.permute.xlu0 1
  %3337 = vperm.xlu0 %3336, %v2781
  %v3338 = vpop.permute.xlu0 %3337
  %3340 = vset.pattern.permute.xlu0 1
  %3341 = vperm.xlu0 %3340, %v2782
  %v3342 = vpop.permute.xlu0 %3341
  %3344 = vset.pattern.permute.xlu0 1
  %3345 = vperm.xlu0 %3344, %v2783
  %v3346 = vpop.permute.xlu0 %3345
  %3348 = vset.pattern.permute.xlu0 1
  %3349 = vperm.xlu0 %3348, %v2784
  %v3350 = vpop.permute.xlu0 %3349
  %3352 = vset.pattern.permute.xlu0 1
  %3353 = vperm.xlu0 %3352, %v2785
  %v3354 = vpop.permute.xlu0 %3353
  %3356 = vset.pattern.permute.xlu0 1
  %3357 = vperm.xlu0 %3356, %v2786
  %v3358 = vpop.permute.xlu0 %3357
  %3360 = vset.pattern.permute.xlu0 1
  %3361 = vperm.xlu0 %3360, %v2787
  %v3362 = vpop.permute.xlu0 %3361
  %3364 = vset.pattern.permute.xlu0 1
  %3365 = vperm.xlu0 %3364, %v2788
  %v3366 = vpop.permute.xlu0 %3365
  %3368 = vset.pattern.permute.xlu0 1
  %3369 = vperm.xlu0 %3368, %v2789
  %v3370 = vpop.permute.xlu0 %3369
  %3372 = vset.pattern.permute.xlu0 1
  %3373 = vperm.xlu0 %3372, %v2790
  %v3374 = vpop.permute.xlu0 %3373
  %3376 = vset.pattern.permute.xlu0 1
  %3377 = vperm.xlu0 %3376, %v2791
  %v3378 = vpop.permute.xlu0 %3377
  %3380 = vset.pattern.permute.xlu0 1
  %3381 = vperm.xlu0 %3380, %v2792
  %v3382 = vpop.permute.xlu0 %3381
  %3384 = vset.pattern.permute.xlu0 1
  %3385 = vperm.xlu0 %3384, %v2793
  %v3386 = vpop.permute.xlu0 %3385
  %3388 = vset.pattern.permute.xlu0 1
  %3389 = vperm.xlu0 %3388, %v2794
  %v3390 = vpop.permute.xlu0 %3389
  %3392 = vset.pattern.permute.xlu0 1
  %3393 = vperm.xlu0 %3392, %v2795
  %v3394 = vpop.permute.xlu0 %3393
  %3396 = vset.pattern.permute.xlu0 1
  %3397 = vperm.xlu0 %3396, %v2796
  %v3398 = vpop.permute.xlu0 %3397
  %3400 = vset.pattern.permute.xlu0 1
  %3401 = vperm.xlu0 %3400, %v2797
  %v3402 = vpop.permute.xlu0 %3401
  %3404 = vset.pattern.permute.xlu0 1
  %3405 = vperm.xlu0 %3404, %v2798
  %v3406 = vpop.permute.xlu0 %3405
  %3408 = vset.pattern.permute.xlu0 1
  %3409 = vperm.xlu0 %3408, %v2799
  %v3410 = vpop.permute.xlu0 %3409
  %3412 = vset.pattern.permute.xlu0 1
  %3413 = vperm.xlu0 %3412, %v2800
  %v3414 = vpop.permute.xlu0 %3413
  %3416 = vset.pattern.permute.xlu0 1
  %3417 = vperm.xlu0 %3416, %v2801
  %v3418 = vpop.permute.xlu0 %3417
  %3420 = vset.pattern.permute.xlu0 1
  %3421 = vperm.xlu0 %3420, %v2802
  %v3422 = vpop.permute.xlu0 %3421
  %3424 = vset.pattern.permute.xlu0 1
  %3425 = vperm.xlu0 %3424, %v2803
  %v3426 = vpop.permute.xlu0 %3425
  %3428 = vset.pattern.permute.xlu0 1
  %3429 = vperm.xlu0 %3428, %v2804
  %v3430 = vpop.permute.xlu0 %3429
  %3432 = vset.pattern.permute.xlu0 1
  %3433 = vperm.xlu0 %3432, %v2805
  %v3434 = vpop.permute.xlu0 %3433
  %3436 = vset.pattern.permute.xlu0 1
  %3437 = vperm.xlu0 %3436, %v2806
  %v3438 = vpop.permute.xlu0 %3437
  %3440 = vset.pattern.permute.xlu0 1
  %3441 = vperm.xlu0 %3440, %v2807
  %v3442 = vpop.permute.xlu0 %3441
  %3444 = vset.pattern.permute.xlu0 1
  %3445 = vperm.xlu0 %3444, %v2808
  %v3446 = vpop.permute.xlu0 %3445
  %3448 = vset.pattern.permute.xlu0 1
  %3449 = vperm.xlu0 %3448, %v2809
  %v3450 = vpop.permute.xlu0 %3449
  %3452 = vset.pattern.permute.xlu0 1
  %3453 = vperm.xlu0 %3452, %v2810
  %v3454 = vpop.permute.xlu0 %3453
  %3456 = vset.pattern.permute.xlu0 1
  %3457 = vperm.xlu0 %3456, %v2811
  %v3458 = vpop.permute.xlu0 %3457
  %3460 = vset.pattern.permute.xlu0 1
  %3461 = vperm.xlu0 %3460, %v2812
  %v3462 = vpop.permute.xlu0 %3461
  %3464 = vset.pattern.permute.xlu0 1
  %3465 = vperm.xlu0 %3464, %v2813
  %v3466 = vpop.permute.xlu0 %3465
  %3468 = vset.pattern.permute.xlu0 1
  %3469 = vperm.xlu0 %3468, %v2814
  %v3470 = vpop.permute.xlu0 %3469
  %3472 = vset.pattern.permute.xlu0 1
  %3473 = vperm.xlu0 %3472, %v2815
  %v3474 = vpop.permute.xlu0 %3473
  %3476 = vset.pattern.permute.xlu0 1
  %3477 = vperm.xlu0 %3476, %v2816
  %v3478 = vpop.permute.xlu0 %3477
  %3480 = vset.pattern.permute.xlu0 1
  %3481 = vperm.xlu0 %3480, %v2817
  %v3482 = vpop.permute.xlu0 %3481
  %3484 = vset.pattern.permute.xlu0 1
  %3485 = vperm.xlu0 %3484, %v2818
  %v3486 = vpop.permute.xlu0 %3485
  %3488 = vset.pattern.permute.xlu0 1
  %3489 = vperm.xlu0 %3488, %v2819
  %v3490 = vpop.permute.xlu0 %3489
  %3492 = vset.pattern.permute.xlu0 1
  %3493 = vperm.xlu0 %3492, %v2820
  %v3494 = vpop.permute.xlu0 %3493
  %3496 = vset.pattern.permute.xlu0 1
  %3497 = vperm.xlu0 %3496, %v2821
  %v3498 = vpop.permute.xlu0 %3497
  %3500 = vset.pattern.permute.xlu0 1
  %3501 = vperm.xlu0 %3500, %v2822
  %v3502 = vpop.permute.xlu0 %3501
  %3504 = vset.pattern.permute.xlu0 1
  %3505 = vperm.xlu0 %3504, %v2823
  %v3506 = vpop.permute.xlu0 %3505
  %3508 = vset.pattern.permute.xlu0 1
  %3509 = vperm.xlu0 %3508, %v2824
  %v3510 = vpop.permute.xlu0 %3509
  %3512 = vset.pattern.permute.xlu0 1
  %3513 = vperm.xlu0 %3512, %v2825
  %v3514 = vpop.permute.xlu0 %3513
  %3516 = vset.pattern.permute.xlu0 1
  %3517 = vperm.xlu0 %3516, %v2826
  %v3518 = vpop.permute.xlu0 %3517
  %3520 = vset.pattern.permute.xlu0 1
  %3521 = vperm.xlu0 %3520, %v2827
  %v3522 = vpop.permute.xlu0 %3521
  %3524 = vset.pattern.permute.xlu0 1
  %3525 = vperm.xlu0 %3524, %v2828
  %v3526 = vpop.permute.xlu0 %3525
  %3528 = vset.pattern.permute.xlu0 1
  %3529 = vperm.xlu0 %3528, %v2829
  %v3530 = vpop.permute.xlu0 %3529
  %3532 = vset.pattern.permute.xlu0 1
  %3533 = vperm.xlu0 %3532, %v2830
  %v3534 = vpop.permute.xlu0 %3533
  %3536 = vset.pattern.permute.xlu0 1
  %3537 = vperm.xlu0 %3536, %v2831
  %v3538 = vpop.permute.xlu0 %3537
  %3540 = vset.pattern.permute.xlu0 1
  %3541 = vperm.xlu0 %3540, %v2832
  %v3542 = vpop.permute.xlu0 %3541
  %v3544 = vperm.slane %v3287, 0
  %v3545 = vmul.f32 %v3290, %v3544
  %v3546 = vmul.f32 %v3294, %v3544
  %v3547 = vmul.f32 %v3298, %v3544
  %v3548 = vmul.f32 %v3302, %v3544
  %v3549 = vmul.f32 %v3306, %v3544
  %v3550 = vmul.f32 %v3310, %v3544
  %v3551 = vmul.f32 %v3314, %v3544
  %v3552 = vmul.f32 %v3318, %v3544
  %v3553 = vmul.f32 %v3322, %v3544
  %v3554 = vmul.f32 %v3326, %v3544
  %v3555 = vmul.f32 %v3330, %v3544
  %v3556 = vmul.f32 %v3334, %v3544
  %v3557 = vmul.f32 %v3338, %v3544
  %v3558 = vmul.f32 %v3342, %v3544
  %v3559 = vmul.f32 %v3346, %v3544
  %v3560 = vmul.f32 %v3350, %v3544
  %v3561 = vmul.f32 %v3354, %v3544
  %v3562 = vmul.f32 %v3358, %v3544
  %v3563 = vmul.f32 %v3362, %v3544
  %v3564 = vmul.f32 %v3366, %v3544
  %v3565 = vmul.f32 %v3370, %v3544
  %v3566 = vmul.f32 %v3374, %v3544
  %v3567 = vmul.f32 %v3378, %v3544
  %v3568 = vmul.f32 %v3382, %v3544
  %v3569 = vmul.f32 %v3386, %v3544
  %v3570 = vmul.f32 %v3390, %v3544
  %v3571 = vmul.f32 %v3394, %v3544
  %v3572 = vmul.f32 %v3398, %v3544
  %v3573 = vmul.f32 %v3402, %v3544
  %v3574 = vmul.f32 %v3406, %v3544
  %v3575 = vmul.f32 %v3410, %v3544
  %v3576 = vmul.f32 %v3414, %v3544
  %v3577 = vmul.f32 %v3418, %v3544
  %v3578 = vmul.f32 %v3422, %v3544
  %v3579 = vmul.f32 %v3426, %v3544
  %v3580 = vmul.f32 %v3430, %v3544
  %v3581 = vmul.f32 %v3434, %v3544
  %v3582 = vmul.f32 %v3438, %v3544
  %v3583 = vmul.f32 %v3442, %v3544
  %v3584 = vmul.f32 %v3446, %v3544
  %v3585 = vmul.f32 %v3450, %v3544
  %v3586 = vmul.f32 %v3454, %v3544
  %v3587 = vmul.f32 %v3458, %v3544
  %v3588 = vmul.f32 %v3462, %v3544
  %v3589 = vmul.f32 %v3466, %v3544
  %v3590 = vmul.f32 %v3470, %v3544
  %v3591 = vmul.f32 %v3474, %v3544
  %v3592 = vmul.f32 %v3478, %v3544
  %v3593 = vmul.f32 %v3482, %v3544
  %v3594 = vmul.f32 %v3486, %v3544
  %v3595 = vmul.f32 %v3490, %v3544
  %v3596 = vmul.f32 %v3494, %v3544
  %v3597 = vmul.f32 %v3498, %v3544
  %v3598 = vmul.f32 %v3502, %v3544
  %v3599 = vmul.f32 %v3506, %v3544
  %v3600 = vmul.f32 %v3510, %v3544
  %v3601 = vmul.f32 %v3514, %v3544
  %v3602 = vmul.f32 %v3518, %v3544
  %v3603 = vmul.f32 %v3522, %v3544
  %v3604 = vmul.f32 %v3526, %v3544
  %v3605 = vmul.f32 %v3530, %v3544
  %v3606 = vmul.f32 %v3534, %v3544
  %v3607 = vmul.f32 %v3538, %v3544
  %v3608 = vmul.f32 %v3542, %v3544
  %v3609 = vadd.f32 %v3223, %v3545
  %v3610 = vadd.f32 %v3224, %v3546
  %v3611 = vadd.f32 %v3225, %v3547
  %v3612 = vadd.f32 %v3226, %v3548
  %v3613 = vadd.f32 %v3227, %v3549
  %v3614 = vadd.f32 %v3228, %v3550
  %v3615 = vadd.f32 %v3229, %v3551
  %v3616 = vadd.f32 %v3230, %v3552
  %v3617 = vadd.f32 %v3231, %v3553
  %v3618 = vadd.f32 %v3232, %v3554
  %v3619 = vadd.f32 %v3233, %v3555
  %v3620 = vadd.f32 %v3234, %v3556
  %v3621 = vadd.f32 %v3235, %v3557
  %v3622 = vadd.f32 %v3236, %v3558
  %v3623 = vadd.f32 %v3237, %v3559
  %v3624 = vadd.f32 %v3238, %v3560
  %v3625 = vadd.f32 %v3239, %v3561
  %v3626 = vadd.f32 %v3240, %v3562
  %v3627 = vadd.f32 %v3241, %v3563
  %v3628 = vadd.f32 %v3242, %v3564
  %v3629 = vadd.f32 %v3243, %v3565
  %v3630 = vadd.f32 %v3244, %v3566
  %v3631 = vadd.f32 %v3245, %v3567
  %v3632 = vadd.f32 %v3246, %v3568
  %v3633 = vadd.f32 %v3247, %v3569
  %v3634 = vadd.f32 %v3248, %v3570
  %v3635 = vadd.f32 %v3249, %v3571
  %v3636 = vadd.f32 %v3250, %v3572
  %v3637 = vadd.f32 %v3251, %v3573
  %v3638 = vadd.f32 %v3252, %v3574
  %v3639 = vadd.f32 %v3253, %v3575
  %v3640 = vadd.f32 %v3254, %v3576
  %v3641 = vadd.f32 %v3255, %v3577
  %v3642 = vadd.f32 %v3256, %v3578
  %v3643 = vadd.f32 %v3257, %v3579
  %v3644 = vadd.f32 %v3258, %v3580
  %v3645 = vadd.f32 %v3259, %v3581
  %v3646 = vadd.f32 %v3260, %v3582
  %v3647 = vadd.f32 %v3261, %v3583
  %v3648 = vadd.f32 %v3262, %v3584
  %v3649 = vadd.f32 %v3263, %v3585
  %v3650 = vadd.f32 %v3264, %v3586
  %v3651 = vadd.f32 %v3265, %v3587
  %v3652 = vadd.f32 %v3266, %v3588
  %v3653 = vadd.f32 %v3267, %v3589
  %v3654 = vadd.f32 %v3268, %v3590
  %v3655 = vadd.f32 %v3269, %v3591
  %v3656 = vadd.f32 %v3270, %v3592
  %v3657 = vadd.f32 %v3271, %v3593
  %v3658 = vadd.f32 %v3272, %v3594
  %v3659 = vadd.f32 %v3273, %v3595
  %v3660 = vadd.f32 %v3274, %v3596
  %v3661 = vadd.f32 %v3275, %v3597
  %v3662 = vadd.f32 %v3276, %v3598
  %v3663 = vadd.f32 %v3277, %v3599
  %v3664 = vadd.f32 %v3278, %v3600
  %v3665 = vadd.f32 %v3279, %v3601
  %v3666 = vadd.f32 %v3280, %v3602
  %v3667 = vadd.f32 %v3281, %v3603
  %v3668 = vadd.f32 %v3282, %v3604
  %v3669 = vadd.f32 %v3283, %v3605
  %v3670 = vadd.f32 %v3284, %v3606
  %v3671 = vadd.f32 %v3285, %v3607
  %v3672 = vadd.f32 %v3286, %v3608
  %v3673 = vld [vmem:[%s13 + $0x2] sm:$0x1]
  %3674 = vset.pattern.permute.xlu0 2
  %3675 = vperm.xlu0 %3674, %v2769
  %v3676 = vpop.permute.xlu0 %3675
  %3678 = vset.pattern.permute.xlu0 2
  %3679 = vperm.xlu0 %3678, %v2770
  %v3680 = vpop.permute.xlu0 %3679
  %3682 = vset.pattern.permute.xlu0 2
  %3683 = vperm.xlu0 %3682, %v2771
  %v3684 = vpop.permute.xlu0 %3683
  %3686 = vset.pattern.permute.xlu0 2
  %3687 = vperm.xlu0 %3686, %v2772
  %v3688 = vpop.permute.xlu0 %3687
  %3690 = vset.pattern.permute.xlu0 2
  %3691 = vperm.xlu0 %3690, %v2773
  %v3692 = vpop.permute.xlu0 %3691
  %3694 = vset.pattern.permute.xlu0 2
  %3695 = vperm.xlu0 %3694, %v2774
  %v3696 = vpop.permute.xlu0 %3695
  %3698 = vset.pattern.permute.xlu0 2
  %3699 = vperm.xlu0 %3698, %v2775
  %v3700 = vpop.permute.xlu0 %3699
  %3702 = vset.pattern.permute.xlu0 2
  %3703 = vperm.xlu0 %3702, %v2776
  %v3704 = vpop.permute.xlu0 %3703
  %3706 = vset.pattern.permute.xlu0 2
  %3707 = vperm.xlu0 %3706, %v2777
  %v3708 = vpop.permute.xlu0 %3707
  %3710 = vset.pattern.permute.xlu0 2
  %3711 = vperm.xlu0 %3710, %v2778
  %v3712 = vpop.permute.xlu0 %3711
  %3714 = vset.pattern.permute.xlu0 2
  %3715 = vperm.xlu0 %3714, %v2779
  %v3716 = vpop.permute.xlu0 %3715
  %3718 = vset.pattern.permute.xlu0 2
  %3719 = vperm.xlu0 %3718, %v2780
  %v3720 = vpop.permute.xlu0 %3719
  %3722 = vset.pattern.permute.xlu0 2
  %3723 = vperm.xlu0 %3722, %v2781
  %v3724 = vpop.permute.xlu0 %3723
  %3726 = vset.pattern.permute.xlu0 2
  %3727 = vperm.xlu0 %3726, %v2782
  %v3728 = vpop.permute.xlu0 %3727
  %3730 = vset.pattern.permute.xlu0 2
  %3731 = vperm.xlu0 %3730, %v2783
  %v3732 = vpop.permute.xlu0 %3731
  %3734 = vset.pattern.permute.xlu0 2
  %3735 = vperm.xlu0 %3734, %v2784
  %v3736 = vpop.permute.xlu0 %3735
  %3738 = vset.pattern.permute.xlu0 2
  %3739 = vperm.xlu0 %3738, %v2785
  %v3740 = vpop.permute.xlu0 %3739
  %3742 = vset.pattern.permute.xlu0 2
  %3743 = vperm.xlu0 %3742, %v2786
  %v3744 = vpop.permute.xlu0 %3743
  %3746 = vset.pattern.permute.xlu0 2
  %3747 = vperm.xlu0 %3746, %v2787
  %v3748 = vpop.permute.xlu0 %3747
  %3750 = vset.pattern.permute.xlu0 2
  %3751 = vperm.xlu0 %3750, %v2788
  %v3752 = vpop.permute.xlu0 %3751
  %3754 = vset.pattern.permute.xlu0 2
  %3755 = vperm.xlu0 %3754, %v2789
  %v3756 = vpop.permute.xlu0 %3755
  %3758 = vset.pattern.permute.xlu0 2
  %3759 = vperm.xlu0 %3758, %v2790
  %v3760 = vpop.permute.xlu0 %3759
  %3762 = vset.pattern.permute.xlu0 2
  %3763 = vperm.xlu0 %3762, %v2791
  %v3764 = vpop.permute.xlu0 %3763
  %3766 = vset.pattern.permute.xlu0 2
  %3767 = vperm.xlu0 %3766, %v2792
  %v3768 = vpop.permute.xlu0 %3767
  %3770 = vset.pattern.permute.xlu0 2
  %3771 = vperm.xlu0 %3770, %v2793
  %v3772 = vpop.permute.xlu0 %3771
  %3774 = vset.pattern.permute.xlu0 2
  %3775 = vperm.xlu0 %3774, %v2794
  %v3776 = vpop.permute.xlu0 %3775
  %3778 = vset.pattern.permute.xlu0 2
  %3779 = vperm.xlu0 %3778, %v2795
  %v3780 = vpop.permute.xlu0 %3779
  %3782 = vset.pattern.permute.xlu0 2
  %3783 = vperm.xlu0 %3782, %v2796
  %v3784 = vpop.permute.xlu0 %3783
  %3786 = vset.pattern.permute.xlu0 2
  %3787 = vperm.xlu0 %3786, %v2797
  %v3788 = vpop.permute.xlu0 %3787
  %3790 = vset.pattern.permute.xlu0 2
  %3791 = vperm.xlu0 %3790, %v2798
  %v3792 = vpop.permute.xlu0 %3791
  %3794 = vset.pattern.permute.xlu0 2
  %3795 = vperm.xlu0 %3794, %v2799
  %v3796 = vpop.permute.xlu0 %3795
  %3798 = vset.pattern.permute.xlu0 2
  %3799 = vperm.xlu0 %3798, %v2800
  %v3800 = vpop.permute.xlu0 %3799
  %3802 = vset.pattern.permute.xlu0 2
  %3803 = vperm.xlu0 %3802, %v2801
  %v3804 = vpop.permute.xlu0 %3803
  %3806 = vset.pattern.permute.xlu0 2
  %3807 = vperm.xlu0 %3806, %v2802
  %v3808 = vpop.permute.xlu0 %3807
  %3810 = vset.pattern.permute.xlu0 2
  %3811 = vperm.xlu0 %3810, %v2803
  %v3812 = vpop.permute.xlu0 %3811
  %3814 = vset.pattern.permute.xlu0 2
  %3815 = vperm.xlu0 %3814, %v2804
  %v3816 = vpop.permute.xlu0 %3815
  %3818 = vset.pattern.permute.xlu0 2
  %3819 = vperm.xlu0 %3818, %v2805
  %v3820 = vpop.permute.xlu0 %3819
  %3822 = vset.pattern.permute.xlu0 2
  %3823 = vperm.xlu0 %3822, %v2806
  %v3824 = vpop.permute.xlu0 %3823
  %3826 = vset.pattern.permute.xlu0 2
  %3827 = vperm.xlu0 %3826, %v2807
  %v3828 = vpop.permute.xlu0 %3827
  %3830 = vset.pattern.permute.xlu0 2
  %3831 = vperm.xlu0 %3830, %v2808
  %v3832 = vpop.permute.xlu0 %3831
  %3834 = vset.pattern.permute.xlu0 2
  %3835 = vperm.xlu0 %3834, %v2809
  %v3836 = vpop.permute.xlu0 %3835
  %3838 = vset.pattern.permute.xlu0 2
  %3839 = vperm.xlu0 %3838, %v2810
  %v3840 = vpop.permute.xlu0 %3839
  %3842 = vset.pattern.permute.xlu0 2
  %3843 = vperm.xlu0 %3842, %v2811
  %v3844 = vpop.permute.xlu0 %3843
  %3846 = vset.pattern.permute.xlu0 2
  %3847 = vperm.xlu0 %3846, %v2812
  %v3848 = vpop.permute.xlu0 %3847
  %3850 = vset.pattern.permute.xlu0 2
  %3851 = vperm.xlu0 %3850, %v2813
  %v3852 = vpop.permute.xlu0 %3851
  %3854 = vset.pattern.permute.xlu0 2
  %3855 = vperm.xlu0 %3854, %v2814
  %v3856 = vpop.permute.xlu0 %3855
  %3858 = vset.pattern.permute.xlu0 2
  %3859 = vperm.xlu0 %3858, %v2815
  %v3860 = vpop.permute.xlu0 %3859
  %3862 = vset.pattern.permute.xlu0 2
  %3863 = vperm.xlu0 %3862, %v2816
  %v3864 = vpop.permute.xlu0 %3863
  %3866 = vset.pattern.permute.xlu0 2
  %3867 = vperm.xlu0 %3866, %v2817
  %v3868 = vpop.permute.xlu0 %3867
  %3870 = vset.pattern.permute.xlu0 2
  %3871 = vperm.xlu0 %3870, %v2818
  %v3872 = vpop.permute.xlu0 %3871
  %3874 = vset.pattern.permute.xlu0 2
  %3875 = vperm.xlu0 %3874, %v2819
  %v3876 = vpop.permute.xlu0 %3875
  %3878 = vset.pattern.permute.xlu0 2
  %3879 = vperm.xlu0 %3878, %v2820
  %v3880 = vpop.permute.xlu0 %3879
  %3882 = vset.pattern.permute.xlu0 2
  %3883 = vperm.xlu0 %3882, %v2821
  %v3884 = vpop.permute.xlu0 %3883
  %3886 = vset.pattern.permute.xlu0 2
  %3887 = vperm.xlu0 %3886, %v2822
  %v3888 = vpop.permute.xlu0 %3887
  %3890 = vset.pattern.permute.xlu0 2
  %3891 = vperm.xlu0 %3890, %v2823
  %v3892 = vpop.permute.xlu0 %3891
  %3894 = vset.pattern.permute.xlu0 2
  %3895 = vperm.xlu0 %3894, %v2824
  %v3896 = vpop.permute.xlu0 %3895
  %3898 = vset.pattern.permute.xlu0 2
  %3899 = vperm.xlu0 %3898, %v2825
  %v3900 = vpop.permute.xlu0 %3899
  %3902 = vset.pattern.permute.xlu0 2
  %3903 = vperm.xlu0 %3902, %v2826
  %v3904 = vpop.permute.xlu0 %3903
  %3906 = vset.pattern.permute.xlu0 2
  %3907 = vperm.xlu0 %3906, %v2827
  %v3908 = vpop.permute.xlu0 %3907
  %3910 = vset.pattern.permute.xlu0 2
  %3911 = vperm.xlu0 %3910, %v2828
  %v3912 = vpop.permute.xlu0 %3911
  %3914 = vset.pattern.permute.xlu0 2
  %3915 = vperm.xlu0 %3914, %v2829
  %v3916 = vpop.permute.xlu0 %3915
  %3918 = vset.pattern.permute.xlu0 2
  %3919 = vperm.xlu0 %3918, %v2830
  %v3920 = vpop.permute.xlu0 %3919
  %3922 = vset.pattern.permute.xlu0 2
  %3923 = vperm.xlu0 %3922, %v2831
  %v3924 = vpop.permute.xlu0 %3923
  %3926 = vset.pattern.permute.xlu0 2
  %3927 = vperm.xlu0 %3926, %v2832
  %v3928 = vpop.permute.xlu0 %3927
  %v3930 = vperm.slane %v3673, 0
  %v3931 = vmul.f32 %v3676, %v3930
  %v3932 = vmul.f32 %v3680, %v3930
  %v3933 = vmul.f32 %v3684, %v3930
  %v3934 = vmul.f32 %v3688, %v3930
  %v3935 = vmul.f32 %v3692, %v3930
  %v3936 = vmul.f32 %v3696, %v3930
  %v3937 = vmul.f32 %v3700, %v3930
  %v3938 = vmul.f32 %v3704, %v3930
  %v3939 = vmul.f32 %v3708, %v3930
  %v3940 = vmul.f32 %v3712, %v3930
  %v3941 = vmul.f32 %v3716, %v3930
  %v3942 = vmul.f32 %v3720, %v3930
  %v3943 = vmul.f32 %v3724, %v3930
  %v3944 = vmul.f32 %v3728, %v3930
  %v3945 = vmul.f32 %v3732, %v3930
  %v3946 = vmul.f32 %v3736, %v3930
  %v3947 = vmul.f32 %v3740, %v3930
  %v3948 = vmul.f32 %v3744, %v3930
  %v3949 = vmul.f32 %v3748, %v3930
  %v3950 = vmul.f32 %v3752, %v3930
  %v3951 = vmul.f32 %v3756, %v3930
  %v3952 = vmul.f32 %v3760, %v3930
  %v3953 = vmul.f32 %v3764, %v3930
  %v3954 = vmul.f32 %v3768, %v3930
  %v3955 = vmul.f32 %v3772, %v3930
  %v3956 = vmul.f32 %v3776, %v3930
  %v3957 = vmul.f32 %v3780, %v3930
  %v3958 = vmul.f32 %v3784, %v3930
  %v3959 = vmul.f32 %v3788, %v3930
  %v3960 = vmul.f32 %v3792, %v3930
  %v3961 = vmul.f32 %v3796, %v3930
  %v3962 = vmul.f32 %v3800, %v3930
  %v3963 = vmul.f32 %v3804, %v3930
  %v3964 = vmul.f32 %v3808, %v3930
  %v3965 = vmul.f32 %v3812, %v3930
  %v3966 = vmul.f32 %v3816, %v3930
  %v3967 = vmul.f32 %v3820, %v3930
  %v3968 = vmul.f32 %v3824, %v3930
  %v3969 = vmul.f32 %v3828, %v3930
  %v3970 = vmul.f32 %v3832, %v3930
  %v3971 = vmul.f32 %v3836, %v3930
  %v3972 = vmul.f32 %v3840, %v3930
  %v3973 = vmul.f32 %v3844, %v3930
  %v3974 = vmul.f32 %v3848, %v3930
  %v3975 = vmul.f32 %v3852, %v3930
  %v3976 = vmul.f32 %v3856, %v3930
  %v3977 = vmul.f32 %v3860, %v3930
  %v3978 = vmul.f32 %v3864, %v3930
  %v3979 = vmul.f32 %v3868, %v3930
  %v3980 = vmul.f32 %v3872, %v3930
  %v3981 = vmul.f32 %v3876, %v3930
  %v3982 = vmul.f32 %v3880, %v3930
  %v3983 = vmul.f32 %v3884, %v3930
  %v3984 = vmul.f32 %v3888, %v3930
  %v3985 = vmul.f32 %v3892, %v3930
  %v3986 = vmul.f32 %v3896, %v3930
  %v3987 = vmul.f32 %v3900, %v3930
  %v3988 = vmul.f32 %v3904, %v3930
  %v3989 = vmul.f32 %v3908, %v3930
  %v3990 = vmul.f32 %v3912, %v3930
  %v3991 = vmul.f32 %v3916, %v3930
  %v3992 = vmul.f32 %v3920, %v3930
  %v3993 = vmul.f32 %v3924, %v3930
  %v3994 = vmul.f32 %v3928, %v3930
  %v3995 = vadd.f32 %v3609, %v3931
  %v3996 = vadd.f32 %v3610, %v3932
  %v3997 = vadd.f32 %v3611, %v3933
  %v3998 = vadd.f32 %v3612, %v3934
  %v3999 = vadd.f32 %v3613, %v3935
  %v4000 = vadd.f32 %v3614, %v3936
  %v4001 = vadd.f32 %v3615, %v3937
  %v4002 = vadd.f32 %v3616, %v3938
  %v4003 = vadd.f32 %v3617, %v3939
  %v4004 = vadd.f32 %v3618, %v3940
  %v4005 = vadd.f32 %v3619, %v3941
  %v4006 = vadd.f32 %v3620, %v3942
  %v4007 = vadd.f32 %v3621, %v3943
  %v4008 = vadd.f32 %v3622, %v3944
  %v4009 = vadd.f32 %v3623, %v3945
  %v4010 = vadd.f32 %v3624, %v3946
  %v4011 = vadd.f32 %v3625, %v3947
  %v4012 = vadd.f32 %v3626, %v3948
  %v4013 = vadd.f32 %v3627, %v3949
  %v4014 = vadd.f32 %v3628, %v3950
  %v4015 = vadd.f32 %v3629, %v3951
  %v4016 = vadd.f32 %v3630, %v3952
  %v4017 = vadd.f32 %v3631, %v3953
  %v4018 = vadd.f32 %v3632, %v3954
  %v4019 = vadd.f32 %v3633, %v3955
  %v4020 = vadd.f32 %v3634, %v3956
  %v4021 = vadd.f32 %v3635, %v3957
  %v4022 = vadd.f32 %v3636, %v3958
  %v4023 = vadd.f32 %v3637, %v3959
  %v4024 = vadd.f32 %v3638, %v3960
  %v4025 = vadd.f32 %v3639, %v3961
  %v4026 = vadd.f32 %v3640, %v3962
  %v4027 = vadd.f32 %v3641, %v3963
  %v4028 = vadd.f32 %v3642, %v3964
  %v4029 = vadd.f32 %v3643, %v3965
  %v4030 = vadd.f32 %v3644, %v3966
  %v4031 = vadd.f32 %v3645, %v3967
  %v4032 = vadd.f32 %v3646, %v3968
  %v4033 = vadd.f32 %v3647, %v3969
  %v4034 = vadd.f32 %v3648, %v3970
  %v4035 = vadd.f32 %v3649, %v3971
  %v4036 = vadd.f32 %v3650, %v3972
  %v4037 = vadd.f32 %v3651, %v3973
  %v4038 = vadd.f32 %v3652, %v3974
  %v4039 = vadd.f32 %v3653, %v3975
  %v4040 = vadd.f32 %v3654, %v3976
  %v4041 = vadd.f32 %v3655, %v3977
  %v4042 = vadd.f32 %v3656, %v3978
  %v4043 = vadd.f32 %v3657, %v3979
  %v4044 = vadd.f32 %v3658, %v3980
  %v4045 = vadd.f32 %v3659, %v3981
  %v4046 = vadd.f32 %v3660, %v3982
  %v4047 = vadd.f32 %v3661, %v3983
  %v4048 = vadd.f32 %v3662, %v3984
  %v4049 = vadd.f32 %v3663, %v3985
  %v4050 = vadd.f32 %v3664, %v3986
  %v4051 = vadd.f32 %v3665, %v3987
  %v4052 = vadd.f32 %v3666, %v3988
  %v4053 = vadd.f32 %v3667, %v3989
  %v4054 = vadd.f32 %v3668, %v3990
  %v4055 = vadd.f32 %v3669, %v3991
  %v4056 = vadd.f32 %v3670, %v3992
  %v4057 = vadd.f32 %v3671, %v3993
  %v4058 = vadd.f32 %v3672, %v3994
  %v4059 = vld [vmem:[%s13 + $0x3] sm:$0x1]
  %4060 = vset.pattern.permute.xlu0 3
  %4061 = vperm.xlu0 %4060, %v2769
  %v4062 = vpop.permute.xlu0 %4061
  %4064 = vset.pattern.permute.xlu0 3
  %4065 = vperm.xlu0 %4064, %v2770
  %v4066 = vpop.permute.xlu0 %4065
  %4068 = vset.pattern.permute.xlu0 3
  %4069 = vperm.xlu0 %4068, %v2771
  %v4070 = vpop.permute.xlu0 %4069
  %4072 = vset.pattern.permute.xlu0 3
  %4073 = vperm.xlu0 %4072, %v2772
  %v4074 = vpop.permute.xlu0 %4073
  %4076 = vset.pattern.permute.xlu0 3
  %4077 = vperm.xlu0 %4076, %v2773
  %v4078 = vpop.permute.xlu0 %4077
  %4080 = vset.pattern.permute.xlu0 3
  %4081 = vperm.xlu0 %4080, %v2774
  %v4082 = vpop.permute.xlu0 %4081
  %4084 = vset.pattern.permute.xlu0 3
  %4085 = vperm.xlu0 %4084, %v2775
  %v4086 = vpop.permute.xlu0 %4085
  %4088 = vset.pattern.permute.xlu0 3
  %4089 = vperm.xlu0 %4088, %v2776
  %v4090 = vpop.permute.xlu0 %4089
  %4092 = vset.pattern.permute.xlu0 3
  %4093 = vperm.xlu0 %4092, %v2777
  %v4094 = vpop.permute.xlu0 %4093
  %4096 = vset.pattern.permute.xlu0 3
  %4097 = vperm.xlu0 %4096, %v2778
  %v4098 = vpop.permute.xlu0 %4097
  %4100 = vset.pattern.permute.xlu0 3
  %4101 = vperm.xlu0 %4100, %v2779
  %v4102 = vpop.permute.xlu0 %4101
  %4104 = vset.pattern.permute.xlu0 3
  %4105 = vperm.xlu0 %4104, %v2780
  %v4106 = vpop.permute.xlu0 %4105
  %4108 = vset.pattern.permute.xlu0 3
  %4109 = vperm.xlu0 %4108, %v2781
  %v4110 = vpop.permute.xlu0 %4109
  %4112 = vset.pattern.permute.xlu0 3
  %4113 = vperm.xlu0 %4112, %v2782
  %v4114 = vpop.permute.xlu0 %4113
  %4116 = vset.pattern.permute.xlu0 3
  %4117 = vperm.xlu0 %4116, %v2783
  %v4118 = vpop.permute.xlu0 %4117
  %4120 = vset.pattern.permute.xlu0 3
  %4121 = vperm.xlu0 %4120, %v2784
  %v4122 = vpop.permute.xlu0 %4121
  %4124 = vset.pattern.permute.xlu0 3
  %4125 = vperm.xlu0 %4124, %v2785
  %v4126 = vpop.permute.xlu0 %4125
  %4128 = vset.pattern.permute.xlu0 3
  %4129 = vperm.xlu0 %4128, %v2786
  %v4130 = vpop.permute.xlu0 %4129
  %4132 = vset.pattern.permute.xlu0 3
  %4133 = vperm.xlu0 %4132, %v2787
  %v4134 = vpop.permute.xlu0 %4133
  %4136 = vset.pattern.permute.xlu0 3
  %4137 = vperm.xlu0 %4136, %v2788
  %v4138 = vpop.permute.xlu0 %4137
  %4140 = vset.pattern.permute.xlu0 3
  %4141 = vperm.xlu0 %4140, %v2789
  %v4142 = vpop.permute.xlu0 %4141
  %4144 = vset.pattern.permute.xlu0 3
  %4145 = vperm.xlu0 %4144, %v2790
  %v4146 = vpop.permute.xlu0 %4145
  %4148 = vset.pattern.permute.xlu0 3
  %4149 = vperm.xlu0 %4148, %v2791
  %v4150 = vpop.permute.xlu0 %4149
  %4152 = vset.pattern.permute.xlu0 3
  %4153 = vperm.xlu0 %4152, %v2792
  %v4154 = vpop.permute.xlu0 %4153
  %4156 = vset.pattern.permute.xlu0 3
  %4157 = vperm.xlu0 %4156, %v2793
  %v4158 = vpop.permute.xlu0 %4157
  %4160 = vset.pattern.permute.xlu0 3
  %4161 = vperm.xlu0 %4160, %v2794
  %v4162 = vpop.permute.xlu0 %4161
  %4164 = vset.pattern.permute.xlu0 3
  %4165 = vperm.xlu0 %4164, %v2795
  %v4166 = vpop.permute.xlu0 %4165
  %4168 = vset.pattern.permute.xlu0 3
  %4169 = vperm.xlu0 %4168, %v2796
  %v4170 = vpop.permute.xlu0 %4169
  %4172 = vset.pattern.permute.xlu0 3
  %4173 = vperm.xlu0 %4172, %v2797
  %v4174 = vpop.permute.xlu0 %4173
  %4176 = vset.pattern.permute.xlu0 3
  %4177 = vperm.xlu0 %4176, %v2798
  %v4178 = vpop.permute.xlu0 %4177
  %4180 = vset.pattern.permute.xlu0 3
  %4181 = vperm.xlu0 %4180, %v2799
  %v4182 = vpop.permute.xlu0 %4181
  %4184 = vset.pattern.permute.xlu0 3
  %4185 = vperm.xlu0 %4184, %v2800
  %v4186 = vpop.permute.xlu0 %4185
  %4188 = vset.pattern.permute.xlu0 3
  %4189 = vperm.xlu0 %4188, %v2801
  %v4190 = vpop.permute.xlu0 %4189
  %4192 = vset.pattern.permute.xlu0 3
  %4193 = vperm.xlu0 %4192, %v2802
  %v4194 = vpop.permute.xlu0 %4193
  %4196 = vset.pattern.permute.xlu0 3
  %4197 = vperm.xlu0 %4196, %v2803
  %v4198 = vpop.permute.xlu0 %4197
  %4200 = vset.pattern.permute.xlu0 3
  %4201 = vperm.xlu0 %4200, %v2804
  %v4202 = vpop.permute.xlu0 %4201
  %4204 = vset.pattern.permute.xlu0 3
  %4205 = vperm.xlu0 %4204, %v2805
  %v4206 = vpop.permute.xlu0 %4205
  %4208 = vset.pattern.permute.xlu0 3
  %4209 = vperm.xlu0 %4208, %v2806
  %v4210 = vpop.permute.xlu0 %4209
  %4212 = vset.pattern.permute.xlu0 3
  %4213 = vperm.xlu0 %4212, %v2807
  %v4214 = vpop.permute.xlu0 %4213
  %4216 = vset.pattern.permute.xlu0 3
  %4217 = vperm.xlu0 %4216, %v2808
  %v4218 = vpop.permute.xlu0 %4217
  %4220 = vset.pattern.permute.xlu0 3
  %4221 = vperm.xlu0 %4220, %v2809
  %v4222 = vpop.permute.xlu0 %4221
  %4224 = vset.pattern.permute.xlu0 3
  %4225 = vperm.xlu0 %4224, %v2810
  %v4226 = vpop.permute.xlu0 %4225
  %4228 = vset.pattern.permute.xlu0 3
  %4229 = vperm.xlu0 %4228, %v2811
  %v4230 = vpop.permute.xlu0 %4229
  %4232 = vset.pattern.permute.xlu0 3
  %4233 = vperm.xlu0 %4232, %v2812
  %v4234 = vpop.permute.xlu0 %4233
  %4236 = vset.pattern.permute.xlu0 3
  %4237 = vperm.xlu0 %4236, %v2813
  %v4238 = vpop.permute.xlu0 %4237
  %4240 = vset.pattern.permute.xlu0 3
  %4241 = vperm.xlu0 %4240, %v2814
  %v4242 = vpop.permute.xlu0 %4241
  %4244 = vset.pattern.permute.xlu0 3
  %4245 = vperm.xlu0 %4244, %v2815
  %v4246 = vpop.permute.xlu0 %4245
  %4248 = vset.pattern.permute.xlu0 3
  %4249 = vperm.xlu0 %4248, %v2816
  %v4250 = vpop.permute.xlu0 %4249
  %4252 = vset.pattern.permute.xlu0 3
  %4253 = vperm.xlu0 %4252, %v2817
  %v4254 = vpop.permute.xlu0 %4253
  %4256 = vset.pattern.permute.xlu0 3
  %4257 = vperm.xlu0 %4256, %v2818
  %v4258 = vpop.permute.xlu0 %4257
  %4260 = vset.pattern.permute.xlu0 3
  %4261 = vperm.xlu0 %4260, %v2819
  %v4262 = vpop.permute.xlu0 %4261
  %4264 = vset.pattern.permute.xlu0 3
  %4265 = vperm.xlu0 %4264, %v2820
  %v4266 = vpop.permute.xlu0 %4265
  %4268 = vset.pattern.permute.xlu0 3
  %4269 = vperm.xlu0 %4268, %v2821
  %v4270 = vpop.permute.xlu0 %4269
  %4272 = vset.pattern.permute.xlu0 3
  %4273 = vperm.xlu0 %4272, %v2822
  %v4274 = vpop.permute.xlu0 %4273
  %4276 = vset.pattern.permute.xlu0 3
  %4277 = vperm.xlu0 %4276, %v2823
  %v4278 = vpop.permute.xlu0 %4277
  %4280 = vset.pattern.permute.xlu0 3
  %4281 = vperm.xlu0 %4280, %v2824
  %v4282 = vpop.permute.xlu0 %4281
  %4284 = vset.pattern.permute.xlu0 3
  %4285 = vperm.xlu0 %4284, %v2825
  %v4286 = vpop.permute.xlu0 %4285
  %4288 = vset.pattern.permute.xlu0 3
  %4289 = vperm.xlu0 %4288, %v2826
  %v4290 = vpop.permute.xlu0 %4289
  %4292 = vset.pattern.permute.xlu0 3
  %4293 = vperm.xlu0 %4292, %v2827
  %v4294 = vpop.permute.xlu0 %4293
  %4296 = vset.pattern.permute.xlu0 3
  %4297 = vperm.xlu0 %4296, %v2828
  %v4298 = vpop.permute.xlu0 %4297
  %4300 = vset.pattern.permute.xlu0 3
  %4301 = vperm.xlu0 %4300, %v2829
  %v4302 = vpop.permute.xlu0 %4301
  %4304 = vset.pattern.permute.xlu0 3
  %4305 = vperm.xlu0 %4304, %v2830
  %v4306 = vpop.permute.xlu0 %4305
  %4308 = vset.pattern.permute.xlu0 3
  %4309 = vperm.xlu0 %4308, %v2831
  %v4310 = vpop.permute.xlu0 %4309
  %4312 = vset.pattern.permute.xlu0 3
  %4313 = vperm.xlu0 %4312, %v2832
  %v4314 = vpop.permute.xlu0 %4313
  %v4316 = vperm.slane %v4059, 0
  %v4317 = vmul.f32 %v4062, %v4316
  %v4318 = vmul.f32 %v4066, %v4316
  %v4319 = vmul.f32 %v4070, %v4316
  %v4320 = vmul.f32 %v4074, %v4316
  %v4321 = vmul.f32 %v4078, %v4316
  %v4322 = vmul.f32 %v4082, %v4316
  %v4323 = vmul.f32 %v4086, %v4316
  %v4324 = vmul.f32 %v4090, %v4316
  %v4325 = vmul.f32 %v4094, %v4316
  %v4326 = vmul.f32 %v4098, %v4316
  %v4327 = vmul.f32 %v4102, %v4316
  %v4328 = vmul.f32 %v4106, %v4316
  %v4329 = vmul.f32 %v4110, %v4316
  %v4330 = vmul.f32 %v4114, %v4316
  %v4331 = vmul.f32 %v4118, %v4316
  %v4332 = vmul.f32 %v4122, %v4316
  %v4333 = vmul.f32 %v4126, %v4316
  %v4334 = vmul.f32 %v4130, %v4316
  %v4335 = vmul.f32 %v4134, %v4316
  %v4336 = vmul.f32 %v4138, %v4316
  %v4337 = vmul.f32 %v4142, %v4316
  %v4338 = vmul.f32 %v4146, %v4316
  %v4339 = vmul.f32 %v4150, %v4316
  %v4340 = vmul.f32 %v4154, %v4316
  %v4341 = vmul.f32 %v4158, %v4316
  %v4342 = vmul.f32 %v4162, %v4316
  %v4343 = vmul.f32 %v4166, %v4316
  %v4344 = vmul.f32 %v4170, %v4316
  %v4345 = vmul.f32 %v4174, %v4316
  %v4346 = vmul.f32 %v4178, %v4316
  %v4347 = vmul.f32 %v4182, %v4316
  %v4348 = vmul.f32 %v4186, %v4316
  %v4349 = vmul.f32 %v4190, %v4316
  %v4350 = vmul.f32 %v4194, %v4316
  %v4351 = vmul.f32 %v4198, %v4316
  %v4352 = vmul.f32 %v4202, %v4316
  %v4353 = vmul.f32 %v4206, %v4316
  %v4354 = vmul.f32 %v4210, %v4316
  %v4355 = vmul.f32 %v4214, %v4316
  %v4356 = vmul.f32 %v4218, %v4316
  %v4357 = vmul.f32 %v4222, %v4316
  %v4358 = vmul.f32 %v4226, %v4316
  %v4359 = vmul.f32 %v4230, %v4316
  %v4360 = vmul.f32 %v4234, %v4316
  %v4361 = vmul.f32 %v4238, %v4316
  %v4362 = vmul.f32 %v4242, %v4316
  %v4363 = vmul.f32 %v4246, %v4316
  %v4364 = vmul.f32 %v4250, %v4316
  %v4365 = vmul.f32 %v4254, %v4316
  %v4366 = vmul.f32 %v4258, %v4316
  %v4367 = vmul.f32 %v4262, %v4316
  %v4368 = vmul.f32 %v4266, %v4316
  %v4369 = vmul.f32 %v4270, %v4316
  %v4370 = vmul.f32 %v4274, %v4316
  %v4371 = vmul.f32 %v4278, %v4316
  %v4372 = vmul.f32 %v4282, %v4316
  %v4373 = vmul.f32 %v4286, %v4316
  %v4374 = vmul.f32 %v4290, %v4316
  %v4375 = vmul.f32 %v4294, %v4316
  %v4376 = vmul.f32 %v4298, %v4316
  %v4377 = vmul.f32 %v4302, %v4316
  %v4378 = vmul.f32 %v4306, %v4316
  %v4379 = vmul.f32 %v4310, %v4316
  %v4380 = vmul.f32 %v4314, %v4316
  %v4381 = vadd.f32 %v3995, %v4317
  %v4382 = vadd.f32 %v3996, %v4318
  %v4383 = vadd.f32 %v3997, %v4319
  %v4384 = vadd.f32 %v3998, %v4320
  %v4385 = vadd.f32 %v3999, %v4321
  %v4386 = vadd.f32 %v4000, %v4322
  %v4387 = vadd.f32 %v4001, %v4323
  %v4388 = vadd.f32 %v4002, %v4324
  %v4389 = vadd.f32 %v4003, %v4325
  %v4390 = vadd.f32 %v4004, %v4326
  %v4391 = vadd.f32 %v4005, %v4327
  %v4392 = vadd.f32 %v4006, %v4328
  %v4393 = vadd.f32 %v4007, %v4329
  %v4394 = vadd.f32 %v4008, %v4330
  %v4395 = vadd.f32 %v4009, %v4331
  %v4396 = vadd.f32 %v4010, %v4332
  %v4397 = vadd.f32 %v4011, %v4333
  %v4398 = vadd.f32 %v4012, %v4334
  %v4399 = vadd.f32 %v4013, %v4335
  %v4400 = vadd.f32 %v4014, %v4336
  %v4401 = vadd.f32 %v4015, %v4337
  %v4402 = vadd.f32 %v4016, %v4338
  %v4403 = vadd.f32 %v4017, %v4339
  %v4404 = vadd.f32 %v4018, %v4340
  %v4405 = vadd.f32 %v4019, %v4341
  %v4406 = vadd.f32 %v4020, %v4342
  %v4407 = vadd.f32 %v4021, %v4343
  %v4408 = vadd.f32 %v4022, %v4344
  %v4409 = vadd.f32 %v4023, %v4345
  %v4410 = vadd.f32 %v4024, %v4346
  %v4411 = vadd.f32 %v4025, %v4347
  %v4412 = vadd.f32 %v4026, %v4348
  %v4413 = vadd.f32 %v4027, %v4349
  %v4414 = vadd.f32 %v4028, %v4350
  %v4415 = vadd.f32 %v4029, %v4351
  %v4416 = vadd.f32 %v4030, %v4352
  %v4417 = vadd.f32 %v4031, %v4353
  %v4418 = vadd.f32 %v4032, %v4354
  %v4419 = vadd.f32 %v4033, %v4355
  %v4420 = vadd.f32 %v4034, %v4356
  %v4421 = vadd.f32 %v4035, %v4357
  %v4422 = vadd.f32 %v4036, %v4358
  %v4423 = vadd.f32 %v4037, %v4359
  %v4424 = vadd.f32 %v4038, %v4360
  %v4425 = vadd.f32 %v4039, %v4361
  %v4426 = vadd.f32 %v4040, %v4362
  %v4427 = vadd.f32 %v4041, %v4363
  %v4428 = vadd.f32 %v4042, %v4364
  %v4429 = vadd.f32 %v4043, %v4365
  %v4430 = vadd.f32 %v4044, %v4366
  %v4431 = vadd.f32 %v4045, %v4367
  %v4432 = vadd.f32 %v4046, %v4368
  %v4433 = vadd.f32 %v4047, %v4369
  %v4434 = vadd.f32 %v4048, %v4370
  %v4435 = vadd.f32 %v4049, %v4371
  %v4436 = vadd.f32 %v4050, %v4372
  %v4437 = vadd.f32 %v4051, %v4373
  %v4438 = vadd.f32 %v4052, %v4374
  %v4439 = vadd.f32 %v4053, %v4375
  %v4440 = vadd.f32 %v4054, %v4376
  %v4441 = vadd.f32 %v4055, %v4377
  %v4442 = vadd.f32 %v4056, %v4378
  %v4443 = vadd.f32 %v4057, %v4379
  %v4444 = vadd.f32 %v4058, %v4380
  %vm4445 = vcmask 31744
  %v4446 = vsel %vm4445, %v4381, -inf
  %v4447 = vrot.slane %v4446, 4
  %v4448 = vmax.f32 %v4446, %v4447
  %v4449 = vrot.slane %v4448, 2
  %v4450 = vmax.f32 %v4448, %v4449
  %v4451 = vrot.slane %v4450, 1
  %v4452 = vmax.f32 %v4450, %v4451
  %v4453 = vsel %vm4445, %v4382, -inf
  %v4454 = vrot.slane %v4453, 4
  %v4455 = vmax.f32 %v4453, %v4454
  %v4456 = vrot.slane %v4455, 2
  %v4457 = vmax.f32 %v4455, %v4456
  %v4458 = vrot.slane %v4457, 1
  %v4459 = vmax.f32 %v4457, %v4458
  %v4460 = vsel %vm4445, %v4383, -inf
  %v4461 = vrot.slane %v4460, 4
  %v4462 = vmax.f32 %v4460, %v4461
  %v4463 = vrot.slane %v4462, 2
  %v4464 = vmax.f32 %v4462, %v4463
  %v4465 = vrot.slane %v4464, 1
  %v4466 = vmax.f32 %v4464, %v4465
  %v4467 = vsel %vm4445, %v4384, -inf
  %v4468 = vrot.slane %v4467, 4
  %v4469 = vmax.f32 %v4467, %v4468
  %v4470 = vrot.slane %v4469, 2
  %v4471 = vmax.f32 %v4469, %v4470
  %v4472 = vrot.slane %v4471, 1
  %v4473 = vmax.f32 %v4471, %v4472
  %v4474 = vsel %vm4445, %v4385, -inf
  %v4475 = vrot.slane %v4474, 4
  %v4476 = vmax.f32 %v4474, %v4475
  %v4477 = vrot.slane %v4476, 2
  %v4478 = vmax.f32 %v4476, %v4477
  %v4479 = vrot.slane %v4478, 1
  %v4480 = vmax.f32 %v4478, %v4479
  %v4481 = vsel %vm4445, %v4386, -inf
  %v4482 = vrot.slane %v4481, 4
  %v4483 = vmax.f32 %v4481, %v4482
  %v4484 = vrot.slane %v4483, 2
  %v4485 = vmax.f32 %v4483, %v4484
  %v4486 = vrot.slane %v4485, 1
  %v4487 = vmax.f32 %v4485, %v4486
  %v4488 = vsel %vm4445, %v4387, -inf
  %v4489 = vrot.slane %v4488, 4
  %v4490 = vmax.f32 %v4488, %v4489
  %v4491 = vrot.slane %v4490, 2
  %v4492 = vmax.f32 %v4490, %v4491
  %v4493 = vrot.slane %v4492, 1
  %v4494 = vmax.f32 %v4492, %v4493
  %v4495 = vsel %vm4445, %v4388, -inf
  %v4496 = vrot.slane %v4495, 4
  %v4497 = vmax.f32 %v4495, %v4496
  %v4498 = vrot.slane %v4497, 2
  %v4499 = vmax.f32 %v4497, %v4498
  %v4500 = vrot.slane %v4499, 1
  %v4501 = vmax.f32 %v4499, %v4500
  %v4502 = vsel %vm4445, %v4389, -inf
  %v4503 = vrot.slane %v4502, 4
  %v4504 = vmax.f32 %v4502, %v4503
  %v4505 = vrot.slane %v4504, 2
  %v4506 = vmax.f32 %v4504, %v4505
  %v4507 = vrot.slane %v4506, 1
  %v4508 = vmax.f32 %v4506, %v4507
  %v4509 = vsel %vm4445, %v4390, -inf
  %v4510 = vrot.slane %v4509, 4
  %v4511 = vmax.f32 %v4509, %v4510
  %v4512 = vrot.slane %v4511, 2
  %v4513 = vmax.f32 %v4511, %v4512
  %v4514 = vrot.slane %v4513, 1
  %v4515 = vmax.f32 %v4513, %v4514
  %v4516 = vsel %vm4445, %v4391, -inf
  %v4517 = vrot.slane %v4516, 4
  %v4518 = vmax.f32 %v4516, %v4517
  %v4519 = vrot.slane %v4518, 2
  %v4520 = vmax.f32 %v4518, %v4519
  %v4521 = vrot.slane %v4520, 1
  %v4522 = vmax.f32 %v4520, %v4521
  %v4523 = vsel %vm4445, %v4392, -inf
  %v4524 = vrot.slane %v4523, 4
  %v4525 = vmax.f32 %v4523, %v4524
  %v4526 = vrot.slane %v4525, 2
  %v4527 = vmax.f32 %v4525, %v4526
  %v4528 = vrot.slane %v4527, 1
  %v4529 = vmax.f32 %v4527, %v4528
  %v4530 = vsel %vm4445, %v4393, -inf
  %v4531 = vrot.slane %v4530, 4
  %v4532 = vmax.f32 %v4530, %v4531
  %v4533 = vrot.slane %v4532, 2
  %v4534 = vmax.f32 %v4532, %v4533
  %v4535 = vrot.slane %v4534, 1
  %v4536 = vmax.f32 %v4534, %v4535
  %v4537 = vsel %vm4445, %v4394, -inf
  %v4538 = vrot.slane %v4537, 4
  %v4539 = vmax.f32 %v4537, %v4538
  %v4540 = vrot.slane %v4539, 2
  %v4541 = vmax.f32 %v4539, %v4540
  %v4542 = vrot.slane %v4541, 1
  %v4543 = vmax.f32 %v4541, %v4542
  %v4544 = vsel %vm4445, %v4395, -inf
  %v4545 = vrot.slane %v4544, 4
  %v4546 = vmax.f32 %v4544, %v4545
  %v4547 = vrot.slane %v4546, 2
  %v4548 = vmax.f32 %v4546, %v4547
  %v4549 = vrot.slane %v4548, 1
  %v4550 = vmax.f32 %v4548, %v4549
  %v4551 = vsel %vm4445, %v4396, -inf
  %v4552 = vrot.slane %v4551, 4
  %v4553 = vmax.f32 %v4551, %v4552
  %v4554 = vrot.slane %v4553, 2
  %v4555 = vmax.f32 %v4553, %v4554
  %v4556 = vrot.slane %v4555, 1
  %v4557 = vmax.f32 %v4555, %v4556
  %v4558 = vsel %vm4445, %v4397, -inf
  %v4559 = vrot.slane %v4558, 4
  %v4560 = vmax.f32 %v4558, %v4559
  %v4561 = vrot.slane %v4560, 2
  %v4562 = vmax.f32 %v4560, %v4561
  %v4563 = vrot.slane %v4562, 1
  %v4564 = vmax.f32 %v4562, %v4563
  %v4565 = vsel %vm4445, %v4398, -inf
  %v4566 = vrot.slane %v4565, 4
  %v4567 = vmax.f32 %v4565, %v4566
  %v4568 = vrot.slane %v4567, 2
  %v4569 = vmax.f32 %v4567, %v4568
  %v4570 = vrot.slane %v4569, 1
  %v4571 = vmax.f32 %v4569, %v4570
  %v4572 = vsel %vm4445, %v4399, -inf
  %v4573 = vrot.slane %v4572, 4
  %v4574 = vmax.f32 %v4572, %v4573
  %v4575 = vrot.slane %v4574, 2
  %v4576 = vmax.f32 %v4574, %v4575
  %v4577 = vrot.slane %v4576, 1
  %v4578 = vmax.f32 %v4576, %v4577
  %v4579 = vsel %vm4445, %v4400, -inf
  %v4580 = vrot.slane %v4579, 4
  %v4581 = vmax.f32 %v4579, %v4580
  %v4582 = vrot.slane %v4581, 2
  %v4583 = vmax.f32 %v4581, %v4582
  %v4584 = vrot.slane %v4583, 1
  %v4585 = vmax.f32 %v4583, %v4584
  %v4586 = vsel %vm4445, %v4401, -inf
  %v4587 = vrot.slane %v4586, 4
  %v4588 = vmax.f32 %v4586, %v4587
  %v4589 = vrot.slane %v4588, 2
  %v4590 = vmax.f32 %v4588, %v4589
  %v4591 = vrot.slane %v4590, 1
  %v4592 = vmax.f32 %v4590, %v4591
  %v4593 = vsel %vm4445, %v4402, -inf
  %v4594 = vrot.slane %v4593, 4
  %v4595 = vmax.f32 %v4593, %v4594
  %v4596 = vrot.slane %v4595, 2
  %v4597 = vmax.f32 %v4595, %v4596
  %v4598 = vrot.slane %v4597, 1
  %v4599 = vmax.f32 %v4597, %v4598
  %v4600 = vsel %vm4445, %v4403, -inf
  %v4601 = vrot.slane %v4600, 4
  %v4602 = vmax.f32 %v4600, %v4601
  %v4603 = vrot.slane %v4602, 2
  %v4604 = vmax.f32 %v4602, %v4603
  %v4605 = vrot.slane %v4604, 1
  %v4606 = vmax.f32 %v4604, %v4605
  %v4607 = vsel %vm4445, %v4404, -inf
  %v4608 = vrot.slane %v4607, 4
  %v4609 = vmax.f32 %v4607, %v4608
  %v4610 = vrot.slane %v4609, 2
  %v4611 = vmax.f32 %v4609, %v4610
  %v4612 = vrot.slane %v4611, 1
  %v4613 = vmax.f32 %v4611, %v4612
  %v4614 = vsel %vm4445, %v4405, -inf
  %v4615 = vrot.slane %v4614, 4
  %v4616 = vmax.f32 %v4614, %v4615
  %v4617 = vrot.slane %v4616, 2
  %v4618 = vmax.f32 %v4616, %v4617
  %v4619 = vrot.slane %v4618, 1
  %v4620 = vmax.f32 %v4618, %v4619
  %v4621 = vsel %vm4445, %v4406, -inf
  %v4622 = vrot.slane %v4621, 4
  %v4623 = vmax.f32 %v4621, %v4622
  %v4624 = vrot.slane %v4623, 2
  %v4625 = vmax.f32 %v4623, %v4624
  %v4626 = vrot.slane %v4625, 1
  %v4627 = vmax.f32 %v4625, %v4626
  %v4628 = vsel %vm4445, %v4407, -inf
  %v4629 = vrot.slane %v4628, 4
  %v4630 = vmax.f32 %v4628, %v4629
  %v4631 = vrot.slane %v4630, 2
  %v4632 = vmax.f32 %v4630, %v4631
  %v4633 = vrot.slane %v4632, 1
  %v4634 = vmax.f32 %v4632, %v4633
  %v4635 = vsel %vm4445, %v4408, -inf
  %v4636 = vrot.slane %v4635, 4
  %v4637 = vmax.f32 %v4635, %v4636
  %v4638 = vrot.slane %v4637, 2
  %v4639 = vmax.f32 %v4637, %v4638
  %v4640 = vrot.slane %v4639, 1
  %v4641 = vmax.f32 %v4639, %v4640
  %v4642 = vsel %vm4445, %v4409, -inf
  %v4643 = vrot.slane %v4642, 4
  %v4644 = vmax.f32 %v4642, %v4643
  %v4645 = vrot.slane %v4644, 2
  %v4646 = vmax.f32 %v4644, %v4645
  %v4647 = vrot.slane %v4646, 1
  %v4648 = vmax.f32 %v4646, %v4647
  %v4649 = vsel %vm4445, %v4410, -inf
  %v4650 = vrot.slane %v4649, 4
  %v4651 = vmax.f32 %v4649, %v4650
  %v4652 = vrot.slane %v4651, 2
  %v4653 = vmax.f32 %v4651, %v4652
  %v4654 = vrot.slane %v4653, 1
  %v4655 = vmax.f32 %v4653, %v4654
  %v4656 = vsel %vm4445, %v4411, -inf
  %v4657 = vrot.slane %v4656, 4
  %v4658 = vmax.f32 %v4656, %v4657
  %v4659 = vrot.slane %v4658, 2
  %v4660 = vmax.f32 %v4658, %v4659
  %v4661 = vrot.slane %v4660, 1
  %v4662 = vmax.f32 %v4660, %v4661
  %v4663 = vsel %vm4445, %v4412, -inf
  %v4664 = vrot.slane %v4663, 4
  %v4665 = vmax.f32 %v4663, %v4664
  %v4666 = vrot.slane %v4665, 2
  %v4667 = vmax.f32 %v4665, %v4666
  %v4668 = vrot.slane %v4667, 1
  %v4669 = vmax.f32 %v4667, %v4668
  %v4670 = vsel %vm4445, %v4413, -inf
  %v4671 = vrot.slane %v4670, 4
  %v4672 = vmax.f32 %v4670, %v4671
  %v4673 = vrot.slane %v4672, 2
  %v4674 = vmax.f32 %v4672, %v4673
  %v4675 = vrot.slane %v4674, 1
  %v4676 = vmax.f32 %v4674, %v4675
  %v4677 = vsel %vm4445, %v4414, -inf
  %v4678 = vrot.slane %v4677, 4
  %v4679 = vmax.f32 %v4677, %v4678
  %v4680 = vrot.slane %v4679, 2
  %v4681 = vmax.f32 %v4679, %v4680
  %v4682 = vrot.slane %v4681, 1
  %v4683 = vmax.f32 %v4681, %v4682
  %v4684 = vsel %vm4445, %v4415, -inf
  %v4685 = vrot.slane %v4684, 4
  %v4686 = vmax.f32 %v4684, %v4685
  %v4687 = vrot.slane %v4686, 2
  %v4688 = vmax.f32 %v4686, %v4687
  %v4689 = vrot.slane %v4688, 1
  %v4690 = vmax.f32 %v4688, %v4689
  %v4691 = vsel %vm4445, %v4416, -inf
  %v4692 = vrot.slane %v4691, 4
  %v4693 = vmax.f32 %v4691, %v4692
  %v4694 = vrot.slane %v4693, 2
  %v4695 = vmax.f32 %v4693, %v4694
  %v4696 = vrot.slane %v4695, 1
  %v4697 = vmax.f32 %v4695, %v4696
  %v4698 = vsel %vm4445, %v4417, -inf
  %v4699 = vrot.slane %v4698, 4
  %v4700 = vmax.f32 %v4698, %v4699
  %v4701 = vrot.slane %v4700, 2
  %v4702 = vmax.f32 %v4700, %v4701
  %v4703 = vrot.slane %v4702, 1
  %v4704 = vmax.f32 %v4702, %v4703
  %v4705 = vsel %vm4445, %v4418, -inf
  %v4706 = vrot.slane %v4705, 4
  %v4707 = vmax.f32 %v4705, %v4706
  %v4708 = vrot.slane %v4707, 2
  %v4709 = vmax.f32 %v4707, %v4708
  %v4710 = vrot.slane %v4709, 1
  %v4711 = vmax.f32 %v4709, %v4710
  %v4712 = vsel %vm4445, %v4419, -inf
  %v4713 = vrot.slane %v4712, 4
  %v4714 = vmax.f32 %v4712, %v4713
  %v4715 = vrot.slane %v4714, 2
  %v4716 = vmax.f32 %v4714, %v4715
  %v4717 = vrot.slane %v4716, 1
  %v4718 = vmax.f32 %v4716, %v4717
  %v4719 = vsel %vm4445, %v4420, -inf
  %v4720 = vrot.slane %v4719, 4
  %v4721 = vmax.f32 %v4719, %v4720
  %v4722 = vrot.slane %v4721, 2
  %v4723 = vmax.f32 %v4721, %v4722
  %v4724 = vrot.slane %v4723, 1
  %v4725 = vmax.f32 %v4723, %v4724
  %v4726 = vsel %vm4445, %v4421, -inf
  %v4727 = vrot.slane %v4726, 4
  %v4728 = vmax.f32 %v4726, %v4727
  %v4729 = vrot.slane %v4728, 2
  %v4730 = vmax.f32 %v4728, %v4729
  %v4731 = vrot.slane %v4730, 1
  %v4732 = vmax.f32 %v4730, %v4731
  %v4733 = vsel %vm4445, %v4422, -inf
  %v4734 = vrot.slane %v4733, 4
  %v4735 = vmax.f32 %v4733, %v4734
  %v4736 = vrot.slane %v4735, 2
  %v4737 = vmax.f32 %v4735, %v4736
  %v4738 = vrot.slane %v4737, 1
  %v4739 = vmax.f32 %v4737, %v4738
  %v4740 = vsel %vm4445, %v4423, -inf
  %v4741 = vrot.slane %v4740, 4
  %v4742 = vmax.f32 %v4740, %v4741
  %v4743 = vrot.slane %v4742, 2
  %v4744 = vmax.f32 %v4742, %v4743
  %v4745 = vrot.slane %v4744, 1
  %v4746 = vmax.f32 %v4744, %v4745
  %v4747 = vsel %vm4445, %v4424, -inf
  %v4748 = vrot.slane %v4747, 4
  %v4749 = vmax.f32 %v4747, %v4748
  %v4750 = vrot.slane %v4749, 2
  %v4751 = vmax.f32 %v4749, %v4750
  %v4752 = vrot.slane %v4751, 1
  %v4753 = vmax.f32 %v4751, %v4752
  %v4754 = vsel %vm4445, %v4425, -inf
  %v4755 = vrot.slane %v4754, 4
  %v4756 = vmax.f32 %v4754, %v4755
  %v4757 = vrot.slane %v4756, 2
  %v4758 = vmax.f32 %v4756, %v4757
  %v4759 = vrot.slane %v4758, 1
  %v4760 = vmax.f32 %v4758, %v4759
  %v4761 = vsel %vm4445, %v4426, -inf
  %v4762 = vrot.slane %v4761, 4
  %v4763 = vmax.f32 %v4761, %v4762
  %v4764 = vrot.slane %v4763, 2
  %v4765 = vmax.f32 %v4763, %v4764
  %v4766 = vrot.slane %v4765, 1
  %v4767 = vmax.f32 %v4765, %v4766
  %v4768 = vsel %vm4445, %v4427, -inf
  %v4769 = vrot.slane %v4768, 4
  %v4770 = vmax.f32 %v4768, %v4769
  %v4771 = vrot.slane %v4770, 2
  %v4772 = vmax.f32 %v4770, %v4771
  %v4773 = vrot.slane %v4772, 1
  %v4774 = vmax.f32 %v4772, %v4773
  %v4775 = vsel %vm4445, %v4428, -inf
  %v4776 = vrot.slane %v4775, 4
  %v4777 = vmax.f32 %v4775, %v4776
  %v4778 = vrot.slane %v4777, 2
  %v4779 = vmax.f32 %v4777, %v4778
  %v4780 = vrot.slane %v4779, 1
  %v4781 = vmax.f32 %v4779, %v4780
  %v4782 = vsel %vm4445, %v4429, -inf
  %v4783 = vrot.slane %v4782, 4
  %v4784 = vmax.f32 %v4782, %v4783
  %v4785 = vrot.slane %v4784, 2
  %v4786 = vmax.f32 %v4784, %v4785
  %v4787 = vrot.slane %v4786, 1
  %v4788 = vmax.f32 %v4786, %v4787
  %v4789 = vsel %vm4445, %v4430, -inf
  %v4790 = vrot.slane %v4789, 4
  %v4791 = vmax.f32 %v4789, %v4790
  %v4792 = vrot.slane %v4791, 2
  %v4793 = vmax.f32 %v4791, %v4792
  %v4794 = vrot.slane %v4793, 1
  %v4795 = vmax.f32 %v4793, %v4794
  %v4796 = vsel %vm4445, %v4431, -inf
  %v4797 = vrot.slane %v4796, 4
  %v4798 = vmax.f32 %v4796, %v4797
  %v4799 = vrot.slane %v4798, 2
  %v4800 = vmax.f32 %v4798, %v4799
  %v4801 = vrot.slane %v4800, 1
  %v4802 = vmax.f32 %v4800, %v4801
  %v4803 = vsel %vm4445, %v4432, -inf
  %v4804 = vrot.slane %v4803, 4
  %v4805 = vmax.f32 %v4803, %v4804
  %v4806 = vrot.slane %v4805, 2
  %v4807 = vmax.f32 %v4805, %v4806
  %v4808 = vrot.slane %v4807, 1
  %v4809 = vmax.f32 %v4807, %v4808
  %v4810 = vsel %vm4445, %v4433, -inf
  %v4811 = vrot.slane %v4810, 4
  %v4812 = vmax.f32 %v4810, %v4811
  %v4813 = vrot.slane %v4812, 2
  %v4814 = vmax.f32 %v4812, %v4813
  %v4815 = vrot.slane %v4814, 1
  %v4816 = vmax.f32 %v4814, %v4815
  %v4817 = vsel %vm4445, %v4434, -inf
  %v4818 = vrot.slane %v4817, 4
  %v4819 = vmax.f32 %v4817, %v4818
  %v4820 = vrot.slane %v4819, 2
  %v4821 = vmax.f32 %v4819, %v4820
  %v4822 = vrot.slane %v4821, 1
  %v4823 = vmax.f32 %v4821, %v4822
  %v4824 = vsel %vm4445, %v4435, -inf
  %v4825 = vrot.slane %v4824, 4
  %v4826 = vmax.f32 %v4824, %v4825
  %v4827 = vrot.slane %v4826, 2
  %v4828 = vmax.f32 %v4826, %v4827
  %v4829 = vrot.slane %v4828, 1
  %v4830 = vmax.f32 %v4828, %v4829
  %v4831 = vsel %vm4445, %v4436, -inf
  %v4832 = vrot.slane %v4831, 4
  %v4833 = vmax.f32 %v4831, %v4832
  %v4834 = vrot.slane %v4833, 2
  %v4835 = vmax.f32 %v4833, %v4834
  %v4836 = vrot.slane %v4835, 1
  %v4837 = vmax.f32 %v4835, %v4836
  %v4838 = vsel %vm4445, %v4437, -inf
  %v4839 = vrot.slane %v4838, 4
  %v4840 = vmax.f32 %v4838, %v4839
  %v4841 = vrot.slane %v4840, 2
  %v4842 = vmax.f32 %v4840, %v4841
  %v4843 = vrot.slane %v4842, 1
  %v4844 = vmax.f32 %v4842, %v4843
  %v4845 = vsel %vm4445, %v4438, -inf
  %v4846 = vrot.slane %v4845, 4
  %v4847 = vmax.f32 %v4845, %v4846
  %v4848 = vrot.slane %v4847, 2
  %v4849 = vmax.f32 %v4847, %v4848
  %v4850 = vrot.slane %v4849, 1
  %v4851 = vmax.f32 %v4849, %v4850
  %v4852 = vsel %vm4445, %v4439, -inf
  %v4853 = vrot.slane %v4852, 4
  %v4854 = vmax.f32 %v4852, %v4853
  %v4855 = vrot.slane %v4854, 2
  %v4856 = vmax.f32 %v4854, %v4855
  %v4857 = vrot.slane %v4856, 1
  %v4858 = vmax.f32 %v4856, %v4857
  %v4859 = vsel %vm4445, %v4440, -inf
  %v4860 = vrot.slane %v4859, 4
  %v4861 = vmax.f32 %v4859, %v4860
  %v4862 = vrot.slane %v4861, 2
  %v4863 = vmax.f32 %v4861, %v4862
  %v4864 = vrot.slane %v4863, 1
  %v4865 = vmax.f32 %v4863, %v4864
  %v4866 = vsel %vm4445, %v4441, -inf
  %v4867 = vrot.slane %v4866, 4
  %v4868 = vmax.f32 %v4866, %v4867
  %v4869 = vrot.slane %v4868, 2
  %v4870 = vmax.f32 %v4868, %v4869
  %v4871 = vrot.slane %v4870, 1
  %v4872 = vmax.f32 %v4870, %v4871
  %v4873 = vsel %vm4445, %v4442, -inf
  %v4874 = vrot.slane %v4873, 4
  %v4875 = vmax.f32 %v4873, %v4874
  %v4876 = vrot.slane %v4875, 2
  %v4877 = vmax.f32 %v4875, %v4876
  %v4878 = vrot.slane %v4877, 1
  %v4879 = vmax.f32 %v4877, %v4878
  %v4880 = vsel %vm4445, %v4443, -inf
  %v4881 = vrot.slane %v4880, 4
  %v4882 = vmax.f32 %v4880, %v4881
  %v4883 = vrot.slane %v4882, 2
  %v4884 = vmax.f32 %v4882, %v4883
  %v4885 = vrot.slane %v4884, 1
  %v4886 = vmax.f32 %v4884, %v4885
  %v4887 = vsel %vm4445, %v4444, -inf
  %v4888 = vrot.slane %v4887, 4
  %v4889 = vmax.f32 %v4887, %v4888
  %v4890 = vrot.slane %v4889, 2
  %v4891 = vmax.f32 %v4889, %v4890
  %v4892 = vrot.slane %v4891, 1
  %v4893 = vmax.f32 %v4891, %v4892
  %v4894 = vsub.f32 %v4381, %v4452
  %v4895 = vsub.f32 %v4382, %v4459
  %v4896 = vsub.f32 %v4383, %v4466
  %v4897 = vsub.f32 %v4384, %v4473
  %v4898 = vsub.f32 %v4385, %v4480
  %v4899 = vsub.f32 %v4386, %v4487
  %v4900 = vsub.f32 %v4387, %v4494
  %v4901 = vsub.f32 %v4388, %v4501
  %v4902 = vsub.f32 %v4389, %v4508
  %v4903 = vsub.f32 %v4390, %v4515
  %v4904 = vsub.f32 %v4391, %v4522
  %v4905 = vsub.f32 %v4392, %v4529
  %v4906 = vsub.f32 %v4393, %v4536
  %v4907 = vsub.f32 %v4394, %v4543
  %v4908 = vsub.f32 %v4395, %v4550
  %v4909 = vsub.f32 %v4396, %v4557
  %v4910 = vsub.f32 %v4397, %v4564
  %v4911 = vsub.f32 %v4398, %v4571
  %v4912 = vsub.f32 %v4399, %v4578
  %v4913 = vsub.f32 %v4400, %v4585
  %v4914 = vsub.f32 %v4401, %v4592
  %v4915 = vsub.f32 %v4402, %v4599
  %v4916 = vsub.f32 %v4403, %v4606
  %v4917 = vsub.f32 %v4404, %v4613
  %v4918 = vsub.f32 %v4405, %v4620
  %v4919 = vsub.f32 %v4406, %v4627
  %v4920 = vsub.f32 %v4407, %v4634
  %v4921 = vsub.f32 %v4408, %v4641
  %v4922 = vsub.f32 %v4409, %v4648
  %v4923 = vsub.f32 %v4410, %v4655
  %v4924 = vsub.f32 %v4411, %v4662
  %v4925 = vsub.f32 %v4412, %v4669
  %v4926 = vsub.f32 %v4413, %v4676
  %v4927 = vsub.f32 %v4414, %v4683
  %v4928 = vsub.f32 %v4415, %v4690
  %v4929 = vsub.f32 %v4416, %v4697
  %v4930 = vsub.f32 %v4417, %v4704
  %v4931 = vsub.f32 %v4418, %v4711
  %v4932 = vsub.f32 %v4419, %v4718
  %v4933 = vsub.f32 %v4420, %v4725
  %v4934 = vsub.f32 %v4421, %v4732
  %v4935 = vsub.f32 %v4422, %v4739
  %v4936 = vsub.f32 %v4423, %v4746
  %v4937 = vsub.f32 %v4424, %v4753
  %v4938 = vsub.f32 %v4425, %v4760
  %v4939 = vsub.f32 %v4426, %v4767
  %v4940 = vsub.f32 %v4427, %v4774
  %v4941 = vsub.f32 %v4428, %v4781
  %v4942 = vsub.f32 %v4429, %v4788
  %v4943 = vsub.f32 %v4430, %v4795
  %v4944 = vsub.f32 %v4431, %v4802
  %v4945 = vsub.f32 %v4432, %v4809
  %v4946 = vsub.f32 %v4433, %v4816
  %v4947 = vsub.f32 %v4434, %v4823
  %v4948 = vsub.f32 %v4435, %v4830
  %v4949 = vsub.f32 %v4436, %v4837
  %v4950 = vsub.f32 %v4437, %v4844
  %v4951 = vsub.f32 %v4438, %v4851
  %v4952 = vsub.f32 %v4439, %v4858
  %v4953 = vsub.f32 %v4440, %v4865
  %v4954 = vsub.f32 %v4441, %v4872
  %v4955 = vsub.f32 %v4442, %v4879
  %v4956 = vsub.f32 %v4443, %v4886
  %v4957 = vsub.f32 %v4444, %v4893
  %v4958 = vmul.f32 %v4894, 1.442695
  %v4959 = vpow.pop %v4958
  %v4960 = vmul.f32 %v4895, 1.442695
  %v4961 = vpow.pop %v4960
  %v4962 = vmul.f32 %v4896, 1.442695
  %v4963 = vpow.pop %v4962
  %v4964 = vmul.f32 %v4897, 1.442695
  %v4965 = vpow.pop %v4964
  %v4966 = vmul.f32 %v4898, 1.442695
  %v4967 = vpow.pop %v4966
  %v4968 = vmul.f32 %v4899, 1.442695
  %v4969 = vpow.pop %v4968
  %v4970 = vmul.f32 %v4900, 1.442695
  %v4971 = vpow.pop %v4970
  %v4972 = vmul.f32 %v4901, 1.442695
  %v4973 = vpow.pop %v4972
  %v4974 = vmul.f32 %v4902, 1.442695
  %v4975 = vpow.pop %v4974
  %v4976 = vmul.f32 %v4903, 1.442695
  %v4977 = vpow.pop %v4976
  %v4978 = vmul.f32 %v4904, 1.442695
  %v4979 = vpow.pop %v4978
  %v4980 = vmul.f32 %v4905, 1.442695
  %v4981 = vpow.pop %v4980
  %v4982 = vmul.f32 %v4906, 1.442695
  %v4983 = vpow.pop %v4982
  %v4984 = vmul.f32 %v4907, 1.442695
  %v4985 = vpow.pop %v4984
  %v4986 = vmul.f32 %v4908, 1.442695
  %v4987 = vpow.pop %v4986
  %v4988 = vmul.f32 %v4909, 1.442695
  %v4989 = vpow.pop %v4988
  %v4990 = vmul.f32 %v4910, 1.442695
  %v4991 = vpow.pop %v4990
  %v4992 = vmul.f32 %v4911, 1.442695
  %v4993 = vpow.pop %v4992
  %v4994 = vmul.f32 %v4912, 1.442695
  %v4995 = vpow.pop %v4994
  %v4996 = vmul.f32 %v4913, 1.442695
  %v4997 = vpow.pop %v4996
  %v4998 = vmul.f32 %v4914, 1.442695
  %v4999 = vpow.pop %v4998
  %v5000 = vmul.f32 %v4915, 1.442695
  %v5001 = vpow.pop %v5000
  %v5002 = vmul.f32 %v4916, 1.442695
  %v5003 = vpow.pop %v5002
  %v5004 = vmul.f32 %v4917, 1.442695
  %v5005 = vpow.pop %v5004
  %v5006 = vmul.f32 %v4918, 1.442695
  %v5007 = vpow.pop %v5006
  %v5008 = vmul.f32 %v4919, 1.442695
  %v5009 = vpow.pop %v5008
  %v5010 = vmul.f32 %v4920, 1.442695
  %v5011 = vpow.pop %v5010
  %v5012 = vmul.f32 %v4921, 1.442695
  %v5013 = vpow.pop %v5012
  %v5014 = vmul.f32 %v4922, 1.442695
  %v5015 = vpow.pop %v5014
  %v5016 = vmul.f32 %v4923, 1.442695
  %v5017 = vpow.pop %v5016
  %v5018 = vmul.f32 %v4924, 1.442695
  %v5019 = vpow.pop %v5018
  %v5020 = vmul.f32 %v4925, 1.442695
  %v5021 = vpow.pop %v5020
  %v5022 = vmul.f32 %v4926, 1.442695
  %v5023 = vpow.pop %v5022
  %v5024 = vmul.f32 %v4927, 1.442695
  %v5025 = vpow.pop %v5024
  %v5026 = vmul.f32 %v4928, 1.442695
  %v5027 = vpow.pop %v5026
  %v5028 = vmul.f32 %v4929, 1.442695
  %v5029 = vpow.pop %v5028
  %v5030 = vmul.f32 %v4930, 1.442695
  %v5031 = vpow.pop %v5030
  %v5032 = vmul.f32 %v4931, 1.442695
  %v5033 = vpow.pop %v5032
  %v5034 = vmul.f32 %v4932, 1.442695
  %v5035 = vpow.pop %v5034
  %v5036 = vmul.f32 %v4933, 1.442695
  %v5037 = vpow.pop %v5036
  %v5038 = vmul.f32 %v4934, 1.442695
  %v5039 = vpow.pop %v5038
  %v5040 = vmul.f32 %v4935, 1.442695
  %v5041 = vpow.pop %v5040
  %v5042 = vmul.f32 %v4936, 1.442695
  %v5043 = vpow.pop %v5042
  %v5044 = vmul.f32 %v4937, 1.442695
  %v5045 = vpow.pop %v5044
  %v5046 = vmul.f32 %v4938, 1.442695
  %v5047 = vpow.pop %v5046
  %v5048 = vmul.f32 %v4939, 1.442695
  %v5049 = vpow.pop %v5048
  %v5050 = vmul.f32 %v4940, 1.442695
  %v5051 = vpow.pop %v5050
  %v5052 = vmul.f32 %v4941, 1.442695
  %v5053 = vpow.pop %v5052
  %v5054 = vmul.f32 %v4942, 1.442695
  %v5055 = vpow.pop %v5054
  %v5056 = vmul.f32 %v4943, 1.442695
  %v5057 = vpow.pop %v5056
  %v5058 = vmul.f32 %v4944, 1.442695
  %v5059 = vpow.pop %v5058
  %v5060 = vmul.f32 %v4945, 1.442695
  %v5061 = vpow.pop %v5060
  %v5062 = vmul.f32 %v4946, 1.442695
  %v5063 = vpow.pop %v5062
  %v5064 = vmul.f32 %v4947, 1.442695
  %v5065 = vpow.pop %v5064
  %v5066 = vmul.f32 %v4948, 1.442695
  %v5067 = vpow.pop %v5066
  %v5068 = vmul.f32 %v4949, 1.442695
  %v5069 = vpow.pop %v5068
  %v5070 = vmul.f32 %v4950, 1.442695
  %v5071 = vpow.pop %v5070
  %v5072 = vmul.f32 %v4951, 1.442695
  %v5073 = vpow.pop %v5072
  %v5074 = vmul.f32 %v4952, 1.442695
  %v5075 = vpow.pop %v5074
  %v5076 = vmul.f32 %v4953, 1.442695
  %v5077 = vpow.pop %v5076
  %v5078 = vmul.f32 %v4954, 1.442695
  %v5079 = vpow.pop %v5078
  %v5080 = vmul.f32 %v4955, 1.442695
  %v5081 = vpow.pop %v5080
  %v5082 = vmul.f32 %v4956, 1.442695
  %v5083 = vpow.pop %v5082
  %v5084 = vmul.f32 %v4957, 1.442695
  %v5085 = vpow.pop %v5084
  %v5086 = vsel %vm4445, %v4959, 0.0
  %v5087 = vrot.slane %v5086, 4
  %v5088 = vadd.f32 %v5086, %v5087
  %v5089 = vrot.slane %v5088, 2
  %v5090 = vadd.f32 %v5088, %v5089
  %v5091 = vrot.slane %v5090, 1
  %v5092 = vadd.f32 %v5090, %v5091
  %v5093 = vsel %vm4445, %v4961, 0.0
  %v5094 = vrot.slane %v5093, 4
  %v5095 = vadd.f32 %v5093, %v5094
  %v5096 = vrot.slane %v5095, 2
  %v5097 = vadd.f32 %v5095, %v5096
  %v5098 = vrot.slane %v5097, 1
  %v5099 = vadd.f32 %v5097, %v5098
  %v5100 = vsel %vm4445, %v4963, 0.0
  %v5101 = vrot.slane %v5100, 4
  %v5102 = vadd.f32 %v5100, %v5101
  %v5103 = vrot.slane %v5102, 2
  %v5104 = vadd.f32 %v5102, %v5103
  %v5105 = vrot.slane %v5104, 1
  %v5106 = vadd.f32 %v5104, %v5105
  %v5107 = vsel %vm4445, %v4965, 0.0
  %v5108 = vrot.slane %v5107, 4
  %v5109 = vadd.f32 %v5107, %v5108
  %v5110 = vrot.slane %v5109, 2
  %v5111 = vadd.f32 %v5109, %v5110
  %v5112 = vrot.slane %v5111, 1
  %v5113 = vadd.f32 %v5111, %v5112
  %v5114 = vsel %vm4445, %v4967, 0.0
  %v5115 = vrot.slane %v5114, 4
  %v5116 = vadd.f32 %v5114, %v5115
  %v5117 = vrot.slane %v5116, 2
  %v5118 = vadd.f32 %v5116, %v5117
  %v5119 = vrot.slane %v5118, 1
  %v5120 = vadd.f32 %v5118, %v5119
  %v5121 = vsel %vm4445, %v4969, 0.0
  %v5122 = vrot.slane %v5121, 4
  %v5123 = vadd.f32 %v5121, %v5122
  %v5124 = vrot.slane %v5123, 2
  %v5125 = vadd.f32 %v5123, %v5124
  %v5126 = vrot.slane %v5125, 1
  %v5127 = vadd.f32 %v5125, %v5126
  %v5128 = vsel %vm4445, %v4971, 0.0
  %v5129 = vrot.slane %v5128, 4
  %v5130 = vadd.f32 %v5128, %v5129
  %v5131 = vrot.slane %v5130, 2
  %v5132 = vadd.f32 %v5130, %v5131
  %v5133 = vrot.slane %v5132, 1
  %v5134 = vadd.f32 %v5132, %v5133
  %v5135 = vsel %vm4445, %v4973, 0.0
  %v5136 = vrot.slane %v5135, 4
  %v5137 = vadd.f32 %v5135, %v5136
  %v5138 = vrot.slane %v5137, 2
  %v5139 = vadd.f32 %v5137, %v5138
  %v5140 = vrot.slane %v5139, 1
  %v5141 = vadd.f32 %v5139, %v5140
  %v5142 = vsel %vm4445, %v4975, 0.0
  %v5143 = vrot.slane %v5142, 4
  %v5144 = vadd.f32 %v5142, %v5143
  %v5145 = vrot.slane %v5144, 2
  %v5146 = vadd.f32 %v5144, %v5145
  %v5147 = vrot.slane %v5146, 1
  %v5148 = vadd.f32 %v5146, %v5147
  %v5149 = vsel %vm4445, %v4977, 0.0
  %v5150 = vrot.slane %v5149, 4
  %v5151 = vadd.f32 %v5149, %v5150
  %v5152 = vrot.slane %v5151, 2
  %v5153 = vadd.f32 %v5151, %v5152
  %v5154 = vrot.slane %v5153, 1
  %v5155 = vadd.f32 %v5153, %v5154
  %v5156 = vsel %vm4445, %v4979, 0.0
  %v5157 = vrot.slane %v5156, 4
  %v5158 = vadd.f32 %v5156, %v5157
  %v5159 = vrot.slane %v5158, 2
  %v5160 = vadd.f32 %v5158, %v5159
  %v5161 = vrot.slane %v5160, 1
  %v5162 = vadd.f32 %v5160, %v5161
  %v5163 = vsel %vm4445, %v4981, 0.0
  %v5164 = vrot.slane %v5163, 4
  %v5165 = vadd.f32 %v5163, %v5164
  %v5166 = vrot.slane %v5165, 2
  %v5167 = vadd.f32 %v5165, %v5166
  %v5168 = vrot.slane %v5167, 1
  %v5169 = vadd.f32 %v5167, %v5168
  %v5170 = vsel %vm4445, %v4983, 0.0
  %v5171 = vrot.slane %v5170, 4
  %v5172 = vadd.f32 %v5170, %v5171
  %v5173 = vrot.slane %v5172, 2
  %v5174 = vadd.f32 %v5172, %v5173
  %v5175 = vrot.slane %v5174, 1
  %v5176 = vadd.f32 %v5174, %v5175
  %v5177 = vsel %vm4445, %v4985, 0.0
  %v5178 = vrot.slane %v5177, 4
  %v5179 = vadd.f32 %v5177, %v5178
  %v5180 = vrot.slane %v5179, 2
  %v5181 = vadd.f32 %v5179, %v5180
  %v5182 = vrot.slane %v5181, 1
  %v5183 = vadd.f32 %v5181, %v5182
  %v5184 = vsel %vm4445, %v4987, 0.0
  %v5185 = vrot.slane %v5184, 4
  %v5186 = vadd.f32 %v5184, %v5185
  %v5187 = vrot.slane %v5186, 2
  %v5188 = vadd.f32 %v5186, %v5187
  %v5189 = vrot.slane %v5188, 1
  %v5190 = vadd.f32 %v5188, %v5189
  %v5191 = vsel %vm4445, %v4989, 0.0
  %v5192 = vrot.slane %v5191, 4
  %v5193 = vadd.f32 %v5191, %v5192
  %v5194 = vrot.slane %v5193, 2
  %v5195 = vadd.f32 %v5193, %v5194
  %v5196 = vrot.slane %v5195, 1
  %v5197 = vadd.f32 %v5195, %v5196
  %v5198 = vsel %vm4445, %v4991, 0.0
  %v5199 = vrot.slane %v5198, 4
  %v5200 = vadd.f32 %v5198, %v5199
  %v5201 = vrot.slane %v5200, 2
  %v5202 = vadd.f32 %v5200, %v5201
  %v5203 = vrot.slane %v5202, 1
  %v5204 = vadd.f32 %v5202, %v5203
  %v5205 = vsel %vm4445, %v4993, 0.0
  %v5206 = vrot.slane %v5205, 4
  %v5207 = vadd.f32 %v5205, %v5206
  %v5208 = vrot.slane %v5207, 2
  %v5209 = vadd.f32 %v5207, %v5208
  %v5210 = vrot.slane %v5209, 1
  %v5211 = vadd.f32 %v5209, %v5210
  %v5212 = vsel %vm4445, %v4995, 0.0
  %v5213 = vrot.slane %v5212, 4
  %v5214 = vadd.f32 %v5212, %v5213
  %v5215 = vrot.slane %v5214, 2
  %v5216 = vadd.f32 %v5214, %v5215
  %v5217 = vrot.slane %v5216, 1
  %v5218 = vadd.f32 %v5216, %v5217
  %v5219 = vsel %vm4445, %v4997, 0.0
  %v5220 = vrot.slane %v5219, 4
  %v5221 = vadd.f32 %v5219, %v5220
  %v5222 = vrot.slane %v5221, 2
  %v5223 = vadd.f32 %v5221, %v5222
  %v5224 = vrot.slane %v5223, 1
  %v5225 = vadd.f32 %v5223, %v5224
  %v5226 = vsel %vm4445, %v4999, 0.0
  %v5227 = vrot.slane %v5226, 4
  %v5228 = vadd.f32 %v5226, %v5227
  %v5229 = vrot.slane %v5228, 2
  %v5230 = vadd.f32 %v5228, %v5229
  %v5231 = vrot.slane %v5230, 1
  %v5232 = vadd.f32 %v5230, %v5231
  %v5233 = vsel %vm4445, %v5001, 0.0
  %v5234 = vrot.slane %v5233, 4
  %v5235 = vadd.f32 %v5233, %v5234
  %v5236 = vrot.slane %v5235, 2
  %v5237 = vadd.f32 %v5235, %v5236
  %v5238 = vrot.slane %v5237, 1
  %v5239 = vadd.f32 %v5237, %v5238
  %v5240 = vsel %vm4445, %v5003, 0.0
  %v5241 = vrot.slane %v5240, 4
  %v5242 = vadd.f32 %v5240, %v5241
  %v5243 = vrot.slane %v5242, 2
  %v5244 = vadd.f32 %v5242, %v5243
  %v5245 = vrot.slane %v5244, 1
  %v5246 = vadd.f32 %v5244, %v5245
  %v5247 = vsel %vm4445, %v5005, 0.0
  %v5248 = vrot.slane %v5247, 4
  %v5249 = vadd.f32 %v5247, %v5248
  %v5250 = vrot.slane %v5249, 2
  %v5251 = vadd.f32 %v5249, %v5250
  %v5252 = vrot.slane %v5251, 1
  %v5253 = vadd.f32 %v5251, %v5252
  %v5254 = vsel %vm4445, %v5007, 0.0
  %v5255 = vrot.slane %v5254, 4
  %v5256 = vadd.f32 %v5254, %v5255
  %v5257 = vrot.slane %v5256, 2
  %v5258 = vadd.f32 %v5256, %v5257
  %v5259 = vrot.slane %v5258, 1
  %v5260 = vadd.f32 %v5258, %v5259
  %v5261 = vsel %vm4445, %v5009, 0.0
  %v5262 = vrot.slane %v5261, 4
  %v5263 = vadd.f32 %v5261, %v5262
  %v5264 = vrot.slane %v5263, 2
  %v5265 = vadd.f32 %v5263, %v5264
  %v5266 = vrot.slane %v5265, 1
  %v5267 = vadd.f32 %v5265, %v5266
  %v5268 = vsel %vm4445, %v5011, 0.0
  %v5269 = vrot.slane %v5268, 4
  %v5270 = vadd.f32 %v5268, %v5269
  %v5271 = vrot.slane %v5270, 2
  %v5272 = vadd.f32 %v5270, %v5271
  %v5273 = vrot.slane %v5272, 1
  %v5274 = vadd.f32 %v5272, %v5273
  %v5275 = vsel %vm4445, %v5013, 0.0
  %v5276 = vrot.slane %v5275, 4
  %v5277 = vadd.f32 %v5275, %v5276
  %v5278 = vrot.slane %v5277, 2
  %v5279 = vadd.f32 %v5277, %v5278
  %v5280 = vrot.slane %v5279, 1
  %v5281 = vadd.f32 %v5279, %v5280
  %v5282 = vsel %vm4445, %v5015, 0.0
  %v5283 = vrot.slane %v5282, 4
  %v5284 = vadd.f32 %v5282, %v5283
  %v5285 = vrot.slane %v5284, 2
  %v5286 = vadd.f32 %v5284, %v5285
  %v5287 = vrot.slane %v5286, 1
  %v5288 = vadd.f32 %v5286, %v5287
  %v5289 = vsel %vm4445, %v5017, 0.0
  %v5290 = vrot.slane %v5289, 4
  %v5291 = vadd.f32 %v5289, %v5290
  %v5292 = vrot.slane %v5291, 2
  %v5293 = vadd.f32 %v5291, %v5292
  %v5294 = vrot.slane %v5293, 1
  %v5295 = vadd.f32 %v5293, %v5294
  %v5296 = vsel %vm4445, %v5019, 0.0
  %v5297 = vrot.slane %v5296, 4
  %v5298 = vadd.f32 %v5296, %v5297
  %v5299 = vrot.slane %v5298, 2
  %v5300 = vadd.f32 %v5298, %v5299
  %v5301 = vrot.slane %v5300, 1
  %v5302 = vadd.f32 %v5300, %v5301
  %v5303 = vsel %vm4445, %v5021, 0.0
  %v5304 = vrot.slane %v5303, 4
  %v5305 = vadd.f32 %v5303, %v5304
  %v5306 = vrot.slane %v5305, 2
  %v5307 = vadd.f32 %v5305, %v5306
  %v5308 = vrot.slane %v5307, 1
  %v5309 = vadd.f32 %v5307, %v5308
  %v5310 = vsel %vm4445, %v5023, 0.0
  %v5311 = vrot.slane %v5310, 4
  %v5312 = vadd.f32 %v5310, %v5311
  %v5313 = vrot.slane %v5312, 2
  %v5314 = vadd.f32 %v5312, %v5313
  %v5315 = vrot.slane %v5314, 1
  %v5316 = vadd.f32 %v5314, %v5315
  %v5317 = vsel %vm4445, %v5025, 0.0
  %v5318 = vrot.slane %v5317, 4
  %v5319 = vadd.f32 %v5317, %v5318
  %v5320 = vrot.slane %v5319, 2
  %v5321 = vadd.f32 %v5319, %v5320
  %v5322 = vrot.slane %v5321, 1
  %v5323 = vadd.f32 %v5321, %v5322
  %v5324 = vsel %vm4445, %v5027, 0.0
  %v5325 = vrot.slane %v5324, 4
  %v5326 = vadd.f32 %v5324, %v5325
  %v5327 = vrot.slane %v5326, 2
  %v5328 = vadd.f32 %v5326, %v5327
  %v5329 = vrot.slane %v5328, 1
  %v5330 = vadd.f32 %v5328, %v5329
  %v5331 = vsel %vm4445, %v5029, 0.0
  %v5332 = vrot.slane %v5331, 4
  %v5333 = vadd.f32 %v5331, %v5332
  %v5334 = vrot.slane %v5333, 2
  %v5335 = vadd.f32 %v5333, %v5334
  %v5336 = vrot.slane %v5335, 1
  %v5337 = vadd.f32 %v5335, %v5336
  %v5338 = vsel %vm4445, %v5031, 0.0
  %v5339 = vrot.slane %v5338, 4
  %v5340 = vadd.f32 %v5338, %v5339
  %v5341 = vrot.slane %v5340, 2
  %v5342 = vadd.f32 %v5340, %v5341
  %v5343 = vrot.slane %v5342, 1
  %v5344 = vadd.f32 %v5342, %v5343
  %v5345 = vsel %vm4445, %v5033, 0.0
  %v5346 = vrot.slane %v5345, 4
  %v5347 = vadd.f32 %v5345, %v5346
  %v5348 = vrot.slane %v5347, 2
  %v5349 = vadd.f32 %v5347, %v5348
  %v5350 = vrot.slane %v5349, 1
  %v5351 = vadd.f32 %v5349, %v5350
  %v5352 = vsel %vm4445, %v5035, 0.0
  %v5353 = vrot.slane %v5352, 4
  %v5354 = vadd.f32 %v5352, %v5353
  %v5355 = vrot.slane %v5354, 2
  %v5356 = vadd.f32 %v5354, %v5355
  %v5357 = vrot.slane %v5356, 1
  %v5358 = vadd.f32 %v5356, %v5357
  %v5359 = vsel %vm4445, %v5037, 0.0
  %v5360 = vrot.slane %v5359, 4
  %v5361 = vadd.f32 %v5359, %v5360
  %v5362 = vrot.slane %v5361, 2
  %v5363 = vadd.f32 %v5361, %v5362
  %v5364 = vrot.slane %v5363, 1
  %v5365 = vadd.f32 %v5363, %v5364
  %v5366 = vsel %vm4445, %v5039, 0.0
  %v5367 = vrot.slane %v5366, 4
  %v5368 = vadd.f32 %v5366, %v5367
  %v5369 = vrot.slane %v5368, 2
  %v5370 = vadd.f32 %v5368, %v5369
  %v5371 = vrot.slane %v5370, 1
  %v5372 = vadd.f32 %v5370, %v5371
  %v5373 = vsel %vm4445, %v5041, 0.0
  %v5374 = vrot.slane %v5373, 4
  %v5375 = vadd.f32 %v5373, %v5374
  %v5376 = vrot.slane %v5375, 2
  %v5377 = vadd.f32 %v5375, %v5376
  %v5378 = vrot.slane %v5377, 1
  %v5379 = vadd.f32 %v5377, %v5378
  %v5380 = vsel %vm4445, %v5043, 0.0
  %v5381 = vrot.slane %v5380, 4
  %v5382 = vadd.f32 %v5380, %v5381
  %v5383 = vrot.slane %v5382, 2
  %v5384 = vadd.f32 %v5382, %v5383
  %v5385 = vrot.slane %v5384, 1
  %v5386 = vadd.f32 %v5384, %v5385
  %v5387 = vsel %vm4445, %v5045, 0.0
  %v5388 = vrot.slane %v5387, 4
  %v5389 = vadd.f32 %v5387, %v5388
  %v5390 = vrot.slane %v5389, 2
  %v5391 = vadd.f32 %v5389, %v5390
  %v5392 = vrot.slane %v5391, 1
  %v5393 = vadd.f32 %v5391, %v5392
  %v5394 = vsel %vm4445, %v5047, 0.0
  %v5395 = vrot.slane %v5394, 4
  %v5396 = vadd.f32 %v5394, %v5395
  %v5397 = vrot.slane %v5396, 2
  %v5398 = vadd.f32 %v5396, %v5397
  %v5399 = vrot.slane %v5398, 1
  %v5400 = vadd.f32 %v5398, %v5399
  %v5401 = vsel %vm4445, %v5049, 0.0
  %v5402 = vrot.slane %v5401, 4
  %v5403 = vadd.f32 %v5401, %v5402
  %v5404 = vrot.slane %v5403, 2
  %v5405 = vadd.f32 %v5403, %v5404
  %v5406 = vrot.slane %v5405, 1
  %v5407 = vadd.f32 %v5405, %v5406
  %v5408 = vsel %vm4445, %v5051, 0.0
  %v5409 = vrot.slane %v5408, 4
  %v5410 = vadd.f32 %v5408, %v5409
  %v5411 = vrot.slane %v5410, 2
  %v5412 = vadd.f32 %v5410, %v5411
  %v5413 = vrot.slane %v5412, 1
  %v5414 = vadd.f32 %v5412, %v5413
  %v5415 = vsel %vm4445, %v5053, 0.0
  %v5416 = vrot.slane %v5415, 4
  %v5417 = vadd.f32 %v5415, %v5416
  %v5418 = vrot.slane %v5417, 2
  %v5419 = vadd.f32 %v5417, %v5418
  %v5420 = vrot.slane %v5419, 1
  %v5421 = vadd.f32 %v5419, %v5420
  %v5422 = vsel %vm4445, %v5055, 0.0
  %v5423 = vrot.slane %v5422, 4
  %v5424 = vadd.f32 %v5422, %v5423
  %v5425 = vrot.slane %v5424, 2
  %v5426 = vadd.f32 %v5424, %v5425
  %v5427 = vrot.slane %v5426, 1
  %v5428 = vadd.f32 %v5426, %v5427
  %v5429 = vsel %vm4445, %v5057, 0.0
  %v5430 = vrot.slane %v5429, 4
  %v5431 = vadd.f32 %v5429, %v5430
  %v5432 = vrot.slane %v5431, 2
  %v5433 = vadd.f32 %v5431, %v5432
  %v5434 = vrot.slane %v5433, 1
  %v5435 = vadd.f32 %v5433, %v5434
  %v5436 = vsel %vm4445, %v5059, 0.0
  %v5437 = vrot.slane %v5436, 4
  %v5438 = vadd.f32 %v5436, %v5437
  %v5439 = vrot.slane %v5438, 2
  %v5440 = vadd.f32 %v5438, %v5439
  %v5441 = vrot.slane %v5440, 1
  %v5442 = vadd.f32 %v5440, %v5441
  %v5443 = vsel %vm4445, %v5061, 0.0
  %v5444 = vrot.slane %v5443, 4
  %v5445 = vadd.f32 %v5443, %v5444
  %v5446 = vrot.slane %v5445, 2
  %v5447 = vadd.f32 %v5445, %v5446
  %v5448 = vrot.slane %v5447, 1
  %v5449 = vadd.f32 %v5447, %v5448
  %v5450 = vsel %vm4445, %v5063, 0.0
  %v5451 = vrot.slane %v5450, 4
  %v5452 = vadd.f32 %v5450, %v5451
  %v5453 = vrot.slane %v5452, 2
  %v5454 = vadd.f32 %v5452, %v5453
  %v5455 = vrot.slane %v5454, 1
  %v5456 = vadd.f32 %v5454, %v5455
  %v5457 = vsel %vm4445, %v5065, 0.0
  %v5458 = vrot.slane %v5457, 4
  %v5459 = vadd.f32 %v5457, %v5458
  %v5460 = vrot.slane %v5459, 2
  %v5461 = vadd.f32 %v5459, %v5460
  %v5462 = vrot.slane %v5461, 1
  %v5463 = vadd.f32 %v5461, %v5462
  %v5464 = vsel %vm4445, %v5067, 0.0
  %v5465 = vrot.slane %v5464, 4
  %v5466 = vadd.f32 %v5464, %v5465
  %v5467 = vrot.slane %v5466, 2
  %v5468 = vadd.f32 %v5466, %v5467
  %v5469 = vrot.slane %v5468, 1
  %v5470 = vadd.f32 %v5468, %v5469
  %v5471 = vsel %vm4445, %v5069, 0.0
  %v5472 = vrot.slane %v5471, 4
  %v5473 = vadd.f32 %v5471, %v5472
  %v5474 = vrot.slane %v5473, 2
  %v5475 = vadd.f32 %v5473, %v5474
  %v5476 = vrot.slane %v5475, 1
  %v5477 = vadd.f32 %v5475, %v5476
  %v5478 = vsel %vm4445, %v5071, 0.0
  %v5479 = vrot.slane %v5478, 4
  %v5480 = vadd.f32 %v5478, %v5479
  %v5481 = vrot.slane %v5480, 2
  %v5482 = vadd.f32 %v5480, %v5481
  %v5483 = vrot.slane %v5482, 1
  %v5484 = vadd.f32 %v5482, %v5483
  %v5485 = vsel %vm4445, %v5073, 0.0
  %v5486 = vrot.slane %v5485, 4
  %v5487 = vadd.f32 %v5485, %v5486
  %v5488 = vrot.slane %v5487, 2
  %v5489 = vadd.f32 %v5487, %v5488
  %v5490 = vrot.slane %v5489, 1
  %v5491 = vadd.f32 %v5489, %v5490
  %v5492 = vsel %vm4445, %v5075, 0.0
  %v5493 = vrot.slane %v5492, 4
  %v5494 = vadd.f32 %v5492, %v5493
  %v5495 = vrot.slane %v5494, 2
  %v5496 = vadd.f32 %v5494, %v5495
  %v5497 = vrot.slane %v5496, 1
  %v5498 = vadd.f32 %v5496, %v5497
  %v5499 = vsel %vm4445, %v5077, 0.0
  %v5500 = vrot.slane %v5499, 4
  %v5501 = vadd.f32 %v5499, %v5500
  %v5502 = vrot.slane %v5501, 2
  %v5503 = vadd.f32 %v5501, %v5502
  %v5504 = vrot.slane %v5503, 1
  %v5505 = vadd.f32 %v5503, %v5504
  %v5506 = vsel %vm4445, %v5079, 0.0
  %v5507 = vrot.slane %v5506, 4
  %v5508 = vadd.f32 %v5506, %v5507
  %v5509 = vrot.slane %v5508, 2
  %v5510 = vadd.f32 %v5508, %v5509
  %v5511 = vrot.slane %v5510, 1
  %v5512 = vadd.f32 %v5510, %v5511
  %v5513 = vsel %vm4445, %v5081, 0.0
  %v5514 = vrot.slane %v5513, 4
  %v5515 = vadd.f32 %v5513, %v5514
  %v5516 = vrot.slane %v5515, 2
  %v5517 = vadd.f32 %v5515, %v5516
  %v5518 = vrot.slane %v5517, 1
  %v5519 = vadd.f32 %v5517, %v5518
  %v5520 = vsel %vm4445, %v5083, 0.0
  %v5521 = vrot.slane %v5520, 4
  %v5522 = vadd.f32 %v5520, %v5521
  %v5523 = vrot.slane %v5522, 2
  %v5524 = vadd.f32 %v5522, %v5523
  %v5525 = vrot.slane %v5524, 1
  %v5526 = vadd.f32 %v5524, %v5525
  %v5527 = vsel %vm4445, %v5085, 0.0
  %v5528 = vrot.slane %v5527, 4
  %v5529 = vadd.f32 %v5527, %v5528
  %v5530 = vrot.slane %v5529, 2
  %v5531 = vadd.f32 %v5529, %v5530
  %v5532 = vrot.slane %v5531, 1
  %v5533 = vadd.f32 %v5531, %v5532
  %v5534 = vrcp.pop %v5092
  %v5535 = vmul.f32 %v5092, %v5534
  %v5536 = vsub.f32 1.0, %v5535
  %v5537 = vmul.f32 %v5534, %v5536
  %v5538 = vadd.f32 %v5534, %v5537
  %vm5539 = vweird.f32 %v5092
  %vm5540 = vweird.f32 %v5534
  %vm5541 = vmor %vm5539, %vm5540
  %v5542 = vsel %vm5541, %v5534, %v5538
  %v5543 = vand.u32 2147483647, %v5092
  %vm5544 = vcmp.eq.f32.partialorder %v5543, 8.507059e+37
  %v5545 = vand.u32 %v5092, 2147483648
  %v5546 = vor.u32 1.1754944e-38, %v5545
  %v5547 = vsel %vm5544, %v5546, %v5542
  %v5548 = vmul.f32 %v4959, %v5547
  %v5549 = vrcp.pop %v5099
  %v5550 = vmul.f32 %v5099, %v5549
  %v5551 = vsub.f32 1.0, %v5550
  %v5552 = vmul.f32 %v5549, %v5551
  %v5553 = vadd.f32 %v5549, %v5552
  %vm5554 = vweird.f32 %v5099
  %vm5555 = vweird.f32 %v5549
  %vm5556 = vmor %vm5554, %vm5555
  %v5557 = vsel %vm5556, %v5549, %v5553
  %v5558 = vand.u32 2147483647, %v5099
  %vm5559 = vcmp.eq.f32.partialorder %v5558, 8.507059e+37
  %v5560 = vand.u32 %v5099, 2147483648
  %v5561 = vor.u32 1.1754944e-38, %v5560
  %v5562 = vsel %vm5559, %v5561, %v5557
  %v5563 = vmul.f32 %v4961, %v5562
  %v5564 = vrcp.pop %v5106
  %v5565 = vmul.f32 %v5106, %v5564
  %v5566 = vsub.f32 1.0, %v5565
  %v5567 = vmul.f32 %v5564, %v5566
  %v5568 = vadd.f32 %v5564, %v5567
  %vm5569 = vweird.f32 %v5106
  %vm5570 = vweird.f32 %v5564
  %vm5571 = vmor %vm5569, %vm5570
  %v5572 = vsel %vm5571, %v5564, %v5568
  %v5573 = vand.u32 2147483647, %v5106
  %vm5574 = vcmp.eq.f32.partialorder %v5573, 8.507059e+37
  %v5575 = vand.u32 %v5106, 2147483648
  %v5576 = vor.u32 1.1754944e-38, %v5575
  %v5577 = vsel %vm5574, %v5576, %v5572
  %v5578 = vmul.f32 %v4963, %v5577
  %v5579 = vrcp.pop %v5113
  %v5580 = vmul.f32 %v5113, %v5579
  %v5581 = vsub.f32 1.0, %v5580
  %v5582 = vmul.f32 %v5579, %v5581
  %v5583 = vadd.f32 %v5579, %v5582
  %vm5584 = vweird.f32 %v5113
  %vm5585 = vweird.f32 %v5579
  %vm5586 = vmor %vm5584, %vm5585
  %v5587 = vsel %vm5586, %v5579, %v5583
  %v5588 = vand.u32 2147483647, %v5113
  %vm5589 = vcmp.eq.f32.partialorder %v5588, 8.507059e+37
  %v5590 = vand.u32 %v5113, 2147483648
  %v5591 = vor.u32 1.1754944e-38, %v5590
  %v5592 = vsel %vm5589, %v5591, %v5587
  %v5593 = vmul.f32 %v4965, %v5592
  %v5594 = vrcp.pop %v5120
  %v5595 = vmul.f32 %v5120, %v5594
  %v5596 = vsub.f32 1.0, %v5595
  %v5597 = vmul.f32 %v5594, %v5596
  %v5598 = vadd.f32 %v5594, %v5597
  %vm5599 = vweird.f32 %v5120
  %vm5600 = vweird.f32 %v5594
  %vm5601 = vmor %vm5599, %vm5600
  %v5602 = vsel %vm5601, %v5594, %v5598
  %v5603 = vand.u32 2147483647, %v5120
  %vm5604 = vcmp.eq.f32.partialorder %v5603, 8.507059e+37
  %v5605 = vand.u32 %v5120, 2147483648
  %v5606 = vor.u32 1.1754944e-38, %v5605
  %v5607 = vsel %vm5604, %v5606, %v5602
  %v5608 = vmul.f32 %v4967, %v5607
  %v5609 = vrcp.pop %v5127
  %v5610 = vmul.f32 %v5127, %v5609
  %v5611 = vsub.f32 1.0, %v5610
  %v5612 = vmul.f32 %v5609, %v5611
  %v5613 = vadd.f32 %v5609, %v5612
  %vm5614 = vweird.f32 %v5127
  %vm5615 = vweird.f32 %v5609
  %vm5616 = vmor %vm5614, %vm5615
  %v5617 = vsel %vm5616, %v5609, %v5613
  %v5618 = vand.u32 2147483647, %v5127
  %vm5619 = vcmp.eq.f32.partialorder %v5618, 8.507059e+37
  %v5620 = vand.u32 %v5127, 2147483648
  %v5621 = vor.u32 1.1754944e-38, %v5620
  %v5622 = vsel %vm5619, %v5621, %v5617
  %v5623 = vmul.f32 %v4969, %v5622
  %v5624 = vrcp.pop %v5134
  %v5625 = vmul.f32 %v5134, %v5624
  %v5626 = vsub.f32 1.0, %v5625
  %v5627 = vmul.f32 %v5624, %v5626
  %v5628 = vadd.f32 %v5624, %v5627
  %vm5629 = vweird.f32 %v5134
  %vm5630 = vweird.f32 %v5624
  %vm5631 = vmor %vm5629, %vm5630
  %v5632 = vsel %vm5631, %v5624, %v5628
  %v5633 = vand.u32 2147483647, %v5134
  %vm5634 = vcmp.eq.f32.partialorder %v5633, 8.507059e+37
  %v5635 = vand.u32 %v5134, 2147483648
  %v5636 = vor.u32 1.1754944e-38, %v5635
  %v5637 = vsel %vm5634, %v5636, %v5632
  %v5638 = vmul.f32 %v4971, %v5637
  %v5639 = vrcp.pop %v5141
  %v5640 = vmul.f32 %v5141, %v5639
  %v5641 = vsub.f32 1.0, %v5640
  %v5642 = vmul.f32 %v5639, %v5641
  %v5643 = vadd.f32 %v5639, %v5642
  %vm5644 = vweird.f32 %v5141
  %vm5645 = vweird.f32 %v5639
  %vm5646 = vmor %vm5644, %vm5645
  %v5647 = vsel %vm5646, %v5639, %v5643
  %v5648 = vand.u32 2147483647, %v5141
  %vm5649 = vcmp.eq.f32.partialorder %v5648, 8.507059e+37
  %v5650 = vand.u32 %v5141, 2147483648
  %v5651 = vor.u32 1.1754944e-38, %v5650
  %v5652 = vsel %vm5649, %v5651, %v5647
  %v5653 = vmul.f32 %v4973, %v5652
  %v5654 = vrcp.pop %v5148
  %v5655 = vmul.f32 %v5148, %v5654
  %v5656 = vsub.f32 1.0, %v5655
  %v5657 = vmul.f32 %v5654, %v5656
  %v5658 = vadd.f32 %v5654, %v5657
  %vm5659 = vweird.f32 %v5148
  %vm5660 = vweird.f32 %v5654
  %vm5661 = vmor %vm5659, %vm5660
  %v5662 = vsel %vm5661, %v5654, %v5658
  %v5663 = vand.u32 2147483647, %v5148
  %vm5664 = vcmp.eq.f32.partialorder %v5663, 8.507059e+37
  %v5665 = vand.u32 %v5148, 2147483648
  %v5666 = vor.u32 1.1754944e-38, %v5665
  %v5667 = vsel %vm5664, %v5666, %v5662
  %v5668 = vmul.f32 %v4975, %v5667
  %v5669 = vrcp.pop %v5155
  %v5670 = vmul.f32 %v5155, %v5669
  %v5671 = vsub.f32 1.0, %v5670
  %v5672 = vmul.f32 %v5669, %v5671
  %v5673 = vadd.f32 %v5669, %v5672
  %vm5674 = vweird.f32 %v5155
  %vm5675 = vweird.f32 %v5669
  %vm5676 = vmor %vm5674, %vm5675
  %v5677 = vsel %vm5676, %v5669, %v5673
  %v5678 = vand.u32 2147483647, %v5155
  %vm5679 = vcmp.eq.f32.partialorder %v5678, 8.507059e+37
  %v5680 = vand.u32 %v5155, 2147483648
  %v5681 = vor.u32 1.1754944e-38, %v5680
  %v5682 = vsel %vm5679, %v5681, %v5677
  %v5683 = vmul.f32 %v4977, %v5682
  %v5684 = vrcp.pop %v5162
  %v5685 = vmul.f32 %v5162, %v5684
  %v5686 = vsub.f32 1.0, %v5685
  %v5687 = vmul.f32 %v5684, %v5686
  %v5688 = vadd.f32 %v5684, %v5687
  %vm5689 = vweird.f32 %v5162
  %vm5690 = vweird.f32 %v5684
  %vm5691 = vmor %vm5689, %vm5690
  %v5692 = vsel %vm5691, %v5684, %v5688
  %v5693 = vand.u32 2147483647, %v5162
  %vm5694 = vcmp.eq.f32.partialorder %v5693, 8.507059e+37
  %v5695 = vand.u32 %v5162, 2147483648
  %v5696 = vor.u32 1.1754944e-38, %v5695
  %v5697 = vsel %vm5694, %v5696, %v5692
  %v5698 = vmul.f32 %v4979, %v5697
  %v5699 = vrcp.pop %v5169
  %v5700 = vmul.f32 %v5169, %v5699
  %v5701 = vsub.f32 1.0, %v5700
  %v5702 = vmul.f32 %v5699, %v5701
  %v5703 = vadd.f32 %v5699, %v5702
  %vm5704 = vweird.f32 %v5169
  %vm5705 = vweird.f32 %v5699
  %vm5706 = vmor %vm5704, %vm5705
  %v5707 = vsel %vm5706, %v5699, %v5703
  %v5708 = vand.u32 2147483647, %v5169
  %vm5709 = vcmp.eq.f32.partialorder %v5708, 8.507059e+37
  %v5710 = vand.u32 %v5169, 2147483648
  %v5711 = vor.u32 1.1754944e-38, %v5710
  %v5712 = vsel %vm5709, %v5711, %v5707
  %v5713 = vmul.f32 %v4981, %v5712
  %v5714 = vrcp.pop %v5176
  %v5715 = vmul.f32 %v5176, %v5714
  %v5716 = vsub.f32 1.0, %v5715
  %v5717 = vmul.f32 %v5714, %v5716
  %v5718 = vadd.f32 %v5714, %v5717
  %vm5719 = vweird.f32 %v5176
  %vm5720 = vweird.f32 %v5714
  %vm5721 = vmor %vm5719, %vm5720
  %v5722 = vsel %vm5721, %v5714, %v5718
  %v5723 = vand.u32 2147483647, %v5176
  %vm5724 = vcmp.eq.f32.partialorder %v5723, 8.507059e+37
  %v5725 = vand.u32 %v5176, 2147483648
  %v5726 = vor.u32 1.1754944e-38, %v5725
  %v5727 = vsel %vm5724, %v5726, %v5722
  %v5728 = vmul.f32 %v4983, %v5727
  %v5729 = vrcp.pop %v5183
  %v5730 = vmul.f32 %v5183, %v5729
  %v5731 = vsub.f32 1.0, %v5730
  %v5732 = vmul.f32 %v5729, %v5731
  %v5733 = vadd.f32 %v5729, %v5732
  %vm5734 = vweird.f32 %v5183
  %vm5735 = vweird.f32 %v5729
  %vm5736 = vmor %vm5734, %vm5735
  %v5737 = vsel %vm5736, %v5729, %v5733
  %v5738 = vand.u32 2147483647, %v5183
  %vm5739 = vcmp.eq.f32.partialorder %v5738, 8.507059e+37
  %v5740 = vand.u32 %v5183, 2147483648
  %v5741 = vor.u32 1.1754944e-38, %v5740
  %v5742 = vsel %vm5739, %v5741, %v5737
  %v5743 = vmul.f32 %v4985, %v5742
  %v5744 = vrcp.pop %v5190
  %v5745 = vmul.f32 %v5190, %v5744
  %v5746 = vsub.f32 1.0, %v5745
  %v5747 = vmul.f32 %v5744, %v5746
  %v5748 = vadd.f32 %v5744, %v5747
  %vm5749 = vweird.f32 %v5190
  %vm5750 = vweird.f32 %v5744
  %vm5751 = vmor %vm5749, %vm5750
  %v5752 = vsel %vm5751, %v5744, %v5748
  %v5753 = vand.u32 2147483647, %v5190
  %vm5754 = vcmp.eq.f32.partialorder %v5753, 8.507059e+37
  %v5755 = vand.u32 %v5190, 2147483648
  %v5756 = vor.u32 1.1754944e-38, %v5755
  %v5757 = vsel %vm5754, %v5756, %v5752
  %v5758 = vmul.f32 %v4987, %v5757
  %v5759 = vrcp.pop %v5197
  %v5760 = vmul.f32 %v5197, %v5759
  %v5761 = vsub.f32 1.0, %v5760
  %v5762 = vmul.f32 %v5759, %v5761
  %v5763 = vadd.f32 %v5759, %v5762
  %vm5764 = vweird.f32 %v5197
  %vm5765 = vweird.f32 %v5759
  %vm5766 = vmor %vm5764, %vm5765
  %v5767 = vsel %vm5766, %v5759, %v5763
  %v5768 = vand.u32 2147483647, %v5197
  %vm5769 = vcmp.eq.f32.partialorder %v5768, 8.507059e+37
  %v5770 = vand.u32 %v5197, 2147483648
  %v5771 = vor.u32 1.1754944e-38, %v5770
  %v5772 = vsel %vm5769, %v5771, %v5767
  %v5773 = vmul.f32 %v4989, %v5772
  %v5774 = vrcp.pop %v5204
  %v5775 = vmul.f32 %v5204, %v5774
  %v5776 = vsub.f32 1.0, %v5775
  %v5777 = vmul.f32 %v5774, %v5776
  %v5778 = vadd.f32 %v5774, %v5777
  %vm5779 = vweird.f32 %v5204
  %vm5780 = vweird.f32 %v5774
  %vm5781 = vmor %vm5779, %vm5780
  %v5782 = vsel %vm5781, %v5774, %v5778
  %v5783 = vand.u32 2147483647, %v5204
  %vm5784 = vcmp.eq.f32.partialorder %v5783, 8.507059e+37
  %v5785 = vand.u32 %v5204, 2147483648
  %v5786 = vor.u32 1.1754944e-38, %v5785
  %v5787 = vsel %vm5784, %v5786, %v5782
  %v5788 = vmul.f32 %v4991, %v5787
  %v5789 = vrcp.pop %v5211
  %v5790 = vmul.f32 %v5211, %v5789
  %v5791 = vsub.f32 1.0, %v5790
  %v5792 = vmul.f32 %v5789, %v5791
  %v5793 = vadd.f32 %v5789, %v5792
  %vm5794 = vweird.f32 %v5211
  %vm5795 = vweird.f32 %v5789
  %vm5796 = vmor %vm5794, %vm5795
  %v5797 = vsel %vm5796, %v5789, %v5793
  %v5798 = vand.u32 2147483647, %v5211
  %vm5799 = vcmp.eq.f32.partialorder %v5798, 8.507059e+37
  %v5800 = vand.u32 %v5211, 2147483648
  %v5801 = vor.u32 1.1754944e-38, %v5800
  %v5802 = vsel %vm5799, %v5801, %v5797
  %v5803 = vmul.f32 %v4993, %v5802
  %v5804 = vrcp.pop %v5218
  %v5805 = vmul.f32 %v5218, %v5804
  %v5806 = vsub.f32 1.0, %v5805
  %v5807 = vmul.f32 %v5804, %v5806
  %v5808 = vadd.f32 %v5804, %v5807
  %vm5809 = vweird.f32 %v5218
  %vm5810 = vweird.f32 %v5804
  %vm5811 = vmor %vm5809, %vm5810
  %v5812 = vsel %vm5811, %v5804, %v5808
  %v5813 = vand.u32 2147483647, %v5218
  %vm5814 = vcmp.eq.f32.partialorder %v5813, 8.507059e+37
  %v5815 = vand.u32 %v5218, 2147483648
  %v5816 = vor.u32 1.1754944e-38, %v5815
  %v5817 = vsel %vm5814, %v5816, %v5812
  %v5818 = vmul.f32 %v4995, %v5817
  %v5819 = vrcp.pop %v5225
  %v5820 = vmul.f32 %v5225, %v5819
  %v5821 = vsub.f32 1.0, %v5820
  %v5822 = vmul.f32 %v5819, %v5821
  %v5823 = vadd.f32 %v5819, %v5822
  %vm5824 = vweird.f32 %v5225
  %vm5825 = vweird.f32 %v5819
  %vm5826 = vmor %vm5824, %vm5825
  %v5827 = vsel %vm5826, %v5819, %v5823
  %v5828 = vand.u32 2147483647, %v5225
  %vm5829 = vcmp.eq.f32.partialorder %v5828, 8.507059e+37
  %v5830 = vand.u32 %v5225, 2147483648
  %v5831 = vor.u32 1.1754944e-38, %v5830
  %v5832 = vsel %vm5829, %v5831, %v5827
  %v5833 = vmul.f32 %v4997, %v5832
  %v5834 = vrcp.pop %v5232
  %v5835 = vmul.f32 %v5232, %v5834
  %v5836 = vsub.f32 1.0, %v5835
  %v5837 = vmul.f32 %v5834, %v5836
  %v5838 = vadd.f32 %v5834, %v5837
  %vm5839 = vweird.f32 %v5232
  %vm5840 = vweird.f32 %v5834
  %vm5841 = vmor %vm5839, %vm5840
  %v5842 = vsel %vm5841, %v5834, %v5838
  %v5843 = vand.u32 2147483647, %v5232
  %vm5844 = vcmp.eq.f32.partialorder %v5843, 8.507059e+37
  %v5845 = vand.u32 %v5232, 2147483648
  %v5846 = vor.u32 1.1754944e-38, %v5845
  %v5847 = vsel %vm5844, %v5846, %v5842
  %v5848 = vmul.f32 %v4999, %v5847
  %v5849 = vrcp.pop %v5239
  %v5850 = vmul.f32 %v5239, %v5849
  %v5851 = vsub.f32 1.0, %v5850
  %v5852 = vmul.f32 %v5849, %v5851
  %v5853 = vadd.f32 %v5849, %v5852
  %vm5854 = vweird.f32 %v5239
  %vm5855 = vweird.f32 %v5849
  %vm5856 = vmor %vm5854, %vm5855
  %v5857 = vsel %vm5856, %v5849, %v5853
  %v5858 = vand.u32 2147483647, %v5239
  %vm5859 = vcmp.eq.f32.partialorder %v5858, 8.507059e+37
  %v5860 = vand.u32 %v5239, 2147483648
  %v5861 = vor.u32 1.1754944e-38, %v5860
  %v5862 = vsel %vm5859, %v5861, %v5857
  %v5863 = vmul.f32 %v5001, %v5862
  %v5864 = vrcp.pop %v5246
  %v5865 = vmul.f32 %v5246, %v5864
  %v5866 = vsub.f32 1.0, %v5865
  %v5867 = vmul.f32 %v5864, %v5866
  %v5868 = vadd.f32 %v5864, %v5867
  %vm5869 = vweird.f32 %v5246
  %vm5870 = vweird.f32 %v5864
  %vm5871 = vmor %vm5869, %vm5870
  %v5872 = vsel %vm5871, %v5864, %v5868
  %v5873 = vand.u32 2147483647, %v5246
  %vm5874 = vcmp.eq.f32.partialorder %v5873, 8.507059e+37
  %v5875 = vand.u32 %v5246, 2147483648
  %v5876 = vor.u32 1.1754944e-38, %v5875
  %v5877 = vsel %vm5874, %v5876, %v5872
  %v5878 = vmul.f32 %v5003, %v5877
  %v5879 = vrcp.pop %v5253
  %v5880 = vmul.f32 %v5253, %v5879
  %v5881 = vsub.f32 1.0, %v5880
  %v5882 = vmul.f32 %v5879, %v5881
  %v5883 = vadd.f32 %v5879, %v5882
  %vm5884 = vweird.f32 %v5253
  %vm5885 = vweird.f32 %v5879
  %vm5886 = vmor %vm5884, %vm5885
  %v5887 = vsel %vm5886, %v5879, %v5883
  %v5888 = vand.u32 2147483647, %v5253
  %vm5889 = vcmp.eq.f32.partialorder %v5888, 8.507059e+37
  %v5890 = vand.u32 %v5253, 2147483648
  %v5891 = vor.u32 1.1754944e-38, %v5890
  %v5892 = vsel %vm5889, %v5891, %v5887
  %v5893 = vmul.f32 %v5005, %v5892
  %v5894 = vrcp.pop %v5260
  %v5895 = vmul.f32 %v5260, %v5894
  %v5896 = vsub.f32 1.0, %v5895
  %v5897 = vmul.f32 %v5894, %v5896
  %v5898 = vadd.f32 %v5894, %v5897
  %vm5899 = vweird.f32 %v5260
  %vm5900 = vweird.f32 %v5894
  %vm5901 = vmor %vm5899, %vm5900
  %v5902 = vsel %vm5901, %v5894, %v5898
  %v5903 = vand.u32 2147483647, %v5260
  %vm5904 = vcmp.eq.f32.partialorder %v5903, 8.507059e+37
  %v5905 = vand.u32 %v5260, 2147483648
  %v5906 = vor.u32 1.1754944e-38, %v5905
  %v5907 = vsel %vm5904, %v5906, %v5902
  %v5908 = vmul.f32 %v5007, %v5907
  %v5909 = vrcp.pop %v5267
  %v5910 = vmul.f32 %v5267, %v5909
  %v5911 = vsub.f32 1.0, %v5910
  %v5912 = vmul.f32 %v5909, %v5911
  %v5913 = vadd.f32 %v5909, %v5912
  %vm5914 = vweird.f32 %v5267
  %vm5915 = vweird.f32 %v5909
  %vm5916 = vmor %vm5914, %vm5915
  %v5917 = vsel %vm5916, %v5909, %v5913
  %v5918 = vand.u32 2147483647, %v5267
  %vm5919 = vcmp.eq.f32.partialorder %v5918, 8.507059e+37
  %v5920 = vand.u32 %v5267, 2147483648
  %v5921 = vor.u32 1.1754944e-38, %v5920
  %v5922 = vsel %vm5919, %v5921, %v5917
  %v5923 = vmul.f32 %v5009, %v5922
  %v5924 = vrcp.pop %v5274
  %v5925 = vmul.f32 %v5274, %v5924
  %v5926 = vsub.f32 1.0, %v5925
  %v5927 = vmul.f32 %v5924, %v5926
  %v5928 = vadd.f32 %v5924, %v5927
  %vm5929 = vweird.f32 %v5274
  %vm5930 = vweird.f32 %v5924
  %vm5931 = vmor %vm5929, %vm5930
  %v5932 = vsel %vm5931, %v5924, %v5928
  %v5933 = vand.u32 2147483647, %v5274
  %vm5934 = vcmp.eq.f32.partialorder %v5933, 8.507059e+37
  %v5935 = vand.u32 %v5274, 2147483648
  %v5936 = vor.u32 1.1754944e-38, %v5935
  %v5937 = vsel %vm5934, %v5936, %v5932
  %v5938 = vmul.f32 %v5011, %v5937
  %v5939 = vrcp.pop %v5281
  %v5940 = vmul.f32 %v5281, %v5939
  %v5941 = vsub.f32 1.0, %v5940
  %v5942 = vmul.f32 %v5939, %v5941
  %v5943 = vadd.f32 %v5939, %v5942
  %vm5944 = vweird.f32 %v5281
  %vm5945 = vweird.f32 %v5939
  %vm5946 = vmor %vm5944, %vm5945
  %v5947 = vsel %vm5946, %v5939, %v5943
  %v5948 = vand.u32 2147483647, %v5281
  %vm5949 = vcmp.eq.f32.partialorder %v5948, 8.507059e+37
  %v5950 = vand.u32 %v5281, 2147483648
  %v5951 = vor.u32 1.1754944e-38, %v5950
  %v5952 = vsel %vm5949, %v5951, %v5947
  %v5953 = vmul.f32 %v5013, %v5952
  %v5954 = vrcp.pop %v5288
  %v5955 = vmul.f32 %v5288, %v5954
  %v5956 = vsub.f32 1.0, %v5955
  %v5957 = vmul.f32 %v5954, %v5956
  %v5958 = vadd.f32 %v5954, %v5957
  %vm5959 = vweird.f32 %v5288
  %vm5960 = vweird.f32 %v5954
  %vm5961 = vmor %vm5959, %vm5960
  %v5962 = vsel %vm5961, %v5954, %v5958
  %v5963 = vand.u32 2147483647, %v5288
  %vm5964 = vcmp.eq.f32.partialorder %v5963, 8.507059e+37
  %v5965 = vand.u32 %v5288, 2147483648
  %v5966 = vor.u32 1.1754944e-38, %v5965
  %v5967 = vsel %vm5964, %v5966, %v5962
  %v5968 = vmul.f32 %v5015, %v5967
  %v5969 = vrcp.pop %v5295
  %v5970 = vmul.f32 %v5295, %v5969
  %v5971 = vsub.f32 1.0, %v5970
  %v5972 = vmul.f32 %v5969, %v5971
  %v5973 = vadd.f32 %v5969, %v5972
  %vm5974 = vweird.f32 %v5295
  %vm5975 = vweird.f32 %v5969
  %vm5976 = vmor %vm5974, %vm5975
  %v5977 = vsel %vm5976, %v5969, %v5973
  %v5978 = vand.u32 2147483647, %v5295
  %vm5979 = vcmp.eq.f32.partialorder %v5978, 8.507059e+37
  %v5980 = vand.u32 %v5295, 2147483648
  %v5981 = vor.u32 1.1754944e-38, %v5980
  %v5982 = vsel %vm5979, %v5981, %v5977
  %v5983 = vmul.f32 %v5017, %v5982
  %v5984 = vrcp.pop %v5302
  %v5985 = vmul.f32 %v5302, %v5984
  %v5986 = vsub.f32 1.0, %v5985
  %v5987 = vmul.f32 %v5984, %v5986
  %v5988 = vadd.f32 %v5984, %v5987
  %vm5989 = vweird.f32 %v5302
  %vm5990 = vweird.f32 %v5984
  %vm5991 = vmor %vm5989, %vm5990
  %v5992 = vsel %vm5991, %v5984, %v5988
  %v5993 = vand.u32 2147483647, %v5302
  %vm5994 = vcmp.eq.f32.partialorder %v5993, 8.507059e+37
  %v5995 = vand.u32 %v5302, 2147483648
  %v5996 = vor.u32 1.1754944e-38, %v5995
  %v5997 = vsel %vm5994, %v5996, %v5992
  %v5998 = vmul.f32 %v5019, %v5997
  %v5999 = vrcp.pop %v5309
  %v6000 = vmul.f32 %v5309, %v5999
  %v6001 = vsub.f32 1.0, %v6000
  %v6002 = vmul.f32 %v5999, %v6001
  %v6003 = vadd.f32 %v5999, %v6002
  %vm6004 = vweird.f32 %v5309
  %vm6005 = vweird.f32 %v5999
  %vm6006 = vmor %vm6004, %vm6005
  %v6007 = vsel %vm6006, %v5999, %v6003
  %v6008 = vand.u32 2147483647, %v5309
  %vm6009 = vcmp.eq.f32.partialorder %v6008, 8.507059e+37
  %v6010 = vand.u32 %v5309, 2147483648
  %v6011 = vor.u32 1.1754944e-38, %v6010
  %v6012 = vsel %vm6009, %v6011, %v6007
  %v6013 = vmul.f32 %v5021, %v6012
  %v6014 = vrcp.pop %v5316
  %v6015 = vmul.f32 %v5316, %v6014
  %v6016 = vsub.f32 1.0, %v6015
  %v6017 = vmul.f32 %v6014, %v6016
  %v6018 = vadd.f32 %v6014, %v6017
  %vm6019 = vweird.f32 %v5316
  %vm6020 = vweird.f32 %v6014
  %vm6021 = vmor %vm6019, %vm6020
  %v6022 = vsel %vm6021, %v6014, %v6018
  %v6023 = vand.u32 2147483647, %v5316
  %vm6024 = vcmp.eq.f32.partialorder %v6023, 8.507059e+37
  %v6025 = vand.u32 %v5316, 2147483648
  %v6026 = vor.u32 1.1754944e-38, %v6025
  %v6027 = vsel %vm6024, %v6026, %v6022
  %v6028 = vmul.f32 %v5023, %v6027
  %v6029 = vrcp.pop %v5323
  %v6030 = vmul.f32 %v5323, %v6029
  %v6031 = vsub.f32 1.0, %v6030
  %v6032 = vmul.f32 %v6029, %v6031
  %v6033 = vadd.f32 %v6029, %v6032
  %vm6034 = vweird.f32 %v5323
  %vm6035 = vweird.f32 %v6029
  %vm6036 = vmor %vm6034, %vm6035
  %v6037 = vsel %vm6036, %v6029, %v6033
  %v6038 = vand.u32 2147483647, %v5323
  %vm6039 = vcmp.eq.f32.partialorder %v6038, 8.507059e+37
  %v6040 = vand.u32 %v5323, 2147483648
  %v6041 = vor.u32 1.1754944e-38, %v6040
  %v6042 = vsel %vm6039, %v6041, %v6037
  %v6043 = vmul.f32 %v5025, %v6042
  %v6044 = vrcp.pop %v5330
  %v6045 = vmul.f32 %v5330, %v6044
  %v6046 = vsub.f32 1.0, %v6045
  %v6047 = vmul.f32 %v6044, %v6046
  %v6048 = vadd.f32 %v6044, %v6047
  %vm6049 = vweird.f32 %v5330
  %vm6050 = vweird.f32 %v6044
  %vm6051 = vmor %vm6049, %vm6050
  %v6052 = vsel %vm6051, %v6044, %v6048
  %v6053 = vand.u32 2147483647, %v5330
  %vm6054 = vcmp.eq.f32.partialorder %v6053, 8.507059e+37
  %v6055 = vand.u32 %v5330, 2147483648
  %v6056 = vor.u32 1.1754944e-38, %v6055
  %v6057 = vsel %vm6054, %v6056, %v6052
  %v6058 = vmul.f32 %v5027, %v6057
  %v6059 = vrcp.pop %v5337
  %v6060 = vmul.f32 %v5337, %v6059
  %v6061 = vsub.f32 1.0, %v6060
  %v6062 = vmul.f32 %v6059, %v6061
  %v6063 = vadd.f32 %v6059, %v6062
  %vm6064 = vweird.f32 %v5337
  %vm6065 = vweird.f32 %v6059
  %vm6066 = vmor %vm6064, %vm6065
  %v6067 = vsel %vm6066, %v6059, %v6063
  %v6068 = vand.u32 2147483647, %v5337
  %vm6069 = vcmp.eq.f32.partialorder %v6068, 8.507059e+37
  %v6070 = vand.u32 %v5337, 2147483648
  %v6071 = vor.u32 1.1754944e-38, %v6070
  %v6072 = vsel %vm6069, %v6071, %v6067
  %v6073 = vmul.f32 %v5029, %v6072
  %v6074 = vrcp.pop %v5344
  %v6075 = vmul.f32 %v5344, %v6074
  %v6076 = vsub.f32 1.0, %v6075
  %v6077 = vmul.f32 %v6074, %v6076
  %v6078 = vadd.f32 %v6074, %v6077
  %vm6079 = vweird.f32 %v5344
  %vm6080 = vweird.f32 %v6074
  %vm6081 = vmor %vm6079, %vm6080
  %v6082 = vsel %vm6081, %v6074, %v6078
  %v6083 = vand.u32 2147483647, %v5344
  %vm6084 = vcmp.eq.f32.partialorder %v6083, 8.507059e+37
  %v6085 = vand.u32 %v5344, 2147483648
  %v6086 = vor.u32 1.1754944e-38, %v6085
  %v6087 = vsel %vm6084, %v6086, %v6082
  %v6088 = vmul.f32 %v5031, %v6087
  %v6089 = vrcp.pop %v5351
  %v6090 = vmul.f32 %v5351, %v6089
  %v6091 = vsub.f32 1.0, %v6090
  %v6092 = vmul.f32 %v6089, %v6091
  %v6093 = vadd.f32 %v6089, %v6092
  %vm6094 = vweird.f32 %v5351
  %vm6095 = vweird.f32 %v6089
  %vm6096 = vmor %vm6094, %vm6095
  %v6097 = vsel %vm6096, %v6089, %v6093
  %v6098 = vand.u32 2147483647, %v5351
  %vm6099 = vcmp.eq.f32.partialorder %v6098, 8.507059e+37
  %v6100 = vand.u32 %v5351, 2147483648
  %v6101 = vor.u32 1.1754944e-38, %v6100
  %v6102 = vsel %vm6099, %v6101, %v6097
  %v6103 = vmul.f32 %v5033, %v6102
  %v6104 = vrcp.pop %v5358
  %v6105 = vmul.f32 %v5358, %v6104
  %v6106 = vsub.f32 1.0, %v6105
  %v6107 = vmul.f32 %v6104, %v6106
  %v6108 = vadd.f32 %v6104, %v6107
  %vm6109 = vweird.f32 %v5358
  %vm6110 = vweird.f32 %v6104
  %vm6111 = vmor %vm6109, %vm6110
  %v6112 = vsel %vm6111, %v6104, %v6108
  %v6113 = vand.u32 2147483647, %v5358
  %vm6114 = vcmp.eq.f32.partialorder %v6113, 8.507059e+37
  %v6115 = vand.u32 %v5358, 2147483648
  %v6116 = vor.u32 1.1754944e-38, %v6115
  %v6117 = vsel %vm6114, %v6116, %v6112
  %v6118 = vmul.f32 %v5035, %v6117
  %v6119 = vrcp.pop %v5365
  %v6120 = vmul.f32 %v5365, %v6119
  %v6121 = vsub.f32 1.0, %v6120
  %v6122 = vmul.f32 %v6119, %v6121
  %v6123 = vadd.f32 %v6119, %v6122
  %vm6124 = vweird.f32 %v5365
  %vm6125 = vweird.f32 %v6119
  %vm6126 = vmor %vm6124, %vm6125
  %v6127 = vsel %vm6126, %v6119, %v6123
  %v6128 = vand.u32 2147483647, %v5365
  %vm6129 = vcmp.eq.f32.partialorder %v6128, 8.507059e+37
  %v6130 = vand.u32 %v5365, 2147483648
  %v6131 = vor.u32 1.1754944e-38, %v6130
  %v6132 = vsel %vm6129, %v6131, %v6127
  %v6133 = vmul.f32 %v5037, %v6132
  %v6134 = vrcp.pop %v5372
  %v6135 = vmul.f32 %v5372, %v6134
  %v6136 = vsub.f32 1.0, %v6135
  %v6137 = vmul.f32 %v6134, %v6136
  %v6138 = vadd.f32 %v6134, %v6137
  %vm6139 = vweird.f32 %v5372
  %vm6140 = vweird.f32 %v6134
  %vm6141 = vmor %vm6139, %vm6140
  %v6142 = vsel %vm6141, %v6134, %v6138
  %v6143 = vand.u32 2147483647, %v5372
  %vm6144 = vcmp.eq.f32.partialorder %v6143, 8.507059e+37
  %v6145 = vand.u32 %v5372, 2147483648
  %v6146 = vor.u32 1.1754944e-38, %v6145
  %v6147 = vsel %vm6144, %v6146, %v6142
  %v6148 = vmul.f32 %v5039, %v6147
  %v6149 = vrcp.pop %v5379
  %v6150 = vmul.f32 %v5379, %v6149
  %v6151 = vsub.f32 1.0, %v6150
  %v6152 = vmul.f32 %v6149, %v6151
  %v6153 = vadd.f32 %v6149, %v6152
  %vm6154 = vweird.f32 %v5379
  %vm6155 = vweird.f32 %v6149
  %vm6156 = vmor %vm6154, %vm6155
  %v6157 = vsel %vm6156, %v6149, %v6153
  %v6158 = vand.u32 2147483647, %v5379
  %vm6159 = vcmp.eq.f32.partialorder %v6158, 8.507059e+37
  %v6160 = vand.u32 %v5379, 2147483648
  %v6161 = vor.u32 1.1754944e-38, %v6160
  %v6162 = vsel %vm6159, %v6161, %v6157
  %v6163 = vmul.f32 %v5041, %v6162
  %v6164 = vrcp.pop %v5386
  %v6165 = vmul.f32 %v5386, %v6164
  %v6166 = vsub.f32 1.0, %v6165
  %v6167 = vmul.f32 %v6164, %v6166
  %v6168 = vadd.f32 %v6164, %v6167
  %vm6169 = vweird.f32 %v5386
  %vm6170 = vweird.f32 %v6164
  %vm6171 = vmor %vm6169, %vm6170
  %v6172 = vsel %vm6171, %v6164, %v6168
  %v6173 = vand.u32 2147483647, %v5386
  %vm6174 = vcmp.eq.f32.partialorder %v6173, 8.507059e+37
  %v6175 = vand.u32 %v5386, 2147483648
  %v6176 = vor.u32 1.1754944e-38, %v6175
  %v6177 = vsel %vm6174, %v6176, %v6172
  %v6178 = vmul.f32 %v5043, %v6177
  %v6179 = vrcp.pop %v5393
  %v6180 = vmul.f32 %v5393, %v6179
  %v6181 = vsub.f32 1.0, %v6180
  %v6182 = vmul.f32 %v6179, %v6181
  %v6183 = vadd.f32 %v6179, %v6182
  %vm6184 = vweird.f32 %v5393
  %vm6185 = vweird.f32 %v6179
  %vm6186 = vmor %vm6184, %vm6185
  %v6187 = vsel %vm6186, %v6179, %v6183
  %v6188 = vand.u32 2147483647, %v5393
  %vm6189 = vcmp.eq.f32.partialorder %v6188, 8.507059e+37
  %v6190 = vand.u32 %v5393, 2147483648
  %v6191 = vor.u32 1.1754944e-38, %v6190
  %v6192 = vsel %vm6189, %v6191, %v6187
  %v6193 = vmul.f32 %v5045, %v6192
  %v6194 = vrcp.pop %v5400
  %v6195 = vmul.f32 %v5400, %v6194
  %v6196 = vsub.f32 1.0, %v6195
  %v6197 = vmul.f32 %v6194, %v6196
  %v6198 = vadd.f32 %v6194, %v6197
  %vm6199 = vweird.f32 %v5400
  %vm6200 = vweird.f32 %v6194
  %vm6201 = vmor %vm6199, %vm6200
  %v6202 = vsel %vm6201, %v6194, %v6198
  %v6203 = vand.u32 2147483647, %v5400
  %vm6204 = vcmp.eq.f32.partialorder %v6203, 8.507059e+37
  %v6205 = vand.u32 %v5400, 2147483648
  %v6206 = vor.u32 1.1754944e-38, %v6205
  %v6207 = vsel %vm6204, %v6206, %v6202
  %v6208 = vmul.f32 %v5047, %v6207
  %v6209 = vrcp.pop %v5407
  %v6210 = vmul.f32 %v5407, %v6209
  %v6211 = vsub.f32 1.0, %v6210
  %v6212 = vmul.f32 %v6209, %v6211
  %v6213 = vadd.f32 %v6209, %v6212
  %vm6214 = vweird.f32 %v5407
  %vm6215 = vweird.f32 %v6209
  %vm6216 = vmor %vm6214, %vm6215
  %v6217 = vsel %vm6216, %v6209, %v6213
  %v6218 = vand.u32 2147483647, %v5407
  %vm6219 = vcmp.eq.f32.partialorder %v6218, 8.507059e+37
  %v6220 = vand.u32 %v5407, 2147483648
  %v6221 = vor.u32 1.1754944e-38, %v6220
  %v6222 = vsel %vm6219, %v6221, %v6217
  %v6223 = vmul.f32 %v5049, %v6222
  %v6224 = vrcp.pop %v5414
  %v6225 = vmul.f32 %v5414, %v6224
  %v6226 = vsub.f32 1.0, %v6225
  %v6227 = vmul.f32 %v6224, %v6226
  %v6228 = vadd.f32 %v6224, %v6227
  %vm6229 = vweird.f32 %v5414
  %vm6230 = vweird.f32 %v6224
  %vm6231 = vmor %vm6229, %vm6230
  %v6232 = vsel %vm6231, %v6224, %v6228
  %v6233 = vand.u32 2147483647, %v5414
  %vm6234 = vcmp.eq.f32.partialorder %v6233, 8.507059e+37
  %v6235 = vand.u32 %v5414, 2147483648
  %v6236 = vor.u32 1.1754944e-38, %v6235
  %v6237 = vsel %vm6234, %v6236, %v6232
  %v6238 = vmul.f32 %v5051, %v6237
  %v6239 = vrcp.pop %v5421
  %v6240 = vmul.f32 %v5421, %v6239
  %v6241 = vsub.f32 1.0, %v6240
  %v6242 = vmul.f32 %v6239, %v6241
  %v6243 = vadd.f32 %v6239, %v6242
  %vm6244 = vweird.f32 %v5421
  %vm6245 = vweird.f32 %v6239
  %vm6246 = vmor %vm6244, %vm6245
  %v6247 = vsel %vm6246, %v6239, %v6243
  %v6248 = vand.u32 2147483647, %v5421
  %vm6249 = vcmp.eq.f32.partialorder %v6248, 8.507059e+37
  %v6250 = vand.u32 %v5421, 2147483648
  %v6251 = vor.u32 1.1754944e-38, %v6250
  %v6252 = vsel %vm6249, %v6251, %v6247
  %v6253 = vmul.f32 %v5053, %v6252
  %v6254 = vrcp.pop %v5428
  %v6255 = vmul.f32 %v5428, %v6254
  %v6256 = vsub.f32 1.0, %v6255
  %v6257 = vmul.f32 %v6254, %v6256
  %v6258 = vadd.f32 %v6254, %v6257
  %vm6259 = vweird.f32 %v5428
  %vm6260 = vweird.f32 %v6254
  %vm6261 = vmor %vm6259, %vm6260
  %v6262 = vsel %vm6261, %v6254, %v6258
  %v6263 = vand.u32 2147483647, %v5428
  %vm6264 = vcmp.eq.f32.partialorder %v6263, 8.507059e+37
  %v6265 = vand.u32 %v5428, 2147483648
  %v6266 = vor.u32 1.1754944e-38, %v6265
  %v6267 = vsel %vm6264, %v6266, %v6262
  %v6268 = vmul.f32 %v5055, %v6267
  %v6269 = vrcp.pop %v5435
  %v6270 = vmul.f32 %v5435, %v6269
  %v6271 = vsub.f32 1.0, %v6270
  %v6272 = vmul.f32 %v6269, %v6271
  %v6273 = vadd.f32 %v6269, %v6272
  %vm6274 = vweird.f32 %v5435
  %vm6275 = vweird.f32 %v6269
  %vm6276 = vmor %vm6274, %vm6275
  %v6277 = vsel %vm6276, %v6269, %v6273
  %v6278 = vand.u32 2147483647, %v5435
  %vm6279 = vcmp.eq.f32.partialorder %v6278, 8.507059e+37
  %v6280 = vand.u32 %v5435, 2147483648
  %v6281 = vor.u32 1.1754944e-38, %v6280
  %v6282 = vsel %vm6279, %v6281, %v6277
  %v6283 = vmul.f32 %v5057, %v6282
  %v6284 = vrcp.pop %v5442
  %v6285 = vmul.f32 %v5442, %v6284
  %v6286 = vsub.f32 1.0, %v6285
  %v6287 = vmul.f32 %v6284, %v6286
  %v6288 = vadd.f32 %v6284, %v6287
  %vm6289 = vweird.f32 %v5442
  %vm6290 = vweird.f32 %v6284
  %vm6291 = vmor %vm6289, %vm6290
  %v6292 = vsel %vm6291, %v6284, %v6288
  %v6293 = vand.u32 2147483647, %v5442
  %vm6294 = vcmp.eq.f32.partialorder %v6293, 8.507059e+37
  %v6295 = vand.u32 %v5442, 2147483648
  %v6296 = vor.u32 1.1754944e-38, %v6295
  %v6297 = vsel %vm6294, %v6296, %v6292
  %v6298 = vmul.f32 %v5059, %v6297
  %v6299 = vrcp.pop %v5449
  %v6300 = vmul.f32 %v5449, %v6299
  %v6301 = vsub.f32 1.0, %v6300
  %v6302 = vmul.f32 %v6299, %v6301
  %v6303 = vadd.f32 %v6299, %v6302
  %vm6304 = vweird.f32 %v5449
  %vm6305 = vweird.f32 %v6299
  %vm6306 = vmor %vm6304, %vm6305
  %v6307 = vsel %vm6306, %v6299, %v6303
  %v6308 = vand.u32 2147483647, %v5449
  %vm6309 = vcmp.eq.f32.partialorder %v6308, 8.507059e+37
  %v6310 = vand.u32 %v5449, 2147483648
  %v6311 = vor.u32 1.1754944e-38, %v6310
  %v6312 = vsel %vm6309, %v6311, %v6307
  %v6313 = vmul.f32 %v5061, %v6312
  %v6314 = vrcp.pop %v5456
  %v6315 = vmul.f32 %v5456, %v6314
  %v6316 = vsub.f32 1.0, %v6315
  %v6317 = vmul.f32 %v6314, %v6316
  %v6318 = vadd.f32 %v6314, %v6317
  %vm6319 = vweird.f32 %v5456
  %vm6320 = vweird.f32 %v6314
  %vm6321 = vmor %vm6319, %vm6320
  %v6322 = vsel %vm6321, %v6314, %v6318
  %v6323 = vand.u32 2147483647, %v5456
  %vm6324 = vcmp.eq.f32.partialorder %v6323, 8.507059e+37
  %v6325 = vand.u32 %v5456, 2147483648
  %v6326 = vor.u32 1.1754944e-38, %v6325
  %v6327 = vsel %vm6324, %v6326, %v6322
  %v6328 = vmul.f32 %v5063, %v6327
  %v6329 = vrcp.pop %v5463
  %v6330 = vmul.f32 %v5463, %v6329
  %v6331 = vsub.f32 1.0, %v6330
  %v6332 = vmul.f32 %v6329, %v6331
  %v6333 = vadd.f32 %v6329, %v6332
  %vm6334 = vweird.f32 %v5463
  %vm6335 = vweird.f32 %v6329
  %vm6336 = vmor %vm6334, %vm6335
  %v6337 = vsel %vm6336, %v6329, %v6333
  %v6338 = vand.u32 2147483647, %v5463
  %vm6339 = vcmp.eq.f32.partialorder %v6338, 8.507059e+37
  %v6340 = vand.u32 %v5463, 2147483648
  %v6341 = vor.u32 1.1754944e-38, %v6340
  %v6342 = vsel %vm6339, %v6341, %v6337
  %v6343 = vmul.f32 %v5065, %v6342
  %v6344 = vrcp.pop %v5470
  %v6345 = vmul.f32 %v5470, %v6344
  %v6346 = vsub.f32 1.0, %v6345
  %v6347 = vmul.f32 %v6344, %v6346
  %v6348 = vadd.f32 %v6344, %v6347
  %vm6349 = vweird.f32 %v5470
  %vm6350 = vweird.f32 %v6344
  %vm6351 = vmor %vm6349, %vm6350
  %v6352 = vsel %vm6351, %v6344, %v6348
  %v6353 = vand.u32 2147483647, %v5470
  %vm6354 = vcmp.eq.f32.partialorder %v6353, 8.507059e+37
  %v6355 = vand.u32 %v5470, 2147483648
  %v6356 = vor.u32 1.1754944e-38, %v6355
  %v6357 = vsel %vm6354, %v6356, %v6352
  %v6358 = vmul.f32 %v5067, %v6357
  %v6359 = vrcp.pop %v5477
  %v6360 = vmul.f32 %v5477, %v6359
  %v6361 = vsub.f32 1.0, %v6360
  %v6362 = vmul.f32 %v6359, %v6361
  %v6363 = vadd.f32 %v6359, %v6362
  %vm6364 = vweird.f32 %v5477
  %vm6365 = vweird.f32 %v6359
  %vm6366 = vmor %vm6364, %vm6365
  %v6367 = vsel %vm6366, %v6359, %v6363
  %v6368 = vand.u32 2147483647, %v5477
  %vm6369 = vcmp.eq.f32.partialorder %v6368, 8.507059e+37
  %v6370 = vand.u32 %v5477, 2147483648
  %v6371 = vor.u32 1.1754944e-38, %v6370
  %v6372 = vsel %vm6369, %v6371, %v6367
  %v6373 = vmul.f32 %v5069, %v6372
  %v6374 = vrcp.pop %v5484
  %v6375 = vmul.f32 %v5484, %v6374
  %v6376 = vsub.f32 1.0, %v6375
  %v6377 = vmul.f32 %v6374, %v6376
  %v6378 = vadd.f32 %v6374, %v6377
  %vm6379 = vweird.f32 %v5484
  %vm6380 = vweird.f32 %v6374
  %vm6381 = vmor %vm6379, %vm6380
  %v6382 = vsel %vm6381, %v6374, %v6378
  %v6383 = vand.u32 2147483647, %v5484
  %vm6384 = vcmp.eq.f32.partialorder %v6383, 8.507059e+37
  %v6385 = vand.u32 %v5484, 2147483648
  %v6386 = vor.u32 1.1754944e-38, %v6385
  %v6387 = vsel %vm6384, %v6386, %v6382
  %v6388 = vmul.f32 %v5071, %v6387
  %v6389 = vrcp.pop %v5491
  %v6390 = vmul.f32 %v5491, %v6389
  %v6391 = vsub.f32 1.0, %v6390
  %v6392 = vmul.f32 %v6389, %v6391
  %v6393 = vadd.f32 %v6389, %v6392
  %vm6394 = vweird.f32 %v5491
  %vm6395 = vweird.f32 %v6389
  %vm6396 = vmor %vm6394, %vm6395
  %v6397 = vsel %vm6396, %v6389, %v6393
  %v6398 = vand.u32 2147483647, %v5491
  %vm6399 = vcmp.eq.f32.partialorder %v6398, 8.507059e+37
  %v6400 = vand.u32 %v5491, 2147483648
  %v6401 = vor.u32 1.1754944e-38, %v6400
  %v6402 = vsel %vm6399, %v6401, %v6397
  %v6403 = vmul.f32 %v5073, %v6402
  %v6404 = vrcp.pop %v5498
  %v6405 = vmul.f32 %v5498, %v6404
  %v6406 = vsub.f32 1.0, %v6405
  %v6407 = vmul.f32 %v6404, %v6406
  %v6408 = vadd.f32 %v6404, %v6407
  %vm6409 = vweird.f32 %v5498
  %vm6410 = vweird.f32 %v6404
  %vm6411 = vmor %vm6409, %vm6410
  %v6412 = vsel %vm6411, %v6404, %v6408
  %v6413 = vand.u32 2147483647, %v5498
  %vm6414 = vcmp.eq.f32.partialorder %v6413, 8.507059e+37
  %v6415 = vand.u32 %v5498, 2147483648
  %v6416 = vor.u32 1.1754944e-38, %v6415
  %v6417 = vsel %vm6414, %v6416, %v6412
  %v6418 = vmul.f32 %v5075, %v6417
  %v6419 = vrcp.pop %v5505
  %v6420 = vmul.f32 %v5505, %v6419
  %v6421 = vsub.f32 1.0, %v6420
  %v6422 = vmul.f32 %v6419, %v6421
  %v6423 = vadd.f32 %v6419, %v6422
  %vm6424 = vweird.f32 %v5505
  %vm6425 = vweird.f32 %v6419
  %vm6426 = vmor %vm6424, %vm6425
  %v6427 = vsel %vm6426, %v6419, %v6423
  %v6428 = vand.u32 2147483647, %v5505
  %vm6429 = vcmp.eq.f32.partialorder %v6428, 8.507059e+37
  %v6430 = vand.u32 %v5505, 2147483648
  %v6431 = vor.u32 1.1754944e-38, %v6430
  %v6432 = vsel %vm6429, %v6431, %v6427
  %v6433 = vmul.f32 %v5077, %v6432
  %v6434 = vrcp.pop %v5512
  %v6435 = vmul.f32 %v5512, %v6434
  %v6436 = vsub.f32 1.0, %v6435
  %v6437 = vmul.f32 %v6434, %v6436
  %v6438 = vadd.f32 %v6434, %v6437
  %vm6439 = vweird.f32 %v5512
  %vm6440 = vweird.f32 %v6434
  %vm6441 = vmor %vm6439, %vm6440
  %v6442 = vsel %vm6441, %v6434, %v6438
  %v6443 = vand.u32 2147483647, %v5512
  %vm6444 = vcmp.eq.f32.partialorder %v6443, 8.507059e+37
  %v6445 = vand.u32 %v5512, 2147483648
  %v6446 = vor.u32 1.1754944e-38, %v6445
  %v6447 = vsel %vm6444, %v6446, %v6442
  %v6448 = vmul.f32 %v5079, %v6447
  %v6449 = vrcp.pop %v5519
  %v6450 = vmul.f32 %v5519, %v6449
  %v6451 = vsub.f32 1.0, %v6450
  %v6452 = vmul.f32 %v6449, %v6451
  %v6453 = vadd.f32 %v6449, %v6452
  %vm6454 = vweird.f32 %v5519
  %vm6455 = vweird.f32 %v6449
  %vm6456 = vmor %vm6454, %vm6455
  %v6457 = vsel %vm6456, %v6449, %v6453
  %v6458 = vand.u32 2147483647, %v5519
  %vm6459 = vcmp.eq.f32.partialorder %v6458, 8.507059e+37
  %v6460 = vand.u32 %v5519, 2147483648
  %v6461 = vor.u32 1.1754944e-38, %v6460
  %v6462 = vsel %vm6459, %v6461, %v6457
  %v6463 = vmul.f32 %v5081, %v6462
  %v6464 = vrcp.pop %v5526
  %v6465 = vmul.f32 %v5526, %v6464
  %v6466 = vsub.f32 1.0, %v6465
  %v6467 = vmul.f32 %v6464, %v6466
  %v6468 = vadd.f32 %v6464, %v6467
  %vm6469 = vweird.f32 %v5526
  %vm6470 = vweird.f32 %v6464
  %vm6471 = vmor %vm6469, %vm6470
  %v6472 = vsel %vm6471, %v6464, %v6468
  %v6473 = vand.u32 2147483647, %v5526
  %vm6474 = vcmp.eq.f32.partialorder %v6473, 8.507059e+37
  %v6475 = vand.u32 %v5526, 2147483648
  %v6476 = vor.u32 1.1754944e-38, %v6475
  %v6477 = vsel %vm6474, %v6476, %v6472
  %v6478 = vmul.f32 %v5083, %v6477
  %v6479 = vrcp.pop %v5533
  %v6480 = vmul.f32 %v5533, %v6479
  %v6481 = vsub.f32 1.0, %v6480
  %v6482 = vmul.f32 %v6479, %v6481
  %v6483 = vadd.f32 %v6479, %v6482
  %vm6484 = vweird.f32 %v5533
  %vm6485 = vweird.f32 %v6479
  %vm6486 = vmor %vm6484, %vm6485
  %v6487 = vsel %vm6486, %v6479, %v6483
  %v6488 = vand.u32 2147483647, %v5533
  %vm6489 = vcmp.eq.f32.partialorder %v6488, 8.507059e+37
  %v6490 = vand.u32 %v5533, 2147483648
  %v6491 = vor.u32 1.1754944e-38, %v6490
  %v6492 = vsel %vm6489, %v6491, %v6487
  %v6493 = vmul.f32 %v5085, %v6492
  %v6494 = vld [vmem:[%s4] sm:$0xff]
  %v6495 = vld [vmem:[%s4 + $0x8] sm:$0xff]
  %v6496 = vld [vmem:[%s4 + $0x10] sm:$0xff]
  %v6497 = vld [vmem:[%s4 + $0x18] sm:$0xff]
  %v6498 = vld [vmem:[%s4 + $0x20] sm:$0xff]
  %v6499 = vld [vmem:[%s4 + $0x28] sm:$0xff]
  %v6500 = vld [vmem:[%s4 + $0x30] sm:$0xff]
  %v6501 = vld [vmem:[%s4 + $0x38] sm:$0xff]
  %v6502 = vperm.slane %v6494, 0
  %v6503 = vlaneseq
  %v6504 = vshrl.u32 %v6503, 7
  %6506 = vset.pattern.permute.xlu0 %v6504
  %6507 = vperm.xlu0 %6506, %v6502
  %v6508 = vpop.permute.xlu0 %6507
  %v6509 = vperm.slane %v6494, 1
  %v6510 = vlaneseq
  %v6511 = vshrl.u32 %v6510, 7
  %6513 = vset.pattern.permute.xlu0 %v6511
  %6514 = vperm.xlu0 %6513, %v6509
  %v6515 = vpop.permute.xlu0 %6514
  %v6516 = vperm.slane %v6494, 2
  %v6517 = vlaneseq
  %v6518 = vshrl.u32 %v6517, 7
  %6520 = vset.pattern.permute.xlu0 %v6518
  %6521 = vperm.xlu0 %6520, %v6516
  %v6522 = vpop.permute.xlu0 %6521
  %v6523 = vperm.slane %v6494, 3
  %v6524 = vlaneseq
  %v6525 = vshrl.u32 %v6524, 7
  %6527 = vset.pattern.permute.xlu0 %v6525
  %6528 = vperm.xlu0 %6527, %v6523
  %v6529 = vpop.permute.xlu0 %6528
  %v6530 = vperm.slane %v6494, 4
  %v6531 = vlaneseq
  %v6532 = vshrl.u32 %v6531, 7
  %6534 = vset.pattern.permute.xlu0 %v6532
  %6535 = vperm.xlu0 %6534, %v6530
  %v6536 = vpop.permute.xlu0 %6535
  %v6537 = vperm.slane %v6494, 5
  %v6538 = vlaneseq
  %v6539 = vshrl.u32 %v6538, 7
  %6541 = vset.pattern.permute.xlu0 %v6539
  %6542 = vperm.xlu0 %6541, %v6537
  %v6543 = vpop.permute.xlu0 %6542
  %v6544 = vperm.slane %v6494, 6
  %v6545 = vlaneseq
  %v6546 = vshrl.u32 %v6545, 7
  %6548 = vset.pattern.permute.xlu0 %v6546
  %6549 = vperm.xlu0 %6548, %v6544
  %v6550 = vpop.permute.xlu0 %6549
  %v6551 = vperm.slane %v6494, 7
  %v6552 = vlaneseq
  %v6553 = vshrl.u32 %v6552, 7
  %6555 = vset.pattern.permute.xlu0 %v6553
  %6556 = vperm.xlu0 %6555, %v6551
  %v6557 = vpop.permute.xlu0 %6556
  %v6558 = vperm.slane %v6495, 0
  %v6559 = vlaneseq
  %v6560 = vshrl.u32 %v6559, 7
  %6562 = vset.pattern.permute.xlu0 %v6560
  %6563 = vperm.xlu0 %6562, %v6558
  %v6564 = vpop.permute.xlu0 %6563
  %v6565 = vperm.slane %v6495, 1
  %v6566 = vlaneseq
  %v6567 = vshrl.u32 %v6566, 7
  %6569 = vset.pattern.permute.xlu0 %v6567
  %6570 = vperm.xlu0 %6569, %v6565
  %v6571 = vpop.permute.xlu0 %6570
  %v6572 = vperm.slane %v6495, 2
  %v6573 = vlaneseq
  %v6574 = vshrl.u32 %v6573, 7
  %6576 = vset.pattern.permute.xlu0 %v6574
  %6577 = vperm.xlu0 %6576, %v6572
  %v6578 = vpop.permute.xlu0 %6577
  %v6579 = vperm.slane %v6495, 3
  %v6580 = vlaneseq
  %v6581 = vshrl.u32 %v6580, 7
  %6583 = vset.pattern.permute.xlu0 %v6581
  %6584 = vperm.xlu0 %6583, %v6579
  %v6585 = vpop.permute.xlu0 %6584
  %v6586 = vperm.slane %v6495, 4
  %v6587 = vlaneseq
  %v6588 = vshrl.u32 %v6587, 7
  %6590 = vset.pattern.permute.xlu0 %v6588
  %6591 = vperm.xlu0 %6590, %v6586
  %v6592 = vpop.permute.xlu0 %6591
  %v6593 = vperm.slane %v6495, 5
  %v6594 = vlaneseq
  %v6595 = vshrl.u32 %v6594, 7
  %6597 = vset.pattern.permute.xlu0 %v6595
  %6598 = vperm.xlu0 %6597, %v6593
  %v6599 = vpop.permute.xlu0 %6598
  %v6600 = vperm.slane %v6495, 6
  %v6601 = vlaneseq
  %v6602 = vshrl.u32 %v6601, 7
  %6604 = vset.pattern.permute.xlu0 %v6602
  %6605 = vperm.xlu0 %6604, %v6600
  %v6606 = vpop.permute.xlu0 %6605
  %v6607 = vperm.slane %v6495, 7
  %v6608 = vlaneseq
  %v6609 = vshrl.u32 %v6608, 7
  %6611 = vset.pattern.permute.xlu0 %v6609
  %6612 = vperm.xlu0 %6611, %v6607
  %v6613 = vpop.permute.xlu0 %6612
  %v6614 = vperm.slane %v6496, 0
  %v6615 = vlaneseq
  %v6616 = vshrl.u32 %v6615, 7
  %6618 = vset.pattern.permute.xlu0 %v6616
  %6619 = vperm.xlu0 %6618, %v6614
  %v6620 = vpop.permute.xlu0 %6619
  %v6621 = vperm.slane %v6496, 1
  %v6622 = vlaneseq
  %v6623 = vshrl.u32 %v6622, 7
  %6625 = vset.pattern.permute.xlu0 %v6623
  %6626 = vperm.xlu0 %6625, %v6621
  %v6627 = vpop.permute.xlu0 %6626
  %v6628 = vperm.slane %v6496, 2
  %v6629 = vlaneseq
  %v6630 = vshrl.u32 %v6629, 7
  %6632 = vset.pattern.permute.xlu0 %v6630
  %6633 = vperm.xlu0 %6632, %v6628
  %v6634 = vpop.permute.xlu0 %6633
  %v6635 = vperm.slane %v6496, 3
  %v6636 = vlaneseq
  %v6637 = vshrl.u32 %v6636, 7
  %6639 = vset.pattern.permute.xlu0 %v6637
  %6640 = vperm.xlu0 %6639, %v6635
  %v6641 = vpop.permute.xlu0 %6640
  %v6642 = vperm.slane %v6496, 4
  %v6643 = vlaneseq
  %v6644 = vshrl.u32 %v6643, 7
  %6646 = vset.pattern.permute.xlu0 %v6644
  %6647 = vperm.xlu0 %6646, %v6642
  %v6648 = vpop.permute.xlu0 %6647
  %v6649 = vperm.slane %v6496, 5
  %v6650 = vlaneseq
  %v6651 = vshrl.u32 %v6650, 7
  %6653 = vset.pattern.permute.xlu0 %v6651
  %6654 = vperm.xlu0 %6653, %v6649
  %v6655 = vpop.permute.xlu0 %6654
  %v6656 = vperm.slane %v6496, 6
  %v6657 = vlaneseq
  %v6658 = vshrl.u32 %v6657, 7
  %6660 = vset.pattern.permute.xlu0 %v6658
  %6661 = vperm.xlu0 %6660, %v6656
  %v6662 = vpop.permute.xlu0 %6661
  %v6663 = vperm.slane %v6496, 7
  %v6664 = vlaneseq
  %v6665 = vshrl.u32 %v6664, 7
  %6667 = vset.pattern.permute.xlu0 %v6665
  %6668 = vperm.xlu0 %6667, %v6663
  %v6669 = vpop.permute.xlu0 %6668
  %v6670 = vperm.slane %v6497, 0
  %v6671 = vlaneseq
  %v6672 = vshrl.u32 %v6671, 7
  %6674 = vset.pattern.permute.xlu0 %v6672
  %6675 = vperm.xlu0 %6674, %v6670
  %v6676 = vpop.permute.xlu0 %6675
  %v6677 = vperm.slane %v6497, 1
  %v6678 = vlaneseq
  %v6679 = vshrl.u32 %v6678, 7
  %6681 = vset.pattern.permute.xlu0 %v6679
  %6682 = vperm.xlu0 %6681, %v6677
  %v6683 = vpop.permute.xlu0 %6682
  %v6684 = vperm.slane %v6497, 2
  %v6685 = vlaneseq
  %v6686 = vshrl.u32 %v6685, 7
  %6688 = vset.pattern.permute.xlu0 %v6686
  %6689 = vperm.xlu0 %6688, %v6684
  %v6690 = vpop.permute.xlu0 %6689
  %v6691 = vperm.slane %v6497, 3
  %v6692 = vlaneseq
  %v6693 = vshrl.u32 %v6692, 7
  %6695 = vset.pattern.permute.xlu0 %v6693
  %6696 = vperm.xlu0 %6695, %v6691
  %v6697 = vpop.permute.xlu0 %6696
  %v6698 = vperm.slane %v6497, 4
  %v6699 = vlaneseq
  %v6700 = vshrl.u32 %v6699, 7
  %6702 = vset.pattern.permute.xlu0 %v6700
  %6703 = vperm.xlu0 %6702, %v6698
  %v6704 = vpop.permute.xlu0 %6703
  %v6705 = vperm.slane %v6497, 5
  %v6706 = vlaneseq
  %v6707 = vshrl.u32 %v6706, 7
  %6709 = vset.pattern.permute.xlu0 %v6707
  %6710 = vperm.xlu0 %6709, %v6705
  %v6711 = vpop.permute.xlu0 %6710
  %v6712 = vperm.slane %v6497, 6
  %v6713 = vlaneseq
  %v6714 = vshrl.u32 %v6713, 7
  %6716 = vset.pattern.permute.xlu0 %v6714
  %6717 = vperm.xlu0 %6716, %v6712
  %v6718 = vpop.permute.xlu0 %6717
  %v6719 = vperm.slane %v6497, 7
  %v6720 = vlaneseq
  %v6721 = vshrl.u32 %v6720, 7
  %6723 = vset.pattern.permute.xlu0 %v6721
  %6724 = vperm.xlu0 %6723, %v6719
  %v6725 = vpop.permute.xlu0 %6724
  %v6726 = vperm.slane %v6498, 0
  %v6727 = vlaneseq
  %v6728 = vshrl.u32 %v6727, 7
  %6730 = vset.pattern.permute.xlu0 %v6728
  %6731 = vperm.xlu0 %6730, %v6726
  %v6732 = vpop.permute.xlu0 %6731
  %v6733 = vperm.slane %v6498, 1
  %v6734 = vlaneseq
  %v6735 = vshrl.u32 %v6734, 7
  %6737 = vset.pattern.permute.xlu0 %v6735
  %6738 = vperm.xlu0 %6737, %v6733
  %v6739 = vpop.permute.xlu0 %6738
  %v6740 = vperm.slane %v6498, 2
  %v6741 = vlaneseq
  %v6742 = vshrl.u32 %v6741, 7
  %6744 = vset.pattern.permute.xlu0 %v6742
  %6745 = vperm.xlu0 %6744, %v6740
  %v6746 = vpop.permute.xlu0 %6745
  %v6747 = vperm.slane %v6498, 3
  %v6748 = vlaneseq
  %v6749 = vshrl.u32 %v6748, 7
  %6751 = vset.pattern.permute.xlu0 %v6749
  %6752 = vperm.xlu0 %6751, %v6747
  %v6753 = vpop.permute.xlu0 %6752
  %v6754 = vperm.slane %v6498, 4
  %v6755 = vlaneseq
  %v6756 = vshrl.u32 %v6755, 7
  %6758 = vset.pattern.permute.xlu0 %v6756
  %6759 = vperm.xlu0 %6758, %v6754
  %v6760 = vpop.permute.xlu0 %6759
  %v6761 = vperm.slane %v6498, 5
  %v6762 = vlaneseq
  %v6763 = vshrl.u32 %v6762, 7
  %6765 = vset.pattern.permute.xlu0 %v6763
  %6766 = vperm.xlu0 %6765, %v6761
  %v6767 = vpop.permute.xlu0 %6766
  %v6768 = vperm.slane %v6498, 6
  %v6769 = vlaneseq
  %v6770 = vshrl.u32 %v6769, 7
  %6772 = vset.pattern.permute.xlu0 %v6770
  %6773 = vperm.xlu0 %6772, %v6768
  %v6774 = vpop.permute.xlu0 %6773
  %v6775 = vperm.slane %v6498, 7
  %v6776 = vlaneseq
  %v6777 = vshrl.u32 %v6776, 7
  %6779 = vset.pattern.permute.xlu0 %v6777
  %6780 = vperm.xlu0 %6779, %v6775
  %v6781 = vpop.permute.xlu0 %6780
  %v6782 = vperm.slane %v6499, 0
  %v6783 = vlaneseq
  %v6784 = vshrl.u32 %v6783, 7
  %6786 = vset.pattern.permute.xlu0 %v6784
  %6787 = vperm.xlu0 %6786, %v6782
  %v6788 = vpop.permute.xlu0 %6787
  %v6789 = vperm.slane %v6499, 1
  %v6790 = vlaneseq
  %v6791 = vshrl.u32 %v6790, 7
  %6793 = vset.pattern.permute.xlu0 %v6791
  %6794 = vperm.xlu0 %6793, %v6789
  %v6795 = vpop.permute.xlu0 %6794
  %v6796 = vperm.slane %v6499, 2
  %v6797 = vlaneseq
  %v6798 = vshrl.u32 %v6797, 7
  %6800 = vset.pattern.permute.xlu0 %v6798
  %6801 = vperm.xlu0 %6800, %v6796
  %v6802 = vpop.permute.xlu0 %6801
  %v6803 = vperm.slane %v6499, 3
  %v6804 = vlaneseq
  %v6805 = vshrl.u32 %v6804, 7
  %6807 = vset.pattern.permute.xlu0 %v6805
  %6808 = vperm.xlu0 %6807, %v6803
  %v6809 = vpop.permute.xlu0 %6808
  %v6810 = vperm.slane %v6499, 4
  %v6811 = vlaneseq
  %v6812 = vshrl.u32 %v6811, 7
  %6814 = vset.pattern.permute.xlu0 %v6812
  %6815 = vperm.xlu0 %6814, %v6810
  %v6816 = vpop.permute.xlu0 %6815
  %v6817 = vperm.slane %v6499, 5
  %v6818 = vlaneseq
  %v6819 = vshrl.u32 %v6818, 7
  %6821 = vset.pattern.permute.xlu0 %v6819
  %6822 = vperm.xlu0 %6821, %v6817
  %v6823 = vpop.permute.xlu0 %6822
  %v6824 = vperm.slane %v6499, 6
  %v6825 = vlaneseq
  %v6826 = vshrl.u32 %v6825, 7
  %6828 = vset.pattern.permute.xlu0 %v6826
  %6829 = vperm.xlu0 %6828, %v6824
  %v6830 = vpop.permute.xlu0 %6829
  %v6831 = vperm.slane %v6499, 7
  %v6832 = vlaneseq
  %v6833 = vshrl.u32 %v6832, 7
  %6835 = vset.pattern.permute.xlu0 %v6833
  %6836 = vperm.xlu0 %6835, %v6831
  %v6837 = vpop.permute.xlu0 %6836
  %v6838 = vperm.slane %v6500, 0
  %v6839 = vlaneseq
  %v6840 = vshrl.u32 %v6839, 7
  %6842 = vset.pattern.permute.xlu0 %v6840
  %6843 = vperm.xlu0 %6842, %v6838
  %v6844 = vpop.permute.xlu0 %6843
  %v6845 = vperm.slane %v6500, 1
  %v6846 = vlaneseq
  %v6847 = vshrl.u32 %v6846, 7
  %6849 = vset.pattern.permute.xlu0 %v6847
  %6850 = vperm.xlu0 %6849, %v6845
  %v6851 = vpop.permute.xlu0 %6850
  %v6852 = vperm.slane %v6500, 2
  %v6853 = vlaneseq
  %v6854 = vshrl.u32 %v6853, 7
  %6856 = vset.pattern.permute.xlu0 %v6854
  %6857 = vperm.xlu0 %6856, %v6852
  %v6858 = vpop.permute.xlu0 %6857
  %v6859 = vperm.slane %v6500, 3
  %v6860 = vlaneseq
  %v6861 = vshrl.u32 %v6860, 7
  %6863 = vset.pattern.permute.xlu0 %v6861
  %6864 = vperm.xlu0 %6863, %v6859
  %v6865 = vpop.permute.xlu0 %6864
  %v6866 = vperm.slane %v6500, 4
  %v6867 = vlaneseq
  %v6868 = vshrl.u32 %v6867, 7
  %6870 = vset.pattern.permute.xlu0 %v6868
  %6871 = vperm.xlu0 %6870, %v6866
  %v6872 = vpop.permute.xlu0 %6871
  %v6873 = vperm.slane %v6500, 5
  %v6874 = vlaneseq
  %v6875 = vshrl.u32 %v6874, 7
  %6877 = vset.pattern.permute.xlu0 %v6875
  %6878 = vperm.xlu0 %6877, %v6873
  %v6879 = vpop.permute.xlu0 %6878
  %v6880 = vperm.slane %v6500, 6
  %v6881 = vlaneseq
  %v6882 = vshrl.u32 %v6881, 7
  %6884 = vset.pattern.permute.xlu0 %v6882
  %6885 = vperm.xlu0 %6884, %v6880
  %v6886 = vpop.permute.xlu0 %6885
  %v6887 = vperm.slane %v6500, 7
  %v6888 = vlaneseq
  %v6889 = vshrl.u32 %v6888, 7
  %6891 = vset.pattern.permute.xlu0 %v6889
  %6892 = vperm.xlu0 %6891, %v6887
  %v6893 = vpop.permute.xlu0 %6892
  %v6894 = vperm.slane %v6501, 0
  %v6895 = vlaneseq
  %v6896 = vshrl.u32 %v6895, 7
  %6898 = vset.pattern.permute.xlu0 %v6896
  %6899 = vperm.xlu0 %6898, %v6894
  %v6900 = vpop.permute.xlu0 %6899
  %v6901 = vperm.slane %v6501, 1
  %v6902 = vlaneseq
  %v6903 = vshrl.u32 %v6902, 7
  %6905 = vset.pattern.permute.xlu0 %v6903
  %6906 = vperm.xlu0 %6905, %v6901
  %v6907 = vpop.permute.xlu0 %6906
  %v6908 = vperm.slane %v6501, 2
  %v6909 = vlaneseq
  %v6910 = vshrl.u32 %v6909, 7
  %6912 = vset.pattern.permute.xlu0 %v6910
  %6913 = vperm.xlu0 %6912, %v6908
  %v6914 = vpop.permute.xlu0 %6913
  %v6915 = vperm.slane %v6501, 3
  %v6916 = vlaneseq
  %v6917 = vshrl.u32 %v6916, 7
  %6919 = vset.pattern.permute.xlu0 %v6917
  %6920 = vperm.xlu0 %6919, %v6915
  %v6921 = vpop.permute.xlu0 %6920
  %v6922 = vperm.slane %v6501, 4
  %v6923 = vlaneseq
  %v6924 = vshrl.u32 %v6923, 7
  %6926 = vset.pattern.permute.xlu0 %v6924
  %6927 = vperm.xlu0 %6926, %v6922
  %v6928 = vpop.permute.xlu0 %6927
  %v6929 = vperm.slane %v6501, 5
  %v6930 = vlaneseq
  %v6931 = vshrl.u32 %v6930, 7
  %6933 = vset.pattern.permute.xlu0 %v6931
  %6934 = vperm.xlu0 %6933, %v6929
  %v6935 = vpop.permute.xlu0 %6934
  %v6936 = vperm.slane %v6501, 6
  %v6937 = vlaneseq
  %v6938 = vshrl.u32 %v6937, 7
  %6940 = vset.pattern.permute.xlu0 %v6938
  %6941 = vperm.xlu0 %6940, %v6936
  %v6942 = vpop.permute.xlu0 %6941
  %v6943 = vperm.slane %v6501, 7
  %v6944 = vlaneseq
  %v6945 = vshrl.u32 %v6944, 7
  %6947 = vset.pattern.permute.xlu0 %v6945
  %6948 = vperm.xlu0 %6947, %v6943
  %v6949 = vpop.permute.xlu0 %6948
  %v6950 = vmul.f32 %v5548, %v6508
  %v6951 = vmul.f32 %v5563, %v6515
  %v6952 = vmul.f32 %v5578, %v6522
  %v6953 = vmul.f32 %v5593, %v6529
  %v6954 = vmul.f32 %v5608, %v6536
  %v6955 = vmul.f32 %v5623, %v6543
  %v6956 = vmul.f32 %v5638, %v6550
  %v6957 = vmul.f32 %v5653, %v6557
  %v6958 = vmul.f32 %v5668, %v6564
  %v6959 = vmul.f32 %v5683, %v6571
  %v6960 = vmul.f32 %v5698, %v6578
  %v6961 = vmul.f32 %v5713, %v6585
  %v6962 = vmul.f32 %v5728, %v6592
  %v6963 = vmul.f32 %v5743, %v6599
  %v6964 = vmul.f32 %v5758, %v6606
  %v6965 = vmul.f32 %v5773, %v6613
  %v6966 = vmul.f32 %v5788, %v6620
  %v6967 = vmul.f32 %v5803, %v6627
  %v6968 = vmul.f32 %v5818, %v6634
  %v6969 = vmul.f32 %v5833, %v6641
  %v6970 = vmul.f32 %v5848, %v6648
  %v6971 = vmul.f32 %v5863, %v6655
  %v6972 = vmul.f32 %v5878, %v6662
  %v6973 = vmul.f32 %v5893, %v6669
  %v6974 = vmul.f32 %v5908, %v6676
  %v6975 = vmul.f32 %v5923, %v6683
  %v6976 = vmul.f32 %v5938, %v6690
  %v6977 = vmul.f32 %v5953, %v6697
  %v6978 = vmul.f32 %v5968, %v6704
  %v6979 = vmul.f32 %v5983, %v6711
  %v6980 = vmul.f32 %v5998, %v6718
  %v6981 = vmul.f32 %v6013, %v6725
  %v6982 = vmul.f32 %v6028, %v6732
  %v6983 = vmul.f32 %v6043, %v6739
  %v6984 = vmul.f32 %v6058, %v6746
  %v6985 = vmul.f32 %v6073, %v6753
  %v6986 = vmul.f32 %v6088, %v6760
  %v6987 = vmul.f32 %v6103, %v6767
  %v6988 = vmul.f32 %v6118, %v6774
  %v6989 = vmul.f32 %v6133, %v6781
  %v6990 = vmul.f32 %v6148, %v6788
  %v6991 = vmul.f32 %v6163, %v6795
  %v6992 = vmul.f32 %v6178, %v6802
  %v6993 = vmul.f32 %v6193, %v6809
  %v6994 = vmul.f32 %v6208, %v6816
  %v6995 = vmul.f32 %v6223, %v6823
  %v6996 = vmul.f32 %v6238, %v6830
  %v6997 = vmul.f32 %v6253, %v6837
  %v6998 = vmul.f32 %v6268, %v6844
  %v6999 = vmul.f32 %v6283, %v6851
  %v7000 = vmul.f32 %v6298, %v6858
  %v7001 = vmul.f32 %v6313, %v6865
  %v7002 = vmul.f32 %v6328, %v6872
  %v7003 = vmul.f32 %v6343, %v6879
  %v7004 = vmul.f32 %v6358, %v6886
  %v7005 = vmul.f32 %v6373, %v6893
  %v7006 = vmul.f32 %v6388, %v6900
  %v7007 = vmul.f32 %v6403, %v6907
  %v7008 = vmul.f32 %v6418, %v6914
  %v7009 = vmul.f32 %v6433, %v6921
  %v7010 = vmul.f32 %v6448, %v6928
  %v7011 = vmul.f32 %v6463, %v6935
  %v7012 = vmul.f32 %v6478, %v6942
  %v7013 = vmul.f32 %v6493, %v6949
  %v7014 = vld [vmem:[%s15] sm:$0x1]
  %7016 = vset.pattern.permute.xlu0 0
  %7017 = vperm.xlu0 %7016, %v6950
  %v7018 = vpop.permute.xlu0 %7017
  %7021 = vset.pattern.permute.xlu0 0
  %7022 = vperm.xlu0 %7021, %v6951
  %v7023 = vpop.permute.xlu0 %7022
  %7026 = vset.pattern.permute.xlu0 0
  %7027 = vperm.xlu0 %7026, %v6952
  %v7028 = vpop.permute.xlu0 %7027
  %7031 = vset.pattern.permute.xlu0 0
  %7032 = vperm.xlu0 %7031, %v6953
  %v7033 = vpop.permute.xlu0 %7032
  %7036 = vset.pattern.permute.xlu0 0
  %7037 = vperm.xlu0 %7036, %v6954
  %v7038 = vpop.permute.xlu0 %7037
  %7041 = vset.pattern.permute.xlu0 0
  %7042 = vperm.xlu0 %7041, %v6955
  %v7043 = vpop.permute.xlu0 %7042
  %7046 = vset.pattern.permute.xlu0 0
  %7047 = vperm.xlu0 %7046, %v6956
  %v7048 = vpop.permute.xlu0 %7047
  %7051 = vset.pattern.permute.xlu0 0
  %7052 = vperm.xlu0 %7051, %v6957
  %v7053 = vpop.permute.xlu0 %7052
  %7056 = vset.pattern.permute.xlu0 0
  %7057 = vperm.xlu0 %7056, %v6958
  %v7058 = vpop.permute.xlu0 %7057
  %7061 = vset.pattern.permute.xlu0 0
  %7062 = vperm.xlu0 %7061, %v6959
  %v7063 = vpop.permute.xlu0 %7062
  %7066 = vset.pattern.permute.xlu0 0
  %7067 = vperm.xlu0 %7066, %v6960
  %v7068 = vpop.permute.xlu0 %7067
  %7071 = vset.pattern.permute.xlu0 0
  %7072 = vperm.xlu0 %7071, %v6961
  %v7073 = vpop.permute.xlu0 %7072
  %7076 = vset.pattern.permute.xlu0 0
  %7077 = vperm.xlu0 %7076, %v6962
  %v7078 = vpop.permute.xlu0 %7077
  %7081 = vset.pattern.permute.xlu0 0
  %7082 = vperm.xlu0 %7081, %v6963
  %v7083 = vpop.permute.xlu0 %7082
  %7086 = vset.pattern.permute.xlu0 0
  %7087 = vperm.xlu0 %7086, %v6964
  %v7088 = vpop.permute.xlu0 %7087
  %7091 = vset.pattern.permute.xlu0 0
  %7092 = vperm.xlu0 %7091, %v6965
  %v7093 = vpop.permute.xlu0 %7092
  %7096 = vset.pattern.permute.xlu0 0
  %7097 = vperm.xlu0 %7096, %v6966
  %v7098 = vpop.permute.xlu0 %7097
  %7101 = vset.pattern.permute.xlu0 0
  %7102 = vperm.xlu0 %7101, %v6967
  %v7103 = vpop.permute.xlu0 %7102
  %7106 = vset.pattern.permute.xlu0 0
  %7107 = vperm.xlu0 %7106, %v6968
  %v7108 = vpop.permute.xlu0 %7107
  %7111 = vset.pattern.permute.xlu0 0
  %7112 = vperm.xlu0 %7111, %v6969
  %v7113 = vpop.permute.xlu0 %7112
  %7116 = vset.pattern.permute.xlu0 0
  %7117 = vperm.xlu0 %7116, %v6970
  %v7118 = vpop.permute.xlu0 %7117
  %7121 = vset.pattern.permute.xlu0 0
  %7122 = vperm.xlu0 %7121, %v6971
  %v7123 = vpop.permute.xlu0 %7122
  %7126 = vset.pattern.permute.xlu0 0
  %7127 = vperm.xlu0 %7126, %v6972
  %v7128 = vpop.permute.xlu0 %7127
  %7131 = vset.pattern.permute.xlu0 0
  %7132 = vperm.xlu0 %7131, %v6973
  %v7133 = vpop.permute.xlu0 %7132
  %7136 = vset.pattern.permute.xlu0 0
  %7137 = vperm.xlu0 %7136, %v6974
  %v7138 = vpop.permute.xlu0 %7137
  %7141 = vset.pattern.permute.xlu0 0
  %7142 = vperm.xlu0 %7141, %v6975
  %v7143 = vpop.permute.xlu0 %7142
  %7146 = vset.pattern.permute.xlu0 0
  %7147 = vperm.xlu0 %7146, %v6976
  %v7148 = vpop.permute.xlu0 %7147
  %7151 = vset.pattern.permute.xlu0 0
  %7152 = vperm.xlu0 %7151, %v6977
  %v7153 = vpop.permute.xlu0 %7152
  %7156 = vset.pattern.permute.xlu0 0
  %7157 = vperm.xlu0 %7156, %v6978
  %v7158 = vpop.permute.xlu0 %7157
  %7161 = vset.pattern.permute.xlu0 0
  %7162 = vperm.xlu0 %7161, %v6979
  %v7163 = vpop.permute.xlu0 %7162
  %7166 = vset.pattern.permute.xlu0 0
  %7167 = vperm.xlu0 %7166, %v6980
  %v7168 = vpop.permute.xlu0 %7167
  %7171 = vset.pattern.permute.xlu0 0
  %7172 = vperm.xlu0 %7171, %v6981
  %v7173 = vpop.permute.xlu0 %7172
  %7176 = vset.pattern.permute.xlu0 0
  %7177 = vperm.xlu0 %7176, %v6982
  %v7178 = vpop.permute.xlu0 %7177
  %7181 = vset.pattern.permute.xlu0 0
  %7182 = vperm.xlu0 %7181, %v6983
  %v7183 = vpop.permute.xlu0 %7182
  %7186 = vset.pattern.permute.xlu0 0
  %7187 = vperm.xlu0 %7186, %v6984
  %v7188 = vpop.permute.xlu0 %7187
  %7191 = vset.pattern.permute.xlu0 0
  %7192 = vperm.xlu0 %7191, %v6985
  %v7193 = vpop.permute.xlu0 %7192
  %7196 = vset.pattern.permute.xlu0 0
  %7197 = vperm.xlu0 %7196, %v6986
  %v7198 = vpop.permute.xlu0 %7197
  %7201 = vset.pattern.permute.xlu0 0
  %7202 = vperm.xlu0 %7201, %v6987
  %v7203 = vpop.permute.xlu0 %7202
  %7206 = vset.pattern.permute.xlu0 0
  %7207 = vperm.xlu0 %7206, %v6988
  %v7208 = vpop.permute.xlu0 %7207
  %7211 = vset.pattern.permute.xlu0 0
  %7212 = vperm.xlu0 %7211, %v6989
  %v7213 = vpop.permute.xlu0 %7212
  %7216 = vset.pattern.permute.xlu0 0
  %7217 = vperm.xlu0 %7216, %v6990
  %v7218 = vpop.permute.xlu0 %7217
  %7221 = vset.pattern.permute.xlu0 0
  %7222 = vperm.xlu0 %7221, %v6991
  %v7223 = vpop.permute.xlu0 %7222
  %7226 = vset.pattern.permute.xlu0 0
  %7227 = vperm.xlu0 %7226, %v6992
  %v7228 = vpop.permute.xlu0 %7227
  %7231 = vset.pattern.permute.xlu0 0
  %7232 = vperm.xlu0 %7231, %v6993
  %v7233 = vpop.permute.xlu0 %7232
  %7236 = vset.pattern.permute.xlu0 0
  %7237 = vperm.xlu0 %7236, %v6994
  %v7238 = vpop.permute.xlu0 %7237
  %7241 = vset.pattern.permute.xlu0 0
  %7242 = vperm.xlu0 %7241, %v6995
  %v7243 = vpop.permute.xlu0 %7242
  %7246 = vset.pattern.permute.xlu0 0
  %7247 = vperm.xlu0 %7246, %v6996
  %v7248 = vpop.permute.xlu0 %7247
  %7251 = vset.pattern.permute.xlu0 0
  %7252 = vperm.xlu0 %7251, %v6997
  %v7253 = vpop.permute.xlu0 %7252
  %7256 = vset.pattern.permute.xlu0 0
  %7257 = vperm.xlu0 %7256, %v6998
  %v7258 = vpop.permute.xlu0 %7257
  %7261 = vset.pattern.permute.xlu0 0
  %7262 = vperm.xlu0 %7261, %v6999
  %v7263 = vpop.permute.xlu0 %7262
  %7266 = vset.pattern.permute.xlu0 0
  %7267 = vperm.xlu0 %7266, %v7000
  %v7268 = vpop.permute.xlu0 %7267
  %7271 = vset.pattern.permute.xlu0 0
  %7272 = vperm.xlu0 %7271, %v7001
  %v7273 = vpop.permute.xlu0 %7272
  %7276 = vset.pattern.permute.xlu0 0
  %7277 = vperm.xlu0 %7276, %v7002
  %v7278 = vpop.permute.xlu0 %7277
  %7281 = vset.pattern.permute.xlu0 0
  %7282 = vperm.xlu0 %7281, %v7003
  %v7283 = vpop.permute.xlu0 %7282
  %7286 = vset.pattern.permute.xlu0 0
  %7287 = vperm.xlu0 %7286, %v7004
  %v7288 = vpop.permute.xlu0 %7287
  %7291 = vset.pattern.permute.xlu0 0
  %7292 = vperm.xlu0 %7291, %v7005
  %v7293 = vpop.permute.xlu0 %7292
  %7296 = vset.pattern.permute.xlu0 0
  %7297 = vperm.xlu0 %7296, %v7006
  %v7298 = vpop.permute.xlu0 %7297
  %7301 = vset.pattern.permute.xlu0 0
  %7302 = vperm.xlu0 %7301, %v7007
  %v7303 = vpop.permute.xlu0 %7302
  %7306 = vset.pattern.permute.xlu0 0
  %7307 = vperm.xlu0 %7306, %v7008
  %v7308 = vpop.permute.xlu0 %7307
  %7311 = vset.pattern.permute.xlu0 0
  %7312 = vperm.xlu0 %7311, %v7009
  %v7313 = vpop.permute.xlu0 %7312
  %7316 = vset.pattern.permute.xlu0 0
  %7317 = vperm.xlu0 %7316, %v7010
  %v7318 = vpop.permute.xlu0 %7317
  %7321 = vset.pattern.permute.xlu0 0
  %7322 = vperm.xlu0 %7321, %v7011
  %v7323 = vpop.permute.xlu0 %7322
  %7326 = vset.pattern.permute.xlu0 0
  %7327 = vperm.xlu0 %7326, %v7012
  %v7328 = vpop.permute.xlu0 %7327
  %7331 = vset.pattern.permute.xlu0 0
  %7332 = vperm.xlu0 %7331, %v7013
  %v7333 = vpop.permute.xlu0 %7332
  %v7335 = vperm.slane %v7014, 0
  %v7336 = vmul.f32 %v7018, %v7335
  %v7337 = vmul.f32 %v7023, %v7335
  %v7338 = vmul.f32 %v7028, %v7335
  %v7339 = vmul.f32 %v7033, %v7335
  %v7340 = vmul.f32 %v7038, %v7335
  %v7341 = vmul.f32 %v7043, %v7335
  %v7342 = vmul.f32 %v7048, %v7335
  %v7343 = vmul.f32 %v7053, %v7335
  %v7344 = vmul.f32 %v7058, %v7335
  %v7345 = vmul.f32 %v7063, %v7335
  %v7346 = vmul.f32 %v7068, %v7335
  %v7347 = vmul.f32 %v7073, %v7335
  %v7348 = vmul.f32 %v7078, %v7335
  %v7349 = vmul.f32 %v7083, %v7335
  %v7350 = vmul.f32 %v7088, %v7335
  %v7351 = vmul.f32 %v7093, %v7335
  %v7352 = vmul.f32 %v7098, %v7335
  %v7353 = vmul.f32 %v7103, %v7335
  %v7354 = vmul.f32 %v7108, %v7335
  %v7355 = vmul.f32 %v7113, %v7335
  %v7356 = vmul.f32 %v7118, %v7335
  %v7357 = vmul.f32 %v7123, %v7335
  %v7358 = vmul.f32 %v7128, %v7335
  %v7359 = vmul.f32 %v7133, %v7335
  %v7360 = vmul.f32 %v7138, %v7335
  %v7361 = vmul.f32 %v7143, %v7335
  %v7362 = vmul.f32 %v7148, %v7335
  %v7363 = vmul.f32 %v7153, %v7335
  %v7364 = vmul.f32 %v7158, %v7335
  %v7365 = vmul.f32 %v7163, %v7335
  %v7366 = vmul.f32 %v7168, %v7335
  %v7367 = vmul.f32 %v7173, %v7335
  %v7368 = vmul.f32 %v7178, %v7335
  %v7369 = vmul.f32 %v7183, %v7335
  %v7370 = vmul.f32 %v7188, %v7335
  %v7371 = vmul.f32 %v7193, %v7335
  %v7372 = vmul.f32 %v7198, %v7335
  %v7373 = vmul.f32 %v7203, %v7335
  %v7374 = vmul.f32 %v7208, %v7335
  %v7375 = vmul.f32 %v7213, %v7335
  %v7376 = vmul.f32 %v7218, %v7335
  %v7377 = vmul.f32 %v7223, %v7335
  %v7378 = vmul.f32 %v7228, %v7335
  %v7379 = vmul.f32 %v7233, %v7335
  %v7380 = vmul.f32 %v7238, %v7335
  %v7381 = vmul.f32 %v7243, %v7335
  %v7382 = vmul.f32 %v7248, %v7335
  %v7383 = vmul.f32 %v7253, %v7335
  %v7384 = vmul.f32 %v7258, %v7335
  %v7385 = vmul.f32 %v7263, %v7335
  %v7386 = vmul.f32 %v7268, %v7335
  %v7387 = vmul.f32 %v7273, %v7335
  %v7388 = vmul.f32 %v7278, %v7335
  %v7389 = vmul.f32 %v7283, %v7335
  %v7390 = vmul.f32 %v7288, %v7335
  %v7391 = vmul.f32 %v7293, %v7335
  %v7392 = vmul.f32 %v7298, %v7335
  %v7393 = vmul.f32 %v7303, %v7335
  %v7394 = vmul.f32 %v7308, %v7335
  %v7395 = vmul.f32 %v7313, %v7335
  %v7396 = vmul.f32 %v7318, %v7335
  %v7397 = vmul.f32 %v7323, %v7335
  %v7398 = vmul.f32 %v7328, %v7335
  %v7399 = vmul.f32 %v7333, %v7335
  %v7400 = vld [vmem:[%s15 + $0x1] sm:$0x1]
  %7401 = vset.pattern.permute.xlu0 1
  %7402 = vperm.xlu0 %7401, %v6950
  %v7403 = vpop.permute.xlu0 %7402
  %7405 = vset.pattern.permute.xlu0 1
  %7406 = vperm.xlu0 %7405, %v6951
  %v7407 = vpop.permute.xlu0 %7406
  %7409 = vset.pattern.permute.xlu0 1
  %7410 = vperm.xlu0 %7409, %v6952
  %v7411 = vpop.permute.xlu0 %7410
  %7413 = vset.pattern.permute.xlu0 1
  %7414 = vperm.xlu0 %7413, %v6953
  %v7415 = vpop.permute.xlu0 %7414
  %7417 = vset.pattern.permute.xlu0 1
  %7418 = vperm.xlu0 %7417, %v6954
  %v7419 = vpop.permute.xlu0 %7418
  %7421 = vset.pattern.permute.xlu0 1
  %7422 = vperm.xlu0 %7421, %v6955
  %v7423 = vpop.permute.xlu0 %7422
  %7425 = vset.pattern.permute.xlu0 1
  %7426 = vperm.xlu0 %7425, %v6956
  %v7427 = vpop.permute.xlu0 %7426
  %7429 = vset.pattern.permute.xlu0 1
  %7430 = vperm.xlu0 %7429, %v6957
  %v7431 = vpop.permute.xlu0 %7430
  %7433 = vset.pattern.permute.xlu0 1
  %7434 = vperm.xlu0 %7433, %v6958
  %v7435 = vpop.permute.xlu0 %7434
  %7437 = vset.pattern.permute.xlu0 1
  %7438 = vperm.xlu0 %7437, %v6959
  %v7439 = vpop.permute.xlu0 %7438
  %7441 = vset.pattern.permute.xlu0 1
  %7442 = vperm.xlu0 %7441, %v6960
  %v7443 = vpop.permute.xlu0 %7442
  %7445 = vset.pattern.permute.xlu0 1
  %7446 = vperm.xlu0 %7445, %v6961
  %v7447 = vpop.permute.xlu0 %7446
  %7449 = vset.pattern.permute.xlu0 1
  %7450 = vperm.xlu0 %7449, %v6962
  %v7451 = vpop.permute.xlu0 %7450
  %7453 = vset.pattern.permute.xlu0 1
  %7454 = vperm.xlu0 %7453, %v6963
  %v7455 = vpop.permute.xlu0 %7454
  %7457 = vset.pattern.permute.xlu0 1
  %7458 = vperm.xlu0 %7457, %v6964
  %v7459 = vpop.permute.xlu0 %7458
  %7461 = vset.pattern.permute.xlu0 1
  %7462 = vperm.xlu0 %7461, %v6965
  %v7463 = vpop.permute.xlu0 %7462
  %7465 = vset.pattern.permute.xlu0 1
  %7466 = vperm.xlu0 %7465, %v6966
  %v7467 = vpop.permute.xlu0 %7466
  %7469 = vset.pattern.permute.xlu0 1
  %7470 = vperm.xlu0 %7469, %v6967
  %v7471 = vpop.permute.xlu0 %7470
  %7473 = vset.pattern.permute.xlu0 1
  %7474 = vperm.xlu0 %7473, %v6968
  %v7475 = vpop.permute.xlu0 %7474
  %7477 = vset.pattern.permute.xlu0 1
  %7478 = vperm.xlu0 %7477, %v6969
  %v7479 = vpop.permute.xlu0 %7478
  %7481 = vset.pattern.permute.xlu0 1
  %7482 = vperm.xlu0 %7481, %v6970
  %v7483 = vpop.permute.xlu0 %7482
  %7485 = vset.pattern.permute.xlu0 1
  %7486 = vperm.xlu0 %7485, %v6971
  %v7487 = vpop.permute.xlu0 %7486
  %7489 = vset.pattern.permute.xlu0 1
  %7490 = vperm.xlu0 %7489, %v6972
  %v7491 = vpop.permute.xlu0 %7490
  %7493 = vset.pattern.permute.xlu0 1
  %7494 = vperm.xlu0 %7493, %v6973
  %v7495 = vpop.permute.xlu0 %7494
  %7497 = vset.pattern.permute.xlu0 1
  %7498 = vperm.xlu0 %7497, %v6974
  %v7499 = vpop.permute.xlu0 %7498
  %7501 = vset.pattern.permute.xlu0 1
  %7502 = vperm.xlu0 %7501, %v6975
  %v7503 = vpop.permute.xlu0 %7502
  %7505 = vset.pattern.permute.xlu0 1
  %7506 = vperm.xlu0 %7505, %v6976
  %v7507 = vpop.permute.xlu0 %7506
  %7509 = vset.pattern.permute.xlu0 1
  %7510 = vperm.xlu0 %7509, %v6977
  %v7511 = vpop.permute.xlu0 %7510
  %7513 = vset.pattern.permute.xlu0 1
  %7514 = vperm.xlu0 %7513, %v6978
  %v7515 = vpop.permute.xlu0 %7514
  %7517 = vset.pattern.permute.xlu0 1
  %7518 = vperm.xlu0 %7517, %v6979
  %v7519 = vpop.permute.xlu0 %7518
  %7521 = vset.pattern.permute.xlu0 1
  %7522 = vperm.xlu0 %7521, %v6980
  %v7523 = vpop.permute.xlu0 %7522
  %7525 = vset.pattern.permute.xlu0 1
  %7526 = vperm.xlu0 %7525, %v6981
  %v7527 = vpop.permute.xlu0 %7526
  %7529 = vset.pattern.permute.xlu0 1
  %7530 = vperm.xlu0 %7529, %v6982
  %v7531 = vpop.permute.xlu0 %7530
  %7533 = vset.pattern.permute.xlu0 1
  %7534 = vperm.xlu0 %7533, %v6983
  %v7535 = vpop.permute.xlu0 %7534
  %7537 = vset.pattern.permute.xlu0 1
  %7538 = vperm.xlu0 %7537, %v6984
  %v7539 = vpop.permute.xlu0 %7538
  %7541 = vset.pattern.permute.xlu0 1
  %7542 = vperm.xlu0 %7541, %v6985
  %v7543 = vpop.permute.xlu0 %7542
  %7545 = vset.pattern.permute.xlu0 1
  %7546 = vperm.xlu0 %7545, %v6986
  %v7547 = vpop.permute.xlu0 %7546
  %7549 = vset.pattern.permute.xlu0 1
  %7550 = vperm.xlu0 %7549, %v6987
  %v7551 = vpop.permute.xlu0 %7550
  %7553 = vset.pattern.permute.xlu0 1
  %7554 = vperm.xlu0 %7553, %v6988
  %v7555 = vpop.permute.xlu0 %7554
  %7557 = vset.pattern.permute.xlu0 1
  %7558 = vperm.xlu0 %7557, %v6989
  %v7559 = vpop.permute.xlu0 %7558
  %7561 = vset.pattern.permute.xlu0 1
  %7562 = vperm.xlu0 %7561, %v6990
  %v7563 = vpop.permute.xlu0 %7562
  %7565 = vset.pattern.permute.xlu0 1
  %7566 = vperm.xlu0 %7565, %v6991
  %v7567 = vpop.permute.xlu0 %7566
  %7569 = vset.pattern.permute.xlu0 1
  %7570 = vperm.xlu0 %7569, %v6992
  %v7571 = vpop.permute.xlu0 %7570
  %7573 = vset.pattern.permute.xlu0 1
  %7574 = vperm.xlu0 %7573, %v6993
  %v7575 = vpop.permute.xlu0 %7574
  %7577 = vset.pattern.permute.xlu0 1
  %7578 = vperm.xlu0 %7577, %v6994
  %v7579 = vpop.permute.xlu0 %7578
  %7581 = vset.pattern.permute.xlu0 1
  %7582 = vperm.xlu0 %7581, %v6995
  %v7583 = vpop.permute.xlu0 %7582
  %7585 = vset.pattern.permute.xlu0 1
  %7586 = vperm.xlu0 %7585, %v6996
  %v7587 = vpop.permute.xlu0 %7586
  %7589 = vset.pattern.permute.xlu0 1
  %7590 = vperm.xlu0 %7589, %v6997
  %v7591 = vpop.permute.xlu0 %7590
  %7593 = vset.pattern.permute.xlu0 1
  %7594 = vperm.xlu0 %7593, %v6998
  %v7595 = vpop.permute.xlu0 %7594
  %7597 = vset.pattern.permute.xlu0 1
  %7598 = vperm.xlu0 %7597, %v6999
  %v7599 = vpop.permute.xlu0 %7598
  %7601 = vset.pattern.permute.xlu0 1
  %7602 = vperm.xlu0 %7601, %v7000
  %v7603 = vpop.permute.xlu0 %7602
  %7605 = vset.pattern.permute.xlu0 1
  %7606 = vperm.xlu0 %7605, %v7001
  %v7607 = vpop.permute.xlu0 %7606
  %7609 = vset.pattern.permute.xlu0 1
  %7610 = vperm.xlu0 %7609, %v7002
  %v7611 = vpop.permute.xlu0 %7610
  %7613 = vset.pattern.permute.xlu0 1
  %7614 = vperm.xlu0 %7613, %v7003
  %v7615 = vpop.permute.xlu0 %7614
  %7617 = vset.pattern.permute.xlu0 1
  %7618 = vperm.xlu0 %7617, %v7004
  %v7619 = vpop.permute.xlu0 %7618
  %7621 = vset.pattern.permute.xlu0 1
  %7622 = vperm.xlu0 %7621, %v7005
  %v7623 = vpop.permute.xlu0 %7622
  %7625 = vset.pattern.permute.xlu0 1
  %7626 = vperm.xlu0 %7625, %v7006
  %v7627 = vpop.permute.xlu0 %7626
  %7629 = vset.pattern.permute.xlu0 1
  %7630 = vperm.xlu0 %7629, %v7007
  %v7631 = vpop.permute.xlu0 %7630
  %7633 = vset.pattern.permute.xlu0 1
  %7634 = vperm.xlu0 %7633, %v7008
  %v7635 = vpop.permute.xlu0 %7634
  %7637 = vset.pattern.permute.xlu0 1
  %7638 = vperm.xlu0 %7637, %v7009
  %v7639 = vpop.permute.xlu0 %7638
  %7641 = vset.pattern.permute.xlu0 1
  %7642 = vperm.xlu0 %7641, %v7010
  %v7643 = vpop.permute.xlu0 %7642
  %7645 = vset.pattern.permute.xlu0 1
  %7646 = vperm.xlu0 %7645, %v7011
  %v7647 = vpop.permute.xlu0 %7646
  %7649 = vset.pattern.permute.xlu0 1
  %7650 = vperm.xlu0 %7649, %v7012
  %v7651 = vpop.permute.xlu0 %7650
  %7653 = vset.pattern.permute.xlu0 1
  %7654 = vperm.xlu0 %7653, %v7013
  %v7655 = vpop.permute.xlu0 %7654
  %v7657 = vperm.slane %v7400, 0
  %v7658 = vmul.f32 %v7403, %v7657
  %v7659 = vmul.f32 %v7407, %v7657
  %v7660 = vmul.f32 %v7411, %v7657
  %v7661 = vmul.f32 %v7415, %v7657
  %v7662 = vmul.f32 %v7419, %v7657
  %v7663 = vmul.f32 %v7423, %v7657
  %v7664 = vmul.f32 %v7427, %v7657
  %v7665 = vmul.f32 %v7431, %v7657
  %v7666 = vmul.f32 %v7435, %v7657
  %v7667 = vmul.f32 %v7439, %v7657
  %v7668 = vmul.f32 %v7443, %v7657
  %v7669 = vmul.f32 %v7447, %v7657
  %v7670 = vmul.f32 %v7451, %v7657
  %v7671 = vmul.f32 %v7455, %v7657
  %v7672 = vmul.f32 %v7459, %v7657
  %v7673 = vmul.f32 %v7463, %v7657
  %v7674 = vmul.f32 %v7467, %v7657
  %v7675 = vmul.f32 %v7471, %v7657
  %v7676 = vmul.f32 %v7475, %v7657
  %v7677 = vmul.f32 %v7479, %v7657
  %v7678 = vmul.f32 %v7483, %v7657
  %v7679 = vmul.f32 %v7487, %v7657
  %v7680 = vmul.f32 %v7491, %v7657
  %v7681 = vmul.f32 %v7495, %v7657
  %v7682 = vmul.f32 %v7499, %v7657
  %v7683 = vmul.f32 %v7503, %v7657
  %v7684 = vmul.f32 %v7507, %v7657
  %v7685 = vmul.f32 %v7511, %v7657
  %v7686 = vmul.f32 %v7515, %v7657
  %v7687 = vmul.f32 %v7519, %v7657
  %v7688 = vmul.f32 %v7523, %v7657
  %v7689 = vmul.f32 %v7527, %v7657
  %v7690 = vmul.f32 %v7531, %v7657
  %v7691 = vmul.f32 %v7535, %v7657
  %v7692 = vmul.f32 %v7539, %v7657
  %v7693 = vmul.f32 %v7543, %v7657
  %v7694 = vmul.f32 %v7547, %v7657
  %v7695 = vmul.f32 %v7551, %v7657
  %v7696 = vmul.f32 %v7555, %v7657
  %v7697 = vmul.f32 %v7559, %v7657
  %v7698 = vmul.f32 %v7563, %v7657
  %v7699 = vmul.f32 %v7567, %v7657
  %v7700 = vmul.f32 %v7571, %v7657
  %v7701 = vmul.f32 %v7575, %v7657
  %v7702 = vmul.f32 %v7579, %v7657
  %v7703 = vmul.f32 %v7583, %v7657
  %v7704 = vmul.f32 %v7587, %v7657
  %v7705 = vmul.f32 %v7591, %v7657
  %v7706 = vmul.f32 %v7595, %v7657
  %v7707 = vmul.f32 %v7599, %v7657
  %v7708 = vmul.f32 %v7603, %v7657
  %v7709 = vmul.f32 %v7607, %v7657
  %v7710 = vmul.f32 %v7611, %v7657
  %v7711 = vmul.f32 %v7615, %v7657
  %v7712 = vmul.f32 %v7619, %v7657
  %v7713 = vmul.f32 %v7623, %v7657
  %v7714 = vmul.f32 %v7627, %v7657
  %v7715 = vmul.f32 %v7631, %v7657
  %v7716 = vmul.f32 %v7635, %v7657
  %v7717 = vmul.f32 %v7639, %v7657
  %v7718 = vmul.f32 %v7643, %v7657
  %v7719 = vmul.f32 %v7647, %v7657
  %v7720 = vmul.f32 %v7651, %v7657
  %v7721 = vmul.f32 %v7655, %v7657
  %v7722 = vadd.f32 %v7336, %v7658
  %v7723 = vadd.f32 %v7337, %v7659
  %v7724 = vadd.f32 %v7338, %v7660
  %v7725 = vadd.f32 %v7339, %v7661
  %v7726 = vadd.f32 %v7340, %v7662
  %v7727 = vadd.f32 %v7341, %v7663
  %v7728 = vadd.f32 %v7342, %v7664
  %v7729 = vadd.f32 %v7343, %v7665
  %v7730 = vadd.f32 %v7344, %v7666
  %v7731 = vadd.f32 %v7345, %v7667
  %v7732 = vadd.f32 %v7346, %v7668
  %v7733 = vadd.f32 %v7347, %v7669
  %v7734 = vadd.f32 %v7348, %v7670
  %v7735 = vadd.f32 %v7349, %v7671
  %v7736 = vadd.f32 %v7350, %v7672
  %v7737 = vadd.f32 %v7351, %v7673
  %v7738 = vadd.f32 %v7352, %v7674
  %v7739 = vadd.f32 %v7353, %v7675
  %v7740 = vadd.f32 %v7354, %v7676
  %v7741 = vadd.f32 %v7355, %v7677
  %v7742 = vadd.f32 %v7356, %v7678
  %v7743 = vadd.f32 %v7357, %v7679
  %v7744 = vadd.f32 %v7358, %v7680
  %v7745 = vadd.f32 %v7359, %v7681
  %v7746 = vadd.f32 %v7360, %v7682
  %v7747 = vadd.f32 %v7361, %v7683
  %v7748 = vadd.f32 %v7362, %v7684
  %v7749 = vadd.f32 %v7363, %v7685
  %v7750 = vadd.f32 %v7364, %v7686
  %v7751 = vadd.f32 %v7365, %v7687
  %v7752 = vadd.f32 %v7366, %v7688
  %v7753 = vadd.f32 %v7367, %v7689
  %v7754 = vadd.f32 %v7368, %v7690
  %v7755 = vadd.f32 %v7369, %v7691
  %v7756 = vadd.f32 %v7370, %v7692
  %v7757 = vadd.f32 %v7371, %v7693
  %v7758 = vadd.f32 %v7372, %v7694
  %v7759 = vadd.f32 %v7373, %v7695
  %v7760 = vadd.f32 %v7374, %v7696
  %v7761 = vadd.f32 %v7375, %v7697
  %v7762 = vadd.f32 %v7376, %v7698
  %v7763 = vadd.f32 %v7377, %v7699
  %v7764 = vadd.f32 %v7378, %v7700
  %v7765 = vadd.f32 %v7379, %v7701
  %v7766 = vadd.f32 %v7380, %v7702
  %v7767 = vadd.f32 %v7381, %v7703
  %v7768 = vadd.f32 %v7382, %v7704
  %v7769 = vadd.f32 %v7383, %v7705
  %v7770 = vadd.f32 %v7384, %v7706
  %v7771 = vadd.f32 %v7385, %v7707
  %v7772 = vadd.f32 %v7386, %v7708
  %v7773 = vadd.f32 %v7387, %v7709
  %v7774 = vadd.f32 %v7388, %v7710
  %v7775 = vadd.f32 %v7389, %v7711
  %v7776 = vadd.f32 %v7390, %v7712
  %v7777 = vadd.f32 %v7391, %v7713
  %v7778 = vadd.f32 %v7392, %v7714
  %v7779 = vadd.f32 %v7393, %v7715
  %v7780 = vadd.f32 %v7394, %v7716
  %v7781 = vadd.f32 %v7395, %v7717
  %v7782 = vadd.f32 %v7396, %v7718
  %v7783 = vadd.f32 %v7397, %v7719
  %v7784 = vadd.f32 %v7398, %v7720
  %v7785 = vadd.f32 %v7399, %v7721
  %v7786 = vld [vmem:[%s15 + $0x2] sm:$0x1]
  %7787 = vset.pattern.permute.xlu0 2
  %7788 = vperm.xlu0 %7787, %v6950
  %v7789 = vpop.permute.xlu0 %7788
  %7791 = vset.pattern.permute.xlu0 2
  %7792 = vperm.xlu0 %7791, %v6951
  %v7793 = vpop.permute.xlu0 %7792
  %7795 = vset.pattern.permute.xlu0 2
  %7796 = vperm.xlu0 %7795, %v6952
  %v7797 = vpop.permute.xlu0 %7796
  %7799 = vset.pattern.permute.xlu0 2
  %7800 = vperm.xlu0 %7799, %v6953
  %v7801 = vpop.permute.xlu0 %7800
  %7803 = vset.pattern.permute.xlu0 2
  %7804 = vperm.xlu0 %7803, %v6954
  %v7805 = vpop.permute.xlu0 %7804
  %7807 = vset.pattern.permute.xlu0 2
  %7808 = vperm.xlu0 %7807, %v6955
  %v7809 = vpop.permute.xlu0 %7808
  %7811 = vset.pattern.permute.xlu0 2
  %7812 = vperm.xlu0 %7811, %v6956
  %v7813 = vpop.permute.xlu0 %7812
  %7815 = vset.pattern.permute.xlu0 2
  %7816 = vperm.xlu0 %7815, %v6957
  %v7817 = vpop.permute.xlu0 %7816
  %7819 = vset.pattern.permute.xlu0 2
  %7820 = vperm.xlu0 %7819, %v6958
  %v7821 = vpop.permute.xlu0 %7820
  %7823 = vset.pattern.permute.xlu0 2
  %7824 = vperm.xlu0 %7823, %v6959
  %v7825 = vpop.permute.xlu0 %7824
  %7827 = vset.pattern.permute.xlu0 2
  %7828 = vperm.xlu0 %7827, %v6960
  %v7829 = vpop.permute.xlu0 %7828
  %7831 = vset.pattern.permute.xlu0 2
  %7832 = vperm.xlu0 %7831, %v6961
  %v7833 = vpop.permute.xlu0 %7832
  %7835 = vset.pattern.permute.xlu0 2
  %7836 = vperm.xlu0 %7835, %v6962
  %v7837 = vpop.permute.xlu0 %7836
  %7839 = vset.pattern.permute.xlu0 2
  %7840 = vperm.xlu0 %7839, %v6963
  %v7841 = vpop.permute.xlu0 %7840
  %7843 = vset.pattern.permute.xlu0 2
  %7844 = vperm.xlu0 %7843, %v6964
  %v7845 = vpop.permute.xlu0 %7844
  %7847 = vset.pattern.permute.xlu0 2
  %7848 = vperm.xlu0 %7847, %v6965
  %v7849 = vpop.permute.xlu0 %7848
  %7851 = vset.pattern.permute.xlu0 2
  %7852 = vperm.xlu0 %7851, %v6966
  %v7853 = vpop.permute.xlu0 %7852
  %7855 = vset.pattern.permute.xlu0 2
  %7856 = vperm.xlu0 %7855, %v6967
  %v7857 = vpop.permute.xlu0 %7856
  %7859 = vset.pattern.permute.xlu0 2
  %7860 = vperm.xlu0 %7859, %v6968
  %v7861 = vpop.permute.xlu0 %7860
  %7863 = vset.pattern.permute.xlu0 2
  %7864 = vperm.xlu0 %7863, %v6969
  %v7865 = vpop.permute.xlu0 %7864
  %7867 = vset.pattern.permute.xlu0 2
  %7868 = vperm.xlu0 %7867, %v6970
  %v7869 = vpop.permute.xlu0 %7868
  %7871 = vset.pattern.permute.xlu0 2
  %7872 = vperm.xlu0 %7871, %v6971
  %v7873 = vpop.permute.xlu0 %7872
  %7875 = vset.pattern.permute.xlu0 2
  %7876 = vperm.xlu0 %7875, %v6972
  %v7877 = vpop.permute.xlu0 %7876
  %7879 = vset.pattern.permute.xlu0 2
  %7880 = vperm.xlu0 %7879, %v6973
  %v7881 = vpop.permute.xlu0 %7880
  %7883 = vset.pattern.permute.xlu0 2
  %7884 = vperm.xlu0 %7883, %v6974
  %v7885 = vpop.permute.xlu0 %7884
  %7887 = vset.pattern.permute.xlu0 2
  %7888 = vperm.xlu0 %7887, %v6975
  %v7889 = vpop.permute.xlu0 %7888
  %7891 = vset.pattern.permute.xlu0 2
  %7892 = vperm.xlu0 %7891, %v6976
  %v7893 = vpop.permute.xlu0 %7892
  %7895 = vset.pattern.permute.xlu0 2
  %7896 = vperm.xlu0 %7895, %v6977
  %v7897 = vpop.permute.xlu0 %7896
  %7899 = vset.pattern.permute.xlu0 2
  %7900 = vperm.xlu0 %7899, %v6978
  %v7901 = vpop.permute.xlu0 %7900
  %7903 = vset.pattern.permute.xlu0 2
  %7904 = vperm.xlu0 %7903, %v6979
  %v7905 = vpop.permute.xlu0 %7904
  %7907 = vset.pattern.permute.xlu0 2
  %7908 = vperm.xlu0 %7907, %v6980
  %v7909 = vpop.permute.xlu0 %7908
  %7911 = vset.pattern.permute.xlu0 2
  %7912 = vperm.xlu0 %7911, %v6981
  %v7913 = vpop.permute.xlu0 %7912
  %7915 = vset.pattern.permute.xlu0 2
  %7916 = vperm.xlu0 %7915, %v6982
  %v7917 = vpop.permute.xlu0 %7916
  %7919 = vset.pattern.permute.xlu0 2
  %7920 = vperm.xlu0 %7919, %v6983
  %v7921 = vpop.permute.xlu0 %7920
  %7923 = vset.pattern.permute.xlu0 2
  %7924 = vperm.xlu0 %7923, %v6984
  %v7925 = vpop.permute.xlu0 %7924
  %7927 = vset.pattern.permute.xlu0 2
  %7928 = vperm.xlu0 %7927, %v6985
  %v7929 = vpop.permute.xlu0 %7928
  %7931 = vset.pattern.permute.xlu0 2
  %7932 = vperm.xlu0 %7931, %v6986
  %v7933 = vpop.permute.xlu0 %7932
  %7935 = vset.pattern.permute.xlu0 2
  %7936 = vperm.xlu0 %7935, %v6987
  %v7937 = vpop.permute.xlu0 %7936
  %7939 = vset.pattern.permute.xlu0 2
  %7940 = vperm.xlu0 %7939, %v6988
  %v7941 = vpop.permute.xlu0 %7940
  %7943 = vset.pattern.permute.xlu0 2
  %7944 = vperm.xlu0 %7943, %v6989
  %v7945 = vpop.permute.xlu0 %7944
  %7947 = vset.pattern.permute.xlu0 2
  %7948 = vperm.xlu0 %7947, %v6990
  %v7949 = vpop.permute.xlu0 %7948
  %7951 = vset.pattern.permute.xlu0 2
  %7952 = vperm.xlu0 %7951, %v6991
  %v7953 = vpop.permute.xlu0 %7952
  %7955 = vset.pattern.permute.xlu0 2
  %7956 = vperm.xlu0 %7955, %v6992
  %v7957 = vpop.permute.xlu0 %7956
  %7959 = vset.pattern.permute.xlu0 2
  %7960 = vperm.xlu0 %7959, %v6993
  %v7961 = vpop.permute.xlu0 %7960
  %7963 = vset.pattern.permute.xlu0 2
  %7964 = vperm.xlu0 %7963, %v6994
  %v7965 = vpop.permute.xlu0 %7964
  %7967 = vset.pattern.permute.xlu0 2
  %7968 = vperm.xlu0 %7967, %v6995
  %v7969 = vpop.permute.xlu0 %7968
  %7971 = vset.pattern.permute.xlu0 2
  %7972 = vperm.xlu0 %7971, %v6996
  %v7973 = vpop.permute.xlu0 %7972
  %7975 = vset.pattern.permute.xlu0 2
  %7976 = vperm.xlu0 %7975, %v6997
  %v7977 = vpop.permute.xlu0 %7976
  %7979 = vset.pattern.permute.xlu0 2
  %7980 = vperm.xlu0 %7979, %v6998
  %v7981 = vpop.permute.xlu0 %7980
  %7983 = vset.pattern.permute.xlu0 2
  %7984 = vperm.xlu0 %7983, %v6999
  %v7985 = vpop.permute.xlu0 %7984
  %7987 = vset.pattern.permute.xlu0 2
  %7988 = vperm.xlu0 %7987, %v7000
  %v7989 = vpop.permute.xlu0 %7988
  %7991 = vset.pattern.permute.xlu0 2
  %7992 = vperm.xlu0 %7991, %v7001
  %v7993 = vpop.permute.xlu0 %7992
  %7995 = vset.pattern.permute.xlu0 2
  %7996 = vperm.xlu0 %7995, %v7002
  %v7997 = vpop.permute.xlu0 %7996
  %7999 = vset.pattern.permute.xlu0 2
  %8000 = vperm.xlu0 %7999, %v7003
  %v8001 = vpop.permute.xlu0 %8000
  %8003 = vset.pattern.permute.xlu0 2
  %8004 = vperm.xlu0 %8003, %v7004
  %v8005 = vpop.permute.xlu0 %8004
  %8007 = vset.pattern.permute.xlu0 2
  %8008 = vperm.xlu0 %8007, %v7005
  %v8009 = vpop.permute.xlu0 %8008
  %8011 = vset.pattern.permute.xlu0 2
  %8012 = vperm.xlu0 %8011, %v7006
  %v8013 = vpop.permute.xlu0 %8012
  %8015 = vset.pattern.permute.xlu0 2
  %8016 = vperm.xlu0 %8015, %v7007
  %v8017 = vpop.permute.xlu0 %8016
  %8019 = vset.pattern.permute.xlu0 2
  %8020 = vperm.xlu0 %8019, %v7008
  %v8021 = vpop.permute.xlu0 %8020
  %8023 = vset.pattern.permute.xlu0 2
  %8024 = vperm.xlu0 %8023, %v7009
  %v8025 = vpop.permute.xlu0 %8024
  %8027 = vset.pattern.permute.xlu0 2
  %8028 = vperm.xlu0 %8027, %v7010
  %v8029 = vpop.permute.xlu0 %8028
  %8031 = vset.pattern.permute.xlu0 2
  %8032 = vperm.xlu0 %8031, %v7011
  %v8033 = vpop.permute.xlu0 %8032
  %8035 = vset.pattern.permute.xlu0 2
  %8036 = vperm.xlu0 %8035, %v7012
  %v8037 = vpop.permute.xlu0 %8036
  %8039 = vset.pattern.permute.xlu0 2
  %8040 = vperm.xlu0 %8039, %v7013
  %v8041 = vpop.permute.xlu0 %8040
  %v8043 = vperm.slane %v7786, 0
  %v8044 = vmul.f32 %v7789, %v8043
  %v8045 = vmul.f32 %v7793, %v8043
  %v8046 = vmul.f32 %v7797, %v8043
  %v8047 = vmul.f32 %v7801, %v8043
  %v8048 = vmul.f32 %v7805, %v8043
  %v8049 = vmul.f32 %v7809, %v8043
  %v8050 = vmul.f32 %v7813, %v8043
  %v8051 = vmul.f32 %v7817, %v8043
  %v8052 = vmul.f32 %v7821, %v8043
  %v8053 = vmul.f32 %v7825, %v8043
  %v8054 = vmul.f32 %v7829, %v8043
  %v8055 = vmul.f32 %v7833, %v8043
  %v8056 = vmul.f32 %v7837, %v8043
  %v8057 = vmul.f32 %v7841, %v8043
  %v8058 = vmul.f32 %v7845, %v8043
  %v8059 = vmul.f32 %v7849, %v8043
  %v8060 = vmul.f32 %v7853, %v8043
  %v8061 = vmul.f32 %v7857, %v8043
  %v8062 = vmul.f32 %v7861, %v8043
  %v8063 = vmul.f32 %v7865, %v8043
  %v8064 = vmul.f32 %v7869, %v8043
  %v8065 = vmul.f32 %v7873, %v8043
  %v8066 = vmul.f32 %v7877, %v8043
  %v8067 = vmul.f32 %v7881, %v8043
  %v8068 = vmul.f32 %v7885, %v8043
  %v8069 = vmul.f32 %v7889, %v8043
  %v8070 = vmul.f32 %v7893, %v8043
  %v8071 = vmul.f32 %v7897, %v8043
  %v8072 = vmul.f32 %v7901, %v8043
  %v8073 = vmul.f32 %v7905, %v8043
  %v8074 = vmul.f32 %v7909, %v8043
  %v8075 = vmul.f32 %v7913, %v8043
  %v8076 = vmul.f32 %v7917, %v8043
  %v8077 = vmul.f32 %v7921, %v8043
  %v8078 = vmul.f32 %v7925, %v8043
  %v8079 = vmul.f32 %v7929, %v8043
  %v8080 = vmul.f32 %v7933, %v8043
  %v8081 = vmul.f32 %v7937, %v8043
  %v8082 = vmul.f32 %v7941, %v8043
  %v8083 = vmul.f32 %v7945, %v8043
  %v8084 = vmul.f32 %v7949, %v8043
  %v8085 = vmul.f32 %v7953, %v8043
  %v8086 = vmul.f32 %v7957, %v8043
  %v8087 = vmul.f32 %v7961, %v8043
  %v8088 = vmul.f32 %v7965, %v8043
  %v8089 = vmul.f32 %v7969, %v8043
  %v8090 = vmul.f32 %v7973, %v8043
  %v8091 = vmul.f32 %v7977, %v8043
  %v8092 = vmul.f32 %v7981, %v8043
  %v8093 = vmul.f32 %v7985, %v8043
  %v8094 = vmul.f32 %v7989, %v8043
  %v8095 = vmul.f32 %v7993, %v8043
  %v8096 = vmul.f32 %v7997, %v8043
  %v8097 = vmul.f32 %v8001, %v8043
  %v8098 = vmul.f32 %v8005, %v8043
  %v8099 = vmul.f32 %v8009, %v8043
  %v8100 = vmul.f32 %v8013, %v8043
  %v8101 = vmul.f32 %v8017, %v8043
  %v8102 = vmul.f32 %v8021, %v8043
  %v8103 = vmul.f32 %v8025, %v8043
  %v8104 = vmul.f32 %v8029, %v8043
  %v8105 = vmul.f32 %v8033, %v8043
  %v8106 = vmul.f32 %v8037, %v8043
  %v8107 = vmul.f32 %v8041, %v8043
  %v8108 = vadd.f32 %v7722, %v8044
  %v8109 = vadd.f32 %v7723, %v8045
  %v8110 = vadd.f32 %v7724, %v8046
  %v8111 = vadd.f32 %v7725, %v8047
  %v8112 = vadd.f32 %v7726, %v8048
  %v8113 = vadd.f32 %v7727, %v8049
  %v8114 = vadd.f32 %v7728, %v8050
  %v8115 = vadd.f32 %v7729, %v8051
  %v8116 = vadd.f32 %v7730, %v8052
  %v8117 = vadd.f32 %v7731, %v8053
  %v8118 = vadd.f32 %v7732, %v8054
  %v8119 = vadd.f32 %v7733, %v8055
  %v8120 = vadd.f32 %v7734, %v8056
  %v8121 = vadd.f32 %v7735, %v8057
  %v8122 = vadd.f32 %v7736, %v8058
  %v8123 = vadd.f32 %v7737, %v8059
  %v8124 = vadd.f32 %v7738, %v8060
  %v8125 = vadd.f32 %v7739, %v8061
  %v8126 = vadd.f32 %v7740, %v8062
  %v8127 = vadd.f32 %v7741, %v8063
  %v8128 = vadd.f32 %v7742, %v8064
  %v8129 = vadd.f32 %v7743, %v8065
  %v8130 = vadd.f32 %v7744, %v8066
  %v8131 = vadd.f32 %v7745, %v8067
  %v8132 = vadd.f32 %v7746, %v8068
  %v8133 = vadd.f32 %v7747, %v8069
  %v8134 = vadd.f32 %v7748, %v8070
  %v8135 = vadd.f32 %v7749, %v8071
  %v8136 = vadd.f32 %v7750, %v8072
  %v8137 = vadd.f32 %v7751, %v8073
  %v8138 = vadd.f32 %v7752, %v8074
  %v8139 = vadd.f32 %v7753, %v8075
  %v8140 = vadd.f32 %v7754, %v8076
  %v8141 = vadd.f32 %v7755, %v8077
  %v8142 = vadd.f32 %v7756, %v8078
  %v8143 = vadd.f32 %v7757, %v8079
  %v8144 = vadd.f32 %v7758, %v8080
  %v8145 = vadd.f32 %v7759, %v8081
  %v8146 = vadd.f32 %v7760, %v8082
  %v8147 = vadd.f32 %v7761, %v8083
  %v8148 = vadd.f32 %v7762, %v8084
  %v8149 = vadd.f32 %v7763, %v8085
  %v8150 = vadd.f32 %v7764, %v8086
  %v8151 = vadd.f32 %v7765, %v8087
  %v8152 = vadd.f32 %v7766, %v8088
  %v8153 = vadd.f32 %v7767, %v8089
  %v8154 = vadd.f32 %v7768, %v8090
  %v8155 = vadd.f32 %v7769, %v8091
  %v8156 = vadd.f32 %v7770, %v8092
  %v8157 = vadd.f32 %v7771, %v8093
  %v8158 = vadd.f32 %v7772, %v8094
  %v8159 = vadd.f32 %v7773, %v8095
  %v8160 = vadd.f32 %v7774, %v8096
  %v8161 = vadd.f32 %v7775, %v8097
  %v8162 = vadd.f32 %v7776, %v8098
  %v8163 = vadd.f32 %v7777, %v8099
  %v8164 = vadd.f32 %v7778, %v8100
  %v8165 = vadd.f32 %v7779, %v8101
  %v8166 = vadd.f32 %v7780, %v8102
  %v8167 = vadd.f32 %v7781, %v8103
  %v8168 = vadd.f32 %v7782, %v8104
  %v8169 = vadd.f32 %v7783, %v8105
  %v8170 = vadd.f32 %v7784, %v8106
  %v8171 = vadd.f32 %v7785, %v8107
  %v8172 = vld [vmem:[%s15 + $0x3] sm:$0x1]
  %8173 = vset.pattern.permute.xlu0 3
  %8174 = vperm.xlu0 %8173, %v6950
  %v8175 = vpop.permute.xlu0 %8174
  %8177 = vset.pattern.permute.xlu0 3
  %8178 = vperm.xlu0 %8177, %v6951
  %v8179 = vpop.permute.xlu0 %8178
  %8181 = vset.pattern.permute.xlu0 3
  %8182 = vperm.xlu0 %8181, %v6952
  %v8183 = vpop.permute.xlu0 %8182
  %8185 = vset.pattern.permute.xlu0 3
  %8186 = vperm.xlu0 %8185, %v6953
  %v8187 = vpop.permute.xlu0 %8186
  %8189 = vset.pattern.permute.xlu0 3
  %8190 = vperm.xlu0 %8189, %v6954
  %v8191 = vpop.permute.xlu0 %8190
  %8193 = vset.pattern.permute.xlu0 3
  %8194 = vperm.xlu0 %8193, %v6955
  %v8195 = vpop.permute.xlu0 %8194
  %8197 = vset.pattern.permute.xlu0 3
  %8198 = vperm.xlu0 %8197, %v6956
  %v8199 = vpop.permute.xlu0 %8198
  %8201 = vset.pattern.permute.xlu0 3
  %8202 = vperm.xlu0 %8201, %v6957
  %v8203 = vpop.permute.xlu0 %8202
  %8205 = vset.pattern.permute.xlu0 3
  %8206 = vperm.xlu0 %8205, %v6958
  %v8207 = vpop.permute.xlu0 %8206
  %8209 = vset.pattern.permute.xlu0 3
  %8210 = vperm.xlu0 %8209, %v6959
  %v8211 = vpop.permute.xlu0 %8210
  %8213 = vset.pattern.permute.xlu0 3
  %8214 = vperm.xlu0 %8213, %v6960
  %v8215 = vpop.permute.xlu0 %8214
  %8217 = vset.pattern.permute.xlu0 3
  %8218 = vperm.xlu0 %8217, %v6961
  %v8219 = vpop.permute.xlu0 %8218
  %8221 = vset.pattern.permute.xlu0 3
  %8222 = vperm.xlu0 %8221, %v6962
  %v8223 = vpop.permute.xlu0 %8222
  %8225 = vset.pattern.permute.xlu0 3
  %8226 = vperm.xlu0 %8225, %v6963
  %v8227 = vpop.permute.xlu0 %8226
  %8229 = vset.pattern.permute.xlu0 3
  %8230 = vperm.xlu0 %8229, %v6964
  %v8231 = vpop.permute.xlu0 %8230
  %8233 = vset.pattern.permute.xlu0 3
  %8234 = vperm.xlu0 %8233, %v6965
  %v8235 = vpop.permute.xlu0 %8234
  %8237 = vset.pattern.permute.xlu0 3
  %8238 = vperm.xlu0 %8237, %v6966
  %v8239 = vpop.permute.xlu0 %8238
  %8241 = vset.pattern.permute.xlu0 3
  %8242 = vperm.xlu0 %8241, %v6967
  %v8243 = vpop.permute.xlu0 %8242
  %8245 = vset.pattern.permute.xlu0 3
  %8246 = vperm.xlu0 %8245, %v6968
  %v8247 = vpop.permute.xlu0 %8246
  %8249 = vset.pattern.permute.xlu0 3
  %8250 = vperm.xlu0 %8249, %v6969
  %v8251 = vpop.permute.xlu0 %8250
  %8253 = vset.pattern.permute.xlu0 3
  %8254 = vperm.xlu0 %8253, %v6970
  %v8255 = vpop.permute.xlu0 %8254
  %8257 = vset.pattern.permute.xlu0 3
  %8258 = vperm.xlu0 %8257, %v6971
  %v8259 = vpop.permute.xlu0 %8258
  %8261 = vset.pattern.permute.xlu0 3
  %8262 = vperm.xlu0 %8261, %v6972
  %v8263 = vpop.permute.xlu0 %8262
  %8265 = vset.pattern.permute.xlu0 3
  %8266 = vperm.xlu0 %8265, %v6973
  %v8267 = vpop.permute.xlu0 %8266
  %8269 = vset.pattern.permute.xlu0 3
  %8270 = vperm.xlu0 %8269, %v6974
  %v8271 = vpop.permute.xlu0 %8270
  %8273 = vset.pattern.permute.xlu0 3
  %8274 = vperm.xlu0 %8273, %v6975
  %v8275 = vpop.permute.xlu0 %8274
  %8277 = vset.pattern.permute.xlu0 3
  %8278 = vperm.xlu0 %8277, %v6976
  %v8279 = vpop.permute.xlu0 %8278
  %8281 = vset.pattern.permute.xlu0 3
  %8282 = vperm.xlu0 %8281, %v6977
  %v8283 = vpop.permute.xlu0 %8282
  %8285 = vset.pattern.permute.xlu0 3
  %8286 = vperm.xlu0 %8285, %v6978
  %v8287 = vpop.permute.xlu0 %8286
  %8289 = vset.pattern.permute.xlu0 3
  %8290 = vperm.xlu0 %8289, %v6979
  %v8291 = vpop.permute.xlu0 %8290
  %8293 = vset.pattern.permute.xlu0 3
  %8294 = vperm.xlu0 %8293, %v6980
  %v8295 = vpop.permute.xlu0 %8294
  %8297 = vset.pattern.permute.xlu0 3
  %8298 = vperm.xlu0 %8297, %v6981
  %v8299 = vpop.permute.xlu0 %8298
  %8301 = vset.pattern.permute.xlu0 3
  %8302 = vperm.xlu0 %8301, %v6982
  %v8303 = vpop.permute.xlu0 %8302
  %8305 = vset.pattern.permute.xlu0 3
  %8306 = vperm.xlu0 %8305, %v6983
  %v8307 = vpop.permute.xlu0 %8306
  %8309 = vset.pattern.permute.xlu0 3
  %8310 = vperm.xlu0 %8309, %v6984
  %v8311 = vpop.permute.xlu0 %8310
  %8313 = vset.pattern.permute.xlu0 3
  %8314 = vperm.xlu0 %8313, %v6985
  %v8315 = vpop.permute.xlu0 %8314
  %8317 = vset.pattern.permute.xlu0 3
  %8318 = vperm.xlu0 %8317, %v6986
  %v8319 = vpop.permute.xlu0 %8318
  %8321 = vset.pattern.permute.xlu0 3
  %8322 = vperm.xlu0 %8321, %v6987
  %v8323 = vpop.permute.xlu0 %8322
  %8325 = vset.pattern.permute.xlu0 3
  %8326 = vperm.xlu0 %8325, %v6988
  %v8327 = vpop.permute.xlu0 %8326
  %8329 = vset.pattern.permute.xlu0 3
  %8330 = vperm.xlu0 %8329, %v6989
  %v8331 = vpop.permute.xlu0 %8330
  %8333 = vset.pattern.permute.xlu0 3
  %8334 = vperm.xlu0 %8333, %v6990
  %v8335 = vpop.permute.xlu0 %8334
  %8337 = vset.pattern.permute.xlu0 3
  %8338 = vperm.xlu0 %8337, %v6991
  %v8339 = vpop.permute.xlu0 %8338
  %8341 = vset.pattern.permute.xlu0 3
  %8342 = vperm.xlu0 %8341, %v6992
  %v8343 = vpop.permute.xlu0 %8342
  %8345 = vset.pattern.permute.xlu0 3
  %8346 = vperm.xlu0 %8345, %v6993
  %v8347 = vpop.permute.xlu0 %8346
  %8349 = vset.pattern.permute.xlu0 3
  %8350 = vperm.xlu0 %8349, %v6994
  %v8351 = vpop.permute.xlu0 %8350
  %8353 = vset.pattern.permute.xlu0 3
  %8354 = vperm.xlu0 %8353, %v6995
  %v8355 = vpop.permute.xlu0 %8354
  %8357 = vset.pattern.permute.xlu0 3
  %8358 = vperm.xlu0 %8357, %v6996
  %v8359 = vpop.permute.xlu0 %8358
  %8361 = vset.pattern.permute.xlu0 3
  %8362 = vperm.xlu0 %8361, %v6997
  %v8363 = vpop.permute.xlu0 %8362
  %8365 = vset.pattern.permute.xlu0 3
  %8366 = vperm.xlu0 %8365, %v6998
  %v8367 = vpop.permute.xlu0 %8366
  %8369 = vset.pattern.permute.xlu0 3
  %8370 = vperm.xlu0 %8369, %v6999
  %v8371 = vpop.permute.xlu0 %8370
  %8373 = vset.pattern.permute.xlu0 3
  %8374 = vperm.xlu0 %8373, %v7000
  %v8375 = vpop.permute.xlu0 %8374
  %8377 = vset.pattern.permute.xlu0 3
  %8378 = vperm.xlu0 %8377, %v7001
  %v8379 = vpop.permute.xlu0 %8378
  %8381 = vset.pattern.permute.xlu0 3
  %8382 = vperm.xlu0 %8381, %v7002
  %v8383 = vpop.permute.xlu0 %8382
  %8385 = vset.pattern.permute.xlu0 3
  %8386 = vperm.xlu0 %8385, %v7003
  %v8387 = vpop.permute.xlu0 %8386
  %8389 = vset.pattern.permute.xlu0 3
  %8390 = vperm.xlu0 %8389, %v7004
  %v8391 = vpop.permute.xlu0 %8390
  %8393 = vset.pattern.permute.xlu0 3
  %8394 = vperm.xlu0 %8393, %v7005
  %v8395 = vpop.permute.xlu0 %8394
  %8397 = vset.pattern.permute.xlu0 3
  %8398 = vperm.xlu0 %8397, %v7006
  %v8399 = vpop.permute.xlu0 %8398
  %8401 = vset.pattern.permute.xlu0 3
  %8402 = vperm.xlu0 %8401, %v7007
  %v8403 = vpop.permute.xlu0 %8402
  %8405 = vset.pattern.permute.xlu0 3
  %8406 = vperm.xlu0 %8405, %v7008
  %v8407 = vpop.permute.xlu0 %8406
  %8409 = vset.pattern.permute.xlu0 3
  %8410 = vperm.xlu0 %8409, %v7009
  %v8411 = vpop.permute.xlu0 %8410
  %8413 = vset.pattern.permute.xlu0 3
  %8414 = vperm.xlu0 %8413, %v7010
  %v8415 = vpop.permute.xlu0 %8414
  %8417 = vset.pattern.permute.xlu0 3
  %8418 = vperm.xlu0 %8417, %v7011
  %v8419 = vpop.permute.xlu0 %8418
  %8421 = vset.pattern.permute.xlu0 3
  %8422 = vperm.xlu0 %8421, %v7012
  %v8423 = vpop.permute.xlu0 %8422
  %8425 = vset.pattern.permute.xlu0 3
  %8426 = vperm.xlu0 %8425, %v7013
  %v8427 = vpop.permute.xlu0 %8426
  %v8429 = vperm.slane %v8172, 0
  %v8430 = vmul.f32 %v8175, %v8429
  %v8431 = vmul.f32 %v8179, %v8429
  %v8432 = vmul.f32 %v8183, %v8429
  %v8433 = vmul.f32 %v8187, %v8429
  %v8434 = vmul.f32 %v8191, %v8429
  %v8435 = vmul.f32 %v8195, %v8429
  %v8436 = vmul.f32 %v8199, %v8429
  %v8437 = vmul.f32 %v8203, %v8429
  %v8438 = vmul.f32 %v8207, %v8429
  %v8439 = vmul.f32 %v8211, %v8429
  %v8440 = vmul.f32 %v8215, %v8429
  %v8441 = vmul.f32 %v8219, %v8429
  %v8442 = vmul.f32 %v8223, %v8429
  %v8443 = vmul.f32 %v8227, %v8429
  %v8444 = vmul.f32 %v8231, %v8429
  %v8445 = vmul.f32 %v8235, %v8429
  %v8446 = vmul.f32 %v8239, %v8429
  %v8447 = vmul.f32 %v8243, %v8429
  %v8448 = vmul.f32 %v8247, %v8429
  %v8449 = vmul.f32 %v8251, %v8429
  %v8450 = vmul.f32 %v8255, %v8429
  %v8451 = vmul.f32 %v8259, %v8429
  %v8452 = vmul.f32 %v8263, %v8429
  %v8453 = vmul.f32 %v8267, %v8429
  %v8454 = vmul.f32 %v8271, %v8429
  %v8455 = vmul.f32 %v8275, %v8429
  %v8456 = vmul.f32 %v8279, %v8429
  %v8457 = vmul.f32 %v8283, %v8429
  %v8458 = vmul.f32 %v8287, %v8429
  %v8459 = vmul.f32 %v8291, %v8429
  %v8460 = vmul.f32 %v8295, %v8429
  %v8461 = vmul.f32 %v8299, %v8429
  %v8462 = vmul.f32 %v8303, %v8429
  %v8463 = vmul.f32 %v8307, %v8429
  %v8464 = vmul.f32 %v8311, %v8429
  %v8465 = vmul.f32 %v8315, %v8429
  %v8466 = vmul.f32 %v8319, %v8429
  %v8467 = vmul.f32 %v8323, %v8429
  %v8468 = vmul.f32 %v8327, %v8429
  %v8469 = vmul.f32 %v8331, %v8429
  %v8470 = vmul.f32 %v8335, %v8429
  %v8471 = vmul.f32 %v8339, %v8429
  %v8472 = vmul.f32 %v8343, %v8429
  %v8473 = vmul.f32 %v8347, %v8429
  %v8474 = vmul.f32 %v8351, %v8429
  %v8475 = vmul.f32 %v8355, %v8429
  %v8476 = vmul.f32 %v8359, %v8429
  %v8477 = vmul.f32 %v8363, %v8429
  %v8478 = vmul.f32 %v8367, %v8429
  %v8479 = vmul.f32 %v8371, %v8429
  %v8480 = vmul.f32 %v8375, %v8429
  %v8481 = vmul.f32 %v8379, %v8429
  %v8482 = vmul.f32 %v8383, %v8429
  %v8483 = vmul.f32 %v8387, %v8429
  %v8484 = vmul.f32 %v8391, %v8429
  %v8485 = vmul.f32 %v8395, %v8429
  %v8486 = vmul.f32 %v8399, %v8429
  %v8487 = vmul.f32 %v8403, %v8429
  %v8488 = vmul.f32 %v8407, %v8429
  %v8489 = vmul.f32 %v8411, %v8429
  %v8490 = vmul.f32 %v8415, %v8429
  %v8491 = vmul.f32 %v8419, %v8429
  %v8492 = vmul.f32 %v8423, %v8429
  %v8493 = vmul.f32 %v8427, %v8429
  %v8494 = vadd.f32 %v8108, %v8430
  %v8495 = vadd.f32 %v8109, %v8431
  %v8496 = vadd.f32 %v8110, %v8432
  %v8497 = vadd.f32 %v8111, %v8433
  %v8498 = vadd.f32 %v8112, %v8434
  %v8499 = vadd.f32 %v8113, %v8435
  %v8500 = vadd.f32 %v8114, %v8436
  %v8501 = vadd.f32 %v8115, %v8437
  %v8502 = vadd.f32 %v8116, %v8438
  %v8503 = vadd.f32 %v8117, %v8439
  %v8504 = vadd.f32 %v8118, %v8440
  %v8505 = vadd.f32 %v8119, %v8441
  %v8506 = vadd.f32 %v8120, %v8442
  %v8507 = vadd.f32 %v8121, %v8443
  %v8508 = vadd.f32 %v8122, %v8444
  %v8509 = vadd.f32 %v8123, %v8445
  %v8510 = vadd.f32 %v8124, %v8446
  %v8511 = vadd.f32 %v8125, %v8447
  %v8512 = vadd.f32 %v8126, %v8448
  %v8513 = vadd.f32 %v8127, %v8449
  %v8514 = vadd.f32 %v8128, %v8450
  %v8515 = vadd.f32 %v8129, %v8451
  %v8516 = vadd.f32 %v8130, %v8452
  %v8517 = vadd.f32 %v8131, %v8453
  %v8518 = vadd.f32 %v8132, %v8454
  %v8519 = vadd.f32 %v8133, %v8455
  %v8520 = vadd.f32 %v8134, %v8456
  %v8521 = vadd.f32 %v8135, %v8457
  %v8522 = vadd.f32 %v8136, %v8458
  %v8523 = vadd.f32 %v8137, %v8459
  %v8524 = vadd.f32 %v8138, %v8460
  %v8525 = vadd.f32 %v8139, %v8461
  %v8526 = vadd.f32 %v8140, %v8462
  %v8527 = vadd.f32 %v8141, %v8463
  %v8528 = vadd.f32 %v8142, %v8464
  %v8529 = vadd.f32 %v8143, %v8465
  %v8530 = vadd.f32 %v8144, %v8466
  %v8531 = vadd.f32 %v8145, %v8467
  %v8532 = vadd.f32 %v8146, %v8468
  %v8533 = vadd.f32 %v8147, %v8469
  %v8534 = vadd.f32 %v8148, %v8470
  %v8535 = vadd.f32 %v8149, %v8471
  %v8536 = vadd.f32 %v8150, %v8472
  %v8537 = vadd.f32 %v8151, %v8473
  %v8538 = vadd.f32 %v8152, %v8474
  %v8539 = vadd.f32 %v8153, %v8475
  %v8540 = vadd.f32 %v8154, %v8476
  %v8541 = vadd.f32 %v8155, %v8477
  %v8542 = vadd.f32 %v8156, %v8478
  %v8543 = vadd.f32 %v8157, %v8479
  %v8544 = vadd.f32 %v8158, %v8480
  %v8545 = vadd.f32 %v8159, %v8481
  %v8546 = vadd.f32 %v8160, %v8482
  %v8547 = vadd.f32 %v8161, %v8483
  %v8548 = vadd.f32 %v8162, %v8484
  %v8549 = vadd.f32 %v8163, %v8485
  %v8550 = vadd.f32 %v8164, %v8486
  %v8551 = vadd.f32 %v8165, %v8487
  %v8552 = vadd.f32 %v8166, %v8488
  %v8553 = vadd.f32 %v8167, %v8489
  %v8554 = vadd.f32 %v8168, %v8490
  %v8555 = vadd.f32 %v8169, %v8491
  %v8556 = vadd.f32 %v8170, %v8492
  %v8557 = vadd.f32 %v8171, %v8493
  %v8558 = vmul.f32 %v2256, %v8494
  %v8559 = vmul.f32 %v2257, %v8495
  %v8560 = vmul.f32 %v2258, %v8496
  %v8561 = vmul.f32 %v2259, %v8497
  %v8562 = vmul.f32 %v2260, %v8498
  %v8563 = vmul.f32 %v2261, %v8499
  %v8564 = vmul.f32 %v2262, %v8500
  %v8565 = vmul.f32 %v2263, %v8501
  %v8566 = vmul.f32 %v2264, %v8502
  %v8567 = vmul.f32 %v2265, %v8503
  %v8568 = vmul.f32 %v2266, %v8504
  %v8569 = vmul.f32 %v2267, %v8505
  %v8570 = vmul.f32 %v2268, %v8506
  %v8571 = vmul.f32 %v2269, %v8507
  %v8572 = vmul.f32 %v2270, %v8508
  %v8573 = vmul.f32 %v2271, %v8509
  %v8574 = vmul.f32 %v2272, %v8510
  %v8575 = vmul.f32 %v2273, %v8511
  %v8576 = vmul.f32 %v2274, %v8512
  %v8577 = vmul.f32 %v2275, %v8513
  %v8578 = vmul.f32 %v2276, %v8514
  %v8579 = vmul.f32 %v2277, %v8515
  %v8580 = vmul.f32 %v2278, %v8516
  %v8581 = vmul.f32 %v2279, %v8517
  %v8582 = vmul.f32 %v2280, %v8518
  %v8583 = vmul.f32 %v2281, %v8519
  %v8584 = vmul.f32 %v2282, %v8520
  %v8585 = vmul.f32 %v2283, %v8521
  %v8586 = vmul.f32 %v2284, %v8522
  %v8587 = vmul.f32 %v2285, %v8523
  %v8588 = vmul.f32 %v2286, %v8524
  %v8589 = vmul.f32 %v2287, %v8525
  %v8590 = vmul.f32 %v2288, %v8526
  %v8591 = vmul.f32 %v2289, %v8527
  %v8592 = vmul.f32 %v2290, %v8528
  %v8593 = vmul.f32 %v2291, %v8529
  %v8594 = vmul.f32 %v2292, %v8530
  %v8595 = vmul.f32 %v2293, %v8531
  %v8596 = vmul.f32 %v2294, %v8532
  %v8597 = vmul.f32 %v2295, %v8533
  %v8598 = vmul.f32 %v2296, %v8534
  %v8599 = vmul.f32 %v2297, %v8535
  %v8600 = vmul.f32 %v2298, %v8536
  %v8601 = vmul.f32 %v2299, %v8537
  %v8602 = vmul.f32 %v2300, %v8538
  %v8603 = vmul.f32 %v2301, %v8539
  %v8604 = vmul.f32 %v2302, %v8540
  %v8605 = vmul.f32 %v2303, %v8541
  %v8606 = vmul.f32 %v2304, %v8542
  %v8607 = vmul.f32 %v2305, %v8543
  %v8608 = vmul.f32 %v2306, %v8544
  %v8609 = vmul.f32 %v2307, %v8545
  %v8610 = vmul.f32 %v2308, %v8546
  %v8611 = vmul.f32 %v2309, %v8547
  %v8612 = vmul.f32 %v2310, %v8548
  %v8613 = vmul.f32 %v2311, %v8549
  %v8614 = vmul.f32 %v2312, %v8550
  %v8615 = vmul.f32 %v2313, %v8551
  %v8616 = vmul.f32 %v2314, %v8552
  %v8617 = vmul.f32 %v2315, %v8553
  %v8618 = vmul.f32 %v2316, %v8554
  %v8619 = vmul.f32 %v2317, %v8555
  %v8620 = vmul.f32 %v2318, %v8556
  %v8621 = vmul.f32 %v2319, %v8557
  %v8622 = vsel %vm1534, %v8558, 0.0
  %v8623 = vrot.slane %v8622, 4
  %v8624 = vadd.f32 %v8622, %v8623
  %v8625 = vrot.slane %v8624, 2
  %v8626 = vadd.f32 %v8624, %v8625
  %v8627 = vrot.slane %v8626, 1
  %v8628 = vadd.f32 %v8626, %v8627
  %v8629 = vsel %vm1534, %v8559, 0.0
  %v8630 = vrot.slane %v8629, 4
  %v8631 = vadd.f32 %v8629, %v8630
  %v8632 = vrot.slane %v8631, 2
  %v8633 = vadd.f32 %v8631, %v8632
  %v8634 = vrot.slane %v8633, 1
  %v8635 = vadd.f32 %v8633, %v8634
  %v8636 = vsel %vm1534, %v8560, 0.0
  %v8637 = vrot.slane %v8636, 4
  %v8638 = vadd.f32 %v8636, %v8637
  %v8639 = vrot.slane %v8638, 2
  %v8640 = vadd.f32 %v8638, %v8639
  %v8641 = vrot.slane %v8640, 1
  %v8642 = vadd.f32 %v8640, %v8641
  %v8643 = vsel %vm1534, %v8561, 0.0
  %v8644 = vrot.slane %v8643, 4
  %v8645 = vadd.f32 %v8643, %v8644
  %v8646 = vrot.slane %v8645, 2
  %v8647 = vadd.f32 %v8645, %v8646
  %v8648 = vrot.slane %v8647, 1
  %v8649 = vadd.f32 %v8647, %v8648
  %v8650 = vsel %vm1534, %v8562, 0.0
  %v8651 = vrot.slane %v8650, 4
  %v8652 = vadd.f32 %v8650, %v8651
  %v8653 = vrot.slane %v8652, 2
  %v8654 = vadd.f32 %v8652, %v8653
  %v8655 = vrot.slane %v8654, 1
  %v8656 = vadd.f32 %v8654, %v8655
  %v8657 = vsel %vm1534, %v8563, 0.0
  %v8658 = vrot.slane %v8657, 4
  %v8659 = vadd.f32 %v8657, %v8658
  %v8660 = vrot.slane %v8659, 2
  %v8661 = vadd.f32 %v8659, %v8660
  %v8662 = vrot.slane %v8661, 1
  %v8663 = vadd.f32 %v8661, %v8662
  %v8664 = vsel %vm1534, %v8564, 0.0
  %v8665 = vrot.slane %v8664, 4
  %v8666 = vadd.f32 %v8664, %v8665
  %v8667 = vrot.slane %v8666, 2
  %v8668 = vadd.f32 %v8666, %v8667
  %v8669 = vrot.slane %v8668, 1
  %v8670 = vadd.f32 %v8668, %v8669
  %v8671 = vsel %vm1534, %v8565, 0.0
  %v8672 = vrot.slane %v8671, 4
  %v8673 = vadd.f32 %v8671, %v8672
  %v8674 = vrot.slane %v8673, 2
  %v8675 = vadd.f32 %v8673, %v8674
  %v8676 = vrot.slane %v8675, 1
  %v8677 = vadd.f32 %v8675, %v8676
  %v8678 = vsel %vm1534, %v8566, 0.0
  %v8679 = vrot.slane %v8678, 4
  %v8680 = vadd.f32 %v8678, %v8679
  %v8681 = vrot.slane %v8680, 2
  %v8682 = vadd.f32 %v8680, %v8681
  %v8683 = vrot.slane %v8682, 1
  %v8684 = vadd.f32 %v8682, %v8683
  %v8685 = vsel %vm1534, %v8567, 0.0
  %v8686 = vrot.slane %v8685, 4
  %v8687 = vadd.f32 %v8685, %v8686
  %v8688 = vrot.slane %v8687, 2
  %v8689 = vadd.f32 %v8687, %v8688
  %v8690 = vrot.slane %v8689, 1
  %v8691 = vadd.f32 %v8689, %v8690
  %v8692 = vsel %vm1534, %v8568, 0.0
  %v8693 = vrot.slane %v8692, 4
  %v8694 = vadd.f32 %v8692, %v8693
  %v8695 = vrot.slane %v8694, 2
  %v8696 = vadd.f32 %v8694, %v8695
  %v8697 = vrot.slane %v8696, 1
  %v8698 = vadd.f32 %v8696, %v8697
  %v8699 = vsel %vm1534, %v8569, 0.0
  %v8700 = vrot.slane %v8699, 4
  %v8701 = vadd.f32 %v8699, %v8700
  %v8702 = vrot.slane %v8701, 2
  %v8703 = vadd.f32 %v8701, %v8702
  %v8704 = vrot.slane %v8703, 1
  %v8705 = vadd.f32 %v8703, %v8704
  %v8706 = vsel %vm1534, %v8570, 0.0
  %v8707 = vrot.slane %v8706, 4
  %v8708 = vadd.f32 %v8706, %v8707
  %v8709 = vrot.slane %v8708, 2
  %v8710 = vadd.f32 %v8708, %v8709
  %v8711 = vrot.slane %v8710, 1
  %v8712 = vadd.f32 %v8710, %v8711
  %v8713 = vsel %vm1534, %v8571, 0.0
  %v8714 = vrot.slane %v8713, 4
  %v8715 = vadd.f32 %v8713, %v8714
  %v8716 = vrot.slane %v8715, 2
  %v8717 = vadd.f32 %v8715, %v8716
  %v8718 = vrot.slane %v8717, 1
  %v8719 = vadd.f32 %v8717, %v8718
  %v8720 = vsel %vm1534, %v8572, 0.0
  %v8721 = vrot.slane %v8720, 4
  %v8722 = vadd.f32 %v8720, %v8721
  %v8723 = vrot.slane %v8722, 2
  %v8724 = vadd.f32 %v8722, %v8723
  %v8725 = vrot.slane %v8724, 1
  %v8726 = vadd.f32 %v8724, %v8725
  %v8727 = vsel %vm1534, %v8573, 0.0
  %v8728 = vrot.slane %v8727, 4
  %v8729 = vadd.f32 %v8727, %v8728
  %v8730 = vrot.slane %v8729, 2
  %v8731 = vadd.f32 %v8729, %v8730
  %v8732 = vrot.slane %v8731, 1
  %v8733 = vadd.f32 %v8731, %v8732
  %v8734 = vsel %vm1534, %v8574, 0.0
  %v8735 = vrot.slane %v8734, 4
  %v8736 = vadd.f32 %v8734, %v8735
  %v8737 = vrot.slane %v8736, 2
  %v8738 = vadd.f32 %v8736, %v8737
  %v8739 = vrot.slane %v8738, 1
  %v8740 = vadd.f32 %v8738, %v8739
  %v8741 = vsel %vm1534, %v8575, 0.0
  %v8742 = vrot.slane %v8741, 4
  %v8743 = vadd.f32 %v8741, %v8742
  %v8744 = vrot.slane %v8743, 2
  %v8745 = vadd.f32 %v8743, %v8744
  %v8746 = vrot.slane %v8745, 1
  %v8747 = vadd.f32 %v8745, %v8746
  %v8748 = vsel %vm1534, %v8576, 0.0
  %v8749 = vrot.slane %v8748, 4
  %v8750 = vadd.f32 %v8748, %v8749
  %v8751 = vrot.slane %v8750, 2
  %v8752 = vadd.f32 %v8750, %v8751
  %v8753 = vrot.slane %v8752, 1
  %v8754 = vadd.f32 %v8752, %v8753
  %v8755 = vsel %vm1534, %v8577, 0.0
  %v8756 = vrot.slane %v8755, 4
  %v8757 = vadd.f32 %v8755, %v8756
  %v8758 = vrot.slane %v8757, 2
  %v8759 = vadd.f32 %v8757, %v8758
  %v8760 = vrot.slane %v8759, 1
  %v8761 = vadd.f32 %v8759, %v8760
  %v8762 = vsel %vm1534, %v8578, 0.0
  %v8763 = vrot.slane %v8762, 4
  %v8764 = vadd.f32 %v8762, %v8763
  %v8765 = vrot.slane %v8764, 2
  %v8766 = vadd.f32 %v8764, %v8765
  %v8767 = vrot.slane %v8766, 1
  %v8768 = vadd.f32 %v8766, %v8767
  %v8769 = vsel %vm1534, %v8579, 0.0
  %v8770 = vrot.slane %v8769, 4
  %v8771 = vadd.f32 %v8769, %v8770
  %v8772 = vrot.slane %v8771, 2
  %v8773 = vadd.f32 %v8771, %v8772
  %v8774 = vrot.slane %v8773, 1
  %v8775 = vadd.f32 %v8773, %v8774
  %v8776 = vsel %vm1534, %v8580, 0.0
  %v8777 = vrot.slane %v8776, 4
  %v8778 = vadd.f32 %v8776, %v8777
  %v8779 = vrot.slane %v8778, 2
  %v8780 = vadd.f32 %v8778, %v8779
  %v8781 = vrot.slane %v8780, 1
  %v8782 = vadd.f32 %v8780, %v8781
  %v8783 = vsel %vm1534, %v8581, 0.0
  %v8784 = vrot.slane %v8783, 4
  %v8785 = vadd.f32 %v8783, %v8784
  %v8786 = vrot.slane %v8785, 2
  %v8787 = vadd.f32 %v8785, %v8786
  %v8788 = vrot.slane %v8787, 1
  %v8789 = vadd.f32 %v8787, %v8788
  %v8790 = vsel %vm1534, %v8582, 0.0
  %v8791 = vrot.slane %v8790, 4
  %v8792 = vadd.f32 %v8790, %v8791
  %v8793 = vrot.slane %v8792, 2
  %v8794 = vadd.f32 %v8792, %v8793
  %v8795 = vrot.slane %v8794, 1
  %v8796 = vadd.f32 %v8794, %v8795
  %v8797 = vsel %vm1534, %v8583, 0.0
  %v8798 = vrot.slane %v8797, 4
  %v8799 = vadd.f32 %v8797, %v8798
  %v8800 = vrot.slane %v8799, 2
  %v8801 = vadd.f32 %v8799, %v8800
  %v8802 = vrot.slane %v8801, 1
  %v8803 = vadd.f32 %v8801, %v8802
  %v8804 = vsel %vm1534, %v8584, 0.0
  %v8805 = vrot.slane %v8804, 4
  %v8806 = vadd.f32 %v8804, %v8805
  %v8807 = vrot.slane %v8806, 2
  %v8808 = vadd.f32 %v8806, %v8807
  %v8809 = vrot.slane %v8808, 1
  %v8810 = vadd.f32 %v8808, %v8809
  %v8811 = vsel %vm1534, %v8585, 0.0
  %v8812 = vrot.slane %v8811, 4
  %v8813 = vadd.f32 %v8811, %v8812
  %v8814 = vrot.slane %v8813, 2
  %v8815 = vadd.f32 %v8813, %v8814
  %v8816 = vrot.slane %v8815, 1
  %v8817 = vadd.f32 %v8815, %v8816
  %v8818 = vsel %vm1534, %v8586, 0.0
  %v8819 = vrot.slane %v8818, 4
  %v8820 = vadd.f32 %v8818, %v8819
  %v8821 = vrot.slane %v8820, 2
  %v8822 = vadd.f32 %v8820, %v8821
  %v8823 = vrot.slane %v8822, 1
  %v8824 = vadd.f32 %v8822, %v8823
  %v8825 = vsel %vm1534, %v8587, 0.0
  %v8826 = vrot.slane %v8825, 4
  %v8827 = vadd.f32 %v8825, %v8826
  %v8828 = vrot.slane %v8827, 2
  %v8829 = vadd.f32 %v8827, %v8828
  %v8830 = vrot.slane %v8829, 1
  %v8831 = vadd.f32 %v8829, %v8830
  %v8832 = vsel %vm1534, %v8588, 0.0
  %v8833 = vrot.slane %v8832, 4
  %v8834 = vadd.f32 %v8832, %v8833
  %v8835 = vrot.slane %v8834, 2
  %v8836 = vadd.f32 %v8834, %v8835
  %v8837 = vrot.slane %v8836, 1
  %v8838 = vadd.f32 %v8836, %v8837
  %v8839 = vsel %vm1534, %v8589, 0.0
  %v8840 = vrot.slane %v8839, 4
  %v8841 = vadd.f32 %v8839, %v8840
  %v8842 = vrot.slane %v8841, 2
  %v8843 = vadd.f32 %v8841, %v8842
  %v8844 = vrot.slane %v8843, 1
  %v8845 = vadd.f32 %v8843, %v8844
  %v8846 = vsel %vm1534, %v8590, 0.0
  %v8847 = vrot.slane %v8846, 4
  %v8848 = vadd.f32 %v8846, %v8847
  %v8849 = vrot.slane %v8848, 2
  %v8850 = vadd.f32 %v8848, %v8849
  %v8851 = vrot.slane %v8850, 1
  %v8852 = vadd.f32 %v8850, %v8851
  %v8853 = vsel %vm1534, %v8591, 0.0
  %v8854 = vrot.slane %v8853, 4
  %v8855 = vadd.f32 %v8853, %v8854
  %v8856 = vrot.slane %v8855, 2
  %v8857 = vadd.f32 %v8855, %v8856
  %v8858 = vrot.slane %v8857, 1
  %v8859 = vadd.f32 %v8857, %v8858
  %v8860 = vsel %vm1534, %v8592, 0.0
  %v8861 = vrot.slane %v8860, 4
  %v8862 = vadd.f32 %v8860, %v8861
  %v8863 = vrot.slane %v8862, 2
  %v8864 = vadd.f32 %v8862, %v8863
  %v8865 = vrot.slane %v8864, 1
  %v8866 = vadd.f32 %v8864, %v8865
  %v8867 = vsel %vm1534, %v8593, 0.0
  %v8868 = vrot.slane %v8867, 4
  %v8869 = vadd.f32 %v8867, %v8868
  %v8870 = vrot.slane %v8869, 2
  %v8871 = vadd.f32 %v8869, %v8870
  %v8872 = vrot.slane %v8871, 1
  %v8873 = vadd.f32 %v8871, %v8872
  %v8874 = vsel %vm1534, %v8594, 0.0
  %v8875 = vrot.slane %v8874, 4
  %v8876 = vadd.f32 %v8874, %v8875
  %v8877 = vrot.slane %v8876, 2
  %v8878 = vadd.f32 %v8876, %v8877
  %v8879 = vrot.slane %v8878, 1
  %v8880 = vadd.f32 %v8878, %v8879
  %v8881 = vsel %vm1534, %v8595, 0.0
  %v8882 = vrot.slane %v8881, 4
  %v8883 = vadd.f32 %v8881, %v8882
  %v8884 = vrot.slane %v8883, 2
  %v8885 = vadd.f32 %v8883, %v8884
  %v8886 = vrot.slane %v8885, 1
  %v8887 = vadd.f32 %v8885, %v8886
  %v8888 = vsel %vm1534, %v8596, 0.0
  %v8889 = vrot.slane %v8888, 4
  %v8890 = vadd.f32 %v8888, %v8889
  %v8891 = vrot.slane %v8890, 2
  %v8892 = vadd.f32 %v8890, %v8891
  %v8893 = vrot.slane %v8892, 1
  %v8894 = vadd.f32 %v8892, %v8893
  %v8895 = vsel %vm1534, %v8597, 0.0
  %v8896 = vrot.slane %v8895, 4
  %v8897 = vadd.f32 %v8895, %v8896
  %v8898 = vrot.slane %v8897, 2
  %v8899 = vadd.f32 %v8897, %v8898
  %v8900 = vrot.slane %v8899, 1
  %v8901 = vadd.f32 %v8899, %v8900
  %v8902 = vsel %vm1534, %v8598, 0.0
  %v8903 = vrot.slane %v8902, 4
  %v8904 = vadd.f32 %v8902, %v8903
  %v8905 = vrot.slane %v8904, 2
  %v8906 = vadd.f32 %v8904, %v8905
  %v8907 = vrot.slane %v8906, 1
  %v8908 = vadd.f32 %v8906, %v8907
  %v8909 = vsel %vm1534, %v8599, 0.0
  %v8910 = vrot.slane %v8909, 4
  %v8911 = vadd.f32 %v8909, %v8910
  %v8912 = vrot.slane %v8911, 2
  %v8913 = vadd.f32 %v8911, %v8912
  %v8914 = vrot.slane %v8913, 1
  %v8915 = vadd.f32 %v8913, %v8914
  %v8916 = vsel %vm1534, %v8600, 0.0
  %v8917 = vrot.slane %v8916, 4
  %v8918 = vadd.f32 %v8916, %v8917
  %v8919 = vrot.slane %v8918, 2
  %v8920 = vadd.f32 %v8918, %v8919
  %v8921 = vrot.slane %v8920, 1
  %v8922 = vadd.f32 %v8920, %v8921
  %v8923 = vsel %vm1534, %v8601, 0.0
  %v8924 = vrot.slane %v8923, 4
  %v8925 = vadd.f32 %v8923, %v8924
  %v8926 = vrot.slane %v8925, 2
  %v8927 = vadd.f32 %v8925, %v8926
  %v8928 = vrot.slane %v8927, 1
  %v8929 = vadd.f32 %v8927, %v8928
  %v8930 = vsel %vm1534, %v8602, 0.0
  %v8931 = vrot.slane %v8930, 4
  %v8932 = vadd.f32 %v8930, %v8931
  %v8933 = vrot.slane %v8932, 2
  %v8934 = vadd.f32 %v8932, %v8933
  %v8935 = vrot.slane %v8934, 1
  %v8936 = vadd.f32 %v8934, %v8935
  %v8937 = vsel %vm1534, %v8603, 0.0
  %v8938 = vrot.slane %v8937, 4
  %v8939 = vadd.f32 %v8937, %v8938
  %v8940 = vrot.slane %v8939, 2
  %v8941 = vadd.f32 %v8939, %v8940
  %v8942 = vrot.slane %v8941, 1
  %v8943 = vadd.f32 %v8941, %v8942
  %v8944 = vsel %vm1534, %v8604, 0.0
  %v8945 = vrot.slane %v8944, 4
  %v8946 = vadd.f32 %v8944, %v8945
  %v8947 = vrot.slane %v8946, 2
  %v8948 = vadd.f32 %v8946, %v8947
  %v8949 = vrot.slane %v8948, 1
  %v8950 = vadd.f32 %v8948, %v8949
  %v8951 = vsel %vm1534, %v8605, 0.0
  %v8952 = vrot.slane %v8951, 4
  %v8953 = vadd.f32 %v8951, %v8952
  %v8954 = vrot.slane %v8953, 2
  %v8955 = vadd.f32 %v8953, %v8954
  %v8956 = vrot.slane %v8955, 1
  %v8957 = vadd.f32 %v8955, %v8956
  %v8958 = vsel %vm1534, %v8606, 0.0
  %v8959 = vrot.slane %v8958, 4
  %v8960 = vadd.f32 %v8958, %v8959
  %v8961 = vrot.slane %v8960, 2
  %v8962 = vadd.f32 %v8960, %v8961
  %v8963 = vrot.slane %v8962, 1
  %v8964 = vadd.f32 %v8962, %v8963
  %v8965 = vsel %vm1534, %v8607, 0.0
  %v8966 = vrot.slane %v8965, 4
  %v8967 = vadd.f32 %v8965, %v8966
  %v8968 = vrot.slane %v8967, 2
  %v8969 = vadd.f32 %v8967, %v8968
  %v8970 = vrot.slane %v8969, 1
  %v8971 = vadd.f32 %v8969, %v8970
  %v8972 = vsel %vm1534, %v8608, 0.0
  %v8973 = vrot.slane %v8972, 4
  %v8974 = vadd.f32 %v8972, %v8973
  %v8975 = vrot.slane %v8974, 2
  %v8976 = vadd.f32 %v8974, %v8975
  %v8977 = vrot.slane %v8976, 1
  %v8978 = vadd.f32 %v8976, %v8977
  %v8979 = vsel %vm1534, %v8609, 0.0
  %v8980 = vrot.slane %v8979, 4
  %v8981 = vadd.f32 %v8979, %v8980
  %v8982 = vrot.slane %v8981, 2
  %v8983 = vadd.f32 %v8981, %v8982
  %v8984 = vrot.slane %v8983, 1
  %v8985 = vadd.f32 %v8983, %v8984
  %v8986 = vsel %vm1534, %v8610, 0.0
  %v8987 = vrot.slane %v8986, 4
  %v8988 = vadd.f32 %v8986, %v8987
  %v8989 = vrot.slane %v8988, 2
  %v8990 = vadd.f32 %v8988, %v8989
  %v8991 = vrot.slane %v8990, 1
  %v8992 = vadd.f32 %v8990, %v8991
  %v8993 = vsel %vm1534, %v8611, 0.0
  %v8994 = vrot.slane %v8993, 4
  %v8995 = vadd.f32 %v8993, %v8994
  %v8996 = vrot.slane %v8995, 2
  %v8997 = vadd.f32 %v8995, %v8996
  %v8998 = vrot.slane %v8997, 1
  %v8999 = vadd.f32 %v8997, %v8998
  %v9000 = vsel %vm1534, %v8612, 0.0
  %v9001 = vrot.slane %v9000, 4
  %v9002 = vadd.f32 %v9000, %v9001
  %v9003 = vrot.slane %v9002, 2
  %v9004 = vadd.f32 %v9002, %v9003
  %v9005 = vrot.slane %v9004, 1
  %v9006 = vadd.f32 %v9004, %v9005
  %v9007 = vsel %vm1534, %v8613, 0.0
  %v9008 = vrot.slane %v9007, 4
  %v9009 = vadd.f32 %v9007, %v9008
  %v9010 = vrot.slane %v9009, 2
  %v9011 = vadd.f32 %v9009, %v9010
  %v9012 = vrot.slane %v9011, 1
  %v9013 = vadd.f32 %v9011, %v9012
  %v9014 = vsel %vm1534, %v8614, 0.0
  %v9015 = vrot.slane %v9014, 4
  %v9016 = vadd.f32 %v9014, %v9015
  %v9017 = vrot.slane %v9016, 2
  %v9018 = vadd.f32 %v9016, %v9017
  %v9019 = vrot.slane %v9018, 1
  %v9020 = vadd.f32 %v9018, %v9019
  %v9021 = vsel %vm1534, %v8615, 0.0
  %v9022 = vrot.slane %v9021, 4
  %v9023 = vadd.f32 %v9021, %v9022
  %v9024 = vrot.slane %v9023, 2
  %v9025 = vadd.f32 %v9023, %v9024
  %v9026 = vrot.slane %v9025, 1
  %v9027 = vadd.f32 %v9025, %v9026
  %v9028 = vsel %vm1534, %v8616, 0.0
  %v9029 = vrot.slane %v9028, 4
  %v9030 = vadd.f32 %v9028, %v9029
  %v9031 = vrot.slane %v9030, 2
  %v9032 = vadd.f32 %v9030, %v9031
  %v9033 = vrot.slane %v9032, 1
  %v9034 = vadd.f32 %v9032, %v9033
  %v9035 = vsel %vm1534, %v8617, 0.0
  %v9036 = vrot.slane %v9035, 4
  %v9037 = vadd.f32 %v9035, %v9036
  %v9038 = vrot.slane %v9037, 2
  %v9039 = vadd.f32 %v9037, %v9038
  %v9040 = vrot.slane %v9039, 1
  %v9041 = vadd.f32 %v9039, %v9040
  %v9042 = vsel %vm1534, %v8618, 0.0
  %v9043 = vrot.slane %v9042, 4
  %v9044 = vadd.f32 %v9042, %v9043
  %v9045 = vrot.slane %v9044, 2
  %v9046 = vadd.f32 %v9044, %v9045
  %v9047 = vrot.slane %v9046, 1
  %v9048 = vadd.f32 %v9046, %v9047
  %v9049 = vsel %vm1534, %v8619, 0.0
  %v9050 = vrot.slane %v9049, 4
  %v9051 = vadd.f32 %v9049, %v9050
  %v9052 = vrot.slane %v9051, 2
  %v9053 = vadd.f32 %v9051, %v9052
  %v9054 = vrot.slane %v9053, 1
  %v9055 = vadd.f32 %v9053, %v9054
  %v9056 = vsel %vm1534, %v8620, 0.0
  %v9057 = vrot.slane %v9056, 4
  %v9058 = vadd.f32 %v9056, %v9057
  %v9059 = vrot.slane %v9058, 2
  %v9060 = vadd.f32 %v9058, %v9059
  %v9061 = vrot.slane %v9060, 1
  %v9062 = vadd.f32 %v9060, %v9061
  %v9063 = vsel %vm1534, %v8621, 0.0
  %v9064 = vrot.slane %v9063, 4
  %v9065 = vadd.f32 %v9063, %v9064
  %v9066 = vrot.slane %v9065, 2
  %v9067 = vadd.f32 %v9065, %v9066
  %v9068 = vrot.slane %v9067, 1
  %v9069 = vadd.f32 %v9067, %v9068
  %v9070 = vld [vmem:[%s16] sm:$0x1]
  %v9072 = vperm.slane %v9070, 0
  %v9074 = vmul.f32 %v8628, %v9072
  %v9075 = vmul.f32 %v8635, %v9072
  %v9076 = vmul.f32 %v8642, %v9072
  %v9077 = vmul.f32 %v8649, %v9072
  %v9078 = vmul.f32 %v8656, %v9072
  %v9079 = vmul.f32 %v8663, %v9072
  %v9080 = vmul.f32 %v8670, %v9072
  %v9081 = vmul.f32 %v8677, %v9072
  %v9082 = vmul.f32 %v8684, %v9072
  %v9083 = vmul.f32 %v8691, %v9072
  %v9084 = vmul.f32 %v8698, %v9072
  %v9085 = vmul.f32 %v8705, %v9072
  %v9086 = vmul.f32 %v8712, %v9072
  %v9087 = vmul.f32 %v8719, %v9072
  %v9088 = vmul.f32 %v8726, %v9072
  %v9089 = vmul.f32 %v8733, %v9072
  %v9090 = vmul.f32 %v8740, %v9072
  %v9091 = vmul.f32 %v8747, %v9072
  %v9092 = vmul.f32 %v8754, %v9072
  %v9093 = vmul.f32 %v8761, %v9072
  %v9094 = vmul.f32 %v8768, %v9072
  %v9095 = vmul.f32 %v8775, %v9072
  %v9096 = vmul.f32 %v8782, %v9072
  %v9097 = vmul.f32 %v8789, %v9072
  %v9098 = vmul.f32 %v8796, %v9072
  %v9099 = vmul.f32 %v8803, %v9072
  %v9100 = vmul.f32 %v8810, %v9072
  %v9101 = vmul.f32 %v8817, %v9072
  %v9102 = vmul.f32 %v8824, %v9072
  %v9103 = vmul.f32 %v8831, %v9072
  %v9104 = vmul.f32 %v8838, %v9072
  %v9105 = vmul.f32 %v8845, %v9072
  %v9106 = vmul.f32 %v8852, %v9072
  %v9107 = vmul.f32 %v8859, %v9072
  %v9108 = vmul.f32 %v8866, %v9072
  %v9109 = vmul.f32 %v8873, %v9072
  %v9110 = vmul.f32 %v8880, %v9072
  %v9111 = vmul.f32 %v8887, %v9072
  %v9112 = vmul.f32 %v8894, %v9072
  %v9113 = vmul.f32 %v8901, %v9072
  %v9114 = vmul.f32 %v8908, %v9072
  %v9115 = vmul.f32 %v8915, %v9072
  %v9116 = vmul.f32 %v8922, %v9072
  %v9117 = vmul.f32 %v8929, %v9072
  %v9118 = vmul.f32 %v8936, %v9072
  %v9119 = vmul.f32 %v8943, %v9072
  %v9120 = vmul.f32 %v8950, %v9072
  %v9121 = vmul.f32 %v8957, %v9072
  %v9122 = vmul.f32 %v8964, %v9072
  %v9123 = vmul.f32 %v8971, %v9072
  %v9124 = vmul.f32 %v8978, %v9072
  %v9125 = vmul.f32 %v8985, %v9072
  %v9126 = vmul.f32 %v8992, %v9072
  %v9127 = vmul.f32 %v8999, %v9072
  %v9128 = vmul.f32 %v9006, %v9072
  %v9129 = vmul.f32 %v9013, %v9072
  %v9130 = vmul.f32 %v9020, %v9072
  %v9131 = vmul.f32 %v9027, %v9072
  %v9132 = vmul.f32 %v9034, %v9072
  %v9133 = vmul.f32 %v9041, %v9072
  %v9134 = vmul.f32 %v9048, %v9072
  %v9135 = vmul.f32 %v9055, %v9072
  %v9136 = vmul.f32 %v9062, %v9072
  %v9137 = vmul.f32 %v9069, %v9072
  %v9138 = vld [vmem:[%s17] sm:$0x1]
  %v9140 = vperm.slane %v9138, 0
  %v9142 = vadd.f32 %v9074, %v9140
  %v9143 = vadd.f32 %v9075, %v9140
  %v9144 = vadd.f32 %v9076, %v9140
  %v9145 = vadd.f32 %v9077, %v9140
  %v9146 = vadd.f32 %v9078, %v9140
  %v9147 = vadd.f32 %v9079, %v9140
  %v9148 = vadd.f32 %v9080, %v9140
  %v9149 = vadd.f32 %v9081, %v9140
  %v9150 = vadd.f32 %v9082, %v9140
  %v9151 = vadd.f32 %v9083, %v9140
  %v9152 = vadd.f32 %v9084, %v9140
  %v9153 = vadd.f32 %v9085, %v9140
  %v9154 = vadd.f32 %v9086, %v9140
  %v9155 = vadd.f32 %v9087, %v9140
  %v9156 = vadd.f32 %v9088, %v9140
  %v9157 = vadd.f32 %v9089, %v9140
  %v9158 = vadd.f32 %v9090, %v9140
  %v9159 = vadd.f32 %v9091, %v9140
  %v9160 = vadd.f32 %v9092, %v9140
  %v9161 = vadd.f32 %v9093, %v9140
  %v9162 = vadd.f32 %v9094, %v9140
  %v9163 = vadd.f32 %v9095, %v9140
  %v9164 = vadd.f32 %v9096, %v9140
  %v9165 = vadd.f32 %v9097, %v9140
  %v9166 = vadd.f32 %v9098, %v9140
  %v9167 = vadd.f32 %v9099, %v9140
  %v9168 = vadd.f32 %v9100, %v9140
  %v9169 = vadd.f32 %v9101, %v9140
  %v9170 = vadd.f32 %v9102, %v9140
  %v9171 = vadd.f32 %v9103, %v9140
  %v9172 = vadd.f32 %v9104, %v9140
  %v9173 = vadd.f32 %v9105, %v9140
  %v9174 = vadd.f32 %v9106, %v9140
  %v9175 = vadd.f32 %v9107, %v9140
  %v9176 = vadd.f32 %v9108, %v9140
  %v9177 = vadd.f32 %v9109, %v9140
  %v9178 = vadd.f32 %v9110, %v9140
  %v9179 = vadd.f32 %v9111, %v9140
  %v9180 = vadd.f32 %v9112, %v9140
  %v9181 = vadd.f32 %v9113, %v9140
  %v9182 = vadd.f32 %v9114, %v9140
  %v9183 = vadd.f32 %v9115, %v9140
  %v9184 = vadd.f32 %v9116, %v9140
  %v9185 = vadd.f32 %v9117, %v9140
  %v9186 = vadd.f32 %v9118, %v9140
  %v9187 = vadd.f32 %v9119, %v9140
  %v9188 = vadd.f32 %v9120, %v9140
  %v9189 = vadd.f32 %v9121, %v9140
  %v9190 = vadd.f32 %v9122, %v9140
  %v9191 = vadd.f32 %v9123, %v9140
  %v9192 = vadd.f32 %v9124, %v9140
  %v9193 = vadd.f32 %v9125, %v9140
  %v9194 = vadd.f32 %v9126, %v9140
  %v9195 = vadd.f32 %v9127, %v9140
  %v9196 = vadd.f32 %v9128, %v9140
  %v9197 = vadd.f32 %v9129, %v9140
  %v9198 = vadd.f32 %v9130, %v9140
  %v9199 = vadd.f32 %v9131, %v9140
  %v9200 = vadd.f32 %v9132, %v9140
  %v9201 = vadd.f32 %v9133, %v9140
  %v9202 = vadd.f32 %v9134, %v9140
  %v9203 = vadd.f32 %v9135, %v9140
  %v9204 = vadd.f32 %v9136, %v9140
  %v9205 = vadd.f32 %v9137, %v9140
  %v9206 = vmax.f32 %v9142, 0.0
  %v9207 = vmax.f32 %v9143, 0.0
  %v9208 = vmax.f32 %v9144, 0.0
  %v9209 = vmax.f32 %v9145, 0.0
  %v9210 = vmax.f32 %v9146, 0.0
  %v9211 = vmax.f32 %v9147, 0.0
  %v9212 = vmax.f32 %v9148, 0.0
  %v9213 = vmax.f32 %v9149, 0.0
  %v9214 = vmax.f32 %v9150, 0.0
  %v9215 = vmax.f32 %v9151, 0.0
  %v9216 = vmax.f32 %v9152, 0.0
  %v9217 = vmax.f32 %v9153, 0.0
  %v9218 = vmax.f32 %v9154, 0.0
  %v9219 = vmax.f32 %v9155, 0.0
  %v9220 = vmax.f32 %v9156, 0.0
  %v9221 = vmax.f32 %v9157, 0.0
  %v9222 = vmax.f32 %v9158, 0.0
  %v9223 = vmax.f32 %v9159, 0.0
  %v9224 = vmax.f32 %v9160, 0.0
  %v9225 = vmax.f32 %v9161, 0.0
  %v9226 = vmax.f32 %v9162, 0.0
  %v9227 = vmax.f32 %v9163, 0.0
  %v9228 = vmax.f32 %v9164, 0.0
  %v9229 = vmax.f32 %v9165, 0.0
  %v9230 = vmax.f32 %v9166, 0.0
  %v9231 = vmax.f32 %v9167, 0.0
  %v9232 = vmax.f32 %v9168, 0.0
  %v9233 = vmax.f32 %v9169, 0.0
  %v9234 = vmax.f32 %v9170, 0.0
  %v9235 = vmax.f32 %v9171, 0.0
  %v9236 = vmax.f32 %v9172, 0.0
  %v9237 = vmax.f32 %v9173, 0.0
  %v9238 = vmax.f32 %v9174, 0.0
  %v9239 = vmax.f32 %v9175, 0.0
  %v9240 = vmax.f32 %v9176, 0.0
  %v9241 = vmax.f32 %v9177, 0.0
  %v9242 = vmax.f32 %v9178, 0.0
  %v9243 = vmax.f32 %v9179, 0.0
  %v9244 = vmax.f32 %v9180, 0.0
  %v9245 = vmax.f32 %v9181, 0.0
  %v9246 = vmax.f32 %v9182, 0.0
  %v9247 = vmax.f32 %v9183, 0.0
  %v9248 = vmax.f32 %v9184, 0.0
  %v9249 = vmax.f32 %v9185, 0.0
  %v9250 = vmax.f32 %v9186, 0.0
  %v9251 = vmax.f32 %v9187, 0.0
  %v9252 = vmax.f32 %v9188, 0.0
  %v9253 = vmax.f32 %v9189, 0.0
  %v9254 = vmax.f32 %v9190, 0.0
  %v9255 = vmax.f32 %v9191, 0.0
  %v9256 = vmax.f32 %v9192, 0.0
  %v9257 = vmax.f32 %v9193, 0.0
  %v9258 = vmax.f32 %v9194, 0.0
  %v9259 = vmax.f32 %v9195, 0.0
  %v9260 = vmax.f32 %v9196, 0.0
  %v9261 = vmax.f32 %v9197, 0.0
  %v9262 = vmax.f32 %v9198, 0.0
  %v9263 = vmax.f32 %v9199, 0.0
  %v9264 = vmax.f32 %v9200, 0.0
  %v9265 = vmax.f32 %v9201, 0.0
  %v9266 = vmax.f32 %v9202, 0.0
  %v9267 = vmax.f32 %v9203, 0.0
  %v9268 = vmax.f32 %v9204, 0.0
  %v9269 = vmax.f32 %v9205, 0.0
  %v9334 = vrot.slane %v9207, 7
  %vm9335 = vcmask 1041409
  %v9336 = vsel %vm9335, %v9334, %v9206
  %v9337 = vrot.slane %v9208, 6
  %vm9338 = vcmask 1042434
  %v9339 = vsel %vm9338, %v9337, %v9336
  %v9340 = vrot.slane %v9209, 5
  %vm9341 = vcmask 1043459
  %v9342 = vsel %vm9341, %v9340, %v9339
  %v9343 = vrot.slane %v9210, 4
  %vm9344 = vcmask 1044484
  %v9345 = vsel %vm9344, %v9343, %v9342
  %v9346 = vrot.slane %v9211, 3
  %vm9347 = vcmask 1045509
  %v9348 = vsel %vm9347, %v9346, %v9345
  %v9349 = vrot.slane %v9212, 2
  %vm9350 = vcmask 1046534
  %v9351 = vsel %vm9350, %v9349, %v9348
  %v9352 = vrot.slane %v9213, 1
  %vm9353 = vcmask 1047559
  %v9354 = vsel %vm9353, %v9352, %v9351
  %v9355 = vrot.slane %v9215, 7
  %v9356 = vsel %vm9335, %v9355, %v9214
  %v9357 = vrot.slane %v9216, 6
  %v9358 = vsel %vm9338, %v9357, %v9356
  %v9359 = vrot.slane %v9217, 5
  %v9360 = vsel %vm9341, %v9359, %v9358
  %v9361 = vrot.slane %v9218, 4
  %v9362 = vsel %vm9344, %v9361, %v9360
  %v9363 = vrot.slane %v9219, 3
  %v9364 = vsel %vm9347, %v9363, %v9362
  %v9365 = vrot.slane %v9220, 2
  %v9366 = vsel %vm9350, %v9365, %v9364
  %v9367 = vrot.slane %v9221, 1
  %v9368 = vsel %vm9353, %v9367, %v9366
  %v9369 = vrot.slane %v9223, 7
  %v9370 = vsel %vm9335, %v9369, %v9222
  %v9371 = vrot.slane %v9224, 6
  %v9372 = vsel %vm9338, %v9371, %v9370
  %v9373 = vrot.slane %v9225, 5
  %v9374 = vsel %vm9341, %v9373, %v9372
  %v9375 = vrot.slane %v9226, 4
  %v9376 = vsel %vm9344, %v9375, %v9374
  %v9377 = vrot.slane %v9227, 3
  %v9378 = vsel %vm9347, %v9377, %v9376
  %v9379 = vrot.slane %v9228, 2
  %v9380 = vsel %vm9350, %v9379, %v9378
  %v9381 = vrot.slane %v9229, 1
  %v9382 = vsel %vm9353, %v9381, %v9380
  %v9383 = vrot.slane %v9231, 7
  %v9384 = vsel %vm9335, %v9383, %v9230
  %v9385 = vrot.slane %v9232, 6
  %v9386 = vsel %vm9338, %v9385, %v9384
  %v9387 = vrot.slane %v9233, 5
  %v9388 = vsel %vm9341, %v9387, %v9386
  %v9389 = vrot.slane %v9234, 4
  %v9390 = vsel %vm9344, %v9389, %v9388
  %v9391 = vrot.slane %v9235, 3
  %v9392 = vsel %vm9347, %v9391, %v9390
  %v9393 = vrot.slane %v9236, 2
  %v9394 = vsel %vm9350, %v9393, %v9392
  %v9395 = vrot.slane %v9237, 1
  %v9396 = vsel %vm9353, %v9395, %v9394
  %v9397 = vrot.slane %v9239, 7
  %v9398 = vsel %vm9335, %v9397, %v9238
  %v9399 = vrot.slane %v9240, 6
  %v9400 = vsel %vm9338, %v9399, %v9398
  %v9401 = vrot.slane %v9241, 5
  %v9402 = vsel %vm9341, %v9401, %v9400
  %v9403 = vrot.slane %v9242, 4
  %v9404 = vsel %vm9344, %v9403, %v9402
  %v9405 = vrot.slane %v9243, 3
  %v9406 = vsel %vm9347, %v9405, %v9404
  %v9407 = vrot.slane %v9244, 2
  %v9408 = vsel %vm9350, %v9407, %v9406
  %v9409 = vrot.slane %v9245, 1
  %v9410 = vsel %vm9353, %v9409, %v9408
  %v9411 = vrot.slane %v9247, 7
  %v9412 = vsel %vm9335, %v9411, %v9246
  %v9413 = vrot.slane %v9248, 6
  %v9414 = vsel %vm9338, %v9413, %v9412
  %v9415 = vrot.slane %v9249, 5
  %v9416 = vsel %vm9341, %v9415, %v9414
  %v9417 = vrot.slane %v9250, 4
  %v9418 = vsel %vm9344, %v9417, %v9416
  %v9419 = vrot.slane %v9251, 3
  %v9420 = vsel %vm9347, %v9419, %v9418
  %v9421 = vrot.slane %v9252, 2
  %v9422 = vsel %vm9350, %v9421, %v9420
  %v9423 = vrot.slane %v9253, 1
  %v9424 = vsel %vm9353, %v9423, %v9422
  %v9425 = vrot.slane %v9255, 7
  %v9426 = vsel %vm9335, %v9425, %v9254
  %v9427 = vrot.slane %v9256, 6
  %v9428 = vsel %vm9338, %v9427, %v9426
  %v9429 = vrot.slane %v9257, 5
  %v9430 = vsel %vm9341, %v9429, %v9428
  %v9431 = vrot.slane %v9258, 4
  %v9432 = vsel %vm9344, %v9431, %v9430
  %v9433 = vrot.slane %v9259, 3
  %v9434 = vsel %vm9347, %v9433, %v9432
  %v9435 = vrot.slane %v9260, 2
  %v9436 = vsel %vm9350, %v9435, %v9434
  %v9437 = vrot.slane %v9261, 1
  %v9438 = vsel %vm9353, %v9437, %v9436
  %v9439 = vrot.slane %v9263, 7
  %v9440 = vsel %vm9335, %v9439, %v9262
  %v9441 = vrot.slane %v9264, 6
  %v9442 = vsel %vm9338, %v9441, %v9440
  %v9443 = vrot.slane %v9265, 5
  %v9444 = vsel %vm9341, %v9443, %v9442
  %v9445 = vrot.slane %v9266, 4
  %v9446 = vsel %vm9344, %v9445, %v9444
  %v9447 = vrot.slane %v9267, 3
  %v9448 = vsel %vm9347, %v9447, %v9446
  %v9449 = vrot.slane %v9268, 2
  %v9450 = vsel %vm9350, %v9449, %v9448
  %v9451 = vrot.slane %v9269, 1
  %v9452 = vsel %vm9353, %v9451, %v9450
  %9461 = vst.msk [vmem:[%s18] sm:$0xff] %vm1534, %v9354
  %9462 = vst.msk [vmem:[%s18 + $0x8] sm:$0xff] %vm1534, %v9368
  %9463 = vst.msk [vmem:[%s18 + $0x10] sm:$0xff] %vm1534, %v9382
  %9464 = vst.msk [vmem:[%s18 + $0x18] sm:$0xff] %vm1534, %v9396
  %9465 = vst.msk [vmem:[%s18 + $0x20] sm:$0xff] %vm1534, %v9410
  %9466 = vst.msk [vmem:[%s18 + $0x28] sm:$0xff] %vm1534, %v9424
  %9467 = vst.msk [vmem:[%s18 + $0x30] sm:$0xff] %vm1534, %v9438
  %9468 = vst.msk [vmem:[%s18 + $0x38] sm:$0xff] %vm1534, %v9452
  // Predicated region
  $region74: #{decoder_forward.11} parent=0 // pred_check
    _
  $region75: #{decoder_forward.11} parent=0 // pred_check_branch
    %9470 = sbr.rel (0) target = $region77
  $region76: #{decoder_forward.11} parent=0 // pred_region
    _
  $region77: #{decoder_forward.11} parent=0 // pred_fallthru
    _
  // Predicated region
  $region78: #{decoder_forward.11} parent=0 // pred_check
    _
  $region79: #{decoder_forward.11} parent=0 // pred_check_branch
    %9472 = sbr.rel (0) target = $region81
  $region80: #{decoder_forward.11} parent=0 // pred_region
    _
  $region81: #{decoder_forward.11} parent=0 // pred_fallthru
    _

</llo_original>
